<compile_context>
chip_gen: v7x
topology: tpu7x:2x2x1
jax: 0.10.0
libtpu: 0.0.40
codegen_flags: <defaults>
</compile_context>

<pallas_src>
import jax
import jax.numpy as jnp
from jax import lax
from jax.experimental import pallas as pl
from jax.experimental.pallas import tpu as pltpu

GROUPS = 32
EPS = 1e-5           # PyTorch GroupNorm default
LANES = 128
_TAPS = tuple((ky, kx) for ky in range(3) for kx in range(3))   # tap-major order


def _silu(y):
    # y * sigmoid(y); the reciprocal rides the EUP slot instead of a VALU divide.
    return y * pl.reciprocal(1.0 + jnp.exp(-y), approx=True)


def _gn_silu(x, p_ref, pt_ref, g_ref, b_ref):
    """GroupNorm(32) + SiLU on an (HW, Cpad) f32 slab.

    p_ref : (Cpad, G) channel->group membership scaled by 1/(HW*cg)
    pt_ref: (G, Cpad) plain 0/1 membership (broadcast group stats to channels)
    Zero-padded channels belong to no group -> mean = var = 0 -> output 0.
    Two-pass (subtract-mean) variance avoids E[x^2]-mean^2 cancellation.
    """
    s = jnp.sum(x, axis=0, keepdims=True)                              # (1, Cp)
    mean = jnp.dot(jnp.dot(s, p_ref[...], preferred_element_type=jnp.float32),
                   pt_ref[...], preferred_element_type=jnp.float32)    # (1, Cp)
    d = x - mean
    ss = jnp.sum(d * d, axis=0, keepdims=True)                         # (1, Cp)
    var = jnp.dot(jnp.dot(ss, p_ref[...], preferred_element_type=jnp.float32),
                  pt_ref[...], preferred_element_type=jnp.float32)
    y = d * lax.rsqrt(var + EPS) * g_ref[...] + b_ref[...]
    return _silu(y)


def _zero_halo(pad_ref, hgt, wdt, c):
    """Zero only the 1-pixel halo ring; the interior is overwritten afterwards.

    The two column strips are 2 columns wide (aligned to the bf16 sublane
    packing); the inner column of each strip is rewritten by the interior
    store, so the net effect is a zero halo around live data.
    """
    zrow = jnp.zeros((wdt + 2, c), pad_ref.dtype)
    pad_ref[0] = zrow
    pad_ref[hgt + 1] = zrow
    zcol = jnp.zeros((hgt + 2, 2, c), pad_ref.dtype)
    pad_ref[:, 0:2, :] = zcol
    pad_ref[:, wdt:wdt + 2, :] = zcol


def _im2col(pad_ref, col_ref, hgt, wdt, c):
    """Write the 9 conv taps as lane-aligned stripes of an (H, W, 9*C) slab."""
    for t, (ky, kx) in enumerate(_TAPS):
        col_ref[:, :, t * c:(t + 1) * c] = pad_ref[ky:ky + hgt, kx:kx + wdt, :]


def _resblock_kernel(x_ref, emb_ref,
                     g1_ref, bg1_ref, p1_ref, p1t_ref, w1_ref, b1_ref,
                     we_ref, be_ref,
                     g2_ref, bg2_ref, p2_ref, p2t_ref, w2s_ref, b2s_ref,
                     o_ref,
                     pad1, col1, pad2, col2):
    hgt = pad1.shape[0] - 2
    wdt = pad1.shape[1] - 2
    hw = hgt * wdt
    c1 = pad1.shape[2]                                    # padded in_ch
    c2 = pad2.shape[2]                                    # padded out_ch

    x = x_ref[0]                                          # (HW, C1p) f32

    # ---- in_layers: GroupNorm(32, in_ch) + SiLU -------------------------
    y = _gn_silu(x, p1_ref, p1t_ref, g1_ref, bg1_ref)

    # "same" padding in VMEM: zero only the halo ring, write the interior once
    # (single f32->bf16 cast; the im2col copies below stay bf16->bf16).
    _zero_halo(pad1, hgt, wdt, c1)
    pad1[1:hgt + 1, 1:wdt + 1, :] = y.reshape(hgt, wdt, c1).astype(pad1.dtype)

    # conv3x3 as ONE lane-dense bf16 im2col matmul (f32 accumulation), fused
    # with the bias and the emb_layers (SiLU -> Linear) per-channel add.
    _im2col(pad1, col1, hgt, wdt, c1)
    h = jnp.dot(col1[...].reshape(hw, 9 * c1), w1_ref[...],
                preferred_element_type=jnp.float32)
    e = _silu(emb_ref[0])                                 # (1, E)
    emb_out = jnp.dot(e, we_ref[...],
                      preferred_element_type=jnp.float32) + be_ref[...]
    h = h + b1_ref[...] + emb_out                         # (HW, C2p)

    # ---- out_layers: GroupNorm(32, out_ch) + SiLU + Dropout(p=0) + conv3x3
    y2 = _gn_silu(h, p2_ref, p2t_ref, g2_ref, bg2_ref)
    _zero_halo(pad2, hgt, wdt, c2)
    pad2[1:hgt + 1, 1:wdt + 1, :] = y2.reshape(hgt, wdt, c2).astype(pad2.dtype)
    _im2col(pad2, col2, hgt, wdt, c2)
    # 10th "tap": the raw input x, so the 1x1 skip conv rides the same matmul
    # (ws is stacked under w2 and bs is folded into the bias row).
    col2[:, :, 9 * c2:] = x.reshape(hgt, wdt, c1).astype(col2.dtype)

    o_ref[0] = jnp.dot(col2[...].reshape(hw, 9 * c2 + c1), w2s_ref[...],
                       preferred_element_type=jnp.float32) + b2s_ref[...]


# --------------------------------------------------------------------------
# Wrapper-side plumbing (layout / padding of parameters, lane-dense slabs)
# --------------------------------------------------------------------------
def _round_up(v, m):
    return (v + m - 1) // m * m


def _pad_row(v, cp):
    """1-D (c,) param -> (1, cp) f32, zero-padded to the lane-dense width."""
    return jnp.pad(v.astype(jnp.float32), (0, cp - v.shape[0])).reshape(1, cp)


def _group_proj(c_real, c_pad, hw):
    """Channel->group membership matrices for the segmented GN reduction."""
    cg = c_real // GROUPS
    ch = jnp.arange(c_pad)
    memb = ((ch[:, None] // cg) == jnp.arange(GROUPS)[None, :]) & (ch[:, None] < c_real)
    memb = memb.astype(jnp.float32)
    return memb / float(hw * cg), memb.T                  # (Cp, G) scaled, (G, Cp)


def _pack_conv_w(w_hwio, cin_pad, cout_pad):
    """(3,3,Cin,Cout) HWIO -> (9*Cin_pad, Cout_pad) bf16, tap-major rows."""
    kh, kw, cin, cout = w_hwio.shape
    w = jnp.pad(w_hwio, ((0, 0), (0, 0), (0, cin_pad - cin), (0, cout_pad - cout)))
    return w.reshape(kh * kw * cin_pad, cout_pad).astype(jnp.bfloat16)


@jax.jit
def resblock_forward(x_nchw, emb, p):
    """ResBlock forward.  x_nchw: (N, in_ch, H, W), emb: (N, emb_dim)."""
    n, cin, hgt, wdt = x_nchw.shape
    cout = p["w1"].shape[-1]
    e_dim = emb.shape[-1]
    hw = hgt * wdt
    c1p = _round_up(cin, LANES)
    c2p = _round_up(cout, LANES)

    # NCHW -> token-major (N, HW, Cpad) so channels sit lane-dense on 128 lanes.
    x_tok = jnp.transpose(x_nchw, (0, 2, 3, 1)).astype(jnp.float32).reshape(n, hw, cin)
    x_tok = jnp.pad(x_tok, ((0, 0), (0, 0), (0, c1p - cin)))

    p1, p1t = _group_proj(cin, c1p, hw)
    p2, p2t = _group_proj(cout, c2p, hw)

    # Fuse the 1x1 skip conv into the second conv's matmul: stack ws under the
    # packed w2 (x becomes a 10th im2col tap) and fold bs into the bias row.
    # skip_connection == Identity (in_ch == out_ch) -> pass ws = I, bs = 0.
    w2s = jnp.concatenate(
        [_pack_conv_w(p["w2"], c2p, c2p),
         jnp.pad(p["ws"], ((0, c1p - cin), (0, c2p - cout))).astype(jnp.bfloat16)],
        axis=0)                                           # (9*C2p + C1p, C2p)
    b2s = _pad_row(p["b2"] + p["bs"], c2p)

    args = (
        x_tok,
        emb.astype(jnp.float32).reshape(n, 1, e_dim),
        _pad_row(p["gn1_g"], c1p), _pad_row(p["gn1_b"], c1p), p1, p1t,
        _pack_conv_w(p["w1"], c1p, c2p), _pad_row(p["b1"], c2p),
        jnp.pad(p["we"].astype(jnp.float32), ((0, 0), (0, c2p - cout))),
        _pad_row(p["be"], c2p),
        _pad_row(p["gn2_g"], c2p), _pad_row(p["gn2_b"], c2p), p2, p2t,
        w2s, b2s,
    )

    const2 = lambda i: (0, 0)
    in_specs = [
        pl.BlockSpec((1, hw, c1p), lambda i: (i, 0, 0)),            # x tokens
        pl.BlockSpec((1, 1, e_dim), lambda i: (i, 0, 0)),           # emb
        pl.BlockSpec((1, c1p), const2),                             # gn1 gamma
        pl.BlockSpec((1, c1p), const2),                             # gn1 beta
        pl.BlockSpec((c1p, GROUPS), const2),                        # p1
        pl.BlockSpec((GROUPS, c1p), const2),                        # p1^T
        pl.BlockSpec((9 * c1p, c2p), const2),                       # w1 (im2col)
        pl.BlockSpec((1, c2p), const2),                             # b1
        pl.BlockSpec((e_dim, c2p), const2),                         # we
        pl.BlockSpec((1, c2p), const2),                             # be
        pl.BlockSpec((1, c2p), const2),                             # gn2 gamma
        pl.BlockSpec((1, c2p), const2),                             # gn2 beta
        pl.BlockSpec((c2p, GROUPS), const2),                        # p2
        pl.BlockSpec((GROUPS, c2p), const2),                        # p2^T
        pl.BlockSpec((9 * c2p + c1p, c2p), const2),                 # w2 + ws
        pl.BlockSpec((1, c2p), const2),                             # b2 + bs
    ]

    out = pl.pallas_call(
        _resblock_kernel,
        out_shape=jax.ShapeDtypeStruct((n, hw, c2p), jnp.float32),
        grid=(n,),
        in_specs=in_specs,
        out_specs=pl.BlockSpec((1, hw, c2p), lambda i: (i, 0, 0)),
        scratch_shapes=[
            pltpu.VMEM((hgt + 2, wdt + 2, c1p), jnp.bfloat16),      # padded act 1
            pltpu.VMEM((hgt, wdt, 9 * c1p), jnp.bfloat16),          # im2col slab 1
            pltpu.VMEM((hgt + 2, wdt + 2, c2p), jnp.bfloat16),      # padded act 2
            pltpu.VMEM((hgt, wdt, 9 * c2p + c1p), jnp.bfloat16),    # im2col + skip tap
        ],
        compiler_params=pltpu.CompilerParams(
            dimension_semantics=("parallel",),
            # ~3 MiB used at this toy size; raise (and row-strip tile) at
            # production diffusion shapes.
            vmem_limit_bytes=32 * 1024 * 1024,
        ),
    )(*args)

    out = out[:, :, :cout].reshape(n, hgt, wdt, cout)
    return jnp.transpose(out, (0, 3, 1, 2))                      # back to NCHW


# --------------------------------------------------------------------------
# Pure-JAX reference for verification
# --------------------------------------------------------------------------
def ref_forward(x_nchw, emb, p):
    x = jnp.transpose(x_nchw, (0, 2, 3, 1)).astype(jnp.float32)

    def gn_silu_ref(v, g, b):
        n_, h_, w_, c_ = v.shape
        cg = c_ // GROUPS
        vg = v.reshape(n_, h_, w_, GROUPS, cg)
        m = vg.mean(axis=(1, 2, 4), keepdims=True)
        var = vg.var(axis=(1, 2, 4), keepdims=True)
        y = ((vg - m) / jnp.sqrt(var + EPS)).reshape(n_, h_, w_, c_) * g + b
        return y * jax.nn.sigmoid(y)

    def conv3(v, w_, b_):
        return lax.conv_general_dilated(
            v, w_, (1, 1), "SAME",
            dimension_numbers=("NHWC", "HWIO", "NHWC"),
            precision=lax.Precision.HIGHEST) + b_

    hh = gn_silu_ref(x, p["gn1_g"], p["gn1_b"])
    hh = conv3(hh, p["w1"], p["b1"])
    e = jax.nn.silu(emb) @ p["we"] + p["be"]
    hh = hh + e[:, None, None, :]
    hh = gn_silu_ref(hh, p["gn2_g"], p["gn2_b"])
    hh = conv3(hh, p["w2"], p["b2"])
    skip = jnp.einsum("nhwc,co->nhwo", x, p["ws"],
                      precision=lax.Precision.HIGHEST) + p["bs"]
    return jnp.transpose(skip + hh, (0, 3, 1, 2))


if __name__ == "__main__":
    N, in_ch, out_ch, emb_dim, H, W = 2, 32, 64, 64, 16, 16
    keys = jax.random.split(jax.random.PRNGKey(0), 14)

    x = jax.random.normal(keys[0], (N, in_ch, H, W), jnp.float32)
    emb = jax.random.normal(keys[1], (N, emb_dim), jnp.float32)

    params = dict(
        gn1_g=1.0 + 0.1 * jax.random.normal(keys[2], (in_ch,), jnp.float32),
        gn1_b=0.1 * jax.random.normal(keys[3], (in_ch,), jnp.float32),
        w1=0.05 * jax.random.normal(keys[4], (3, 3, in_ch, out_ch), jnp.float32),  # HWIO
        b1=0.05 * jax.random.normal(keys[5], (out_ch,), jnp.float32),
        we=0.05 * jax.random.normal(keys[6], (emb_dim, out_ch), jnp.float32),      # Linear W^T
        be=0.05 * jax.random.normal(keys[7], (out_ch,), jnp.float32),
        gn2_g=1.0 + 0.1 * jax.random.normal(keys[8], (out_ch,), jnp.float32),
        gn2_b=0.1 * jax.random.normal(keys[9], (out_ch,), jnp.float32),
        # zero_module() initializes these to exactly zero in the real module;
        # small random values are used here so the second conv path is exercised.
        w2=0.05 * jax.random.normal(keys[10], (3, 3, out_ch, out_ch), jnp.float32),
        b2=0.05 * jax.random.normal(keys[11], (out_ch,), jnp.float32),
        # skip_connection = 1x1 conv since in_ch != out_ch
        ws=0.05 * jax.random.normal(keys[12], (in_ch, out_ch), jnp.float32),
        bs=0.05 * jax.random.normal(keys[13], (out_ch,), jnp.float32),
    )

    out = resblock_forward(x, emb, params)
    out = jax.block_until_ready(out)

    ref = ref_forward(x, emb, params)
    err = float(jnp.max(jnp.abs(out - ref)))
    assert out.shape == (N, out_ch, H, W), out.shape
    # Conv / skip matmuls run with bf16 operands on the MXU (f32 accumulation),
    # so compare against the f32 reference with a bf16-level tolerance.
    assert err < 5e-2, f"max abs err {err}"
    print("KERNEL_OK")
</pallas_src>

<mosaic_0001>
module attributes {stable_mosaic.version = 11 : i64} {
  func.func @_resblock_kernel(%arg0: i32, %arg1: memref<1x256x128xf32, #tpu.memory_space<vmem>>, %arg2: memref<1x1x64xf32, #tpu.memory_space<vmem>>, %arg3: memref<1x128xf32, #tpu.memory_space<vmem>>, %arg4: memref<1x128xf32, #tpu.memory_space<vmem>>, %arg5: memref<128x32xf32, #tpu.memory_space<vmem>>, %arg6: memref<32x128xf32, #tpu.memory_space<vmem>>, %arg7: memref<1152x128xbf16, #tpu.memory_space<vmem>>, %arg8: memref<1x128xf32, #tpu.memory_space<vmem>>, %arg9: memref<64x128xf32, #tpu.memory_space<vmem>>, %arg10: memref<1x128xf32, #tpu.memory_space<vmem>>, %arg11: memref<1x128xf32, #tpu.memory_space<vmem>>, %arg12: memref<1x128xf32, #tpu.memory_space<vmem>>, %arg13: memref<128x32xf32, #tpu.memory_space<vmem>>, %arg14: memref<32x128xf32, #tpu.memory_space<vmem>>, %arg15: memref<1280x128xbf16, #tpu.memory_space<vmem>>, %arg16: memref<1x128xf32, #tpu.memory_space<vmem>>, %arg17: memref<1x256x128xf32, #tpu.memory_space<vmem>>, %arg18: memref<18x18x128xbf16, #tpu.memory_space<vmem>>, %arg19: memref<16x16x1152xbf16, #tpu.memory_space<vmem>>, %arg20: memref<18x18x128xbf16, #tpu.memory_space<vmem>>, %arg21: memref<16x16x1280xbf16, #tpu.memory_space<vmem>>) attributes {dimension_semantics = [#tpu.dimension_semantics<parallel>], iteration_bounds = array<i64: 2>, scalar_prefetch = 0 : i64, scratch_operands = 4 : i64, tpu.core_type = #tpu.core_type<tc>, window_params = [{transform_indices = @transform_0, window_bounds = array<i64: 1, 256, 128>}, {transform_indices = @transform_1, window_bounds = array<i64: 1, 1, 64>}, {pipeline_mode = #tpu.pipeline_mode<synchronous>, transform_indices = @transform_2, window_bounds = array<i64: 1, 128>}, {pipeline_mode = #tpu.pipeline_mode<synchronous>, transform_indices = @transform_3, window_bounds = array<i64: 1, 128>}, {pipeline_mode = #tpu.pipeline_mode<synchronous>, transform_indices = @transform_4, window_bounds = array<i64: 128, 32>}, {pipeline_mode = #tpu.pipeline_mode<synchronous>, transform_indices = @transform_5, window_bounds = array<i64: 32, 128>}, {pipeline_mode = #tpu.pipeline_mode<synchronous>, transform_indices = @transform_6, window_bounds = array<i64: 1152, 128>}, {pipeline_mode = #tpu.pipeline_mode<synchronous>, transform_indices = @transform_7, window_bounds = array<i64: 1, 128>}, {pipeline_mode = #tpu.pipeline_mode<synchronous>, transform_indices = @transform_8, window_bounds = array<i64: 64, 128>}, {pipeline_mode = #tpu.pipeline_mode<synchronous>, transform_indices = @transform_9, window_bounds = array<i64: 1, 128>}, {pipeline_mode = #tpu.pipeline_mode<synchronous>, transform_indices = @transform_10, window_bounds = array<i64: 1, 128>}, {pipeline_mode = #tpu.pipeline_mode<synchronous>, transform_indices = @transform_11, window_bounds = array<i64: 1, 128>}, {pipeline_mode = #tpu.pipeline_mode<synchronous>, transform_indices = @transform_12, window_bounds = array<i64: 128, 32>}, {pipeline_mode = #tpu.pipeline_mode<synchronous>, transform_indices = @transform_13, window_bounds = array<i64: 32, 128>}, {pipeline_mode = #tpu.pipeline_mode<synchronous>, transform_indices = @transform_14, window_bounds = array<i64: 1280, 128>}, {pipeline_mode = #tpu.pipeline_mode<synchronous>, transform_indices = @transform_15, window_bounds = array<i64: 1, 128>}, {transform_indices = @transform_16, window_bounds = array<i64: 1, 256, 128>}]} {
    %c0 = arith.constant 0 : index
    %c0_0 = arith.constant 0 : index
    %c0_1 = arith.constant 0 : index
    %0 = vector.load %arg1[%c0, %c0_0, %c0_1] : memref<1x256x128xf32, #tpu.memory_space<vmem>>, vector<1x256x128xf32>
    %1 = vector.shape_cast %0 : vector<1x256x128xf32> to vector<256x128xf32>
    %cst = arith.constant dense<0.000000e+00> : vector<128xf32>
    %2 = vector.multi_reduction <add>, %1, %cst [0] : vector<256x128xf32> to vector<128xf32>
    %3 = vector.shape_cast %2 : vector<128xf32> to vector<1x128xf32>
    %c0_2 = arith.constant 0 : index
    %c0_3 = arith.constant 0 : index
    %4 = vector.load %arg5[%c0_2, %c0_3] : memref<128x32xf32, #tpu.memory_space<vmem>>, vector<128x32xf32>
    %cst_4 = arith.constant dense<0.000000e+00> : vector<1x32xf32>
    %5 = tpu.matmul %3, %4, %cst_4 {dimension_numbers = #tpu.dot_dimension_numbers<[1], [0], [0], [1], [0, 0, 1, 1], [], []>} : vector<1x128xf32>, vector<128x32xf32>, vector<1x32xf32> -> vector<1x32xf32>
    %c0_5 = arith.constant 0 : index
    %c0_6 = arith.constant 0 : index
    %6 = vector.load %arg6[%c0_5, %c0_6] : memref<32x128xf32, #tpu.memory_space<vmem>>, vector<32x128xf32>
    %cst_7 = arith.constant dense<0.000000e+00> : vector<1x128xf32>
    %7 = tpu.matmul %5, %6, %cst_7 {dimension_numbers = #tpu.dot_dimension_numbers<[1], [0], [0], [1], [0, 0, 1, 1], [], []>} : vector<1x32xf32>, vector<32x128xf32>, vector<1x128xf32> -> vector<1x128xf32>
    %8 = vector.broadcast %7 : vector<1x128xf32> to vector<256x128xf32>
    %9 = arith.subf %1, %8 : vector<256x128xf32>
    %10 = arith.mulf %9, %9 : vector<256x128xf32>
    %cst_8 = arith.constant dense<0.000000e+00> : vector<128xf32>
    %11 = vector.multi_reduction <add>, %10, %cst_8 [0] : vector<256x128xf32> to vector<128xf32>
    %12 = vector.shape_cast %11 : vector<128xf32> to vector<1x128xf32>
    %c0_9 = arith.constant 0 : index
    %c0_10 = arith.constant 0 : index
    %13 = vector.load %arg5[%c0_9, %c0_10] : memref<128x32xf32, #tpu.memory_space<vmem>>, vector<128x32xf32>
    %cst_11 = arith.constant dense<0.000000e+00> : vector<1x32xf32>
    %14 = tpu.matmul %12, %13, %cst_11 {dimension_numbers = #tpu.dot_dimension_numbers<[1], [0], [0], [1], [0, 0, 1, 1], [], []>} : vector<1x128xf32>, vector<128x32xf32>, vector<1x32xf32> -> vector<1x32xf32>
    %c0_12 = arith.constant 0 : index
    %c0_13 = arith.constant 0 : index
    %15 = vector.load %arg6[%c0_12, %c0_13] : memref<32x128xf32, #tpu.memory_space<vmem>>, vector<32x128xf32>
    %cst_14 = arith.constant dense<0.000000e+00> : vector<1x128xf32>
    %16 = tpu.matmul %14, %15, %cst_14 {dimension_numbers = #tpu.dot_dimension_numbers<[1], [0], [0], [1], [0, 0, 1, 1], [], []>} : vector<1x32xf32>, vector<32x128xf32>, vector<1x128xf32> -> vector<1x128xf32>
    %cst_15 = arith.constant 9.99999974E-6 : f32
    %17 = vector.broadcast %cst_15 : f32 to vector<1x128xf32>
    %18 = arith.addf %16, %17 : vector<1x128xf32>
    %19 = math.rsqrt %18 : vector<1x128xf32>
    %20 = vector.broadcast %19 : vector<1x128xf32> to vector<256x128xf32>
    %21 = arith.mulf %9, %20 : vector<256x128xf32>
    %c0_16 = arith.constant 0 : index
    %c0_17 = arith.constant 0 : index
    %22 = vector.load %arg3[%c0_16, %c0_17] : memref<1x128xf32, #tpu.memory_space<vmem>>, vector<1x128xf32>
    %23 = vector.broadcast %22 : vector<1x128xf32> to vector<256x128xf32>
    %24 = arith.mulf %21, %23 : vector<256x128xf32>
    %c0_18 = arith.constant 0 : index
    %c0_19 = arith.constant 0 : index
    %25 = vector.load %arg4[%c0_18, %c0_19] : memref<1x128xf32, #tpu.memory_space<vmem>>, vector<1x128xf32>
    %26 = vector.broadcast %25 : vector<1x128xf32> to vector<256x128xf32>
    %27 = arith.addf %24, %26 : vector<256x128xf32>
    %cst_20 = arith.constant 0.000000e+00 : f32
    %28 = vector.broadcast %cst_20 : f32 to vector<256x128xf32>
    %29 = arith.subf %28, %27 : vector<256x128xf32>
    %30 = math.exp %29 : vector<256x128xf32>
    %cst_21 = arith.constant 1.000000e+00 : f32
    %31 = vector.broadcast %cst_21 : f32 to vector<256x128xf32>
    %32 = arith.addf %31, %30 : vector<256x128xf32>
    %33 = tpu.reciprocal %32 {approx = true} : vector<256x128xf32> -> vector<256x128xf32>
    %34 = arith.mulf %27, %33 : vector<256x128xf32>
    %cst_22 = arith.constant 0.000000e+00 : bf16
    %35 = vector.broadcast %cst_22 : bf16 to vector<18x128xbf16>
    %c0_23 = arith.constant 0 : index
    %c0_24 = arith.constant 0 : index
    %c0_25 = arith.constant 0 : index
    %36 = vector.load %arg18[%c0_23, %c0_24, %c0_25] : memref<18x18x128xbf16, #tpu.memory_space<vmem>>, vector<1x18x128xbf16>
    %37 = vector.shape_cast %36 : vector<1x18x128xbf16> to vector<18x128xbf16>
    %38 = vector.shape_cast %35 : vector<18x128xbf16> to vector<1x18x128xbf16>
    tpu.vector_store %arg18[%c0_23, %c0_24, %c0_25], %38 {strides = array<i32>} : memref<18x18x128xbf16, #tpu.memory_space<vmem>>, vector<1x18x128xbf16>,
    %c17 = arith.constant 17 : index
    %c0_26 = arith.constant 0 : index
    %c0_27 = arith.constant 0 : index
    %39 = vector.load %arg18[%c17, %c0_26, %c0_27] : memref<18x18x128xbf16, #tpu.memory_space<vmem>>, vector<1x18x128xbf16>
    %40 = vector.shape_cast %39 : vector<1x18x128xbf16> to vector<18x128xbf16>
    %41 = vector.shape_cast %35 : vector<18x128xbf16> to vector<1x18x128xbf16>
    tpu.vector_store %arg18[%c17, %c0_26, %c0_27], %41 {strides = array<i32>} : memref<18x18x128xbf16, #tpu.memory_space<vmem>>, vector<1x18x128xbf16>,
    %cst_28 = arith.constant 0.000000e+00 : bf16
    %42 = vector.broadcast %cst_28 : bf16 to vector<18x2x128xbf16>
    %c0_29 = arith.constant 0 : index
    %c0_30 = arith.constant 0 : index
    %c0_31 = arith.constant 0 : index
    %43 = vector.load %arg18[%c0_29, %c0_30, %c0_31] : memref<18x18x128xbf16, #tpu.memory_space<vmem>>, vector<18x2x128xbf16>
    tpu.vector_store %arg18[%c0_29, %c0_30, %c0_31], %42 {strides = array<i32>} : memref<18x18x128xbf16, #tpu.memory_space<vmem>>, vector<18x2x128xbf16>,
    %c0_32 = arith.constant 0 : index
    %c16 = arith.constant 16 : index
    %c0_33 = arith.constant 0 : index
    %44 = vector.load %arg18[%c0_32, %c16, %c0_33] : memref<18x18x128xbf16, #tpu.memory_space<vmem>>, vector<18x2x128xbf16>
    tpu.vector_store %arg18[%c0_32, %c16, %c0_33], %42 {strides = array<i32>} : memref<18x18x128xbf16, #tpu.memory_space<vmem>>, vector<18x2x128xbf16>,
    %45 = vector.shape_cast %34 : vector<256x128xf32> to vector<16x16x128xf32>
    %46 = arith.truncf %45 : vector<16x16x128xf32> to vector<16x16x128xbf16>
    %c1 = arith.constant 1 : index
    %c1_34 = arith.constant 1 : index
    %c0_35 = arith.constant 0 : index
    %47 = vector.load %arg18[%c1, %c1_34, %c0_35] : memref<18x18x128xbf16, #tpu.memory_space<vmem>>, vector<16x16x128xbf16>
    tpu.vector_store %arg18[%c1, %c1_34, %c0_35], %46 {strides = array<i32>} : memref<18x18x128xbf16, #tpu.memory_space<vmem>>, vector<16x16x128xbf16>,
    %c0_36 = arith.constant 0 : index
    %c0_37 = arith.constant 0 : index
    %c0_38 = arith.constant 0 : index
    %48 = vector.load %arg18[%c0_36, %c0_37, %c0_38] : memref<18x18x128xbf16, #tpu.memory_space<vmem>>, vector<16x16x128xbf16>
    %c0_39 = arith.constant 0 : index
    %c0_40 = arith.constant 0 : index
    %c0_41 = arith.constant 0 : index
    %49 = vector.load %arg19[%c0_39, %c0_40, %c0_41] : memref<16x16x1152xbf16, #tpu.memory_space<vmem>>, vector<16x16x128xbf16>
    tpu.vector_store %arg19[%c0_39, %c0_40, %c0_41], %48 {strides = array<i32>} : memref<16x16x1152xbf16, #tpu.memory_space<vmem>>, vector<16x16x128xbf16>,
    %c0_42 = arith.constant 0 : index
    %c1_43 = arith.constant 1 : index
    %c0_44 = arith.constant 0 : index
    %50 = vector.load %arg18[%c0_42, %c1_43, %c0_44] : memref<18x18x128xbf16, #tpu.memory_space<vmem>>, vector<16x16x128xbf16>
    %c0_45 = arith.constant 0 : index
    %c0_46 = arith.constant 0 : index
    %c128 = arith.constant 128 : index
    %51 = vector.load %arg19[%c0_45, %c0_46, %c128] : memref<16x16x1152xbf16, #tpu.memory_space<vmem>>, vector<16x16x128xbf16>
    tpu.vector_store %arg19[%c0_45, %c0_46, %c128], %50 {strides = array<i32>} : memref<16x16x1152xbf16, #tpu.memory_space<vmem>>, vector<16x16x128xbf16>,
    %c0_47 = arith.constant 0 : index
    %c2 = arith.constant 2 : index
    %c0_48 = arith.constant 0 : index
    %52 = vector.load %arg18[%c0_47, %c2, %c0_48] : memref<18x18x128xbf16, #tpu.memory_space<vmem>>, vector<16x16x128xbf16>
    %c0_49 = arith.constant 0 : index
    %c0_50 = arith.constant 0 : index
    %c256 = arith.constant 256 : index
    %53 = vector.load %arg19[%c0_49, %c0_50, %c256] : memref<16x16x1152xbf16, #tpu.memory_space<vmem>>, vector<16x16x128xbf16>
    tpu.vector_store %arg19[%c0_49, %c0_50, %c256], %52 {strides = array<i32>} : memref<16x16x1152xbf16, #tpu.memory_space<vmem>>, vector<16x16x128xbf16>,
    %c1_51 = arith.constant 1 : index
    %c0_52 = arith.constant 0 : index
    %c0_53 = arith.constant 0 : index
    %54 = vector.load %arg18[%c1_51, %c0_52, %c0_53] : memref<18x18x128xbf16, #tpu.memory_space<vmem>>, vector<16x16x128xbf16>
    %c0_54 = arith.constant 0 : index
    %c0_55 = arith.constant 0 : index
    %c384 = arith.constant 384 : index
    %55 = vector.load %arg19[%c0_54, %c0_55, %c384] : memref<16x16x1152xbf16, #tpu.memory_space<vmem>>, vector<16x16x128xbf16>
    tpu.vector_store %arg19[%c0_54, %c0_55, %c384], %54 {strides = array<i32>} : memref<16x16x1152xbf16, #tpu.memory_space<vmem>>, vector<16x16x128xbf16>,
    %c1_56 = arith.constant 1 : index
    %c1_57 = arith.constant 1 : index
    %c0_58 = arith.constant 0 : index
    %56 = vector.load %arg18[%c1_56, %c1_57, %c0_58] : memref<18x18x128xbf16, #tpu.memory_space<vmem>>, vector<16x16x128xbf16>
    %c0_59 = arith.constant 0 : index
    %c0_60 = arith.constant 0 : index
    %c512 = arith.constant 512 : index
    %57 = vector.load %arg19[%c0_59, %c0_60, %c512] : memref<16x16x1152xbf16, #tpu.memory_space<vmem>>, vector<16x16x128xbf16>
    tpu.vector_store %arg19[%c0_59, %c0_60, %c512], %56 {strides = array<i32>} : memref<16x16x1152xbf16, #tpu.memory_space<vmem>>, vector<16x16x128xbf16>,
    %c1_61 = arith.constant 1 : index
    %c2_62 = arith.constant 2 : index
    %c0_63 = arith.constant 0 : index
    %58 = vector.load %arg18[%c1_61, %c2_62, %c0_63] : memref<18x18x128xbf16, #tpu.memory_space<vmem>>, vector<16x16x128xbf16>
    %c0_64 = arith.constant 0 : index
    %c0_65 = arith.constant 0 : index
    %c640 = arith.constant 640 : index
    %59 = vector.load %arg19[%c0_64, %c0_65, %c640] : memref<16x16x1152xbf16, #tpu.memory_space<vmem>>, vector<16x16x128xbf16>
    tpu.vector_store %arg19[%c0_64, %c0_65, %c640], %58 {strides = array<i32>} : memref<16x16x1152xbf16, #tpu.memory_space<vmem>>, vector<16x16x128xbf16>,
    %c2_66 = arith.constant 2 : index
    %c0_67 = arith.constant 0 : index
    %c0_68 = arith.constant 0 : index
    %60 = vector.load %arg18[%c2_66, %c0_67, %c0_68] : memref<18x18x128xbf16, #tpu.memory_space<vmem>>, vector<16x16x128xbf16>
    %c0_69 = arith.constant 0 : index
    %c0_70 = arith.constant 0 : index
    %c768 = arith.constant 768 : index
    %61 = vector.load %arg19[%c0_69, %c0_70, %c768] : memref<16x16x1152xbf16, #tpu.memory_space<vmem>>, vector<16x16x128xbf16>
    tpu.vector_store %arg19[%c0_69, %c0_70, %c768], %60 {strides = array<i32>} : memref<16x16x1152xbf16, #tpu.memory_space<vmem>>, vector<16x16x128xbf16>,
    %c2_71 = arith.constant 2 : index
    %c1_72 = arith.constant 1 : index
    %c0_73 = arith.constant 0 : index
    %62 = vector.load %arg18[%c2_71, %c1_72, %c0_73] : memref<18x18x128xbf16, #tpu.memory_space<vmem>>, vector<16x16x128xbf16>
    %c0_74 = arith.constant 0 : index
    %c0_75 = arith.constant 0 : index
    %c896 = arith.constant 896 : index
    %63 = vector.load %arg19[%c0_74, %c0_75, %c896] : memref<16x16x1152xbf16, #tpu.memory_space<vmem>>, vector<16x16x128xbf16>
    tpu.vector_store %arg19[%c0_74, %c0_75, %c896], %62 {strides = array<i32>} : memref<16x16x1152xbf16, #tpu.memory_space<vmem>>, vector<16x16x128xbf16>,
    %c2_76 = arith.constant 2 : index
    %c2_77 = arith.constant 2 : index
    %c0_78 = arith.constant 0 : index
    %64 = vector.load %arg18[%c2_76, %c2_77, %c0_78] : memref<18x18x128xbf16, #tpu.memory_space<vmem>>, vector<16x16x128xbf16>
    %c0_79 = arith.constant 0 : index
    %c0_80 = arith.constant 0 : index
    %c1024 = arith.constant 1024 : index
    %65 = vector.load %arg19[%c0_79, %c0_80, %c1024] : memref<16x16x1152xbf16, #tpu.memory_space<vmem>>, vector<16x16x128xbf16>
    tpu.vector_store %arg19[%c0_79, %c0_80, %c1024], %64 {strides = array<i32>} : memref<16x16x1152xbf16, #tpu.memory_space<vmem>>, vector<16x16x128xbf16>,
    %c0_81 = arith.constant 0 : index
    %c0_82 = arith.constant 0 : index
    %c0_83 = arith.constant 0 : index
    %66 = vector.load %arg19[%c0_81, %c0_82, %c0_83] : memref<16x16x1152xbf16, #tpu.memory_space<vmem>>, vector<16x16x1152xbf16>
    %67 = vector.shape_cast %66 : vector<16x16x1152xbf16> to vector<256x1152xbf16>
    %c0_84 = arith.constant 0 : index
    %c0_85 = arith.constant 0 : index
    %68 = vector.load %arg7[%c0_84, %c0_85] : memref<1152x128xbf16, #tpu.memory_space<vmem>>, vector<1152x128xbf16>
    %cst_86 = arith.constant dense<0.000000e+00> : vector<256x128xf32>
    %69 = tpu.matmul %67, %68, %cst_86 {dimension_numbers = #tpu.dot_dimension_numbers<[1], [0], [0], [1], [0, 0, 1, 1], [], []>} : vector<256x1152xbf16>, vector<1152x128xbf16>, vector<256x128xf32> -> vector<256x128xf32>
    %c0_87 = arith.constant 0 : index
    %c0_88 = arith.constant 0 : index
    %c0_89 = arith.constant 0 : index
    %70 = vector.load %arg2[%c0_87, %c0_88, %c0_89] : memref<1x1x64xf32, #tpu.memory_space<vmem>>, vector<1x1x64xf32>
    %71 = vector.shape_cast %70 : vector<1x1x64xf32> to vector<1x64xf32>
    %cst_90 = arith.constant 0.000000e+00 : f32
    %72 = vector.broadcast %cst_90 : f32 to vector<1x64xf32>
    %73 = arith.subf %72, %71 : vector<1x64xf32>
    %74 = math.exp %73 : vector<1x64xf32>
    %cst_91 = arith.constant 1.000000e+00 : f32
    %75 = vector.broadcast %cst_91 : f32 to vector<1x64xf32>
    %76 = arith.addf %75, %74 : vector<1x64xf32>
    %77 = tpu.reciprocal %76 {approx = true} : vector<1x64xf32> -> vector<1x64xf32>
    %78 = arith.mulf %71, %77 : vector<1x64xf32>
    %c0_92 = arith.constant 0 : index
    %c0_93 = arith.constant 0 : index
    %79 = vector.load %arg9[%c0_92, %c0_93] : memref<64x128xf32, #tpu.memory_space<vmem>>, vector<64x128xf32>
    %cst_94 = arith.constant dense<0.000000e+00> : vector<1x128xf32>
    %80 = tpu.matmul %78, %79, %cst_94 {dimension_numbers = #tpu.dot_dimension_numbers<[1], [0], [0], [1], [0, 0, 1, 1], [], []>} : vector<1x64xf32>, vector<64x128xf32>, vector<1x128xf32> -> vector<1x128xf32>
    %c0_95 = arith.constant 0 : index
    %c0_96 = arith.constant 0 : index
    %81 = vector.load %arg10[%c0_95, %c0_96] : memref<1x128xf32, #tpu.memory_space<vmem>>, vector<1x128xf32>
    %82 = arith.addf %80, %81 : vector<1x128xf32>
    %c0_97 = arith.constant 0 : index
    %c0_98 = arith.constant 0 : index
    %83 = vector.load %arg8[%c0_97, %c0_98] : memref<1x128xf32, #tpu.memory_space<vmem>>, vector<1x128xf32>
    %84 = vector.broadcast %83 : vector<1x128xf32> to vector<256x128xf32>
    %85 = arith.addf %69, %84 : vector<256x128xf32>
    %86 = vector.broadcast %82 : vector<1x128xf32> to vector<256x128xf32>
    %87 = arith.addf %85, %86 : vector<256x128xf32>
    %cst_99 = arith.constant dense<0.000000e+00> : vector<128xf32>
    %88 = vector.multi_reduction <add>, %87, %cst_99 [0] : vector<256x128xf32> to vector<128xf32>
    %89 = vector.shape_cast %88 : vector<128xf32> to vector<1x128xf32>
    %c0_100 = arith.constant 0 : index
    %c0_101 = arith.constant 0 : index
    %90 = vector.load %arg13[%c0_100, %c0_101] : memref<128x32xf32, #tpu.memory_space<vmem>>, vector<128x32xf32>
    %cst_102 = arith.constant dense<0.000000e+00> : vector<1x32xf32>
    %91 = tpu.matmul %89, %90, %cst_102 {dimension_numbers = #tpu.dot_dimension_numbers<[1], [0], [0], [1], [0, 0, 1, 1], [], []>} : vector<1x128xf32>, vector<128x32xf32>, vector<1x32xf32> -> vector<1x32xf32>
    %c0_103 = arith.constant 0 : index
    %c0_104 = arith.constant 0 : index
    %92 = vector.load %arg14[%c0_103, %c0_104] : memref<32x128xf32, #tpu.memory_space<vmem>>, vector<32x128xf32>
    %cst_105 = arith.constant dense<0.000000e+00> : vector<1x128xf32>
    %93 = tpu.matmul %91, %92, %cst_105 {dimension_numbers = #tpu.dot_dimension_numbers<[1], [0], [0], [1], [0, 0, 1, 1], [], []>} : vector<1x32xf32>, vector<32x128xf32>, vector<1x128xf32> -> vector<1x128xf32>
    %94 = vector.broadcast %93 : vector<1x128xf32> to vector<256x128xf32>
    %95 = arith.subf %87, %94 : vector<256x128xf32>
    %96 = arith.mulf %95, %95 : vector<256x128xf32>
    %cst_106 = arith.constant dense<0.000000e+00> : vector<128xf32>
    %97 = vector.multi_reduction <add>, %96, %cst_106 [0] : vector<256x128xf32> to vector<128xf32>
    %98 = vector.shape_cast %97 : vector<128xf32> to vector<1x128xf32>
    %c0_107 = arith.constant 0 : index
    %c0_108 = arith.constant 0 : index
    %99 = vector.load %arg13[%c0_107, %c0_108] : memref<128x32xf32, #tpu.memory_space<vmem>>, vector<128x32xf32>
    %cst_109 = arith.constant dense<0.000000e+00> : vector<1x32xf32>
    %100 = tpu.matmul %98, %99, %cst_109 {dimension_numbers = #tpu.dot_dimension_numbers<[1], [0], [0], [1], [0, 0, 1, 1], [], []>} : vector<1x128xf32>, vector<128x32xf32>, vector<1x32xf32> -> vector<1x32xf32>
    %c0_110 = arith.constant 0 : index
    %c0_111 = arith.constant 0 : index
    %101 = vector.load %arg14[%c0_110, %c0_111] : memref<32x128xf32, #tpu.memory_space<vmem>>, vector<32x128xf32>
    %cst_112 = arith.constant dense<0.000000e+00> : vector<1x128xf32>
    %102 = tpu.matmul %100, %101, %cst_112 {dimension_numbers = #tpu.dot_dimension_numbers<[1], [0], [0], [1], [0, 0, 1, 1], [], []>} : vector<1x32xf32>, vector<32x128xf32>, vector<1x128xf32> -> vector<1x128xf32>
    %cst_113 = arith.constant 9.99999974E-6 : f32
    %103 = vector.broadcast %cst_113 : f32 to vector<1x128xf32>
    %104 = arith.addf %102, %103 : vector<1x128xf32>
    %105 = math.rsqrt %104 : vector<1x128xf32>
    %106 = vector.broadcast %105 : vector<1x128xf32> to vector<256x128xf32>
    %107 = arith.mulf %95, %106 : vector<256x128xf32>
    %c0_114 = arith.constant 0 : index
    %c0_115 = arith.constant 0 : index
    %108 = vector.load %arg11[%c0_114, %c0_115] : memref<1x128xf32, #tpu.memory_space<vmem>>, vector<1x128xf32>
    %109 = vector.broadcast %108 : vector<1x128xf32> to vector<256x128xf32>
    %110 = arith.mulf %107, %109 : vector<256x128xf32>
    %c0_116 = arith.constant 0 : index
    %c0_117 = arith.constant 0 : index
    %111 = vector.load %arg12[%c0_116, %c0_117] : memref<1x128xf32, #tpu.memory_space<vmem>>, vector<1x128xf32>
    %112 = vector.broadcast %111 : vector<1x128xf32> to vector<256x128xf32>
    %113 = arith.addf %110, %112 : vector<256x128xf32>
    %cst_118 = arith.constant 0.000000e+00 : f32
    %114 = vector.broadcast %cst_118 : f32 to vector<256x128xf32>
    %115 = arith.subf %114, %113 : vector<256x128xf32>
    %116 = math.exp %115 : vector<256x128xf32>
    %cst_119 = arith.constant 1.000000e+00 : f32
    %117 = vector.broadcast %cst_119 : f32 to vector<256x128xf32>
    %118 = arith.addf %117, %116 : vector<256x128xf32>
    %119 = tpu.reciprocal %118 {approx = true} : vector<256x128xf32> -> vector<256x128xf32>
    %120 = arith.mulf %113, %119 : vector<256x128xf32>
    %cst_120 = arith.constant 0.000000e+00 : bf16
    %121 = vector.broadcast %cst_120 : bf16 to vector<18x128xbf16>
    %c0_121 = arith.constant 0 : index
    %c0_122 = arith.constant 0 : index
    %c0_123 = arith.constant 0 : index
    %122 = vector.load %arg20[%c0_121, %c0_122, %c0_123] : memref<18x18x128xbf16, #tpu.memory_space<vmem>>, vector<1x18x128xbf16>
    %123 = vector.shape_cast %122 : vector<1x18x128xbf16> to vector<18x128xbf16>
    %124 = vector.shape_cast %121 : vector<18x128xbf16> to vector<1x18x128xbf16>
    tpu.vector_store %arg20[%c0_121, %c0_122, %c0_123], %124 {strides = array<i32>} : memref<18x18x128xbf16, #tpu.memory_space<vmem>>, vector<1x18x128xbf16>,
    %c17_124 = arith.constant 17 : index
    %c0_125 = arith.constant 0 : index
    %c0_126 = arith.constant 0 : index
    %125 = vector.load %arg20[%c17_124, %c0_125, %c0_126] : memref<18x18x128xbf16, #tpu.memory_space<vmem>>, vector<1x18x128xbf16>
    %126 = vector.shape_cast %125 : vector<1x18x128xbf16> to vector<18x128xbf16>
    %127 = vector.shape_cast %121 : vector<18x128xbf16> to vector<1x18x128xbf16>
    tpu.vector_store %arg20[%c17_124, %c0_125, %c0_126], %127 {strides = array<i32>} : memref<18x18x128xbf16, #tpu.memory_space<vmem>>, vector<1x18x128xbf16>,
    %cst_127 = arith.constant 0.000000e+00 : bf16
    %128 = vector.broadcast %cst_127 : bf16 to vector<18x2x128xbf16>
    %c0_128 = arith.constant 0 : index
    %c0_129 = arith.constant 0 : index
    %c0_130 = arith.constant 0 : index
    %129 = vector.load %arg20[%c0_128, %c0_129, %c0_130] : memref<18x18x128xbf16, #tpu.memory_space<vmem>>, vector<18x2x128xbf16>
    tpu.vector_store %arg20[%c0_128, %c0_129, %c0_130], %128 {strides = array<i32>} : memref<18x18x128xbf16, #tpu.memory_space<vmem>>, vector<18x2x128xbf16>,
    %c0_131 = arith.constant 0 : index
    %c16_132 = arith.constant 16 : index
    %c0_133 = arith.constant 0 : index
    %130 = vector.load %arg20[%c0_131, %c16_132, %c0_133] : memref<18x18x128xbf16, #tpu.memory_space<vmem>>, vector<18x2x128xbf16>
    tpu.vector_store %arg20[%c0_131, %c16_132, %c0_133], %128 {strides = array<i32>} : memref<18x18x128xbf16, #tpu.memory_space<vmem>>, vector<18x2x128xbf16>,
    %131 = vector.shape_cast %120 : vector<256x128xf32> to vector<16x16x128xf32>
    %132 = arith.truncf %131 : vector<16x16x128xf32> to vector<16x16x128xbf16>
    %c1_134 = arith.constant 1 : index
    %c1_135 = arith.constant 1 : index
    %c0_136 = arith.constant 0 : index
    %133 = vector.load %arg20[%c1_134, %c1_135, %c0_136] : memref<18x18x128xbf16, #tpu.memory_space<vmem>>, vector<16x16x128xbf16>
    tpu.vector_store %arg20[%c1_134, %c1_135, %c0_136], %132 {strides = array<i32>} : memref<18x18x128xbf16, #tpu.memory_space<vmem>>, vector<16x16x128xbf16>,
    %c0_137 = arith.constant 0 : index
    %c0_138 = arith.constant 0 : index
    %c0_139 = arith.constant 0 : index
    %134 = vector.load %arg20[%c0_137, %c0_138, %c0_139] : memref<18x18x128xbf16, #tpu.memory_space<vmem>>, vector<16x16x128xbf16>
    %c0_140 = arith.constant 0 : index
    %c0_141 = arith.constant 0 : index
    %c0_142 = arith.constant 0 : index
    %135 = vector.load %arg21[%c0_140, %c0_141, %c0_142] : memref<16x16x1280xbf16, #tpu.memory_space<vmem>>, vector<16x16x128xbf16>
    tpu.vector_store %arg21[%c0_140, %c0_141, %c0_142], %134 {strides = array<i32>} : memref<16x16x1280xbf16, #tpu.memory_space<vmem>>, vector<16x16x128xbf16>,
    %c0_143 = arith.constant 0 : index
    %c1_144 = arith.constant 1 : index
    %c0_145 = arith.constant 0 : index
    %136 = vector.load %arg20[%c0_143, %c1_144, %c0_145] : memref<18x18x128xbf16, #tpu.memory_space<vmem>>, vector<16x16x128xbf16>
    %c0_146 = arith.constant 0 : index
    %c0_147 = arith.constant 0 : index
    %c128_148 = arith.constant 128 : index
    %137 = vector.load %arg21[%c0_146, %c0_147, %c128_148] : memref<16x16x1280xbf16, #tpu.memory_space<vmem>>, vector<16x16x128xbf16>
    tpu.vector_store %arg21[%c0_146, %c0_147, %c128_148], %136 {strides = array<i32>} : memref<16x16x1280xbf16, #tpu.memory_space<vmem>>, vector<16x16x128xbf16>,
    %c0_149 = arith.constant 0 : index
    %c2_150 = arith.constant 2 : index
    %c0_151 = arith.constant 0 : index
    %138 = vector.load %arg20[%c0_149, %c2_150, %c0_151] : memref<18x18x128xbf16, #tpu.memory_space<vmem>>, vector<16x16x128xbf16>
    %c0_152 = arith.constant 0 : index
    %c0_153 = arith.constant 0 : index
    %c256_154 = arith.constant 256 : index
    %139 = vector.load %arg21[%c0_152, %c0_153, %c256_154] : memref<16x16x1280xbf16, #tpu.memory_space<vmem>>, vector<16x16x128xbf16>
    tpu.vector_store %arg21[%c0_152, %c0_153, %c256_154], %138 {strides = array<i32>} : memref<16x16x1280xbf16, #tpu.memory_space<vmem>>, vector<16x16x128xbf16>,
    %c1_155 = arith.constant 1 : index
    %c0_156 = arith.constant 0 : index
    %c0_157 = arith.constant 0 : index
    %140 = vector.load %arg20[%c1_155, %c0_156, %c0_157] : memref<18x18x128xbf16, #tpu.memory_space<vmem>>, vector<16x16x128xbf16>
    %c0_158 = arith.constant 0 : index
    %c0_159 = arith.constant 0 : index
    %c384_160 = arith.constant 384 : index
    %141 = vector.load %arg21[%c0_158, %c0_159, %c384_160] : memref<16x16x1280xbf16, #tpu.memory_space<vmem>>, vector<16x16x128xbf16>
    tpu.vector_store %arg21[%c0_158, %c0_159, %c384_160], %140 {strides = array<i32>} : memref<16x16x1280xbf16, #tpu.memory_space<vmem>>, vector<16x16x128xbf16>,
    %c1_161 = arith.constant 1 : index
    %c1_162 = arith.constant 1 : index
    %c0_163 = arith.constant 0 : index
    %142 = vector.load %arg20[%c1_161, %c1_162, %c0_163] : memref<18x18x128xbf16, #tpu.memory_space<vmem>>, vector<16x16x128xbf16>
    %c0_164 = arith.constant 0 : index
    %c0_165 = arith.constant 0 : index
    %c512_166 = arith.constant 512 : index
    %143 = vector.load %arg21[%c0_164, %c0_165, %c512_166] : memref<16x16x1280xbf16, #tpu.memory_space<vmem>>, vector<16x16x128xbf16>
    tpu.vector_store %arg21[%c0_164, %c0_165, %c512_166], %142 {strides = array<i32>} : memref<16x16x1280xbf16, #tpu.memory_space<vmem>>, vector<16x16x128xbf16>,
    %c1_167 = arith.constant 1 : index
    %c2_168 = arith.constant 2 : index
    %c0_169 = arith.constant 0 : index
    %144 = vector.load %arg20[%c1_167, %c2_168, %c0_169] : memref<18x18x128xbf16, #tpu.memory_space<vmem>>, vector<16x16x128xbf16>
    %c0_170 = arith.constant 0 : index
    %c0_171 = arith.constant 0 : index
    %c640_172 = arith.constant 640 : index
    %145 = vector.load %arg21[%c0_170, %c0_171, %c640_172] : memref<16x16x1280xbf16, #tpu.memory_space<vmem>>, vector<16x16x128xbf16>
    tpu.vector_store %arg21[%c0_170, %c0_171, %c640_172], %144 {strides = array<i32>} : memref<16x16x1280xbf16, #tpu.memory_space<vmem>>, vector<16x16x128xbf16>,
    %c2_173 = arith.constant 2 : index
    %c0_174 = arith.constant 0 : index
    %c0_175 = arith.constant 0 : index
    %146 = vector.load %arg20[%c2_173, %c0_174, %c0_175] : memref<18x18x128xbf16, #tpu.memory_space<vmem>>, vector<16x16x128xbf16>
    %c0_176 = arith.constant 0 : index
    %c0_177 = arith.constant 0 : index
    %c768_178 = arith.constant 768 : index
    %147 = vector.load %arg21[%c0_176, %c0_177, %c768_178] : memref<16x16x1280xbf16, #tpu.memory_space<vmem>>, vector<16x16x128xbf16>
    tpu.vector_store %arg21[%c0_176, %c0_177, %c768_178], %146 {strides = array<i32>} : memref<16x16x1280xbf16, #tpu.memory_space<vmem>>, vector<16x16x128xbf16>,
    %c2_179 = arith.constant 2 : index
    %c1_180 = arith.constant 1 : index
    %c0_181 = arith.constant 0 : index
    %148 = vector.load %arg20[%c2_179, %c1_180, %c0_181] : memref<18x18x128xbf16, #tpu.memory_space<vmem>>, vector<16x16x128xbf16>
    %c0_182 = arith.constant 0 : index
    %c0_183 = arith.constant 0 : index
    %c896_184 = arith.constant 896 : index
    %149 = vector.load %arg21[%c0_182, %c0_183, %c896_184] : memref<16x16x1280xbf16, #tpu.memory_space<vmem>>, vector<16x16x128xbf16>
    tpu.vector_store %arg21[%c0_182, %c0_183, %c896_184], %148 {strides = array<i32>} : memref<16x16x1280xbf16, #tpu.memory_space<vmem>>, vector<16x16x128xbf16>,
    %c2_185 = arith.constant 2 : index
    %c2_186 = arith.constant 2 : index
    %c0_187 = arith.constant 0 : index
    %150 = vector.load %arg20[%c2_185, %c2_186, %c0_187] : memref<18x18x128xbf16, #tpu.memory_space<vmem>>, vector<16x16x128xbf16>
    %c0_188 = arith.constant 0 : index
    %c0_189 = arith.constant 0 : index
    %c1024_190 = arith.constant 1024 : index
    %151 = vector.load %arg21[%c0_188, %c0_189, %c1024_190] : memref<16x16x1280xbf16, #tpu.memory_space<vmem>>, vector<16x16x128xbf16>
    tpu.vector_store %arg21[%c0_188, %c0_189, %c1024_190], %150 {strides = array<i32>} : memref<16x16x1280xbf16, #tpu.memory_space<vmem>>, vector<16x16x128xbf16>,
    %152 = vector.shape_cast %1 : vector<256x128xf32> to vector<16x16x128xf32>
    %153 = arith.truncf %152 : vector<16x16x128xf32> to vector<16x16x128xbf16>
    %c0_191 = arith.constant 0 : index
    %c0_192 = arith.constant 0 : index
    %c1152 = arith.constant 1152 : index
    %154 = vector.load %arg21[%c0_191, %c0_192, %c1152] : memref<16x16x1280xbf16, #tpu.memory_space<vmem>>, vector<16x16x128xbf16>
    tpu.vector_store %arg21[%c0_191, %c0_192, %c1152], %153 {strides = array<i32>} : memref<16x16x1280xbf16, #tpu.memory_space<vmem>>, vector<16x16x128xbf16>,
    %c0_193 = arith.constant 0 : index
    %c0_194 = arith.constant 0 : index
    %c0_195 = arith.constant 0 : index
    %155 = vector.load %arg21[%c0_193, %c0_194, %c0_195] : memref<16x16x1280xbf16, #tpu.memory_space<vmem>>, vector<16x16x1280xbf16>
    %156 = vector.shape_cast %155 : vector<16x16x1280xbf16> to vector<256x1280xbf16>
    %c0_196 = arith.constant 0 : index
    %c0_197 = arith.constant 0 : index
    %157 = vector.load %arg15[%c0_196, %c0_197] : memref<1280x128xbf16, #tpu.memory_space<vmem>>, vector<1280x128xbf16>
    %cst_198 = arith.constant dense<0.000000e+00> : vector<256x128xf32>
    %158 = tpu.matmul %156, %157, %cst_198 {dimension_numbers = #tpu.dot_dimension_numbers<[1], [0], [0], [1], [0, 0, 1, 1], [], []>} : vector<256x1280xbf16>, vector<1280x128xbf16>, vector<256x128xf32> -> vector<256x128xf32>
    %c0_199 = arith.constant 0 : index
    %c0_200 = arith.constant 0 : index
    %159 = vector.load %arg16[%c0_199, %c0_200] : memref<1x128xf32, #tpu.memory_space<vmem>>, vector<1x128xf32>
    %160 = vector.broadcast %159 : vector<1x128xf32> to vector<256x128xf32>
    %161 = arith.addf %158, %160 : vector<256x128xf32>
    %c0_201 = arith.constant 0 : index
    %c0_202 = arith.constant 0 : index
    %c0_203 = arith.constant 0 : index
    %162 = vector.load %arg17[%c0_201, %c0_202, %c0_203] : memref<1x256x128xf32, #tpu.memory_space<vmem>>, vector<1x256x128xf32>
    %163 = vector.shape_cast %162 : vector<1x256x128xf32> to vector<256x128xf32>
    %164 = vector.shape_cast %161 : vector<256x128xf32> to vector<1x256x128xf32>
    tpu.vector_store %arg17[%c0_201, %c0_202, %c0_203], %164 {strides = array<i32>} : memref<1x256x128xf32, #tpu.memory_space<vmem>>, vector<1x256x128xf32>,
    return
  }
  func.func @transform_0(%arg0: i32) -> (i32, i32, i32) {
    %c0_i32 = arith.constant 0 : i32
    %c0_i32_0 = arith.constant 0 : i32
    %c0_i32_1 = arith.constant 0 : i32
    return %arg0, %c0_i32, %c0_i32_0 : i32, i32, i32
  }
  func.func @transform_1(%arg0: i32) -> (i32, i32, i32) {
    %c0_i32 = arith.constant 0 : i32
    %c0_i32_0 = arith.constant 0 : i32
    %c0_i32_1 = arith.constant 0 : i32
    return %arg0, %c0_i32, %c0_i32_0 : i32, i32, i32
  }
  func.func @transform_2(%arg0: i32) -> (i32, i32) {
    %c0_i32 = arith.constant 0 : i32
    %c0_i32_0 = arith.constant 0 : i32
    %c0_i32_1 = arith.constant 0 : i32
    return %c0_i32, %c0_i32_0 : i32, i32
  }
  func.func @transform_3(%arg0: i32) -> (i32, i32) {
    %c0_i32 = arith.constant 0 : i32
    %c0_i32_0 = arith.constant 0 : i32
    %c0_i32_1 = arith.constant 0 : i32
    return %c0_i32, %c0_i32_0 : i32, i32
  }
  func.func @transform_4(%arg0: i32) -> (i32, i32) {
    %c0_i32 = arith.constant 0 : i32
    %c0_i32_0 = arith.constant 0 : i32
    %c0_i32_1 = arith.constant 0 : i32
    return %c0_i32, %c0_i32_0 : i32, i32
  }
  func.func @transform_5(%arg0: i32) -> (i32, i32) {
    %c0_i32 = arith.constant 0 : i32
    %c0_i32_0 = arith.constant 0 : i32
    %c0_i32_1 = arith.constant 0 : i32
    return %c0_i32, %c0_i32_0 : i32, i32
  }
  func.func @transform_6(%arg0: i32) -> (i32, i32) {
    %c0_i32 = arith.constant 0 : i32
    %c0_i32_0 = arith.constant 0 : i32
    %c0_i32_1 = arith.constant 0 : i32
    return %c0_i32, %c0_i32_0 : i32, i32
  }
  func.func @transform_7(%arg0: i32) -> (i32, i32) {
    %c0_i32 = arith.constant 0 : i32
    %c0_i32_0 = arith.constant 0 : i32
    %c0_i32_1 = arith.constant 0 : i32
    return %c0_i32, %c0_i32_0 : i32, i32
  }
  func.func @transform_8(%arg0: i32) -> (i32, i32) {
    %c0_i32 = arith.constant 0 : i32
    %c0_i32_0 = arith.constant 0 : i32
    %c0_i32_1 = arith.constant 0 : i32
    return %c0_i32, %c0_i32_0 : i32, i32
  }
  func.func @transform_9(%arg0: i32) -> (i32, i32) {
    %c0_i32 = arith.constant 0 : i32
    %c0_i32_0 = arith.constant 0 : i32
    %c0_i32_1 = arith.constant 0 : i32
    return %c0_i32, %c0_i32_0 : i32, i32
  }
  func.func @transform_10(%arg0: i32) -> (i32, i32) {
    %c0_i32 = arith.constant 0 : i32
    %c0_i32_0 = arith.constant 0 : i32
    %c0_i32_1 = arith.constant 0 : i32
    return %c0_i32, %c0_i32_0 : i32, i32
  }
  func.func @transform_11(%arg0: i32) -> (i32, i32) {
    %c0_i32 = arith.constant 0 : i32
    %c0_i32_0 = arith.constant 0 : i32
    %c0_i32_1 = arith.constant 0 : i32
    return %c0_i32, %c0_i32_0 : i32, i32
  }
  func.func @transform_12(%arg0: i32) -> (i32, i32) {
    %c0_i32 = arith.constant 0 : i32
    %c0_i32_0 = arith.constant 0 : i32
    %c0_i32_1 = arith.constant 0 : i32
    return %c0_i32, %c0_i32_0 : i32, i32
  }
  func.func @transform_13(%arg0: i32) -> (i32, i32) {
    %c0_i32 = arith.constant 0 : i32
    %c0_i32_0 = arith.constant 0 : i32
    %c0_i32_1 = arith.constant 0 : i32
    return %c0_i32, %c0_i32_0 : i32, i32
  }
  func.func @transform_14(%arg0: i32) -> (i32, i32) {
    %c0_i32 = arith.constant 0 : i32
    %c0_i32_0 = arith.constant 0 : i32
    %c0_i32_1 = arith.constant 0 : i32
    return %c0_i32, %c0_i32_0 : i32, i32
  }
  func.func @transform_15(%arg0: i32) -> (i32, i32) {
    %c0_i32 = arith.constant 0 : i32
    %c0_i32_0 = arith.constant 0 : i32
    %c0_i32_1 = arith.constant 0 : i32
    return %c0_i32, %c0_i32_0 : i32, i32
  }
  func.func @transform_16(%arg0: i32) -> (i32, i32, i32) {
    %c0_i32 = arith.constant 0 : i32
    %c0_i32_0 = arith.constant 0 : i32
    %c0_i32_1 = arith.constant 0 : i32
    return %arg0, %c0_i32, %c0_i32_0 : i32, i32, i32
  }
}

</mosaic_0001>

<llo_original>
// kernel: resblock_forward.1
$region0: #{resblock_forward.1}
  #allocation0 [shape = 'u32[]', space=smem, size = 0x4, offset = 0x4, fixed_abs, tag = 'smem constant byte address 0x4 - core index']
  #allocation1 [shape = 'u32[144,128]{1,0:T(1,128)}', space=vmem, size = 0x12000, scoped, tag = 'internal scratch']
  #allocation2 [shape = 'bf16[18,18,128]{2,1,0:T(8,128)(2,1)}', space=vmem, size = 0x1b000, scoped, tag = 'scratch operand']
  #allocation3 [shape = 'bf16[16,16,1152]{2,1,0:T(16,128)(2,1)}', space=vmem, size = 0x90000, scoped, tag = 'scratch operand']
  #allocation4 [shape = 'bf16[18,18,128]{2,1,0:T(8,128)(2,1)}', space=vmem, size = 0x1b000, scoped, tag = 'scratch operand']
  #allocation5 [shape = 'bf16[16,16,1280]{2,1,0:T(16,128)(2,1)}', space=vmem, size = 0xa0000, scoped, tag = 'scratch operand']
  %s0 = inlined_call_operand.vmem [shape: f32[2,256,128], index: 0, kind: input, shape index: {}]
  %s1 = inlined_call_operand.vmem [shape: f32[2,1,64], index: 1, kind: input, shape index: {}]
  %s2 = inlined_call_operand.vmem [shape: f32[1,128], index: 2, kind: input, shape index: {}]
  %s3 = inlined_call_operand.vmem [shape: f32[1,128], index: 3, kind: input, shape index: {}]
  %s4 = inlined_call_operand.vmem [shape: f32[128,32], index: 4, kind: input, shape index: {}]
  %s5 = inlined_call_operand.vmem [shape: f32[32,128], index: 5, kind: input, shape index: {}]
  %s6 = inlined_call_operand.vmem [shape: bf16[1152,128], index: 6, kind: input, shape index: {}]
  %s7 = inlined_call_operand.vmem [shape: f32[1,128], index: 7, kind: input, shape index: {}]
  %s8 = inlined_call_operand.vmem [shape: f32[64,128], index: 8, kind: input, shape index: {}]
  %s9 = inlined_call_operand.vmem [shape: f32[1,128], index: 9, kind: input, shape index: {}]
  %s10 = inlined_call_operand.vmem [shape: f32[1,128], index: 10, kind: input, shape index: {}]
  %s11 = inlined_call_operand.vmem [shape: f32[1,128], index: 11, kind: input, shape index: {}]
  %s12 = inlined_call_operand.vmem [shape: f32[128,32], index: 12, kind: input, shape index: {}]
  %s13 = inlined_call_operand.vmem [shape: f32[32,128], index: 13, kind: input, shape index: {}]
  %s14 = inlined_call_operand.vmem [shape: bf16[1280,128], index: 14, kind: input, shape index: {}]
  %s15 = inlined_call_operand.vmem [shape: f32[1,128], index: 15, kind: input, shape index: {}]
  %s16 = inlined_call_operand.hbm [shape: f32[2,256,128], index: 16, kind: output, shape index: {}]
  %s17 = sld [smem:[#allocation0]]
  $region97: #{resblock_forward.1} parent=0
    _
  %s19 = ssub.s32 1, %s17
  %s20 = scalar_select 0, %s19, %s17
  $region1: #{resblock_forward.1} parent=0
    #allocation6 [shape = 'u8[262144]{0}', space=vmem, size = 0x40000, scoped, tag = 'output window, operand 0']
    #allocation7 [shape = 's32[2]{0}', space=sflag, size = 0x8, scoped, tag = 'scoped memory for resblock_forward.1']
    %21 = vsyncpa [#allocation7], 0
    %s22 = scalar_lea.sflag [#allocation7], 1
    %23 = vsyncpa %s22, 0
    loop: start=0, step=1, limit=4
    $region2: #{resblock_forward.1} parent=1 // loop_pre_header
      _
    $region3: #{resblock_forward.1} parent=1 // loop_header
      %s25 = sphi 0, %s29
      %p26 = scmp.ge.s32.totalorder %s25, 4
      %s35 = sphi 0, %s37
      %s38 = sphi 0, %s35
      %s39 = sphi 0, %s38
      %s55 = sphi 0, %s39
      %s61 = sphi 0, %s63
      %s64 = sphi 0, %s61
      %s65 = sphi 0, %s64
      %s81 = sphi 0, %s65
      %s85 = sphi 0, %s85
      %s87 = sphi 0, %s85
      %s88 = sphi 0, %s87
      %s102 = sphi 0, %s88
      %s106 = sphi 0, %s106
      %s108 = sphi 0, %s106
      %s109 = sphi 0, %s108
      %s123 = sphi 0, %s109
      %s127 = sphi 0, %s127
      %s129 = sphi 0, %s127
      %s130 = sphi 0, %s129
      %s144 = sphi 0, %s130
      %s148 = sphi 0, %s148
      %s150 = sphi 0, %s148
      %s151 = sphi 0, %s150
      %s165 = sphi 0, %s151
      %s169 = sphi 0, %s169
      %s171 = sphi 0, %s169
      %s172 = sphi 0, %s171
      %s186 = sphi 0, %s172
      %s190 = sphi 0, %s190
      %s192 = sphi 0, %s190
      %s193 = sphi 0, %s192
      %s207 = sphi 0, %s193
      %s211 = sphi 0, %s211
      %s213 = sphi 0, %s211
      %s214 = sphi 0, %s213
      %s228 = sphi 0, %s214
      %s232 = sphi 0, %s232
      %s234 = sphi 0, %s232
      %s235 = sphi 0, %s234
      %s249 = sphi 0, %s235
      %s253 = sphi 0, %s253
      %s255 = sphi 0, %s253
      %s256 = sphi 0, %s255
      %s270 = sphi 0, %s256
      %s274 = sphi 0, %s274
      %s276 = sphi 0, %s274
      %s277 = sphi 0, %s276
      %s291 = sphi 0, %s277
      %s295 = sphi 0, %s295
      %s297 = sphi 0, %s295
      %s298 = sphi 0, %s297
      %s312 = sphi 0, %s298
      %s316 = sphi 0, %s316
      %s318 = sphi 0, %s316
      %s319 = sphi 0, %s318
      %s333 = sphi 0, %s319
      %s337 = sphi 0, %s337
      %s339 = sphi 0, %s337
      %s340 = sphi 0, %s339
      %s354 = sphi 0, %s340
      %s358 = sphi 0, %s358
      %s360 = sphi 0, %s358
      %s361 = sphi 0, %s360
      %s375 = sphi 0, %s361
      %s381 = sphi 0, %s383
      %s384 = sphi 0, %s381
      %s385 = sphi 0, %s384
      %s401 = sphi 0, %s385
    $region4: #{resblock_forward.1} parent=1 // loop_header_branch
      %28 = sbr.rel (%p26) target = $region8
    $region5: #{resblock_forward.1} parent=1 // loop_body
      %s30 = ssub.s32 %s25, 1
      %s31 = ssub.s32 %s25, 2
      %s32 = sadd.s32 %s25, 1
      %s33 = ssub.s32 %s25, %s32
      %p34 = scmp.eq.s32.totalorder %s33, 0
      %s36 = sadd.s32 %s35, 1
      %s37 = scalar_select %p34, %s35, %s36
      %p40 = pneg %p34
      %p41 = scmp.eq.s32.totalorder %s25, 1
      %p42 = por %p40, %p41
      %p43 = scmp.ne.s32.totalorder %s35, %s38
      %p44 = scmp.eq.s32.totalorder %s25, 0
      %p45 = por %p43, %p44
      %p46 = scmp.ne.s32.totalorder %s35, %s38
      %p47 = scmp.eq.s32.totalorder %s30, 1
      %p48 = por %p46, %p47
      %p49 = scmp.ne.s32.totalorder %s38, %s39
      %p50 = scmp.eq.s32.totalorder %s30, 0
      %p51 = por %p49, %p50
      %p52 = scmp.ne.s32.totalorder %s38, %s39
      %p53 = scmp.eq.s32.totalorder %s31, 1
      %p54 = por %p52, %p53
      %p56 = scmp.ne.s32.totalorder %s39, %s55
      %p57 = scmp.eq.s32.totalorder %s31, 0
      %p58 = por %p56, %p57
      %s59 = ssub.s32 %s25, %s32
      %p60 = scmp.eq.s32.totalorder %s59, 0
      %s62 = sadd.s32 %s61, 1
      %s63 = scalar_select %p60, %s61, %s62
      %p66 = pneg %p60
      %p67 = scmp.eq.s32.totalorder %s25, 1
      %p68 = por %p66, %p67
      %p69 = scmp.ne.s32.totalorder %s61, %s64
      %p70 = scmp.eq.s32.totalorder %s25, 0
      %p71 = por %p69, %p70
      %p72 = scmp.ne.s32.totalorder %s61, %s64
      %p73 = scmp.eq.s32.totalorder %s30, 1
      %p74 = por %p72, %p73
      %p75 = scmp.ne.s32.totalorder %s64, %s65
      %p76 = scmp.eq.s32.totalorder %s30, 0
      %p77 = por %p75, %p76
      %p78 = scmp.ne.s32.totalorder %s64, %s65
      %p79 = scmp.eq.s32.totalorder %s31, 1
      %p80 = por %p78, %p79
      %p82 = scmp.ne.s32.totalorder %s65, %s81
      %p83 = scmp.eq.s32.totalorder %s31, 0
      %p84 = por %p82, %p83
      %s86 = sadd.s32 %s85, 1
      %p89 = scmp.eq.s32.totalorder %s25, 1
      %p90 = scmp.ne.s32.totalorder %s85, %s87
      %p91 = scmp.eq.s32.totalorder %s25, 0
      %p92 = por %p90, %p91
      %p93 = scmp.ne.s32.totalorder %s85, %s87
      %p94 = scmp.eq.s32.totalorder %s30, 1
      %p95 = por %p93, %p94
      %p96 = scmp.ne.s32.totalorder %s87, %s88
      %p97 = scmp.eq.s32.totalorder %s30, 0
      %p98 = por %p96, %p97
      %p99 = scmp.ne.s32.totalorder %s87, %s88
      %p100 = scmp.eq.s32.totalorder %s31, 1
      %p101 = por %p99, %p100
      %p103 = scmp.ne.s32.totalorder %s88, %s102
      %p104 = scmp.eq.s32.totalorder %s31, 0
      %p105 = por %p103, %p104
      %s107 = sadd.s32 %s106, 1
      %p110 = scmp.eq.s32.totalorder %s25, 1
      %p111 = scmp.ne.s32.totalorder %s106, %s108
      %p112 = scmp.eq.s32.totalorder %s25, 0
      %p113 = por %p111, %p112
      %p114 = scmp.ne.s32.totalorder %s106, %s108
      %p115 = scmp.eq.s32.totalorder %s30, 1
      %p116 = por %p114, %p115
      %p117 = scmp.ne.s32.totalorder %s108, %s109
      %p118 = scmp.eq.s32.totalorder %s30, 0
      %p119 = por %p117, %p118
      %p120 = scmp.ne.s32.totalorder %s108, %s109
      %p121 = scmp.eq.s32.totalorder %s31, 1
      %p122 = por %p120, %p121
      %p124 = scmp.ne.s32.totalorder %s109, %s123
      %p125 = scmp.eq.s32.totalorder %s31, 0
      %p126 = por %p124, %p125
      %s128 = sadd.s32 %s127, 1
      %p131 = scmp.eq.s32.totalorder %s25, 1
      %p132 = scmp.ne.s32.totalorder %s127, %s129
      %p133 = scmp.eq.s32.totalorder %s25, 0
      %p134 = por %p132, %p133
      %p135 = scmp.ne.s32.totalorder %s127, %s129
      %p136 = scmp.eq.s32.totalorder %s30, 1
      %p137 = por %p135, %p136
      %p138 = scmp.ne.s32.totalorder %s129, %s130
      %p139 = scmp.eq.s32.totalorder %s30, 0
      %p140 = por %p138, %p139
      %p141 = scmp.ne.s32.totalorder %s129, %s130
      %p142 = scmp.eq.s32.totalorder %s31, 1
      %p143 = por %p141, %p142
      %p145 = scmp.ne.s32.totalorder %s130, %s144
      %p146 = scmp.eq.s32.totalorder %s31, 0
      %p147 = por %p145, %p146
      %s149 = sadd.s32 %s148, 1
      %p152 = scmp.eq.s32.totalorder %s25, 1
      %p153 = scmp.ne.s32.totalorder %s148, %s150
      %p154 = scmp.eq.s32.totalorder %s25, 0
      %p155 = por %p153, %p154
      %p156 = scmp.ne.s32.totalorder %s148, %s150
      %p157 = scmp.eq.s32.totalorder %s30, 1
      %p158 = por %p156, %p157
      %p159 = scmp.ne.s32.totalorder %s150, %s151
      %p160 = scmp.eq.s32.totalorder %s30, 0
      %p161 = por %p159, %p160
      %p162 = scmp.ne.s32.totalorder %s150, %s151
      %p163 = scmp.eq.s32.totalorder %s31, 1
      %p164 = por %p162, %p163
      %p166 = scmp.ne.s32.totalorder %s151, %s165
      %p167 = scmp.eq.s32.totalorder %s31, 0
      %p168 = por %p166, %p167
      %s170 = sadd.s32 %s169, 1
      %p173 = scmp.eq.s32.totalorder %s25, 1
      %p174 = scmp.ne.s32.totalorder %s169, %s171
      %p175 = scmp.eq.s32.totalorder %s25, 0
      %p176 = por %p174, %p175
      %p177 = scmp.ne.s32.totalorder %s169, %s171
      %p178 = scmp.eq.s32.totalorder %s30, 1
      %p179 = por %p177, %p178
      %p180 = scmp.ne.s32.totalorder %s171, %s172
      %p181 = scmp.eq.s32.totalorder %s30, 0
      %p182 = por %p180, %p181
      %p183 = scmp.ne.s32.totalorder %s171, %s172
      %p184 = scmp.eq.s32.totalorder %s31, 1
      %p185 = por %p183, %p184
      %p187 = scmp.ne.s32.totalorder %s172, %s186
      %p188 = scmp.eq.s32.totalorder %s31, 0
      %p189 = por %p187, %p188
      %s191 = sadd.s32 %s190, 1
      %p194 = scmp.eq.s32.totalorder %s25, 1
      %p195 = scmp.ne.s32.totalorder %s190, %s192
      %p196 = scmp.eq.s32.totalorder %s25, 0
      %p197 = por %p195, %p196
      %p198 = scmp.ne.s32.totalorder %s190, %s192
      %p199 = scmp.eq.s32.totalorder %s30, 1
      %p200 = por %p198, %p199
      %p201 = scmp.ne.s32.totalorder %s192, %s193
      %p202 = scmp.eq.s32.totalorder %s30, 0
      %p203 = por %p201, %p202
      %p204 = scmp.ne.s32.totalorder %s192, %s193
      %p205 = scmp.eq.s32.totalorder %s31, 1
      %p206 = por %p204, %p205
      %p208 = scmp.ne.s32.totalorder %s193, %s207
      %p209 = scmp.eq.s32.totalorder %s31, 0
      %p210 = por %p208, %p209
      %s212 = sadd.s32 %s211, 1
      %p215 = scmp.eq.s32.totalorder %s25, 1
      %p216 = scmp.ne.s32.totalorder %s211, %s213
      %p217 = scmp.eq.s32.totalorder %s25, 0
      %p218 = por %p216, %p217
      %p219 = scmp.ne.s32.totalorder %s211, %s213
      %p220 = scmp.eq.s32.totalorder %s30, 1
      %p221 = por %p219, %p220
      %p222 = scmp.ne.s32.totalorder %s213, %s214
      %p223 = scmp.eq.s32.totalorder %s30, 0
      %p224 = por %p222, %p223
      %p225 = scmp.ne.s32.totalorder %s213, %s214
      %p226 = scmp.eq.s32.totalorder %s31, 1
      %p227 = por %p225, %p226
      %p229 = scmp.ne.s32.totalorder %s214, %s228
      %p230 = scmp.eq.s32.totalorder %s31, 0
      %p231 = por %p229, %p230
      %s233 = sadd.s32 %s232, 1
      %p236 = scmp.eq.s32.totalorder %s25, 1
      %p237 = scmp.ne.s32.totalorder %s232, %s234
      %p238 = scmp.eq.s32.totalorder %s25, 0
      %p239 = por %p237, %p238
      %p240 = scmp.ne.s32.totalorder %s232, %s234
      %p241 = scmp.eq.s32.totalorder %s30, 1
      %p242 = por %p240, %p241
      %p243 = scmp.ne.s32.totalorder %s234, %s235
      %p244 = scmp.eq.s32.totalorder %s30, 0
      %p245 = por %p243, %p244
      %p246 = scmp.ne.s32.totalorder %s234, %s235
      %p247 = scmp.eq.s32.totalorder %s31, 1
      %p248 = por %p246, %p247
      %p250 = scmp.ne.s32.totalorder %s235, %s249
      %p251 = scmp.eq.s32.totalorder %s31, 0
      %p252 = por %p250, %p251
      %s254 = sadd.s32 %s253, 1
      %p257 = scmp.eq.s32.totalorder %s25, 1
      %p258 = scmp.ne.s32.totalorder %s253, %s255
      %p259 = scmp.eq.s32.totalorder %s25, 0
      %p260 = por %p258, %p259
      %p261 = scmp.ne.s32.totalorder %s253, %s255
      %p262 = scmp.eq.s32.totalorder %s30, 1
      %p263 = por %p261, %p262
      %p264 = scmp.ne.s32.totalorder %s255, %s256
      %p265 = scmp.eq.s32.totalorder %s30, 0
      %p266 = por %p264, %p265
      %p267 = scmp.ne.s32.totalorder %s255, %s256
      %p268 = scmp.eq.s32.totalorder %s31, 1
      %p269 = por %p267, %p268
      %p271 = scmp.ne.s32.totalorder %s256, %s270
      %p272 = scmp.eq.s32.totalorder %s31, 0
      %p273 = por %p271, %p272
      %s275 = sadd.s32 %s274, 1
      %p278 = scmp.eq.s32.totalorder %s25, 1
      %p279 = scmp.ne.s32.totalorder %s274, %s276
      %p280 = scmp.eq.s32.totalorder %s25, 0
      %p281 = por %p279, %p280
      %p282 = scmp.ne.s32.totalorder %s274, %s276
      %p283 = scmp.eq.s32.totalorder %s30, 1
      %p284 = por %p282, %p283
      %p285 = scmp.ne.s32.totalorder %s276, %s277
      %p286 = scmp.eq.s32.totalorder %s30, 0
      %p287 = por %p285, %p286
      %p288 = scmp.ne.s32.totalorder %s276, %s277
      %p289 = scmp.eq.s32.totalorder %s31, 1
      %p290 = por %p288, %p289
      %p292 = scmp.ne.s32.totalorder %s277, %s291
      %p293 = scmp.eq.s32.totalorder %s31, 0
      %p294 = por %p292, %p293
      %s296 = sadd.s32 %s295, 1
      %p299 = scmp.eq.s32.totalorder %s25, 1
      %p300 = scmp.ne.s32.totalorder %s295, %s297
      %p301 = scmp.eq.s32.totalorder %s25, 0
      %p302 = por %p300, %p301
      %p303 = scmp.ne.s32.totalorder %s295, %s297
      %p304 = scmp.eq.s32.totalorder %s30, 1
      %p305 = por %p303, %p304
      %p306 = scmp.ne.s32.totalorder %s297, %s298
      %p307 = scmp.eq.s32.totalorder %s30, 0
      %p308 = por %p306, %p307
      %p309 = scmp.ne.s32.totalorder %s297, %s298
      %p310 = scmp.eq.s32.totalorder %s31, 1
      %p311 = por %p309, %p310
      %p313 = scmp.ne.s32.totalorder %s298, %s312
      %p314 = scmp.eq.s32.totalorder %s31, 0
      %p315 = por %p313, %p314
      %s317 = sadd.s32 %s316, 1
      %p320 = scmp.eq.s32.totalorder %s25, 1
      %p321 = scmp.ne.s32.totalorder %s316, %s318
      %p322 = scmp.eq.s32.totalorder %s25, 0
      %p323 = por %p321, %p322
      %p324 = scmp.ne.s32.totalorder %s316, %s318
      %p325 = scmp.eq.s32.totalorder %s30, 1
      %p326 = por %p324, %p325
      %p327 = scmp.ne.s32.totalorder %s318, %s319
      %p328 = scmp.eq.s32.totalorder %s30, 0
      %p329 = por %p327, %p328
      %p330 = scmp.ne.s32.totalorder %s318, %s319
      %p331 = scmp.eq.s32.totalorder %s31, 1
      %p332 = por %p330, %p331
      %p334 = scmp.ne.s32.totalorder %s319, %s333
      %p335 = scmp.eq.s32.totalorder %s31, 0
      %p336 = por %p334, %p335
      %s338 = sadd.s32 %s337, 1
      %p341 = scmp.eq.s32.totalorder %s25, 1
      %p342 = scmp.ne.s32.totalorder %s337, %s339
      %p343 = scmp.eq.s32.totalorder %s25, 0
      %p344 = por %p342, %p343
      %p345 = scmp.ne.s32.totalorder %s337, %s339
      %p346 = scmp.eq.s32.totalorder %s30, 1
      %p347 = por %p345, %p346
      %p348 = scmp.ne.s32.totalorder %s339, %s340
      %p349 = scmp.eq.s32.totalorder %s30, 0
      %p350 = por %p348, %p349
      %p351 = scmp.ne.s32.totalorder %s339, %s340
      %p352 = scmp.eq.s32.totalorder %s31, 1
      %p353 = por %p351, %p352
      %p355 = scmp.ne.s32.totalorder %s340, %s354
      %p356 = scmp.eq.s32.totalorder %s31, 0
      %p357 = por %p355, %p356
      %s359 = sadd.s32 %s358, 1
      %p362 = scmp.eq.s32.totalorder %s25, 1
      %p363 = scmp.ne.s32.totalorder %s358, %s360
      %p364 = scmp.eq.s32.totalorder %s25, 0
      %p365 = por %p363, %p364
      %p366 = scmp.ne.s32.totalorder %s358, %s360
      %p367 = scmp.eq.s32.totalorder %s30, 1
      %p368 = por %p366, %p367
      %p369 = scmp.ne.s32.totalorder %s360, %s361
      %p370 = scmp.eq.s32.totalorder %s30, 0
      %p371 = por %p369, %p370
      %p372 = scmp.ne.s32.totalorder %s360, %s361
      %p373 = scmp.eq.s32.totalorder %s31, 1
      %p374 = por %p372, %p373
      %p376 = scmp.ne.s32.totalorder %s361, %s375
      %p377 = scmp.eq.s32.totalorder %s31, 0
      %p378 = por %p376, %p377
      %s379 = ssub.s32 %s25, %s32
      %p380 = scmp.eq.s32.totalorder %s379, 0
      %s382 = sadd.s32 %s381, 1
      %s383 = scalar_select %p380, %s381, %s382
      %p386 = pneg %p380
      %p387 = scmp.eq.s32.totalorder %s25, 1
      %p388 = por %p386, %p387
      %p389 = scmp.ne.s32.totalorder %s381, %s384
      %p390 = scmp.eq.s32.totalorder %s25, 0
      %p391 = por %p389, %p390
      %p392 = scmp.ne.s32.totalorder %s381, %s384
      %p393 = scmp.eq.s32.totalorder %s30, 1
      %p394 = por %p392, %p393
      %p395 = scmp.ne.s32.totalorder %s384, %s385
      %p396 = scmp.eq.s32.totalorder %s30, 0
      %p397 = por %p395, %p396
      %p398 = scmp.ne.s32.totalorder %s384, %s385
      %p399 = scmp.eq.s32.totalorder %s31, 1
      %p400 = por %p398, %p399
      %p402 = scmp.ne.s32.totalorder %s385, %s401
      %p403 = scmp.eq.s32.totalorder %s31, 0
      %p404 = por %p402, %p403
      %p405 = scmp.le.s32.totalorder 1, %s25
      %p406 = scmp.lt.s32.totalorder %s25, 3
      %p407 = pnand %p405, %p406
      %p408 = pneg %p407
      // Predicated region
      $region9: #{resblock_forward.1} parent=5 // pred_check
        _
      $region10: #{resblock_forward.1} parent=5 // pred_check_branch
        %410 = sbr.rel (%p407) target = $region12
      $region11: #{resblock_forward.1} parent=5 // pred_region
        %s411 = ssub.s32 %s25, 1
        // Predicated region
        $region13: #{resblock_forward.1} parent=11 // pred_check
          %p412 = pneg %p98
        $region14: #{resblock_forward.1} parent=11 // pred_check_branch
          %414 = sbr.rel (%p412) target = $region16
        $region15: #{resblock_forward.1} parent=11 // pred_region
          _
        $region16: #{resblock_forward.1} parent=11 // pred_fallthru
          _
        // Predicated region
        $region17: #{resblock_forward.1} parent=11 // pred_check
          %p415 = pneg %p119
        $region18: #{resblock_forward.1} parent=11 // pred_check_branch
          %417 = sbr.rel (%p415) target = $region20
        $region19: #{resblock_forward.1} parent=11 // pred_region
          _
        $region20: #{resblock_forward.1} parent=11 // pred_fallthru
          _
        // Predicated region
        $region21: #{resblock_forward.1} parent=11 // pred_check
          %p418 = pneg %p140
        $region22: #{resblock_forward.1} parent=11 // pred_check_branch
          %420 = sbr.rel (%p418) target = $region24
        $region23: #{resblock_forward.1} parent=11 // pred_region
          _
        $region24: #{resblock_forward.1} parent=11 // pred_fallthru
          _
        // Predicated region
        $region25: #{resblock_forward.1} parent=11 // pred_check
          %p421 = pneg %p161
        $region26: #{resblock_forward.1} parent=11 // pred_check_branch
          %423 = sbr.rel (%p421) target = $region28
        $region27: #{resblock_forward.1} parent=11 // pred_region
          _
        $region28: #{resblock_forward.1} parent=11 // pred_fallthru
          _
        // Predicated region
        $region29: #{resblock_forward.1} parent=11 // pred_check
          %p424 = pneg %p182
        $region30: #{resblock_forward.1} parent=11 // pred_check_branch
          %426 = sbr.rel (%p424) target = $region32
        $region31: #{resblock_forward.1} parent=11 // pred_region
          _
        $region32: #{resblock_forward.1} parent=11 // pred_fallthru
          _
        // Predicated region
        $region33: #{resblock_forward.1} parent=11 // pred_check
          %p427 = pneg %p203
        $region34: #{resblock_forward.1} parent=11 // pred_check_branch
          %429 = sbr.rel (%p427) target = $region36
        $region35: #{resblock_forward.1} parent=11 // pred_region
          _
        $region36: #{resblock_forward.1} parent=11 // pred_fallthru
          _
        // Predicated region
        $region37: #{resblock_forward.1} parent=11 // pred_check
          %p430 = pneg %p224
        $region38: #{resblock_forward.1} parent=11 // pred_check_branch
          %432 = sbr.rel (%p430) target = $region40
        $region39: #{resblock_forward.1} parent=11 // pred_region
          _
        $region40: #{resblock_forward.1} parent=11 // pred_fallthru
          _
        // Predicated region
        $region41: #{resblock_forward.1} parent=11 // pred_check
          %p433 = pneg %p245
        $region42: #{resblock_forward.1} parent=11 // pred_check_branch
          %435 = sbr.rel (%p433) target = $region44
        $region43: #{resblock_forward.1} parent=11 // pred_region
          _
        $region44: #{resblock_forward.1} parent=11 // pred_fallthru
          _
        // Predicated region
        $region45: #{resblock_forward.1} parent=11 // pred_check
          %p436 = pneg %p266
        $region46: #{resblock_forward.1} parent=11 // pred_check_branch
          %438 = sbr.rel (%p436) target = $region48
        $region47: #{resblock_forward.1} parent=11 // pred_region
          _
        $region48: #{resblock_forward.1} parent=11 // pred_fallthru
          _
        // Predicated region
        $region49: #{resblock_forward.1} parent=11 // pred_check
          %p439 = pneg %p287
        $region50: #{resblock_forward.1} parent=11 // pred_check_branch
          %441 = sbr.rel (%p439) target = $region52
        $region51: #{resblock_forward.1} parent=11 // pred_region
          _
        $region52: #{resblock_forward.1} parent=11 // pred_fallthru
          _
        // Predicated region
        $region53: #{resblock_forward.1} parent=11 // pred_check
          %p442 = pneg %p308
        $region54: #{resblock_forward.1} parent=11 // pred_check_branch
          %444 = sbr.rel (%p442) target = $region56
        $region55: #{resblock_forward.1} parent=11 // pred_region
          _
        $region56: #{resblock_forward.1} parent=11 // pred_fallthru
          _
        // Predicated region
        $region57: #{resblock_forward.1} parent=11 // pred_check
          %p445 = pneg %p329
        $region58: #{resblock_forward.1} parent=11 // pred_check_branch
          %447 = sbr.rel (%p445) target = $region60
        $region59: #{resblock_forward.1} parent=11 // pred_region
          _
        $region60: #{resblock_forward.1} parent=11 // pred_fallthru
          _
        // Predicated region
        $region61: #{resblock_forward.1} parent=11 // pred_check
          %p448 = pneg %p350
        $region62: #{resblock_forward.1} parent=11 // pred_check_branch
          %450 = sbr.rel (%p448) target = $region64
        $region63: #{resblock_forward.1} parent=11 // pred_region
          _
        $region64: #{resblock_forward.1} parent=11 // pred_fallthru
          _
        // Predicated region
        $region65: #{resblock_forward.1} parent=11 // pred_check
          %p451 = pneg %p371
        $region66: #{resblock_forward.1} parent=11 // pred_check_branch
          %453 = sbr.rel (%p451) target = $region68
        $region67: #{resblock_forward.1} parent=11 // pred_region
          _
        $region68: #{resblock_forward.1} parent=11 // pred_fallthru
          _
      $region12: #{resblock_forward.1} parent=5 // pred_fallthru
        _
      %p454 = scmp.lt.s32.totalorder %s25, 2
      // Predicated region
      $region69: #{resblock_forward.1} parent=5 // pred_check
        %p455 = pneg %p454
      $region70: #{resblock_forward.1} parent=5 // pred_check_branch
        %457 = sbr.rel (%p455) target = $region72
      $region71: #{resblock_forward.1} parent=5 // pred_region
        // Predicated region
        $region73: #{resblock_forward.1} parent=71 // pred_check
          %p458 = pneg %p45
        $region74: #{resblock_forward.1} parent=71 // pred_check_branch
          %460 = sbr.rel (%p458) target = $region76
        $region75: #{resblock_forward.1} parent=71 // pred_region
          %p461 = scmp.lt.s32.totalorder %s25, 1
          %s462 = scalar_select %p461, %s25, 1
          %s463 = smul.addr %s462, 32
          %s464 = smul.addr %s463, 8
          %s465 = scalar_lea.vmem %s0, %s464
        $region76: #{resblock_forward.1} parent=71 // pred_fallthru
          _
        // Predicated region
        $region77: #{resblock_forward.1} parent=71 // pred_check
          %p466 = pneg %p71
        $region78: #{resblock_forward.1} parent=71 // pred_check_branch
          %468 = sbr.rel (%p466) target = $region80
        $region79: #{resblock_forward.1} parent=71 // pred_region
          %p469 = scmp.lt.s32.totalorder %s25, 1
          %s470 = scalar_select %p469, %s25, 1
          %s471 = scalar_lea.vmem %s1, %s470
        $region80: #{resblock_forward.1} parent=71 // pred_fallthru
          _
      $region72: #{resblock_forward.1} parent=5 // pred_fallthru
        _
      %p472 = scmp.le.s32.totalorder 1, %s25
      %p473 = scmp.lt.s32.totalorder %s25, 3
      %p474 = pnand %p472, %p473
      %p475 = pneg %p474
      // Predicated region
      $region81: #{resblock_forward.1} parent=5 // pred_check
        _
      $region82: #{resblock_forward.1} parent=5 // pred_check_branch
        %477 = sbr.rel (%p474) target = $region84
      $region83: #{resblock_forward.1} parent=5 // pred_region
        %s478 = ssub.s32 %s25, 1
        %p479 = scmp.lt.s32.totalorder %s30, 1
        %s480 = scalar_select %p479, %s30, 1
        %s481 = smul.addr %s480, 32
        %s482 = smul.addr %s481, 8
        %s483 = scalar_lea.vmem %s0, %s482
        %p484 = pneg %p51
        %p485 = pneg %p48
        %p486 = scmp.lt.s32.totalorder %s30, 1
        %s487 = scalar_select %p486, %s30, 1
        %s488 = scalar_lea.vmem %s1, %s487
        %p489 = pneg %p77
        %p490 = pneg %p74
        %p491 = pneg %p98
        %p492 = pneg %p95
        %p493 = pneg %p119
        %p494 = pneg %p116
        %p495 = pneg %p140
        %p496 = pneg %p137
        %p497 = pneg %p161
        %p498 = pneg %p158
        %p499 = pneg %p182
        %p500 = pneg %p179
        %p501 = pneg %p203
        %p502 = pneg %p200
        %p503 = pneg %p224
        %p504 = pneg %p221
        %p505 = pneg %p245
        %p506 = pneg %p242
        %p507 = pneg %p266
        %p508 = pneg %p263
        %p509 = pneg %p287
        %p510 = pneg %p284
        %p511 = pneg %p308
        %p512 = pneg %p305
        %p513 = pneg %p329
        %p514 = pneg %p326
        %p515 = pneg %p350
        %p516 = pneg %p347
        %p517 = pneg %p371
        %p518 = pneg %p368
        %p519 = pneg %p397
        %p520 = pneg %p394
        %s521 = sand.u32 %s384, 1
        %s522 = scalar_lea.sflag [#allocation7], %s521
        %s523 = sand.u32 %s384, 1
        %s524 = smul.addr %s523, 256
        %s525 = scalar_lea.vmem [#allocation6], %s524
        %p526 = scmp.lt.s32.totalorder %s30, 1
        %s527 = scalar_select %p526, %s30, 1
        %s528 = smul.addr %s527, 32
        %s529 = smul.addr %s528, 8
        %s530 = scalar_lea.vmem %s0, %s529
        %p531 = scmp.lt.s32.totalorder %s30, 1
        %s532 = scalar_select %p531, %s30, 1
        %s533 = scalar_lea.vmem %s1, %s532
        %v535 = vld [vmem:[%s530] sm:$0xff]
        %v536 = vld [vmem:[%s530 + $0x8] sm:$0xff]
        %v537 = vld [vmem:[%s530 + $0x10] sm:$0xff]
        %v538 = vld [vmem:[%s530 + $0x18] sm:$0xff]
        %v539 = vld [vmem:[%s530 + $0x20] sm:$0xff]
        %v540 = vld [vmem:[%s530 + $0x28] sm:$0xff]
        %v541 = vld [vmem:[%s530 + $0x30] sm:$0xff]
        %v542 = vld [vmem:[%s530 + $0x38] sm:$0xff]
        %v543 = vld [vmem:[%s530 + $0x40] sm:$0xff]
        %v544 = vld [vmem:[%s530 + $0x48] sm:$0xff]
        %v545 = vld [vmem:[%s530 + $0x50] sm:$0xff]
        %v546 = vld [vmem:[%s530 + $0x58] sm:$0xff]
        %v547 = vld [vmem:[%s530 + $0x60] sm:$0xff]
        %v548 = vld [vmem:[%s530 + $0x68] sm:$0xff]
        %v549 = vld [vmem:[%s530 + $0x70] sm:$0xff]
        %v550 = vld [vmem:[%s530 + $0x78] sm:$0xff]
        %v551 = vld [vmem:[%s530 + $0x80] sm:$0xff]
        %v552 = vld [vmem:[%s530 + $0x88] sm:$0xff]
        %v553 = vld [vmem:[%s530 + $0x90] sm:$0xff]
        %v554 = vld [vmem:[%s530 + $0x98] sm:$0xff]
        %v555 = vld [vmem:[%s530 + $0xa0] sm:$0xff]
        %v556 = vld [vmem:[%s530 + $0xa8] sm:$0xff]
        %v557 = vld [vmem:[%s530 + $0xb0] sm:$0xff]
        %v558 = vld [vmem:[%s530 + $0xb8] sm:$0xff]
        %v559 = vld [vmem:[%s530 + $0xc0] sm:$0xff]
        %v560 = vld [vmem:[%s530 + $0xc8] sm:$0xff]
        %v561 = vld [vmem:[%s530 + $0xd0] sm:$0xff]
        %v562 = vld [vmem:[%s530 + $0xd8] sm:$0xff]
        %v563 = vld [vmem:[%s530 + $0xe0] sm:$0xff]
        %v564 = vld [vmem:[%s530 + $0xe8] sm:$0xff]
        %v565 = vld [vmem:[%s530 + $0xf0] sm:$0xff]
        %v566 = vld [vmem:[%s530 + $0xf8] sm:$0xff]
        %v567 = vadd.f32 %v535, %v536
        %v568 = vadd.f32 %v567, %v537
        %v569 = vadd.f32 %v568, %v538
        %v570 = vadd.f32 %v569, %v539
        %v571 = vadd.f32 %v570, %v540
        %v572 = vadd.f32 %v571, %v541
        %v573 = vadd.f32 %v572, %v542
        %v574 = vadd.f32 %v573, %v543
        %v575 = vadd.f32 %v574, %v544
        %v576 = vadd.f32 %v575, %v545
        %v577 = vadd.f32 %v576, %v546
        %v578 = vadd.f32 %v577, %v547
        %v579 = vadd.f32 %v578, %v548
        %v580 = vadd.f32 %v579, %v549
        %v581 = vadd.f32 %v580, %v550
        %v582 = vadd.f32 %v581, %v551
        %v583 = vadd.f32 %v582, %v552
        %v584 = vadd.f32 %v583, %v553
        %v585 = vadd.f32 %v584, %v554
        %v586 = vadd.f32 %v585, %v555
        %v587 = vadd.f32 %v586, %v556
        %v588 = vadd.f32 %v587, %v557
        %v589 = vadd.f32 %v588, %v558
        %v590 = vadd.f32 %v589, %v559
        %v591 = vadd.f32 %v590, %v560
        %v592 = vadd.f32 %v591, %v561
        %v593 = vadd.f32 %v592, %v562
        %v594 = vadd.f32 %v593, %v563
        %v595 = vadd.f32 %v594, %v564
        %v596 = vadd.f32 %v595, %v565
        %v597 = vadd.f32 %v596, %v566
        %v598 = vrot.slane %v597, 4
        %v599 = vadd.f32 %v597, %v598
        %v600 = vrot.slane %v599, 2
        %v601 = vadd.f32 %v599, %v600
        %v602 = vrot.slane %v601, 1
        %v603 = vadd.f32 %v601, %v602
        %v604 = vld [vmem:[%s4] sm:$0xff]
        %v605 = vld [vmem:[%s4 + $0x8] sm:$0xff]
        %v606 = vld [vmem:[%s4 + $0x10] sm:$0xff]
        %v607 = vld [vmem:[%s4 + $0x18] sm:$0xff]
        %v608 = vld [vmem:[%s4 + $0x20] sm:$0xff]
        %v609 = vld [vmem:[%s4 + $0x28] sm:$0xff]
        %v610 = vld [vmem:[%s4 + $0x30] sm:$0xff]
        %v611 = vld [vmem:[%s4 + $0x38] sm:$0xff]
        %v612 = vld [vmem:[%s4 + $0x40] sm:$0xff]
        %v613 = vld [vmem:[%s4 + $0x48] sm:$0xff]
        %v614 = vld [vmem:[%s4 + $0x50] sm:$0xff]
        %v615 = vld [vmem:[%s4 + $0x58] sm:$0xff]
        %v616 = vld [vmem:[%s4 + $0x60] sm:$0xff]
        %v617 = vld [vmem:[%s4 + $0x68] sm:$0xff]
        %v618 = vld [vmem:[%s4 + $0x70] sm:$0xff]
        %v619 = vld [vmem:[%s4 + $0x78] sm:$0xff]
        %620 = vmatprep.subr.mxu0 0.0
        %621 = vmatpush1.msra.mxu0 %v604
        %622 = vmatprep.subr.mxu0 0.0
        %623 = vmatpush1.msra.mxu0 %v605
        %624 = vmatprep.subr.mxu0 0.0
        %625 = vmatpush1.msra.mxu0 %v606
        %626 = vmatprep.subr.mxu0 0.0
        %627 = vmatpush1.msra.mxu0 %v607
        %628 = vmatprep.subr.mxu0 0.0
        %629 = vmatpush1.msra.mxu0 %v608
        %630 = vmatprep.subr.mxu0 0.0
        %631 = vmatpush1.msra.mxu0 %v609
        %632 = vmatprep.subr.mxu0 0.0
        %633 = vmatpush1.msra.mxu0 %v610
        %634 = vmatprep.subr.mxu0 0.0
        %635 = vmatpush1.msra.mxu0 %v611
        %636 = vmatprep.subr.mxu0 0.0
        %637 = vmatpush1.msra.mxu0 %v612
        %638 = vmatprep.subr.mxu0 0.0
        %639 = vmatpush1.msra.mxu0 %v613
        %640 = vmatprep.subr.mxu0 0.0
        %641 = vmatpush1.msra.mxu0 %v614
        %642 = vmatprep.subr.mxu0 0.0
        %643 = vmatpush1.msra.mxu0 %v615
        %644 = vmatprep.subr.mxu0 0.0
        %645 = vmatpush1.msra.mxu0 %v616
        %646 = vmatprep.subr.mxu0 0.0
        %647 = vmatpush1.msra.mxu0 %v617
        %648 = vmatprep.subr.mxu0 0.0
        %649 = vmatpush1.msra.mxu0 %v618
        %650 = vmatprep.subr.mxu0 0.0
        %651 = vmatpush1.msra.mxu0 %v619
        %652 = vmatprep.subr.mxu0 0.0
        %653 = vmatpush1.msra.mxu0 0.0
        %654 = vmatprep.subr.mxu0 0.0
        %655 = vmatpush1.msra.mxu0 0.0
        %656 = vmatprep.subr.mxu0 0.0
        %657 = vmatpush1.msra.mxu0 0.0
        %658 = vmatprep.subr.mxu0 0.0
        %659 = vmatpush1.msra.mxu0 0.0
        %660 = vmatprep.subr.mxu0 0.0
        %661 = vmatpush1.msra.mxu0 0.0
        %662 = vmatprep.subr.mxu0 0.0
        %663 = vmatpush1.msra.mxu0 0.0
        %664 = vmatprep.subr.mxu0 0.0
        %665 = vmatpush1.msra.mxu0 0.0
        %666 = vmatprep.subr.mxu0 0.0
        %667 = vmatpush1.msra.mxu0 0.0
        %668 = vmatprep.subr.mxu0 0.0
        %669 = vmatpush1.msra.mxu0 0.0
        %670 = vmatprep.subr.mxu0 0.0
        %671 = vmatpush1.msra.mxu0 0.0
        %672 = vmatprep.subr.mxu0 0.0
        %673 = vmatpush1.msra.mxu0 0.0
        %674 = vmatprep.subr.mxu0 0.0
        %675 = vmatpush1.msra.mxu0 0.0
        %676 = vmatprep.subr.mxu0 0.0
        %677 = vmatpush1.msra.mxu0 0.0
        %678 = vmatprep.subr.mxu0 0.0
        %679 = vmatpush1.msra.mxu0 0.0
        %680 = vmatprep.subr.mxu0 0.0
        %681 = vmatpush1.msra.mxu0 0.0
        %682 = vmatprep.subr.mxu0 0.0
        %683 = vmatpush1.msra.mxu0 0.0
        %684 = vmatprep.mubr.f32.mxu0 0.0
        %685 = vmatmul.mubr.f32.gmra.mrb[0].mxu0 %v603
        %v686 = vpop.f32.mrb[0].mxu0
        %v687 = vadd.f32 0.0, %v686
        %v688 = vpop.f32.mrb[0].mxu0
        %689 = vdwg.mxu0
        %v690 = vld [vmem:[%s5] sm:$0xff]
        %v691 = vld [vmem:[%s5 + $0x8] sm:$0xff]
        %v692 = vld [vmem:[%s5 + $0x10] sm:$0xff]
        %v693 = vld [vmem:[%s5 + $0x18] sm:$0xff]
        %vm694 = vcmask 261120
        %v696 = vsel %vm694, %v687, 0
        %698 = vmatprep.subr.mxu0 0.0
        %699 = vmatpush1.msra.mxu0 %v690
        %700 = vmatprep.subr.mxu0 0.0
        %701 = vmatpush1.msra.mxu0 %v691
        %702 = vmatprep.subr.mxu0 0.0
        %703 = vmatpush1.msra.mxu0 %v692
        %704 = vmatprep.subr.mxu0 0.0
        %705 = vmatpush1.msra.mxu0 %v693
        %706 = vmatprep.subr.mxu0 0.0
        %707 = vmatpush1.msra.mxu0 0.0
        %708 = vmatprep.subr.mxu0 0.0
        %709 = vmatpush1.msra.mxu0 0.0
        %710 = vmatprep.subr.mxu0 0.0
        %711 = vmatpush1.msra.mxu0 0.0
        %712 = vmatprep.subr.mxu0 0.0
        %713 = vmatpush1.msra.mxu0 0.0
        %714 = vmatprep.subr.mxu0 0.0
        %715 = vmatpush1.msra.mxu0 0.0
        %716 = vmatprep.subr.mxu0 0.0
        %717 = vmatpush1.msra.mxu0 0.0
        %718 = vmatprep.subr.mxu0 0.0
        %719 = vmatpush1.msra.mxu0 0.0
        %720 = vmatprep.subr.mxu0 0.0
        %721 = vmatpush1.msra.mxu0 0.0
        %722 = vmatprep.subr.mxu0 0.0
        %723 = vmatpush1.msra.mxu0 0.0
        %724 = vmatprep.subr.mxu0 0.0
        %725 = vmatpush1.msra.mxu0 0.0
        %726 = vmatprep.subr.mxu0 0.0
        %727 = vmatpush1.msra.mxu0 0.0
        %728 = vmatprep.subr.mxu0 0.0
        %729 = vmatpush1.msra.mxu0 0.0
        %730 = vmatprep.subr.mxu0 0.0
        %731 = vmatpush1.msra.mxu0 0.0
        %732 = vmatprep.subr.mxu0 0.0
        %733 = vmatpush1.msra.mxu0 0.0
        %734 = vmatprep.subr.mxu0 0.0
        %735 = vmatpush1.msra.mxu0 0.0
        %736 = vmatprep.subr.mxu0 0.0
        %737 = vmatpush1.msra.mxu0 0.0
        %738 = vmatprep.subr.mxu0 0.0
        %739 = vmatpush1.msra.mxu0 0.0
        %740 = vmatprep.subr.mxu0 0.0
        %741 = vmatpush1.msra.mxu0 0.0
        %742 = vmatprep.subr.mxu0 0.0
        %743 = vmatpush1.msra.mxu0 0.0
        %744 = vmatprep.subr.mxu0 0.0
        %745 = vmatpush1.msra.mxu0 0.0
        %746 = vmatprep.subr.mxu0 0.0
        %747 = vmatpush1.msra.mxu0 0.0
        %748 = vmatprep.subr.mxu0 0.0
        %749 = vmatpush1.msra.mxu0 0.0
        %750 = vmatprep.subr.mxu0 0.0
        %751 = vmatpush1.msra.mxu0 0.0
        %752 = vmatprep.subr.mxu0 0.0
        %753 = vmatpush1.msra.mxu0 0.0
        %754 = vmatprep.subr.mxu0 0.0
        %755 = vmatpush1.msra.mxu0 0.0
        %756 = vmatprep.subr.mxu0 0.0
        %757 = vmatpush1.msra.mxu0 0.0
        %758 = vmatprep.subr.mxu0 0.0
        %759 = vmatpush1.msra.mxu0 0.0
        %760 = vmatprep.subr.mxu0 0.0
        %761 = vmatpush1.msra.mxu0 0.0
        %762 = vmatprep.mubr.f32.mxu0 0.0
        %763 = vmatmul.mubr.f32.gmra.mrb[0].mxu0 %v696
        %v764 = vpop.f32.mrb[0].mxu0
        %v765 = vadd.f32 0.0, %v764
        %v766 = vpop.f32.mrb[0].mxu0
        %767 = vdwg.mxu0
        %v768 = vlaneseq
        %v769 = vshrl.u32 %v768, 7
        %v770 = vsub.s32 0, %v769
        %v771 = vrot.slane %v765, %v770
        %v772 = vsub.f32 %v535, %v771
        %v773 = vsub.f32 %v536, %v771
        %v774 = vsub.f32 %v537, %v771
        %v775 = vsub.f32 %v538, %v771
        %v776 = vsub.f32 %v539, %v771
        %v777 = vsub.f32 %v540, %v771
        %v778 = vsub.f32 %v541, %v771
        %v779 = vsub.f32 %v542, %v771
        %v780 = vsub.f32 %v543, %v771
        %v781 = vsub.f32 %v544, %v771
        %v782 = vsub.f32 %v545, %v771
        %v783 = vsub.f32 %v546, %v771
        %v784 = vsub.f32 %v547, %v771
        %v785 = vsub.f32 %v548, %v771
        %v786 = vsub.f32 %v549, %v771
        %v787 = vsub.f32 %v550, %v771
        %v788 = vsub.f32 %v551, %v771
        %v789 = vsub.f32 %v552, %v771
        %v790 = vsub.f32 %v553, %v771
        %v791 = vsub.f32 %v554, %v771
        %v792 = vsub.f32 %v555, %v771
        %v793 = vsub.f32 %v556, %v771
        %v794 = vsub.f32 %v557, %v771
        %v795 = vsub.f32 %v558, %v771
        %v796 = vsub.f32 %v559, %v771
        %v797 = vsub.f32 %v560, %v771
        %v798 = vsub.f32 %v561, %v771
        %v799 = vsub.f32 %v562, %v771
        %v800 = vsub.f32 %v563, %v771
        %v801 = vsub.f32 %v564, %v771
        %v802 = vsub.f32 %v565, %v771
        %v803 = vsub.f32 %v566, %v771
        %v804 = vmul.f32 %v772, %v772
        %v805 = vmul.f32 %v773, %v773
        %v806 = vmul.f32 %v774, %v774
        %v807 = vmul.f32 %v775, %v775
        %v808 = vmul.f32 %v776, %v776
        %v809 = vmul.f32 %v777, %v777
        %v810 = vmul.f32 %v778, %v778
        %v811 = vmul.f32 %v779, %v779
        %v812 = vmul.f32 %v780, %v780
        %v813 = vmul.f32 %v781, %v781
        %v814 = vmul.f32 %v782, %v782
        %v815 = vmul.f32 %v783, %v783
        %v816 = vmul.f32 %v784, %v784
        %v817 = vmul.f32 %v785, %v785
        %v818 = vmul.f32 %v786, %v786
        %v819 = vmul.f32 %v787, %v787
        %v820 = vmul.f32 %v788, %v788
        %v821 = vmul.f32 %v789, %v789
        %v822 = vmul.f32 %v790, %v790
        %v823 = vmul.f32 %v791, %v791
        %v824 = vmul.f32 %v792, %v792
        %v825 = vmul.f32 %v793, %v793
        %v826 = vmul.f32 %v794, %v794
        %v827 = vmul.f32 %v795, %v795
        %v828 = vmul.f32 %v796, %v796
        %v829 = vmul.f32 %v797, %v797
        %v830 = vmul.f32 %v798, %v798
        %v831 = vmul.f32 %v799, %v799
        %v832 = vmul.f32 %v800, %v800
        %v833 = vmul.f32 %v801, %v801
        %v834 = vmul.f32 %v802, %v802
        %v835 = vmul.f32 %v803, %v803
        %v836 = vadd.f32 %v804, %v805
        %v837 = vadd.f32 %v836, %v806
        %v838 = vadd.f32 %v837, %v807
        %v839 = vadd.f32 %v838, %v808
        %v840 = vadd.f32 %v839, %v809
        %v841 = vadd.f32 %v840, %v810
        %v842 = vadd.f32 %v841, %v811
        %v843 = vadd.f32 %v842, %v812
        %v844 = vadd.f32 %v843, %v813
        %v845 = vadd.f32 %v844, %v814
        %v846 = vadd.f32 %v845, %v815
        %v847 = vadd.f32 %v846, %v816
        %v848 = vadd.f32 %v847, %v817
        %v849 = vadd.f32 %v848, %v818
        %v850 = vadd.f32 %v849, %v819
        %v851 = vadd.f32 %v850, %v820
        %v852 = vadd.f32 %v851, %v821
        %v853 = vadd.f32 %v852, %v822
        %v854 = vadd.f32 %v853, %v823
        %v855 = vadd.f32 %v854, %v824
        %v856 = vadd.f32 %v855, %v825
        %v857 = vadd.f32 %v856, %v826
        %v858 = vadd.f32 %v857, %v827
        %v859 = vadd.f32 %v858, %v828
        %v860 = vadd.f32 %v859, %v829
        %v861 = vadd.f32 %v860, %v830
        %v862 = vadd.f32 %v861, %v831
        %v863 = vadd.f32 %v862, %v832
        %v864 = vadd.f32 %v863, %v833
        %v865 = vadd.f32 %v864, %v834
        %v866 = vadd.f32 %v865, %v835
        %v867 = vrot.slane %v866, 4
        %v868 = vadd.f32 %v866, %v867
        %v869 = vrot.slane %v868, 2
        %v870 = vadd.f32 %v868, %v869
        %v871 = vrot.slane %v870, 1
        %v872 = vadd.f32 %v870, %v871
        %873 = vmatprep.subr.mxu0 0.0
        %874 = vmatpush1.msra.mxu0 %v604
        %875 = vmatprep.subr.mxu0 0.0
        %876 = vmatpush1.msra.mxu0 %v605
        %877 = vmatprep.subr.mxu0 0.0
        %878 = vmatpush1.msra.mxu0 %v606
        %879 = vmatprep.subr.mxu0 0.0
        %880 = vmatpush1.msra.mxu0 %v607
        %881 = vmatprep.subr.mxu0 0.0
        %882 = vmatpush1.msra.mxu0 %v608
        %883 = vmatprep.subr.mxu0 0.0
        %884 = vmatpush1.msra.mxu0 %v609
        %885 = vmatprep.subr.mxu0 0.0
        %886 = vmatpush1.msra.mxu0 %v610
        %887 = vmatprep.subr.mxu0 0.0
        %888 = vmatpush1.msra.mxu0 %v611
        %889 = vmatprep.subr.mxu0 0.0
        %890 = vmatpush1.msra.mxu0 %v612
        %891 = vmatprep.subr.mxu0 0.0
        %892 = vmatpush1.msra.mxu0 %v613
        %893 = vmatprep.subr.mxu0 0.0
        %894 = vmatpush1.msra.mxu0 %v614
        %895 = vmatprep.subr.mxu0 0.0
        %896 = vmatpush1.msra.mxu0 %v615
        %897 = vmatprep.subr.mxu0 0.0
        %898 = vmatpush1.msra.mxu0 %v616
        %899 = vmatprep.subr.mxu0 0.0
        %900 = vmatpush1.msra.mxu0 %v617
        %901 = vmatprep.subr.mxu0 0.0
        %902 = vmatpush1.msra.mxu0 %v618
        %903 = vmatprep.subr.mxu0 0.0
        %904 = vmatpush1.msra.mxu0 %v619
        %905 = vmatprep.subr.mxu0 0.0
        %906 = vmatpush1.msra.mxu0 0.0
        %907 = vmatprep.subr.mxu0 0.0
        %908 = vmatpush1.msra.mxu0 0.0
        %909 = vmatprep.subr.mxu0 0.0
        %910 = vmatpush1.msra.mxu0 0.0
        %911 = vmatprep.subr.mxu0 0.0
        %912 = vmatpush1.msra.mxu0 0.0
        %913 = vmatprep.subr.mxu0 0.0
        %914 = vmatpush1.msra.mxu0 0.0
        %915 = vmatprep.subr.mxu0 0.0
        %916 = vmatpush1.msra.mxu0 0.0
        %917 = vmatprep.subr.mxu0 0.0
        %918 = vmatpush1.msra.mxu0 0.0
        %919 = vmatprep.subr.mxu0 0.0
        %920 = vmatpush1.msra.mxu0 0.0
        %921 = vmatprep.subr.mxu0 0.0
        %922 = vmatpush1.msra.mxu0 0.0
        %923 = vmatprep.subr.mxu0 0.0
        %924 = vmatpush1.msra.mxu0 0.0
        %925 = vmatprep.subr.mxu0 0.0
        %926 = vmatpush1.msra.mxu0 0.0
        %927 = vmatprep.subr.mxu0 0.0
        %928 = vmatpush1.msra.mxu0 0.0
        %929 = vmatprep.subr.mxu0 0.0
        %930 = vmatpush1.msra.mxu0 0.0
        %931 = vmatprep.subr.mxu0 0.0
        %932 = vmatpush1.msra.mxu0 0.0
        %933 = vmatprep.subr.mxu0 0.0
        %934 = vmatpush1.msra.mxu0 0.0
        %935 = vmatprep.subr.mxu0 0.0
        %936 = vmatpush1.msra.mxu0 0.0
        %937 = vmatprep.mubr.f32.mxu0 0.0
        %938 = vmatmul.mubr.f32.gmra.mrb[0].mxu0 %v872
        %v939 = vpop.f32.mrb[0].mxu0
        %v940 = vadd.f32 0.0, %v939
        %v941 = vpop.f32.mrb[0].mxu0
        %942 = vdwg.mxu0
        %v944 = vsel %vm694, %v940, 0
        %946 = vmatprep.subr.mxu0 0.0
        %947 = vmatpush1.msra.mxu0 %v690
        %948 = vmatprep.subr.mxu0 0.0
        %949 = vmatpush1.msra.mxu0 %v691
        %950 = vmatprep.subr.mxu0 0.0
        %951 = vmatpush1.msra.mxu0 %v692
        %952 = vmatprep.subr.mxu0 0.0
        %953 = vmatpush1.msra.mxu0 %v693
        %954 = vmatprep.subr.mxu0 0.0
        %955 = vmatpush1.msra.mxu0 0.0
        %956 = vmatprep.subr.mxu0 0.0
        %957 = vmatpush1.msra.mxu0 0.0
        %958 = vmatprep.subr.mxu0 0.0
        %959 = vmatpush1.msra.mxu0 0.0
        %960 = vmatprep.subr.mxu0 0.0
        %961 = vmatpush1.msra.mxu0 0.0
        %962 = vmatprep.subr.mxu0 0.0
        %963 = vmatpush1.msra.mxu0 0.0
        %964 = vmatprep.subr.mxu0 0.0
        %965 = vmatpush1.msra.mxu0 0.0
        %966 = vmatprep.subr.mxu0 0.0
        %967 = vmatpush1.msra.mxu0 0.0
        %968 = vmatprep.subr.mxu0 0.0
        %969 = vmatpush1.msra.mxu0 0.0
        %970 = vmatprep.subr.mxu0 0.0
        %971 = vmatpush1.msra.mxu0 0.0
        %972 = vmatprep.subr.mxu0 0.0
        %973 = vmatpush1.msra.mxu0 0.0
        %974 = vmatprep.subr.mxu0 0.0
        %975 = vmatpush1.msra.mxu0 0.0
        %976 = vmatprep.subr.mxu0 0.0
        %977 = vmatpush1.msra.mxu0 0.0
        %978 = vmatprep.subr.mxu0 0.0
        %979 = vmatpush1.msra.mxu0 0.0
        %980 = vmatprep.subr.mxu0 0.0
        %981 = vmatpush1.msra.mxu0 0.0
        %982 = vmatprep.subr.mxu0 0.0
        %983 = vmatpush1.msra.mxu0 0.0
        %984 = vmatprep.subr.mxu0 0.0
        %985 = vmatpush1.msra.mxu0 0.0
        %986 = vmatprep.subr.mxu0 0.0
        %987 = vmatpush1.msra.mxu0 0.0
        %988 = vmatprep.subr.mxu0 0.0
        %989 = vmatpush1.msra.mxu0 0.0
        %990 = vmatprep.subr.mxu0 0.0
        %991 = vmatpush1.msra.mxu0 0.0
        %992 = vmatprep.subr.mxu0 0.0
        %993 = vmatpush1.msra.mxu0 0.0
        %994 = vmatprep.subr.mxu0 0.0
        %995 = vmatpush1.msra.mxu0 0.0
        %996 = vmatprep.subr.mxu0 0.0
        %997 = vmatpush1.msra.mxu0 0.0
        %998 = vmatprep.subr.mxu0 0.0
        %999 = vmatpush1.msra.mxu0 0.0
        %1000 = vmatprep.subr.mxu0 0.0
        %1001 = vmatpush1.msra.mxu0 0.0
        %1002 = vmatprep.subr.mxu0 0.0
        %1003 = vmatpush1.msra.mxu0 0.0
        %1004 = vmatprep.subr.mxu0 0.0
        %1005 = vmatpush1.msra.mxu0 0.0
        %1006 = vmatprep.subr.mxu0 0.0
        %1007 = vmatpush1.msra.mxu0 0.0
        %1008 = vmatprep.subr.mxu0 0.0
        %1009 = vmatpush1.msra.mxu0 0.0
        %1010 = vmatprep.mubr.f32.mxu0 0.0
        %1011 = vmatmul.mubr.f32.gmra.mrb[0].mxu0 %v944
        %v1012 = vpop.f32.mrb[0].mxu0
        %v1013 = vadd.f32 1e-05, %v1012
        %v1014 = vpop.f32.mrb[0].mxu0
        %1015 = vdwg.mxu0
        %v1016 = vrsqrt.pop %v1013
        %v1017 = vlaneseq
        %v1018 = vshrl.u32 %v1017, 7
        %v1019 = vsub.s32 0, %v1018
        %v1020 = vrot.slane %v1016, %v1019
        %v1021 = vmul.f32 %v772, %v1020
        %v1022 = vmul.f32 %v773, %v1020
        %v1023 = vmul.f32 %v774, %v1020
        %v1024 = vmul.f32 %v775, %v1020
        %v1025 = vmul.f32 %v776, %v1020
        %v1026 = vmul.f32 %v777, %v1020
        %v1027 = vmul.f32 %v778, %v1020
        %v1028 = vmul.f32 %v779, %v1020
        %v1029 = vmul.f32 %v780, %v1020
        %v1030 = vmul.f32 %v781, %v1020
        %v1031 = vmul.f32 %v782, %v1020
        %v1032 = vmul.f32 %v783, %v1020
        %v1033 = vmul.f32 %v784, %v1020
        %v1034 = vmul.f32 %v785, %v1020
        %v1035 = vmul.f32 %v786, %v1020
        %v1036 = vmul.f32 %v787, %v1020
        %v1037 = vmul.f32 %v788, %v1020
        %v1038 = vmul.f32 %v789, %v1020
        %v1039 = vmul.f32 %v790, %v1020
        %v1040 = vmul.f32 %v791, %v1020
        %v1041 = vmul.f32 %v792, %v1020
        %v1042 = vmul.f32 %v793, %v1020
        %v1043 = vmul.f32 %v794, %v1020
        %v1044 = vmul.f32 %v795, %v1020
        %v1045 = vmul.f32 %v796, %v1020
        %v1046 = vmul.f32 %v797, %v1020
        %v1047 = vmul.f32 %v798, %v1020
        %v1048 = vmul.f32 %v799, %v1020
        %v1049 = vmul.f32 %v800, %v1020
        %v1050 = vmul.f32 %v801, %v1020
        %v1051 = vmul.f32 %v802, %v1020
        %v1052 = vmul.f32 %v803, %v1020
        %v1053 = vld [vmem:[%s2] sm:$0x1]
        %v1055 = vlaneseq
        %v1056 = vshrl.u32 %v1055, 7
        %v1057 = vsub.s32 0, %v1056
        %v1058 = vrot.slane %v1053, %v1057
        %v1060 = vmul.f32 %v1021, %v1058
        %v1061 = vmul.f32 %v1022, %v1058
        %v1062 = vmul.f32 %v1023, %v1058
        %v1063 = vmul.f32 %v1024, %v1058
        %v1064 = vmul.f32 %v1025, %v1058
        %v1065 = vmul.f32 %v1026, %v1058
        %v1066 = vmul.f32 %v1027, %v1058
        %v1067 = vmul.f32 %v1028, %v1058
        %v1068 = vmul.f32 %v1029, %v1058
        %v1069 = vmul.f32 %v1030, %v1058
        %v1070 = vmul.f32 %v1031, %v1058
        %v1071 = vmul.f32 %v1032, %v1058
        %v1072 = vmul.f32 %v1033, %v1058
        %v1073 = vmul.f32 %v1034, %v1058
        %v1074 = vmul.f32 %v1035, %v1058
        %v1075 = vmul.f32 %v1036, %v1058
        %v1076 = vmul.f32 %v1037, %v1058
        %v1077 = vmul.f32 %v1038, %v1058
        %v1078 = vmul.f32 %v1039, %v1058
        %v1079 = vmul.f32 %v1040, %v1058
        %v1080 = vmul.f32 %v1041, %v1058
        %v1081 = vmul.f32 %v1042, %v1058
        %v1082 = vmul.f32 %v1043, %v1058
        %v1083 = vmul.f32 %v1044, %v1058
        %v1084 = vmul.f32 %v1045, %v1058
        %v1085 = vmul.f32 %v1046, %v1058
        %v1086 = vmul.f32 %v1047, %v1058
        %v1087 = vmul.f32 %v1048, %v1058
        %v1088 = vmul.f32 %v1049, %v1058
        %v1089 = vmul.f32 %v1050, %v1058
        %v1090 = vmul.f32 %v1051, %v1058
        %v1091 = vmul.f32 %v1052, %v1058
        %v1092 = vld [vmem:[%s3] sm:$0x1]
        %v1094 = vlaneseq
        %v1095 = vshrl.u32 %v1094, 7
        %v1096 = vsub.s32 0, %v1095
        %v1097 = vrot.slane %v1092, %v1096
        %v1099 = vadd.f32 %v1060, %v1097
        %v1100 = vadd.f32 %v1061, %v1097
        %v1101 = vadd.f32 %v1062, %v1097
        %v1102 = vadd.f32 %v1063, %v1097
        %v1103 = vadd.f32 %v1064, %v1097
        %v1104 = vadd.f32 %v1065, %v1097
        %v1105 = vadd.f32 %v1066, %v1097
        %v1106 = vadd.f32 %v1067, %v1097
        %v1107 = vadd.f32 %v1068, %v1097
        %v1108 = vadd.f32 %v1069, %v1097
        %v1109 = vadd.f32 %v1070, %v1097
        %v1110 = vadd.f32 %v1071, %v1097
        %v1111 = vadd.f32 %v1072, %v1097
        %v1112 = vadd.f32 %v1073, %v1097
        %v1113 = vadd.f32 %v1074, %v1097
        %v1114 = vadd.f32 %v1075, %v1097
        %v1115 = vadd.f32 %v1076, %v1097
        %v1116 = vadd.f32 %v1077, %v1097
        %v1117 = vadd.f32 %v1078, %v1097
        %v1118 = vadd.f32 %v1079, %v1097
        %v1119 = vadd.f32 %v1080, %v1097
        %v1120 = vadd.f32 %v1081, %v1097
        %v1121 = vadd.f32 %v1082, %v1097
        %v1122 = vadd.f32 %v1083, %v1097
        %v1123 = vadd.f32 %v1084, %v1097
        %v1124 = vadd.f32 %v1085, %v1097
        %v1125 = vadd.f32 %v1086, %v1097
        %v1126 = vadd.f32 %v1087, %v1097
        %v1127 = vadd.f32 %v1088, %v1097
        %v1128 = vadd.f32 %v1089, %v1097
        %v1129 = vadd.f32 %v1090, %v1097
        %v1130 = vadd.f32 %v1091, %v1097
        %v1131 = vsub.f32 0.0, %v1099
        %v1132 = vsub.f32 0.0, %v1100
        %v1133 = vsub.f32 0.0, %v1101
        %v1134 = vsub.f32 0.0, %v1102
        %v1135 = vsub.f32 0.0, %v1103
        %v1136 = vsub.f32 0.0, %v1104
        %v1137 = vsub.f32 0.0, %v1105
        %v1138 = vsub.f32 0.0, %v1106
        %v1139 = vsub.f32 0.0, %v1107
        %v1140 = vsub.f32 0.0, %v1108
        %v1141 = vsub.f32 0.0, %v1109
        %v1142 = vsub.f32 0.0, %v1110
        %v1143 = vsub.f32 0.0, %v1111
        %v1144 = vsub.f32 0.0, %v1112
        %v1145 = vsub.f32 0.0, %v1113
        %v1146 = vsub.f32 0.0, %v1114
        %v1147 = vsub.f32 0.0, %v1115
        %v1148 = vsub.f32 0.0, %v1116
        %v1149 = vsub.f32 0.0, %v1117
        %v1150 = vsub.f32 0.0, %v1118
        %v1151 = vsub.f32 0.0, %v1119
        %v1152 = vsub.f32 0.0, %v1120
        %v1153 = vsub.f32 0.0, %v1121
        %v1154 = vsub.f32 0.0, %v1122
        %v1155 = vsub.f32 0.0, %v1123
        %v1156 = vsub.f32 0.0, %v1124
        %v1157 = vsub.f32 0.0, %v1125
        %v1158 = vsub.f32 0.0, %v1126
        %v1159 = vsub.f32 0.0, %v1127
        %v1160 = vsub.f32 0.0, %v1128
        %v1161 = vsub.f32 0.0, %v1129
        %v1162 = vsub.f32 0.0, %v1130
        %v1163 = vmul.f32 %v1131, 1.442695
        %v1164 = vpow.pop %v1163
        %v1165 = vmul.f32 %v1132, 1.442695
        %v1166 = vpow.pop %v1165
        %v1167 = vmul.f32 %v1133, 1.442695
        %v1168 = vpow.pop %v1167
        %v1169 = vmul.f32 %v1134, 1.442695
        %v1170 = vpow.pop %v1169
        %v1171 = vmul.f32 %v1135, 1.442695
        %v1172 = vpow.pop %v1171
        %v1173 = vmul.f32 %v1136, 1.442695
        %v1174 = vpow.pop %v1173
        %v1175 = vmul.f32 %v1137, 1.442695
        %v1176 = vpow.pop %v1175
        %v1177 = vmul.f32 %v1138, 1.442695
        %v1178 = vpow.pop %v1177
        %v1179 = vmul.f32 %v1139, 1.442695
        %v1180 = vpow.pop %v1179
        %v1181 = vmul.f32 %v1140, 1.442695
        %v1182 = vpow.pop %v1181
        %v1183 = vmul.f32 %v1141, 1.442695
        %v1184 = vpow.pop %v1183
        %v1185 = vmul.f32 %v1142, 1.442695
        %v1186 = vpow.pop %v1185
        %v1187 = vmul.f32 %v1143, 1.442695
        %v1188 = vpow.pop %v1187
        %v1189 = vmul.f32 %v1144, 1.442695
        %v1190 = vpow.pop %v1189
        %v1191 = vmul.f32 %v1145, 1.442695
        %v1192 = vpow.pop %v1191
        %v1193 = vmul.f32 %v1146, 1.442695
        %v1194 = vpow.pop %v1193
        %v1195 = vmul.f32 %v1147, 1.442695
        %v1196 = vpow.pop %v1195
        %v1197 = vmul.f32 %v1148, 1.442695
        %v1198 = vpow.pop %v1197
        %v1199 = vmul.f32 %v1149, 1.442695
        %v1200 = vpow.pop %v1199
        %v1201 = vmul.f32 %v1150, 1.442695
        %v1202 = vpow.pop %v1201
        %v1203 = vmul.f32 %v1151, 1.442695
        %v1204 = vpow.pop %v1203
        %v1205 = vmul.f32 %v1152, 1.442695
        %v1206 = vpow.pop %v1205
        %v1207 = vmul.f32 %v1153, 1.442695
        %v1208 = vpow.pop %v1207
        %v1209 = vmul.f32 %v1154, 1.442695
        %v1210 = vpow.pop %v1209
        %v1211 = vmul.f32 %v1155, 1.442695
        %v1212 = vpow.pop %v1211
        %v1213 = vmul.f32 %v1156, 1.442695
        %v1214 = vpow.pop %v1213
        %v1215 = vmul.f32 %v1157, 1.442695
        %v1216 = vpow.pop %v1215
        %v1217 = vmul.f32 %v1158, 1.442695
        %v1218 = vpow.pop %v1217
        %v1219 = vmul.f32 %v1159, 1.442695
        %v1220 = vpow.pop %v1219
        %v1221 = vmul.f32 %v1160, 1.442695
        %v1222 = vpow.pop %v1221
        %v1223 = vmul.f32 %v1161, 1.442695
        %v1224 = vpow.pop %v1223
        %v1225 = vmul.f32 %v1162, 1.442695
        %v1226 = vpow.pop %v1225
        %v1227 = vadd.f32 %v1164, 1.0
        %v1228 = vadd.f32 %v1166, 1.0
        %v1229 = vadd.f32 %v1168, 1.0
        %v1230 = vadd.f32 %v1170, 1.0
        %v1231 = vadd.f32 %v1172, 1.0
        %v1232 = vadd.f32 %v1174, 1.0
        %v1233 = vadd.f32 %v1176, 1.0
        %v1234 = vadd.f32 %v1178, 1.0
        %v1235 = vadd.f32 %v1180, 1.0
        %v1236 = vadd.f32 %v1182, 1.0
        %v1237 = vadd.f32 %v1184, 1.0
        %v1238 = vadd.f32 %v1186, 1.0
        %v1239 = vadd.f32 %v1188, 1.0
        %v1240 = vadd.f32 %v1190, 1.0
        %v1241 = vadd.f32 %v1192, 1.0
        %v1242 = vadd.f32 %v1194, 1.0
        %v1243 = vadd.f32 %v1196, 1.0
        %v1244 = vadd.f32 %v1198, 1.0
        %v1245 = vadd.f32 %v1200, 1.0
        %v1246 = vadd.f32 %v1202, 1.0
        %v1247 = vadd.f32 %v1204, 1.0
        %v1248 = vadd.f32 %v1206, 1.0
        %v1249 = vadd.f32 %v1208, 1.0
        %v1250 = vadd.f32 %v1210, 1.0
        %v1251 = vadd.f32 %v1212, 1.0
        %v1252 = vadd.f32 %v1214, 1.0
        %v1253 = vadd.f32 %v1216, 1.0
        %v1254 = vadd.f32 %v1218, 1.0
        %v1255 = vadd.f32 %v1220, 1.0
        %v1256 = vadd.f32 %v1222, 1.0
        %v1257 = vadd.f32 %v1224, 1.0
        %v1258 = vadd.f32 %v1226, 1.0
        %v1259 = vrcp.pop %v1227
        %v1260 = vrcp.pop %v1228
        %v1261 = vrcp.pop %v1229
        %v1262 = vrcp.pop %v1230
        %v1263 = vrcp.pop %v1231
        %v1264 = vrcp.pop %v1232
        %v1265 = vrcp.pop %v1233
        %v1266 = vrcp.pop %v1234
        %v1267 = vrcp.pop %v1235
        %v1268 = vrcp.pop %v1236
        %v1269 = vrcp.pop %v1237
        %v1270 = vrcp.pop %v1238
        %v1271 = vrcp.pop %v1239
        %v1272 = vrcp.pop %v1240
        %v1273 = vrcp.pop %v1241
        %v1274 = vrcp.pop %v1242
        %v1275 = vrcp.pop %v1243
        %v1276 = vrcp.pop %v1244
        %v1277 = vrcp.pop %v1245
        %v1278 = vrcp.pop %v1246
        %v1279 = vrcp.pop %v1247
        %v1280 = vrcp.pop %v1248
        %v1281 = vrcp.pop %v1249
        %v1282 = vrcp.pop %v1250
        %v1283 = vrcp.pop %v1251
        %v1284 = vrcp.pop %v1252
        %v1285 = vrcp.pop %v1253
        %v1286 = vrcp.pop %v1254
        %v1287 = vrcp.pop %v1255
        %v1288 = vrcp.pop %v1256
        %v1289 = vrcp.pop %v1257
        %v1290 = vrcp.pop %v1258
        %v1291 = vmul.f32 %v1099, %v1259
        %v1292 = vmul.f32 %v1100, %v1260
        %v1293 = vmul.f32 %v1101, %v1261
        %v1294 = vmul.f32 %v1102, %v1262
        %v1295 = vmul.f32 %v1103, %v1263
        %v1296 = vmul.f32 %v1104, %v1264
        %v1297 = vmul.f32 %v1105, %v1265
        %v1298 = vmul.f32 %v1106, %v1266
        %v1299 = vmul.f32 %v1107, %v1267
        %v1300 = vmul.f32 %v1108, %v1268
        %v1301 = vmul.f32 %v1109, %v1269
        %v1302 = vmul.f32 %v1110, %v1270
        %v1303 = vmul.f32 %v1111, %v1271
        %v1304 = vmul.f32 %v1112, %v1272
        %v1305 = vmul.f32 %v1113, %v1273
        %v1306 = vmul.f32 %v1114, %v1274
        %v1307 = vmul.f32 %v1115, %v1275
        %v1308 = vmul.f32 %v1116, %v1276
        %v1309 = vmul.f32 %v1117, %v1277
        %v1310 = vmul.f32 %v1118, %v1278
        %v1311 = vmul.f32 %v1119, %v1279
        %v1312 = vmul.f32 %v1120, %v1280
        %v1313 = vmul.f32 %v1121, %v1281
        %v1314 = vmul.f32 %v1122, %v1282
        %v1315 = vmul.f32 %v1123, %v1283
        %v1316 = vmul.f32 %v1124, %v1284
        %v1317 = vmul.f32 %v1125, %v1285
        %v1318 = vmul.f32 %v1126, %v1286
        %v1319 = vmul.f32 %v1127, %v1287
        %v1320 = vmul.f32 %v1128, %v1288
        %v1321 = vmul.f32 %v1129, %v1289
        %v1322 = vmul.f32 %v1130, %v1290
        %1323 = vst [vmem:[#allocation2] sm:$0xf] 0
        %1324 = vst [vmem:[#allocation2 + $0x4] sm:$0xf] 0
        %1325 = vst [vmem:[#allocation2 + $0x8] sm:$0x1] 0
        %s1326 = scalar_lea.vmem [#allocation2], 204
        %1327 = vst [vmem:[%s1326] sm:$0xf] 0
        %1328 = vst [vmem:[%s1326 + $0x4] sm:$0xf] 0
        %1329 = vst [vmem:[%s1326 + $0x8] sm:$0x1] 0
        %1330 = vst [vmem:[#allocation2] sm:$0x1] 0
        %1331 = vst [vmem:[#allocation2 + $0xc] sm:$0x1] 0
        %1332 = vst [vmem:[#allocation2 + $0x18] sm:$0x1] 0
        %1333 = vst [vmem:[#allocation2 + $0x24] sm:$0x1] 0
        %1334 = vst [vmem:[#allocation2 + $0x30] sm:$0x1] 0
        %1335 = vst [vmem:[#allocation2 + $0x3c] sm:$0x1] 0
        %1336 = vst [vmem:[#allocation2 + $0x48] sm:$0x1] 0
        %1337 = vst [vmem:[#allocation2 + $0x54] sm:$0x1] 0
        %1338 = vst [vmem:[#allocation2 + $0x60] sm:$0x1] 0
        %1339 = vst [vmem:[#allocation2 + $0x6c] sm:$0x1] 0
        %1340 = vst [vmem:[#allocation2 + $0x78] sm:$0x1] 0
        %1341 = vst [vmem:[#allocation2 + $0x84] sm:$0x1] 0
        %1342 = vst [vmem:[#allocation2 + $0x90] sm:$0x1] 0
        %1343 = vst [vmem:[#allocation2 + $0x9c] sm:$0x1] 0
        %1344 = vst [vmem:[#allocation2 + $0xa8] sm:$0x1] 0
        %1345 = vst [vmem:[#allocation2 + $0xb4] sm:$0x1] 0
        %1346 = vst [vmem:[#allocation2 + $0xc0] sm:$0x1] 0
        %1347 = vst [vmem:[#allocation2 + $0xcc] sm:$0x1] 0
        %1348 = vst [vmem:[#allocation2 + $0x8] sm:$0x1] 0
        %1349 = vst [vmem:[#allocation2 + $0x14] sm:$0x1] 0
        %1350 = vst [vmem:[#allocation2 + $0x20] sm:$0x1] 0
        %1351 = vst [vmem:[#allocation2 + $0x2c] sm:$0x1] 0
        %1352 = vst [vmem:[#allocation2 + $0x38] sm:$0x1] 0
        %1353 = vst [vmem:[#allocation2 + $0x44] sm:$0x1] 0
        %1354 = vst [vmem:[#allocation2 + $0x50] sm:$0x1] 0
        %1355 = vst [vmem:[#allocation2 + $0x5c] sm:$0x1] 0
        %1356 = vst [vmem:[#allocation2 + $0x68] sm:$0x1] 0
        %1357 = vst [vmem:[#allocation2 + $0x74] sm:$0x1] 0
        %1358 = vst [vmem:[#allocation2 + $0x80] sm:$0x1] 0
        %1359 = vst [vmem:[#allocation2 + $0x8c] sm:$0x1] 0
        %1360 = vst [vmem:[#allocation2 + $0x98] sm:$0x1] 0
        %1361 = vst [vmem:[#allocation2 + $0xa4] sm:$0x1] 0
        %1362 = vst [vmem:[#allocation2 + $0xb0] sm:$0x1] 0
        %1363 = vst [vmem:[#allocation2 + $0xbc] sm:$0x1] 0
        %1364 = vst [vmem:[#allocation2 + $0xc8] sm:$0x1] 0
        %1365 = vst [vmem:[#allocation2 + $0xd4] sm:$0x1] 0
        %v1366 = vpack.c.bf16 %v1292, %v1291
        %v1367 = vpack.c.bf16 %v1294, %v1293
        %v1368 = vpack.c.bf16 %v1296, %v1295
        %v1369 = vpack.c.bf16 %v1298, %v1297
        %v1370 = vpack.c.bf16 %v1300, %v1299
        %v1371 = vpack.c.bf16 %v1302, %v1301
        %v1372 = vpack.c.bf16 %v1304, %v1303
        %v1373 = vpack.c.bf16 %v1306, %v1305
        %v1374 = vpack.c.bf16 %v1308, %v1307
        %v1375 = vpack.c.bf16 %v1310, %v1309
        %v1376 = vpack.c.bf16 %v1312, %v1311
        %v1377 = vpack.c.bf16 %v1314, %v1313
        %v1378 = vpack.c.bf16 %v1316, %v1315
        %v1379 = vpack.c.bf16 %v1318, %v1317
        %v1380 = vpack.c.bf16 %v1320, %v1319
        %v1381 = vpack.c.bf16 %v1322, %v1321
        %v1398 = vunpack.c.l.b16 %v1366
        %v1399 = vunpack.c.h.b16 %v1366
        %v1400 = vunpack.c.l.b16 %v1367
        %v1401 = vunpack.c.h.b16 %v1367
        %v1402 = vunpack.c.l.b16 %v1368
        %v1403 = vunpack.c.h.b16 %v1368
        %v1404 = vunpack.c.l.b16 %v1369
        %v1405 = vunpack.c.h.b16 %v1369
        %v1406 = vunpack.c.l.b16 %v1370
        %v1407 = vunpack.c.h.b16 %v1370
        %v1408 = vunpack.c.l.b16 %v1371
        %v1409 = vunpack.c.h.b16 %v1371
        %v1410 = vunpack.c.l.b16 %v1372
        %v1411 = vunpack.c.h.b16 %v1372
        %v1412 = vunpack.c.l.b16 %v1373
        %v1413 = vunpack.c.h.b16 %v1373
        %v1414 = vunpack.c.l.b16 %v1374
        %v1415 = vunpack.c.h.b16 %v1374
        %v1416 = vunpack.c.l.b16 %v1375
        %v1417 = vunpack.c.h.b16 %v1375
        %v1418 = vunpack.c.l.b16 %v1376
        %v1419 = vunpack.c.h.b16 %v1376
        %v1420 = vunpack.c.l.b16 %v1377
        %v1421 = vunpack.c.h.b16 %v1377
        %v1422 = vunpack.c.l.b16 %v1378
        %v1423 = vunpack.c.h.b16 %v1378
        %v1424 = vunpack.c.l.b16 %v1379
        %v1425 = vunpack.c.h.b16 %v1379
        %v1426 = vunpack.c.l.b16 %v1380
        %v1427 = vunpack.c.h.b16 %v1380
        %v1428 = vunpack.c.l.b16 %v1381
        %v1429 = vunpack.c.h.b16 %v1381
        %v1430 = vpack.c.b16 %v1398, %v1398
        %v1431 = vpack.c.b16 %v1399, %v1399
        %v1432 = vpack.c.b16 %v1400, %v1400
        %v1433 = vpack.c.b16 %v1401, %v1401
        %v1434 = vpack.c.b16 %v1402, %v1402
        %v1435 = vpack.c.b16 %v1403, %v1403
        %v1436 = vpack.c.b16 %v1404, %v1404
        %v1437 = vpack.c.b16 %v1405, %v1405
        %v1438 = vpack.c.b16 %v1406, %v1406
        %v1439 = vpack.c.b16 %v1407, %v1407
        %v1440 = vpack.c.b16 %v1408, %v1408
        %v1441 = vpack.c.b16 %v1409, %v1409
        %v1442 = vpack.c.b16 %v1410, %v1410
        %v1443 = vpack.c.b16 %v1411, %v1411
        %v1444 = vpack.c.b16 %v1412, %v1412
        %v1445 = vpack.c.b16 %v1413, %v1413
        %v1446 = vpack.c.b16 %v1414, %v1414
        %v1447 = vpack.c.b16 %v1415, %v1415
        %v1448 = vpack.c.b16 %v1416, %v1416
        %v1449 = vpack.c.b16 %v1417, %v1417
        %v1450 = vpack.c.b16 %v1418, %v1418
        %v1451 = vpack.c.b16 %v1419, %v1419
        %v1452 = vpack.c.b16 %v1420, %v1420
        %v1453 = vpack.c.b16 %v1421, %v1421
        %v1454 = vpack.c.b16 %v1422, %v1422
        %v1455 = vpack.c.b16 %v1423, %v1423
        %v1456 = vpack.c.b16 %v1424, %v1424
        %v1457 = vpack.c.b16 %v1425, %v1425
        %v1458 = vpack.c.b16 %v1426, %v1426
        %v1459 = vpack.c.b16 %v1427, %v1427
        %v1460 = vpack.c.b16 %v1428, %v1428
        %v1461 = vpack.c.b16 %v1429, %v1429
        %vm1462 = vsmask.f32 256
        %vm1463 = vsmask.f32 4368
        %vm1464 = vmor %vm1462, %vm1463
        %v1466 = vshrl.u32 %v1430, 16
        %v1468 = vrot.slane %v1466, 7
        %v1469 = vshll.u32 %v1430, 16
        %v1471 = vor.u32 %v1468, %v1469
        %v1472 = vrot.slane %v1468, 4
        %v1474 = vshrl.u32 %v1431, 16
        %v1476 = vrot.slane %v1474, 7
        %v1477 = vshll.u32 %v1431, 16
        %v1479 = vor.u32 %v1476, %v1477
        %v1480 = vsel %vm1464, %v1472, %v1479
        %v1481 = vrot.slane %v1476, 4
        %v1483 = vshrl.u32 %v1432, 16
        %v1485 = vrot.slane %v1483, 7
        %v1486 = vshll.u32 %v1432, 16
        %v1488 = vor.u32 %v1485, %v1486
        %v1489 = vrot.slane %v1485, 4
        %v1491 = vshrl.u32 %v1433, 16
        %v1493 = vrot.slane %v1491, 7
        %v1494 = vshll.u32 %v1433, 16
        %v1496 = vor.u32 %v1493, %v1494
        %v1497 = vsel %vm1464, %v1489, %v1496
        %v1498 = vrot.slane %v1493, 4
        %v1500 = vshrl.u32 %v1434, 16
        %v1502 = vrot.slane %v1500, 7
        %v1503 = vshll.u32 %v1434, 16
        %v1505 = vor.u32 %v1502, %v1503
        %v1506 = vrot.slane %v1502, 4
        %v1508 = vshrl.u32 %v1435, 16
        %v1510 = vrot.slane %v1508, 7
        %v1511 = vshll.u32 %v1435, 16
        %v1513 = vor.u32 %v1510, %v1511
        %v1514 = vsel %vm1464, %v1506, %v1513
        %v1515 = vrot.slane %v1510, 4
        %v1517 = vshrl.u32 %v1436, 16
        %v1519 = vrot.slane %v1517, 7
        %v1520 = vshll.u32 %v1436, 16
        %v1522 = vor.u32 %v1519, %v1520
        %v1523 = vrot.slane %v1519, 4
        %v1525 = vshrl.u32 %v1437, 16
        %v1527 = vrot.slane %v1525, 7
        %v1528 = vshll.u32 %v1437, 16
        %v1530 = vor.u32 %v1527, %v1528
        %v1531 = vsel %vm1464, %v1523, %v1530
        %v1532 = vrot.slane %v1527, 4
        %v1534 = vshrl.u32 %v1438, 16
        %v1536 = vrot.slane %v1534, 7
        %v1537 = vshll.u32 %v1438, 16
        %v1539 = vor.u32 %v1536, %v1537
        %v1540 = vrot.slane %v1536, 4
        %v1542 = vshrl.u32 %v1439, 16
        %v1544 = vrot.slane %v1542, 7
        %v1545 = vshll.u32 %v1439, 16
        %v1547 = vor.u32 %v1544, %v1545
        %v1548 = vsel %vm1464, %v1540, %v1547
        %v1549 = vrot.slane %v1544, 4
        %v1551 = vshrl.u32 %v1440, 16
        %v1553 = vrot.slane %v1551, 7
        %v1554 = vshll.u32 %v1440, 16
        %v1556 = vor.u32 %v1553, %v1554
        %v1557 = vrot.slane %v1553, 4
        %v1559 = vshrl.u32 %v1441, 16
        %v1561 = vrot.slane %v1559, 7
        %v1562 = vshll.u32 %v1441, 16
        %v1564 = vor.u32 %v1561, %v1562
        %v1565 = vsel %vm1464, %v1557, %v1564
        %v1566 = vrot.slane %v1561, 4
        %v1568 = vshrl.u32 %v1442, 16
        %v1570 = vrot.slane %v1568, 7
        %v1571 = vshll.u32 %v1442, 16
        %v1573 = vor.u32 %v1570, %v1571
        %v1574 = vrot.slane %v1570, 4
        %v1576 = vshrl.u32 %v1443, 16
        %v1578 = vrot.slane %v1576, 7
        %v1579 = vshll.u32 %v1443, 16
        %v1581 = vor.u32 %v1578, %v1579
        %v1582 = vsel %vm1464, %v1574, %v1581
        %v1583 = vrot.slane %v1578, 4
        %v1585 = vshrl.u32 %v1444, 16
        %v1587 = vrot.slane %v1585, 7
        %v1588 = vshll.u32 %v1444, 16
        %v1590 = vor.u32 %v1587, %v1588
        %v1591 = vrot.slane %v1587, 4
        %v1593 = vshrl.u32 %v1445, 16
        %v1595 = vrot.slane %v1593, 7
        %v1596 = vshll.u32 %v1445, 16
        %v1598 = vor.u32 %v1595, %v1596
        %v1599 = vsel %vm1464, %v1591, %v1598
        %v1600 = vrot.slane %v1595, 4
        %v1602 = vshrl.u32 %v1446, 16
        %v1604 = vrot.slane %v1602, 7
        %v1605 = vshll.u32 %v1446, 16
        %v1607 = vor.u32 %v1604, %v1605
        %v1608 = vrot.slane %v1604, 4
        %v1610 = vshrl.u32 %v1447, 16
        %v1612 = vrot.slane %v1610, 7
        %v1613 = vshll.u32 %v1447, 16
        %v1615 = vor.u32 %v1612, %v1613
        %v1616 = vsel %vm1464, %v1608, %v1615
        %v1617 = vrot.slane %v1612, 4
        %v1619 = vshrl.u32 %v1448, 16
        %v1621 = vrot.slane %v1619, 7
        %v1622 = vshll.u32 %v1448, 16
        %v1624 = vor.u32 %v1621, %v1622
        %v1625 = vrot.slane %v1621, 4
        %v1627 = vshrl.u32 %v1449, 16
        %v1629 = vrot.slane %v1627, 7
        %v1630 = vshll.u32 %v1449, 16
        %v1632 = vor.u32 %v1629, %v1630
        %v1633 = vsel %vm1464, %v1625, %v1632
        %v1634 = vrot.slane %v1629, 4
        %v1636 = vshrl.u32 %v1450, 16
        %v1638 = vrot.slane %v1636, 7
        %v1639 = vshll.u32 %v1450, 16
        %v1641 = vor.u32 %v1638, %v1639
        %v1642 = vrot.slane %v1638, 4
        %v1644 = vshrl.u32 %v1451, 16
        %v1646 = vrot.slane %v1644, 7
        %v1647 = vshll.u32 %v1451, 16
        %v1649 = vor.u32 %v1646, %v1647
        %v1650 = vsel %vm1464, %v1642, %v1649
        %v1651 = vrot.slane %v1646, 4
        %v1653 = vshrl.u32 %v1452, 16
        %v1655 = vrot.slane %v1653, 7
        %v1656 = vshll.u32 %v1452, 16
        %v1658 = vor.u32 %v1655, %v1656
        %v1659 = vrot.slane %v1655, 4
        %v1661 = vshrl.u32 %v1453, 16
        %v1663 = vrot.slane %v1661, 7
        %v1664 = vshll.u32 %v1453, 16
        %v1666 = vor.u32 %v1663, %v1664
        %v1667 = vsel %vm1464, %v1659, %v1666
        %v1668 = vrot.slane %v1663, 4
        %v1670 = vshrl.u32 %v1454, 16
        %v1672 = vrot.slane %v1670, 7
        %v1673 = vshll.u32 %v1454, 16
        %v1675 = vor.u32 %v1672, %v1673
        %v1676 = vrot.slane %v1672, 4
        %v1678 = vshrl.u32 %v1455, 16
        %v1680 = vrot.slane %v1678, 7
        %v1681 = vshll.u32 %v1455, 16
        %v1683 = vor.u32 %v1680, %v1681
        %v1684 = vsel %vm1464, %v1676, %v1683
        %v1685 = vrot.slane %v1680, 4
        %v1687 = vshrl.u32 %v1456, 16
        %v1689 = vrot.slane %v1687, 7
        %v1690 = vshll.u32 %v1456, 16
        %v1692 = vor.u32 %v1689, %v1690
        %v1693 = vrot.slane %v1689, 4
        %v1695 = vshrl.u32 %v1457, 16
        %v1697 = vrot.slane %v1695, 7
        %v1698 = vshll.u32 %v1457, 16
        %v1700 = vor.u32 %v1697, %v1698
        %v1701 = vsel %vm1464, %v1693, %v1700
        %v1702 = vrot.slane %v1697, 4
        %v1704 = vshrl.u32 %v1458, 16
        %v1706 = vrot.slane %v1704, 7
        %v1707 = vshll.u32 %v1458, 16
        %v1709 = vor.u32 %v1706, %v1707
        %v1710 = vrot.slane %v1706, 4
        %v1712 = vshrl.u32 %v1459, 16
        %v1714 = vrot.slane %v1712, 7
        %v1715 = vshll.u32 %v1459, 16
        %v1717 = vor.u32 %v1714, %v1715
        %v1718 = vsel %vm1464, %v1710, %v1717
        %v1719 = vrot.slane %v1714, 4
        %v1721 = vshrl.u32 %v1460, 16
        %v1723 = vrot.slane %v1721, 7
        %v1724 = vshll.u32 %v1460, 16
        %v1726 = vor.u32 %v1723, %v1724
        %v1727 = vrot.slane %v1723, 4
        %v1729 = vshrl.u32 %v1461, 16
        %v1731 = vrot.slane %v1729, 7
        %v1732 = vshll.u32 %v1461, 16
        %v1734 = vor.u32 %v1731, %v1732
        %v1735 = vsel %vm1464, %v1727, %v1734
        %v1736 = vrot.slane %v1731, 4
        %s1785 = scalar_lea.vmem [#allocation2], 12
        %vm1786 = vcmask 1043456
        %vm1787 = vsmask.f32 7938
        %vm1788 = vmand %vm1786, %vm1787
        %v1789 = vld [vmem:[%s1785] sm:$0xf]
        %v1790 = vsel %vm1788, %v1471, %v1789
        %1791 = vst [vmem:[%s1785] sm:$0xf] %v1790
        %1792 = vst [vmem:[%s1785 + $0x4] sm:$0xf] %v1480
        %vm1793 = vcmask 1040384
        %vm1794 = vmand %vm1793, %vm1462
        %v1795 = vld [vmem:[%s1785 + $0x8] sm:$0x1]
        %v1796 = vsel %vm1794, %v1481, %v1795
        %1797 = vst [vmem:[%s1785 + $0x8] sm:$0x1] %v1796
        %v1798 = vld [vmem:[%s1785 + $0xc] sm:$0xf]
        %v1799 = vsel %vm1788, %v1488, %v1798
        %1800 = vst [vmem:[%s1785 + $0xc] sm:$0xf] %v1799
        %1801 = vst [vmem:[%s1785 + $0x10] sm:$0xf] %v1497
        %v1802 = vld [vmem:[%s1785 + $0x14] sm:$0x1]
        %v1803 = vsel %vm1794, %v1498, %v1802
        %1804 = vst [vmem:[%s1785 + $0x14] sm:$0x1] %v1803
        %v1805 = vld [vmem:[%s1785 + $0x18] sm:$0xf]
        %v1806 = vsel %vm1788, %v1505, %v1805
        %1807 = vst [vmem:[%s1785 + $0x18] sm:$0xf] %v1806
        %1808 = vst [vmem:[%s1785 + $0x1c] sm:$0xf] %v1514
        %v1809 = vld [vmem:[%s1785 + $0x20] sm:$0x1]
        %v1810 = vsel %vm1794, %v1515, %v1809
        %1811 = vst [vmem:[%s1785 + $0x20] sm:$0x1] %v1810
        %v1812 = vld [vmem:[%s1785 + $0x24] sm:$0xf]
        %v1813 = vsel %vm1788, %v1522, %v1812
        %1814 = vst [vmem:[%s1785 + $0x24] sm:$0xf] %v1813
        %1815 = vst [vmem:[%s1785 + $0x28] sm:$0xf] %v1531
        %v1816 = vld [vmem:[%s1785 + $0x2c] sm:$0x1]
        %v1817 = vsel %vm1794, %v1532, %v1816
        %1818 = vst [vmem:[%s1785 + $0x2c] sm:$0x1] %v1817
        %v1819 = vld [vmem:[%s1785 + $0x30] sm:$0xf]
        %v1820 = vsel %vm1788, %v1539, %v1819
        %1821 = vst [vmem:[%s1785 + $0x30] sm:$0xf] %v1820
        %1822 = vst [vmem:[%s1785 + $0x34] sm:$0xf] %v1548
        %v1823 = vld [vmem:[%s1785 + $0x38] sm:$0x1]
        %v1824 = vsel %vm1794, %v1549, %v1823
        %1825 = vst [vmem:[%s1785 + $0x38] sm:$0x1] %v1824
        %v1826 = vld [vmem:[%s1785 + $0x3c] sm:$0xf]
        %v1827 = vsel %vm1788, %v1556, %v1826
        %1828 = vst [vmem:[%s1785 + $0x3c] sm:$0xf] %v1827
        %1829 = vst [vmem:[%s1785 + $0x40] sm:$0xf] %v1565
        %v1830 = vld [vmem:[%s1785 + $0x44] sm:$0x1]
        %v1831 = vsel %vm1794, %v1566, %v1830
        %1832 = vst [vmem:[%s1785 + $0x44] sm:$0x1] %v1831
        %v1833 = vld [vmem:[%s1785 + $0x48] sm:$0xf]
        %v1834 = vsel %vm1788, %v1573, %v1833
        %1835 = vst [vmem:[%s1785 + $0x48] sm:$0xf] %v1834
        %1836 = vst [vmem:[%s1785 + $0x4c] sm:$0xf] %v1582
        %v1837 = vld [vmem:[%s1785 + $0x50] sm:$0x1]
        %v1838 = vsel %vm1794, %v1583, %v1837
        %1839 = vst [vmem:[%s1785 + $0x50] sm:$0x1] %v1838
        %v1840 = vld [vmem:[%s1785 + $0x54] sm:$0xf]
        %v1841 = vsel %vm1788, %v1590, %v1840
        %1842 = vst [vmem:[%s1785 + $0x54] sm:$0xf] %v1841
        %1843 = vst [vmem:[%s1785 + $0x58] sm:$0xf] %v1599
        %v1844 = vld [vmem:[%s1785 + $0x5c] sm:$0x1]
        %v1845 = vsel %vm1794, %v1600, %v1844
        %1846 = vst [vmem:[%s1785 + $0x5c] sm:$0x1] %v1845
        %v1847 = vld [vmem:[%s1785 + $0x60] sm:$0xf]
        %v1848 = vsel %vm1788, %v1607, %v1847
        %1849 = vst [vmem:[%s1785 + $0x60] sm:$0xf] %v1848
        %1850 = vst [vmem:[%s1785 + $0x64] sm:$0xf] %v1616
        %v1851 = vld [vmem:[%s1785 + $0x68] sm:$0x1]
        %v1852 = vsel %vm1794, %v1617, %v1851
        %1853 = vst [vmem:[%s1785 + $0x68] sm:$0x1] %v1852
        %v1854 = vld [vmem:[%s1785 + $0x6c] sm:$0xf]
        %v1855 = vsel %vm1788, %v1624, %v1854
        %1856 = vst [vmem:[%s1785 + $0x6c] sm:$0xf] %v1855
        %1857 = vst [vmem:[%s1785 + $0x70] sm:$0xf] %v1633
        %v1858 = vld [vmem:[%s1785 + $0x74] sm:$0x1]
        %v1859 = vsel %vm1794, %v1634, %v1858
        %1860 = vst [vmem:[%s1785 + $0x74] sm:$0x1] %v1859
        %v1861 = vld [vmem:[%s1785 + $0x78] sm:$0xf]
        %v1862 = vsel %vm1788, %v1641, %v1861
        %1863 = vst [vmem:[%s1785 + $0x78] sm:$0xf] %v1862
        %1864 = vst [vmem:[%s1785 + $0x7c] sm:$0xf] %v1650
        %v1865 = vld [vmem:[%s1785 + $0x80] sm:$0x1]
        %v1866 = vsel %vm1794, %v1651, %v1865
        %1867 = vst [vmem:[%s1785 + $0x80] sm:$0x1] %v1866
        %v1868 = vld [vmem:[%s1785 + $0x84] sm:$0xf]
        %v1869 = vsel %vm1788, %v1658, %v1868
        %1870 = vst [vmem:[%s1785 + $0x84] sm:$0xf] %v1869
        %1871 = vst [vmem:[%s1785 + $0x88] sm:$0xf] %v1667
        %v1872 = vld [vmem:[%s1785 + $0x8c] sm:$0x1]
        %v1873 = vsel %vm1794, %v1668, %v1872
        %1874 = vst [vmem:[%s1785 + $0x8c] sm:$0x1] %v1873
        %v1875 = vld [vmem:[%s1785 + $0x90] sm:$0xf]
        %v1876 = vsel %vm1788, %v1675, %v1875
        %1877 = vst [vmem:[%s1785 + $0x90] sm:$0xf] %v1876
        %1878 = vst [vmem:[%s1785 + $0x94] sm:$0xf] %v1684
        %v1879 = vld [vmem:[%s1785 + $0x98] sm:$0x1]
        %v1880 = vsel %vm1794, %v1685, %v1879
        %1881 = vst [vmem:[%s1785 + $0x98] sm:$0x1] %v1880
        %v1882 = vld [vmem:[%s1785 + $0x9c] sm:$0xf]
        %v1883 = vsel %vm1788, %v1692, %v1882
        %1884 = vst [vmem:[%s1785 + $0x9c] sm:$0xf] %v1883
        %1885 = vst [vmem:[%s1785 + $0xa0] sm:$0xf] %v1701
        %v1886 = vld [vmem:[%s1785 + $0xa4] sm:$0x1]
        %v1887 = vsel %vm1794, %v1702, %v1886
        %1888 = vst [vmem:[%s1785 + $0xa4] sm:$0x1] %v1887
        %v1889 = vld [vmem:[%s1785 + $0xa8] sm:$0xf]
        %v1890 = vsel %vm1788, %v1709, %v1889
        %1891 = vst [vmem:[%s1785 + $0xa8] sm:$0xf] %v1890
        %1892 = vst [vmem:[%s1785 + $0xac] sm:$0xf] %v1718
        %v1893 = vld [vmem:[%s1785 + $0xb0] sm:$0x1]
        %v1894 = vsel %vm1794, %v1719, %v1893
        %1895 = vst [vmem:[%s1785 + $0xb0] sm:$0x1] %v1894
        %v1896 = vld [vmem:[%s1785 + $0xb4] sm:$0xf]
        %v1897 = vsel %vm1788, %v1726, %v1896
        %1898 = vst [vmem:[%s1785 + $0xb4] sm:$0xf] %v1897
        %1899 = vst [vmem:[%s1785 + $0xb8] sm:$0xf] %v1735
        %v1900 = vld [vmem:[%s1785 + $0xbc] sm:$0x1]
        %v1901 = vsel %vm1794, %v1736, %v1900
        %1902 = vst [vmem:[%s1785 + $0xbc] sm:$0x1] %v1901
        %v1903 = vld [vmem:[#allocation2] sm:$0xf]
        %v1904 = vld [vmem:[#allocation2 + $0x4] sm:$0xf]
        %v1905 = vld [vmem:[#allocation2 + $0xc] sm:$0xf]
        %v1906 = vld [vmem:[#allocation2 + $0x10] sm:$0xf]
        %v1907 = vld [vmem:[#allocation2 + $0x18] sm:$0xf]
        %v1908 = vld [vmem:[#allocation2 + $0x1c] sm:$0xf]
        %v1909 = vld [vmem:[#allocation2 + $0x24] sm:$0xf]
        %v1910 = vld [vmem:[#allocation2 + $0x28] sm:$0xf]
        %v1911 = vld [vmem:[#allocation2 + $0x30] sm:$0xf]
        %v1912 = vld [vmem:[#allocation2 + $0x34] sm:$0xf]
        %v1913 = vld [vmem:[#allocation2 + $0x3c] sm:$0xf]
        %v1914 = vld [vmem:[#allocation2 + $0x40] sm:$0xf]
        %v1915 = vld [vmem:[#allocation2 + $0x48] sm:$0xf]
        %v1916 = vld [vmem:[#allocation2 + $0x4c] sm:$0xf]
        %v1917 = vld [vmem:[#allocation2 + $0x54] sm:$0xf]
        %v1918 = vld [vmem:[#allocation2 + $0x58] sm:$0xf]
        %v1919 = vld [vmem:[#allocation2 + $0x60] sm:$0xf]
        %v1920 = vld [vmem:[#allocation2 + $0x64] sm:$0xf]
        %v1921 = vld [vmem:[#allocation2 + $0x6c] sm:$0xf]
        %v1922 = vld [vmem:[#allocation2 + $0x70] sm:$0xf]
        %v1923 = vld [vmem:[#allocation2 + $0x78] sm:$0xf]
        %v1924 = vld [vmem:[#allocation2 + $0x7c] sm:$0xf]
        %v1925 = vld [vmem:[#allocation2 + $0x84] sm:$0xf]
        %v1926 = vld [vmem:[#allocation2 + $0x88] sm:$0xf]
        %v1927 = vld [vmem:[#allocation2 + $0x90] sm:$0xf]
        %v1928 = vld [vmem:[#allocation2 + $0x94] sm:$0xf]
        %v1929 = vld [vmem:[#allocation2 + $0x9c] sm:$0xf]
        %v1930 = vld [vmem:[#allocation2 + $0xa0] sm:$0xf]
        %v1931 = vld [vmem:[#allocation2 + $0xa8] sm:$0xf]
        %v1932 = vld [vmem:[#allocation2 + $0xac] sm:$0xf]
        %v1933 = vld [vmem:[#allocation2 + $0xb4] sm:$0xf]
        %v1934 = vld [vmem:[#allocation2 + $0xb8] sm:$0xf]
        %v1967 = vunpack.c.l.b16 %v1903
        %v1968 = vunpack.c.l.b16 %v1904
        %v1969 = vunpack.c.l.b16 %v1905
        %v1970 = vunpack.c.l.b16 %v1906
        %v1971 = vunpack.c.l.b16 %v1907
        %v1972 = vunpack.c.l.b16 %v1908
        %v1973 = vunpack.c.l.b16 %v1909
        %v1974 = vunpack.c.l.b16 %v1910
        %v1975 = vunpack.c.l.b16 %v1911
        %v1976 = vunpack.c.l.b16 %v1912
        %v1977 = vunpack.c.l.b16 %v1913
        %v1978 = vunpack.c.l.b16 %v1914
        %v1979 = vunpack.c.l.b16 %v1915
        %v1980 = vunpack.c.l.b16 %v1916
        %v1981 = vunpack.c.l.b16 %v1917
        %v1982 = vunpack.c.l.b16 %v1918
        %v1983 = vunpack.c.l.b16 %v1919
        %v1984 = vunpack.c.l.b16 %v1920
        %v1985 = vunpack.c.l.b16 %v1921
        %v1986 = vunpack.c.l.b16 %v1922
        %v1987 = vunpack.c.l.b16 %v1923
        %v1988 = vunpack.c.l.b16 %v1924
        %v1989 = vunpack.c.l.b16 %v1925
        %v1990 = vunpack.c.l.b16 %v1926
        %v1991 = vunpack.c.l.b16 %v1927
        %v1992 = vunpack.c.l.b16 %v1928
        %v1993 = vunpack.c.l.b16 %v1929
        %v1994 = vunpack.c.l.b16 %v1930
        %v1995 = vunpack.c.l.b16 %v1931
        %v1996 = vunpack.c.l.b16 %v1932
        %v1997 = vunpack.c.l.b16 %v1933
        %v1998 = vunpack.c.l.b16 %v1934
        %v1999 = vpack.c.b16 %v1968, %v1967
        %v2000 = vpack.c.b16 %v1970, %v1969
        %v2001 = vpack.c.b16 %v1972, %v1971
        %v2002 = vpack.c.b16 %v1974, %v1973
        %v2003 = vpack.c.b16 %v1976, %v1975
        %v2004 = vpack.c.b16 %v1978, %v1977
        %v2005 = vpack.c.b16 %v1980, %v1979
        %v2006 = vpack.c.b16 %v1982, %v1981
        %v2007 = vpack.c.b16 %v1984, %v1983
        %v2008 = vpack.c.b16 %v1986, %v1985
        %v2009 = vpack.c.b16 %v1988, %v1987
        %v2010 = vpack.c.b16 %v1990, %v1989
        %v2011 = vpack.c.b16 %v1992, %v1991
        %v2012 = vpack.c.b16 %v1994, %v1993
        %v2013 = vpack.c.b16 %v1996, %v1995
        %v2014 = vpack.c.b16 %v1998, %v1997
        %2031 = vst [vmem:[#allocation3] sm:$0xff] %v1999
        %2032 = vst [vmem:[#allocation3 + $0x48] sm:$0xff] %v2000
        %2033 = vst [vmem:[#allocation3 + $0x90] sm:$0xff] %v2001
        %2034 = vst [vmem:[#allocation3 + $0xd8] sm:$0xff] %v2002
        %2035 = vst [vmem:[#allocation3 + $0x120] sm:$0xff] %v2003
        %2036 = vst [vmem:[#allocation3 + $0x168] sm:$0xff] %v2004
        %2037 = vst [vmem:[#allocation3 + $0x1b0] sm:$0xff] %v2005
        %2038 = vst [vmem:[#allocation3 + $0x1f8] sm:$0xff] %v2006
        %2039 = vst [vmem:[#allocation3 + $0x240] sm:$0xff] %v2007
        %2040 = vst [vmem:[#allocation3 + $0x288] sm:$0xff] %v2008
        %2041 = vst [vmem:[#allocation3 + $0x2d0] sm:$0xff] %v2009
        %2042 = vst [vmem:[#allocation3 + $0x318] sm:$0xff] %v2010
        %2043 = vst [vmem:[#allocation3 + $0x360] sm:$0xff] %v2011
        %2044 = vst [vmem:[#allocation3 + $0x3a8] sm:$0xff] %v2012
        %2045 = vst [vmem:[#allocation3 + $0x3f0] sm:$0xff] %v2013
        %2046 = vst [vmem:[#allocation3 + $0x438] sm:$0xff] %v2014
        %v2047 = vld [vmem:[#allocation2] sm:$0xf]
        %v2048 = vld [vmem:[#allocation2 + $0x4] sm:$0xf]
        %v2049 = vld [vmem:[#allocation2 + $0x8] sm:$0x1]
        %v2050 = vld [vmem:[#allocation2 + $0xc] sm:$0xf]
        %v2051 = vld [vmem:[#allocation2 + $0x10] sm:$0xf]
        %v2052 = vld [vmem:[#allocation2 + $0x14] sm:$0x1]
        %v2053 = vld [vmem:[#allocation2 + $0x18] sm:$0xf]
        %v2054 = vld [vmem:[#allocation2 + $0x1c] sm:$0xf]
        %v2055 = vld [vmem:[#allocation2 + $0x20] sm:$0x1]
        %v2056 = vld [vmem:[#allocation2 + $0x24] sm:$0xf]
        %v2057 = vld [vmem:[#allocation2 + $0x28] sm:$0xf]
        %v2058 = vld [vmem:[#allocation2 + $0x2c] sm:$0x1]
        %v2059 = vld [vmem:[#allocation2 + $0x30] sm:$0xf]
        %v2060 = vld [vmem:[#allocation2 + $0x34] sm:$0xf]
        %v2061 = vld [vmem:[#allocation2 + $0x38] sm:$0x1]
        %v2062 = vld [vmem:[#allocation2 + $0x3c] sm:$0xf]
        %v2063 = vld [vmem:[#allocation2 + $0x40] sm:$0xf]
        %v2064 = vld [vmem:[#allocation2 + $0x44] sm:$0x1]
        %v2065 = vld [vmem:[#allocation2 + $0x48] sm:$0xf]
        %v2066 = vld [vmem:[#allocation2 + $0x4c] sm:$0xf]
        %v2067 = vld [vmem:[#allocation2 + $0x50] sm:$0x1]
        %v2068 = vld [vmem:[#allocation2 + $0x54] sm:$0xf]
        %v2069 = vld [vmem:[#allocation2 + $0x58] sm:$0xf]
        %v2070 = vld [vmem:[#allocation2 + $0x5c] sm:$0x1]
        %v2071 = vld [vmem:[#allocation2 + $0x60] sm:$0xf]
        %v2072 = vld [vmem:[#allocation2 + $0x64] sm:$0xf]
        %v2073 = vld [vmem:[#allocation2 + $0x68] sm:$0x1]
        %v2074 = vld [vmem:[#allocation2 + $0x6c] sm:$0xf]
        %v2075 = vld [vmem:[#allocation2 + $0x70] sm:$0xf]
        %v2076 = vld [vmem:[#allocation2 + $0x74] sm:$0x1]
        %v2077 = vld [vmem:[#allocation2 + $0x78] sm:$0xf]
        %v2078 = vld [vmem:[#allocation2 + $0x7c] sm:$0xf]
        %v2079 = vld [vmem:[#allocation2 + $0x80] sm:$0x1]
        %v2080 = vld [vmem:[#allocation2 + $0x84] sm:$0xf]
        %v2081 = vld [vmem:[#allocation2 + $0x88] sm:$0xf]
        %v2082 = vld [vmem:[#allocation2 + $0x8c] sm:$0x1]
        %v2083 = vld [vmem:[#allocation2 + $0x90] sm:$0xf]
        %v2084 = vld [vmem:[#allocation2 + $0x94] sm:$0xf]
        %v2085 = vld [vmem:[#allocation2 + $0x98] sm:$0x1]
        %v2086 = vld [vmem:[#allocation2 + $0x9c] sm:$0xf]
        %v2087 = vld [vmem:[#allocation2 + $0xa0] sm:$0xf]
        %v2088 = vld [vmem:[#allocation2 + $0xa4] sm:$0x1]
        %v2089 = vld [vmem:[#allocation2 + $0xa8] sm:$0xf]
        %v2090 = vld [vmem:[#allocation2 + $0xac] sm:$0xf]
        %v2091 = vld [vmem:[#allocation2 + $0xb0] sm:$0x1]
        %v2092 = vld [vmem:[#allocation2 + $0xb4] sm:$0xf]
        %v2093 = vld [vmem:[#allocation2 + $0xb8] sm:$0xf]
        %v2094 = vld [vmem:[#allocation2 + $0xbc] sm:$0x1]
        %v2143 = vunpack.c.l.b16 %v2047
        %v2144 = vunpack.c.l.b16 %v2048
        %v2145 = vunpack.c.l.b16 %v2049
        %v2146 = vunpack.c.l.b16 %v2050
        %v2147 = vunpack.c.l.b16 %v2051
        %v2148 = vunpack.c.l.b16 %v2052
        %v2149 = vunpack.c.l.b16 %v2053
        %v2150 = vunpack.c.l.b16 %v2054
        %v2151 = vunpack.c.l.b16 %v2055
        %v2152 = vunpack.c.l.b16 %v2056
        %v2153 = vunpack.c.l.b16 %v2057
        %v2154 = vunpack.c.l.b16 %v2058
        %v2155 = vunpack.c.l.b16 %v2059
        %v2156 = vunpack.c.l.b16 %v2060
        %v2157 = vunpack.c.l.b16 %v2061
        %v2158 = vunpack.c.l.b16 %v2062
        %v2159 = vunpack.c.l.b16 %v2063
        %v2160 = vunpack.c.l.b16 %v2064
        %v2161 = vunpack.c.l.b16 %v2065
        %v2162 = vunpack.c.l.b16 %v2066
        %v2163 = vunpack.c.l.b16 %v2067
        %v2164 = vunpack.c.l.b16 %v2068
        %v2165 = vunpack.c.l.b16 %v2069
        %v2166 = vunpack.c.l.b16 %v2070
        %v2167 = vunpack.c.l.b16 %v2071
        %v2168 = vunpack.c.l.b16 %v2072
        %v2169 = vunpack.c.l.b16 %v2073
        %v2170 = vunpack.c.l.b16 %v2074
        %v2171 = vunpack.c.l.b16 %v2075
        %v2172 = vunpack.c.l.b16 %v2076
        %v2173 = vunpack.c.l.b16 %v2077
        %v2174 = vunpack.c.l.b16 %v2078
        %v2175 = vunpack.c.l.b16 %v2079
        %v2176 = vunpack.c.l.b16 %v2080
        %v2177 = vunpack.c.l.b16 %v2081
        %v2178 = vunpack.c.l.b16 %v2082
        %v2179 = vunpack.c.l.b16 %v2083
        %v2180 = vunpack.c.l.b16 %v2084
        %v2181 = vunpack.c.l.b16 %v2085
        %v2182 = vunpack.c.l.b16 %v2086
        %v2183 = vunpack.c.l.b16 %v2087
        %v2184 = vunpack.c.l.b16 %v2088
        %v2185 = vunpack.c.l.b16 %v2089
        %v2186 = vunpack.c.l.b16 %v2090
        %v2187 = vunpack.c.l.b16 %v2091
        %v2188 = vunpack.c.l.b16 %v2092
        %v2189 = vunpack.c.l.b16 %v2093
        %v2190 = vunpack.c.l.b16 %v2094
        %v2191 = vpack.c.b16 %v2144, %v2143
        %v2192 = vpack.c.b16 %v2145, %v2145
        %v2193 = vpack.c.b16 %v2147, %v2146
        %v2194 = vpack.c.b16 %v2148, %v2148
        %v2195 = vpack.c.b16 %v2150, %v2149
        %v2196 = vpack.c.b16 %v2151, %v2151
        %v2197 = vpack.c.b16 %v2153, %v2152
        %v2198 = vpack.c.b16 %v2154, %v2154
        %v2199 = vpack.c.b16 %v2156, %v2155
        %v2200 = vpack.c.b16 %v2157, %v2157
        %v2201 = vpack.c.b16 %v2159, %v2158
        %v2202 = vpack.c.b16 %v2160, %v2160
        %v2203 = vpack.c.b16 %v2162, %v2161
        %v2204 = vpack.c.b16 %v2163, %v2163
        %v2205 = vpack.c.b16 %v2165, %v2164
        %v2206 = vpack.c.b16 %v2166, %v2166
        %v2207 = vpack.c.b16 %v2168, %v2167
        %v2208 = vpack.c.b16 %v2169, %v2169
        %v2209 = vpack.c.b16 %v2171, %v2170
        %v2210 = vpack.c.b16 %v2172, %v2172
        %v2211 = vpack.c.b16 %v2174, %v2173
        %v2212 = vpack.c.b16 %v2175, %v2175
        %v2213 = vpack.c.b16 %v2177, %v2176
        %v2214 = vpack.c.b16 %v2178, %v2178
        %v2215 = vpack.c.b16 %v2180, %v2179
        %v2216 = vpack.c.b16 %v2181, %v2181
        %v2217 = vpack.c.b16 %v2183, %v2182
        %v2218 = vpack.c.b16 %v2184, %v2184
        %v2219 = vpack.c.b16 %v2186, %v2185
        %v2220 = vpack.c.b16 %v2187, %v2187
        %v2221 = vpack.c.b16 %v2189, %v2188
        %v2222 = vpack.c.b16 %v2190, %v2190
        %vm2223 = vsmask.f32 7424
        %v2225 = vshrl.u32 %v2191, 16
        %v2227 = vshll.u32 %v2191, 16
        %v2229 = vrot.slane %v2227, 1
        %v2230 = vor.u32 %v2225, %v2229
        %v2232 = vshll.u32 %v2192, 16
        %v2234 = vrot.slane %v2232, 1
        %v2235 = vsel %vm2223, %v2230, %v2234
        %v2237 = vshrl.u32 %v2193, 16
        %v2239 = vshll.u32 %v2193, 16
        %v2241 = vrot.slane %v2239, 1
        %v2242 = vor.u32 %v2237, %v2241
        %v2244 = vshll.u32 %v2194, 16
        %v2246 = vrot.slane %v2244, 1
        %v2247 = vsel %vm2223, %v2242, %v2246
        %v2249 = vshrl.u32 %v2195, 16
        %v2251 = vshll.u32 %v2195, 16
        %v2253 = vrot.slane %v2251, 1
        %v2254 = vor.u32 %v2249, %v2253
        %v2256 = vshll.u32 %v2196, 16
        %v2258 = vrot.slane %v2256, 1
        %v2259 = vsel %vm2223, %v2254, %v2258
        %v2261 = vshrl.u32 %v2197, 16
        %v2263 = vshll.u32 %v2197, 16
        %v2265 = vrot.slane %v2263, 1
        %v2266 = vor.u32 %v2261, %v2265
        %v2268 = vshll.u32 %v2198, 16
        %v2270 = vrot.slane %v2268, 1
        %v2271 = vsel %vm2223, %v2266, %v2270
        %v2273 = vshrl.u32 %v2199, 16
        %v2275 = vshll.u32 %v2199, 16
        %v2277 = vrot.slane %v2275, 1
        %v2278 = vor.u32 %v2273, %v2277
        %v2280 = vshll.u32 %v2200, 16
        %v2282 = vrot.slane %v2280, 1
        %v2283 = vsel %vm2223, %v2278, %v2282
        %v2285 = vshrl.u32 %v2201, 16
        %v2287 = vshll.u32 %v2201, 16
        %v2289 = vrot.slane %v2287, 1
        %v2290 = vor.u32 %v2285, %v2289
        %v2292 = vshll.u32 %v2202, 16
        %v2294 = vrot.slane %v2292, 1
        %v2295 = vsel %vm2223, %v2290, %v2294
        %v2297 = vshrl.u32 %v2203, 16
        %v2299 = vshll.u32 %v2203, 16
        %v2301 = vrot.slane %v2299, 1
        %v2302 = vor.u32 %v2297, %v2301
        %v2304 = vshll.u32 %v2204, 16
        %v2306 = vrot.slane %v2304, 1
        %v2307 = vsel %vm2223, %v2302, %v2306
        %v2309 = vshrl.u32 %v2205, 16
        %v2311 = vshll.u32 %v2205, 16
        %v2313 = vrot.slane %v2311, 1
        %v2314 = vor.u32 %v2309, %v2313
        %v2316 = vshll.u32 %v2206, 16
        %v2318 = vrot.slane %v2316, 1
        %v2319 = vsel %vm2223, %v2314, %v2318
        %v2321 = vshrl.u32 %v2207, 16
        %v2323 = vshll.u32 %v2207, 16
        %v2325 = vrot.slane %v2323, 1
        %v2326 = vor.u32 %v2321, %v2325
        %v2328 = vshll.u32 %v2208, 16
        %v2330 = vrot.slane %v2328, 1
        %v2331 = vsel %vm2223, %v2326, %v2330
        %v2333 = vshrl.u32 %v2209, 16
        %v2335 = vshll.u32 %v2209, 16
        %v2337 = vrot.slane %v2335, 1
        %v2338 = vor.u32 %v2333, %v2337
        %v2340 = vshll.u32 %v2210, 16
        %v2342 = vrot.slane %v2340, 1
        %v2343 = vsel %vm2223, %v2338, %v2342
        %v2345 = vshrl.u32 %v2211, 16
        %v2347 = vshll.u32 %v2211, 16
        %v2349 = vrot.slane %v2347, 1
        %v2350 = vor.u32 %v2345, %v2349
        %v2352 = vshll.u32 %v2212, 16
        %v2354 = vrot.slane %v2352, 1
        %v2355 = vsel %vm2223, %v2350, %v2354
        %v2357 = vshrl.u32 %v2213, 16
        %v2359 = vshll.u32 %v2213, 16
        %v2361 = vrot.slane %v2359, 1
        %v2362 = vor.u32 %v2357, %v2361
        %v2364 = vshll.u32 %v2214, 16
        %v2366 = vrot.slane %v2364, 1
        %v2367 = vsel %vm2223, %v2362, %v2366
        %v2369 = vshrl.u32 %v2215, 16
        %v2371 = vshll.u32 %v2215, 16
        %v2373 = vrot.slane %v2371, 1
        %v2374 = vor.u32 %v2369, %v2373
        %v2376 = vshll.u32 %v2216, 16
        %v2378 = vrot.slane %v2376, 1
        %v2379 = vsel %vm2223, %v2374, %v2378
        %v2381 = vshrl.u32 %v2217, 16
        %v2383 = vshll.u32 %v2217, 16
        %v2385 = vrot.slane %v2383, 1
        %v2386 = vor.u32 %v2381, %v2385
        %v2388 = vshll.u32 %v2218, 16
        %v2390 = vrot.slane %v2388, 1
        %v2391 = vsel %vm2223, %v2386, %v2390
        %v2393 = vshrl.u32 %v2219, 16
        %v2395 = vshll.u32 %v2219, 16
        %v2397 = vrot.slane %v2395, 1
        %v2398 = vor.u32 %v2393, %v2397
        %v2400 = vshll.u32 %v2220, 16
        %v2402 = vrot.slane %v2400, 1
        %v2403 = vsel %vm2223, %v2398, %v2402
        %v2405 = vshrl.u32 %v2221, 16
        %v2407 = vshll.u32 %v2221, 16
        %v2409 = vrot.slane %v2407, 1
        %v2410 = vor.u32 %v2405, %v2409
        %v2412 = vshll.u32 %v2222, 16
        %v2414 = vrot.slane %v2412, 1
        %v2415 = vsel %vm2223, %v2410, %v2414
        %2432 = vst [vmem:[#allocation3 + $0x8] sm:$0xff] %v2235
        %2433 = vst [vmem:[#allocation3 + $0x50] sm:$0xff] %v2247
        %2434 = vst [vmem:[#allocation3 + $0x98] sm:$0xff] %v2259
        %2435 = vst [vmem:[#allocation3 + $0xe0] sm:$0xff] %v2271
        %2436 = vst [vmem:[#allocation3 + $0x128] sm:$0xff] %v2283
        %2437 = vst [vmem:[#allocation3 + $0x170] sm:$0xff] %v2295
        %2438 = vst [vmem:[#allocation3 + $0x1b8] sm:$0xff] %v2307
        %2439 = vst [vmem:[#allocation3 + $0x200] sm:$0xff] %v2319
        %2440 = vst [vmem:[#allocation3 + $0x248] sm:$0xff] %v2331
        %2441 = vst [vmem:[#allocation3 + $0x290] sm:$0xff] %v2343
        %2442 = vst [vmem:[#allocation3 + $0x2d8] sm:$0xff] %v2355
        %2443 = vst [vmem:[#allocation3 + $0x320] sm:$0xff] %v2367
        %2444 = vst [vmem:[#allocation3 + $0x368] sm:$0xff] %v2379
        %2445 = vst [vmem:[#allocation3 + $0x3b0] sm:$0xff] %v2391
        %2446 = vst [vmem:[#allocation3 + $0x3f8] sm:$0xff] %v2403
        %2447 = vst [vmem:[#allocation3 + $0x440] sm:$0xff] %v2415
        %v2448 = vld [vmem:[#allocation2] sm:$0xe]
        %v2449 = vld [vmem:[#allocation2 + $0x4] sm:$0xf]
        %v2450 = vld [vmem:[#allocation2 + $0x8] sm:$0x1]
        %v2451 = vld [vmem:[#allocation2 + $0xc] sm:$0xe]
        %v2452 = vld [vmem:[#allocation2 + $0x10] sm:$0xf]
        %v2453 = vld [vmem:[#allocation2 + $0x14] sm:$0x1]
        %v2454 = vld [vmem:[#allocation2 + $0x18] sm:$0xe]
        %v2455 = vld [vmem:[#allocation2 + $0x1c] sm:$0xf]
        %v2456 = vld [vmem:[#allocation2 + $0x20] sm:$0x1]
        %v2457 = vld [vmem:[#allocation2 + $0x24] sm:$0xe]
        %v2458 = vld [vmem:[#allocation2 + $0x28] sm:$0xf]
        %v2459 = vld [vmem:[#allocation2 + $0x2c] sm:$0x1]
        %v2460 = vld [vmem:[#allocation2 + $0x30] sm:$0xe]
        %v2461 = vld [vmem:[#allocation2 + $0x34] sm:$0xf]
        %v2462 = vld [vmem:[#allocation2 + $0x38] sm:$0x1]
        %v2463 = vld [vmem:[#allocation2 + $0x3c] sm:$0xe]
        %v2464 = vld [vmem:[#allocation2 + $0x40] sm:$0xf]
        %v2465 = vld [vmem:[#allocation2 + $0x44] sm:$0x1]
        %v2466 = vld [vmem:[#allocation2 + $0x48] sm:$0xe]
        %v2467 = vld [vmem:[#allocation2 + $0x4c] sm:$0xf]
        %v2468 = vld [vmem:[#allocation2 + $0x50] sm:$0x1]
        %v2469 = vld [vmem:[#allocation2 + $0x54] sm:$0xe]
        %v2470 = vld [vmem:[#allocation2 + $0x58] sm:$0xf]
        %v2471 = vld [vmem:[#allocation2 + $0x5c] sm:$0x1]
        %v2472 = vld [vmem:[#allocation2 + $0x60] sm:$0xe]
        %v2473 = vld [vmem:[#allocation2 + $0x64] sm:$0xf]
        %v2474 = vld [vmem:[#allocation2 + $0x68] sm:$0x1]
        %v2475 = vld [vmem:[#allocation2 + $0x6c] sm:$0xe]
        %v2476 = vld [vmem:[#allocation2 + $0x70] sm:$0xf]
        %v2477 = vld [vmem:[#allocation2 + $0x74] sm:$0x1]
        %v2478 = vld [vmem:[#allocation2 + $0x78] sm:$0xe]
        %v2479 = vld [vmem:[#allocation2 + $0x7c] sm:$0xf]
        %v2480 = vld [vmem:[#allocation2 + $0x80] sm:$0x1]
        %v2481 = vld [vmem:[#allocation2 + $0x84] sm:$0xe]
        %v2482 = vld [vmem:[#allocation2 + $0x88] sm:$0xf]
        %v2483 = vld [vmem:[#allocation2 + $0x8c] sm:$0x1]
        %v2484 = vld [vmem:[#allocation2 + $0x90] sm:$0xe]
        %v2485 = vld [vmem:[#allocation2 + $0x94] sm:$0xf]
        %v2486 = vld [vmem:[#allocation2 + $0x98] sm:$0x1]
        %v2487 = vld [vmem:[#allocation2 + $0x9c] sm:$0xe]
        %v2488 = vld [vmem:[#allocation2 + $0xa0] sm:$0xf]
        %v2489 = vld [vmem:[#allocation2 + $0xa4] sm:$0x1]
        %v2490 = vld [vmem:[#allocation2 + $0xa8] sm:$0xe]
        %v2491 = vld [vmem:[#allocation2 + $0xac] sm:$0xf]
        %v2492 = vld [vmem:[#allocation2 + $0xb0] sm:$0x1]
        %v2493 = vld [vmem:[#allocation2 + $0xb4] sm:$0xe]
        %v2494 = vld [vmem:[#allocation2 + $0xb8] sm:$0xf]
        %v2495 = vld [vmem:[#allocation2 + $0xbc] sm:$0x1]
        %v2544 = vunpack.c.l.b16 %v2448
        %v2545 = vunpack.c.l.b16 %v2449
        %v2546 = vunpack.c.l.b16 %v2450
        %v2547 = vunpack.c.l.b16 %v2451
        %v2548 = vunpack.c.l.b16 %v2452
        %v2549 = vunpack.c.l.b16 %v2453
        %v2550 = vunpack.c.l.b16 %v2454
        %v2551 = vunpack.c.l.b16 %v2455
        %v2552 = vunpack.c.l.b16 %v2456
        %v2553 = vunpack.c.l.b16 %v2457
        %v2554 = vunpack.c.l.b16 %v2458
        %v2555 = vunpack.c.l.b16 %v2459
        %v2556 = vunpack.c.l.b16 %v2460
        %v2557 = vunpack.c.l.b16 %v2461
        %v2558 = vunpack.c.l.b16 %v2462
        %v2559 = vunpack.c.l.b16 %v2463
        %v2560 = vunpack.c.l.b16 %v2464
        %v2561 = vunpack.c.l.b16 %v2465
        %v2562 = vunpack.c.l.b16 %v2466
        %v2563 = vunpack.c.l.b16 %v2467
        %v2564 = vunpack.c.l.b16 %v2468
        %v2565 = vunpack.c.l.b16 %v2469
        %v2566 = vunpack.c.l.b16 %v2470
        %v2567 = vunpack.c.l.b16 %v2471
        %v2568 = vunpack.c.l.b16 %v2472
        %v2569 = vunpack.c.l.b16 %v2473
        %v2570 = vunpack.c.l.b16 %v2474
        %v2571 = vunpack.c.l.b16 %v2475
        %v2572 = vunpack.c.l.b16 %v2476
        %v2573 = vunpack.c.l.b16 %v2477
        %v2574 = vunpack.c.l.b16 %v2478
        %v2575 = vunpack.c.l.b16 %v2479
        %v2576 = vunpack.c.l.b16 %v2480
        %v2577 = vunpack.c.l.b16 %v2481
        %v2578 = vunpack.c.l.b16 %v2482
        %v2579 = vunpack.c.l.b16 %v2483
        %v2580 = vunpack.c.l.b16 %v2484
        %v2581 = vunpack.c.l.b16 %v2485
        %v2582 = vunpack.c.l.b16 %v2486
        %v2583 = vunpack.c.l.b16 %v2487
        %v2584 = vunpack.c.l.b16 %v2488
        %v2585 = vunpack.c.l.b16 %v2489
        %v2586 = vunpack.c.l.b16 %v2490
        %v2587 = vunpack.c.l.b16 %v2491
        %v2588 = vunpack.c.l.b16 %v2492
        %v2589 = vunpack.c.l.b16 %v2493
        %v2590 = vunpack.c.l.b16 %v2494
        %v2591 = vunpack.c.l.b16 %v2495
        %v2592 = vpack.c.b16 %v2545, %v2544
        %v2593 = vpack.c.b16 %v2546, %v2546
        %v2594 = vpack.c.b16 %v2548, %v2547
        %v2595 = vpack.c.b16 %v2549, %v2549
        %v2596 = vpack.c.b16 %v2551, %v2550
        %v2597 = vpack.c.b16 %v2552, %v2552
        %v2598 = vpack.c.b16 %v2554, %v2553
        %v2599 = vpack.c.b16 %v2555, %v2555
        %v2600 = vpack.c.b16 %v2557, %v2556
        %v2601 = vpack.c.b16 %v2558, %v2558
        %v2602 = vpack.c.b16 %v2560, %v2559
        %v2603 = vpack.c.b16 %v2561, %v2561
        %v2604 = vpack.c.b16 %v2563, %v2562
        %v2605 = vpack.c.b16 %v2564, %v2564
        %v2606 = vpack.c.b16 %v2566, %v2565
        %v2607 = vpack.c.b16 %v2567, %v2567
        %v2608 = vpack.c.b16 %v2569, %v2568
        %v2609 = vpack.c.b16 %v2570, %v2570
        %v2610 = vpack.c.b16 %v2572, %v2571
        %v2611 = vpack.c.b16 %v2573, %v2573
        %v2612 = vpack.c.b16 %v2575, %v2574
        %v2613 = vpack.c.b16 %v2576, %v2576
        %v2614 = vpack.c.b16 %v2578, %v2577
        %v2615 = vpack.c.b16 %v2579, %v2579
        %v2616 = vpack.c.b16 %v2581, %v2580
        %v2617 = vpack.c.b16 %v2582, %v2582
        %v2618 = vpack.c.b16 %v2584, %v2583
        %v2619 = vpack.c.b16 %v2585, %v2585
        %v2620 = vpack.c.b16 %v2587, %v2586
        %v2621 = vpack.c.b16 %v2588, %v2588
        %v2622 = vpack.c.b16 %v2590, %v2589
        %v2623 = vpack.c.b16 %v2591, %v2591
        %vm2624 = vcmask 1046528
        %v2625 = vrot.slane %v2592, 1
        %v2626 = vrot.slane %v2593, 1
        %v2627 = vsel %vm2624, %v2625, %v2626
        %v2628 = vrot.slane %v2594, 1
        %v2629 = vrot.slane %v2595, 1
        %v2630 = vsel %vm2624, %v2628, %v2629
        %v2631 = vrot.slane %v2596, 1
        %v2632 = vrot.slane %v2597, 1
        %v2633 = vsel %vm2624, %v2631, %v2632
        %v2634 = vrot.slane %v2598, 1
        %v2635 = vrot.slane %v2599, 1
        %v2636 = vsel %vm2624, %v2634, %v2635
        %v2637 = vrot.slane %v2600, 1
        %v2638 = vrot.slane %v2601, 1
        %v2639 = vsel %vm2624, %v2637, %v2638
        %v2640 = vrot.slane %v2602, 1
        %v2641 = vrot.slane %v2603, 1
        %v2642 = vsel %vm2624, %v2640, %v2641
        %v2643 = vrot.slane %v2604, 1
        %v2644 = vrot.slane %v2605, 1
        %v2645 = vsel %vm2624, %v2643, %v2644
        %v2646 = vrot.slane %v2606, 1
        %v2647 = vrot.slane %v2607, 1
        %v2648 = vsel %vm2624, %v2646, %v2647
        %v2649 = vrot.slane %v2608, 1
        %v2650 = vrot.slane %v2609, 1
        %v2651 = vsel %vm2624, %v2649, %v2650
        %v2652 = vrot.slane %v2610, 1
        %v2653 = vrot.slane %v2611, 1
        %v2654 = vsel %vm2624, %v2652, %v2653
        %v2655 = vrot.slane %v2612, 1
        %v2656 = vrot.slane %v2613, 1
        %v2657 = vsel %vm2624, %v2655, %v2656
        %v2658 = vrot.slane %v2614, 1
        %v2659 = vrot.slane %v2615, 1
        %v2660 = vsel %vm2624, %v2658, %v2659
        %v2661 = vrot.slane %v2616, 1
        %v2662 = vrot.slane %v2617, 1
        %v2663 = vsel %vm2624, %v2661, %v2662
        %v2664 = vrot.slane %v2618, 1
        %v2665 = vrot.slane %v2619, 1
        %v2666 = vsel %vm2624, %v2664, %v2665
        %v2667 = vrot.slane %v2620, 1
        %v2668 = vrot.slane %v2621, 1
        %v2669 = vsel %vm2624, %v2667, %v2668
        %v2670 = vrot.slane %v2622, 1
        %v2671 = vrot.slane %v2623, 1
        %v2672 = vsel %vm2624, %v2670, %v2671
        %2689 = vst [vmem:[#allocation3 + $0x10] sm:$0xff] %v2627
        %2690 = vst [vmem:[#allocation3 + $0x58] sm:$0xff] %v2630
        %2691 = vst [vmem:[#allocation3 + $0xa0] sm:$0xff] %v2633
        %2692 = vst [vmem:[#allocation3 + $0xe8] sm:$0xff] %v2636
        %2693 = vst [vmem:[#allocation3 + $0x130] sm:$0xff] %v2639
        %2694 = vst [vmem:[#allocation3 + $0x178] sm:$0xff] %v2642
        %2695 = vst [vmem:[#allocation3 + $0x1c0] sm:$0xff] %v2645
        %2696 = vst [vmem:[#allocation3 + $0x208] sm:$0xff] %v2648
        %2697 = vst [vmem:[#allocation3 + $0x250] sm:$0xff] %v2651
        %2698 = vst [vmem:[#allocation3 + $0x298] sm:$0xff] %v2654
        %2699 = vst [vmem:[#allocation3 + $0x2e0] sm:$0xff] %v2657
        %2700 = vst [vmem:[#allocation3 + $0x328] sm:$0xff] %v2660
        %2701 = vst [vmem:[#allocation3 + $0x370] sm:$0xff] %v2663
        %2702 = vst [vmem:[#allocation3 + $0x3b8] sm:$0xff] %v2666
        %2703 = vst [vmem:[#allocation3 + $0x400] sm:$0xff] %v2669
        %2704 = vst [vmem:[#allocation3 + $0x448] sm:$0xff] %v2672
        %v2705 = vld [vmem:[%s1785] sm:$0xf]
        %v2706 = vld [vmem:[%s1785 + $0x4] sm:$0xf]
        %v2707 = vld [vmem:[%s1785 + $0xc] sm:$0xf]
        %v2708 = vld [vmem:[%s1785 + $0x10] sm:$0xf]
        %v2709 = vld [vmem:[%s1785 + $0x18] sm:$0xf]
        %v2710 = vld [vmem:[%s1785 + $0x1c] sm:$0xf]
        %v2711 = vld [vmem:[%s1785 + $0x24] sm:$0xf]
        %v2712 = vld [vmem:[%s1785 + $0x28] sm:$0xf]
        %v2713 = vld [vmem:[%s1785 + $0x30] sm:$0xf]
        %v2714 = vld [vmem:[%s1785 + $0x34] sm:$0xf]
        %v2715 = vld [vmem:[%s1785 + $0x3c] sm:$0xf]
        %v2716 = vld [vmem:[%s1785 + $0x40] sm:$0xf]
        %v2717 = vld [vmem:[%s1785 + $0x48] sm:$0xf]
        %v2718 = vld [vmem:[%s1785 + $0x4c] sm:$0xf]
        %v2719 = vld [vmem:[%s1785 + $0x54] sm:$0xf]
        %v2720 = vld [vmem:[%s1785 + $0x58] sm:$0xf]
        %v2721 = vld [vmem:[%s1785 + $0x60] sm:$0xf]
        %v2722 = vld [vmem:[%s1785 + $0x64] sm:$0xf]
        %v2723 = vld [vmem:[%s1785 + $0x6c] sm:$0xf]
        %v2724 = vld [vmem:[%s1785 + $0x70] sm:$0xf]
        %v2725 = vld [vmem:[%s1785 + $0x78] sm:$0xf]
        %v2726 = vld [vmem:[%s1785 + $0x7c] sm:$0xf]
        %v2727 = vld [vmem:[%s1785 + $0x84] sm:$0xf]
        %v2728 = vld [vmem:[%s1785 + $0x88] sm:$0xf]
        %v2729 = vld [vmem:[%s1785 + $0x90] sm:$0xf]
        %v2730 = vld [vmem:[%s1785 + $0x94] sm:$0xf]
        %v2731 = vld [vmem:[%s1785 + $0x9c] sm:$0xf]
        %v2732 = vld [vmem:[%s1785 + $0xa0] sm:$0xf]
        %v2733 = vld [vmem:[%s1785 + $0xa8] sm:$0xf]
        %v2734 = vld [vmem:[%s1785 + $0xac] sm:$0xf]
        %v2735 = vld [vmem:[%s1785 + $0xb4] sm:$0xf]
        %v2736 = vld [vmem:[%s1785 + $0xb8] sm:$0xf]
        %v2769 = vunpack.c.l.b16 %v2705
        %v2770 = vunpack.c.l.b16 %v2706
        %v2771 = vunpack.c.l.b16 %v2707
        %v2772 = vunpack.c.l.b16 %v2708
        %v2773 = vunpack.c.l.b16 %v2709
        %v2774 = vunpack.c.l.b16 %v2710
        %v2775 = vunpack.c.l.b16 %v2711
        %v2776 = vunpack.c.l.b16 %v2712
        %v2777 = vunpack.c.l.b16 %v2713
        %v2778 = vunpack.c.l.b16 %v2714
        %v2779 = vunpack.c.l.b16 %v2715
        %v2780 = vunpack.c.l.b16 %v2716
        %v2781 = vunpack.c.l.b16 %v2717
        %v2782 = vunpack.c.l.b16 %v2718
        %v2783 = vunpack.c.l.b16 %v2719
        %v2784 = vunpack.c.l.b16 %v2720
        %v2785 = vunpack.c.l.b16 %v2721
        %v2786 = vunpack.c.l.b16 %v2722
        %v2787 = vunpack.c.l.b16 %v2723
        %v2788 = vunpack.c.l.b16 %v2724
        %v2789 = vunpack.c.l.b16 %v2725
        %v2790 = vunpack.c.l.b16 %v2726
        %v2791 = vunpack.c.l.b16 %v2727
        %v2792 = vunpack.c.l.b16 %v2728
        %v2793 = vunpack.c.l.b16 %v2729
        %v2794 = vunpack.c.l.b16 %v2730
        %v2795 = vunpack.c.l.b16 %v2731
        %v2796 = vunpack.c.l.b16 %v2732
        %v2797 = vunpack.c.l.b16 %v2733
        %v2798 = vunpack.c.l.b16 %v2734
        %v2799 = vunpack.c.l.b16 %v2735
        %v2800 = vunpack.c.l.b16 %v2736
        %v2801 = vpack.c.b16 %v2770, %v2769
        %v2802 = vpack.c.b16 %v2772, %v2771
        %v2803 = vpack.c.b16 %v2774, %v2773
        %v2804 = vpack.c.b16 %v2776, %v2775
        %v2805 = vpack.c.b16 %v2778, %v2777
        %v2806 = vpack.c.b16 %v2780, %v2779
        %v2807 = vpack.c.b16 %v2782, %v2781
        %v2808 = vpack.c.b16 %v2784, %v2783
        %v2809 = vpack.c.b16 %v2786, %v2785
        %v2810 = vpack.c.b16 %v2788, %v2787
        %v2811 = vpack.c.b16 %v2790, %v2789
        %v2812 = vpack.c.b16 %v2792, %v2791
        %v2813 = vpack.c.b16 %v2794, %v2793
        %v2814 = vpack.c.b16 %v2796, %v2795
        %v2815 = vpack.c.b16 %v2798, %v2797
        %v2816 = vpack.c.b16 %v2800, %v2799
        %2833 = vst [vmem:[#allocation3 + $0x18] sm:$0xff] %v2801
        %2834 = vst [vmem:[#allocation3 + $0x60] sm:$0xff] %v2802
        %2835 = vst [vmem:[#allocation3 + $0xa8] sm:$0xff] %v2803
        %2836 = vst [vmem:[#allocation3 + $0xf0] sm:$0xff] %v2804
        %2837 = vst [vmem:[#allocation3 + $0x138] sm:$0xff] %v2805
        %2838 = vst [vmem:[#allocation3 + $0x180] sm:$0xff] %v2806
        %2839 = vst [vmem:[#allocation3 + $0x1c8] sm:$0xff] %v2807
        %2840 = vst [vmem:[#allocation3 + $0x210] sm:$0xff] %v2808
        %2841 = vst [vmem:[#allocation3 + $0x258] sm:$0xff] %v2809
        %2842 = vst [vmem:[#allocation3 + $0x2a0] sm:$0xff] %v2810
        %2843 = vst [vmem:[#allocation3 + $0x2e8] sm:$0xff] %v2811
        %2844 = vst [vmem:[#allocation3 + $0x330] sm:$0xff] %v2812
        %2845 = vst [vmem:[#allocation3 + $0x378] sm:$0xff] %v2813
        %2846 = vst [vmem:[#allocation3 + $0x3c0] sm:$0xff] %v2814
        %2847 = vst [vmem:[#allocation3 + $0x408] sm:$0xff] %v2815
        %2848 = vst [vmem:[#allocation3 + $0x450] sm:$0xff] %v2816
        %v2849 = vld [vmem:[%s1785] sm:$0xf]
        %v2850 = vld [vmem:[%s1785 + $0x4] sm:$0xf]
        %v2851 = vld [vmem:[%s1785 + $0x8] sm:$0x1]
        %v2852 = vld [vmem:[%s1785 + $0xc] sm:$0xf]
        %v2853 = vld [vmem:[%s1785 + $0x10] sm:$0xf]
        %v2854 = vld [vmem:[%s1785 + $0x14] sm:$0x1]
        %v2855 = vld [vmem:[%s1785 + $0x18] sm:$0xf]
        %v2856 = vld [vmem:[%s1785 + $0x1c] sm:$0xf]
        %v2857 = vld [vmem:[%s1785 + $0x20] sm:$0x1]
        %v2858 = vld [vmem:[%s1785 + $0x24] sm:$0xf]
        %v2859 = vld [vmem:[%s1785 + $0x28] sm:$0xf]
        %v2860 = vld [vmem:[%s1785 + $0x2c] sm:$0x1]
        %v2861 = vld [vmem:[%s1785 + $0x30] sm:$0xf]
        %v2862 = vld [vmem:[%s1785 + $0x34] sm:$0xf]
        %v2863 = vld [vmem:[%s1785 + $0x38] sm:$0x1]
        %v2864 = vld [vmem:[%s1785 + $0x3c] sm:$0xf]
        %v2865 = vld [vmem:[%s1785 + $0x40] sm:$0xf]
        %v2866 = vld [vmem:[%s1785 + $0x44] sm:$0x1]
        %v2867 = vld [vmem:[%s1785 + $0x48] sm:$0xf]
        %v2868 = vld [vmem:[%s1785 + $0x4c] sm:$0xf]
        %v2869 = vld [vmem:[%s1785 + $0x50] sm:$0x1]
        %v2870 = vld [vmem:[%s1785 + $0x54] sm:$0xf]
        %v2871 = vld [vmem:[%s1785 + $0x58] sm:$0xf]
        %v2872 = vld [vmem:[%s1785 + $0x5c] sm:$0x1]
        %v2873 = vld [vmem:[%s1785 + $0x60] sm:$0xf]
        %v2874 = vld [vmem:[%s1785 + $0x64] sm:$0xf]
        %v2875 = vld [vmem:[%s1785 + $0x68] sm:$0x1]
        %v2876 = vld [vmem:[%s1785 + $0x6c] sm:$0xf]
        %v2877 = vld [vmem:[%s1785 + $0x70] sm:$0xf]
        %v2878 = vld [vmem:[%s1785 + $0x74] sm:$0x1]
        %v2879 = vld [vmem:[%s1785 + $0x78] sm:$0xf]
        %v2880 = vld [vmem:[%s1785 + $0x7c] sm:$0xf]
        %v2881 = vld [vmem:[%s1785 + $0x80] sm:$0x1]
        %v2882 = vld [vmem:[%s1785 + $0x84] sm:$0xf]
        %v2883 = vld [vmem:[%s1785 + $0x88] sm:$0xf]
        %v2884 = vld [vmem:[%s1785 + $0x8c] sm:$0x1]
        %v2885 = vld [vmem:[%s1785 + $0x90] sm:$0xf]
        %v2886 = vld [vmem:[%s1785 + $0x94] sm:$0xf]
        %v2887 = vld [vmem:[%s1785 + $0x98] sm:$0x1]
        %v2888 = vld [vmem:[%s1785 + $0x9c] sm:$0xf]
        %v2889 = vld [vmem:[%s1785 + $0xa0] sm:$0xf]
        %v2890 = vld [vmem:[%s1785 + $0xa4] sm:$0x1]
        %v2891 = vld [vmem:[%s1785 + $0xa8] sm:$0xf]
        %v2892 = vld [vmem:[%s1785 + $0xac] sm:$0xf]
        %v2893 = vld [vmem:[%s1785 + $0xb0] sm:$0x1]
        %v2894 = vld [vmem:[%s1785 + $0xb4] sm:$0xf]
        %v2895 = vld [vmem:[%s1785 + $0xb8] sm:$0xf]
        %v2896 = vld [vmem:[%s1785 + $0xbc] sm:$0x1]
        %v2945 = vunpack.c.l.b16 %v2849
        %v2946 = vunpack.c.l.b16 %v2850
        %v2947 = vunpack.c.l.b16 %v2851
        %v2948 = vunpack.c.l.b16 %v2852
        %v2949 = vunpack.c.l.b16 %v2853
        %v2950 = vunpack.c.l.b16 %v2854
        %v2951 = vunpack.c.l.b16 %v2855
        %v2952 = vunpack.c.l.b16 %v2856
        %v2953 = vunpack.c.l.b16 %v2857
        %v2954 = vunpack.c.l.b16 %v2858
        %v2955 = vunpack.c.l.b16 %v2859
        %v2956 = vunpack.c.l.b16 %v2860
        %v2957 = vunpack.c.l.b16 %v2861
        %v2958 = vunpack.c.l.b16 %v2862
        %v2959 = vunpack.c.l.b16 %v2863
        %v2960 = vunpack.c.l.b16 %v2864
        %v2961 = vunpack.c.l.b16 %v2865
        %v2962 = vunpack.c.l.b16 %v2866
        %v2963 = vunpack.c.l.b16 %v2867
        %v2964 = vunpack.c.l.b16 %v2868
        %v2965 = vunpack.c.l.b16 %v2869
        %v2966 = vunpack.c.l.b16 %v2870
        %v2967 = vunpack.c.l.b16 %v2871
        %v2968 = vunpack.c.l.b16 %v2872
        %v2969 = vunpack.c.l.b16 %v2873
        %v2970 = vunpack.c.l.b16 %v2874
        %v2971 = vunpack.c.l.b16 %v2875
        %v2972 = vunpack.c.l.b16 %v2876
        %v2973 = vunpack.c.l.b16 %v2877
        %v2974 = vunpack.c.l.b16 %v2878
        %v2975 = vunpack.c.l.b16 %v2879
        %v2976 = vunpack.c.l.b16 %v2880
        %v2977 = vunpack.c.l.b16 %v2881
        %v2978 = vunpack.c.l.b16 %v2882
        %v2979 = vunpack.c.l.b16 %v2883
        %v2980 = vunpack.c.l.b16 %v2884
        %v2981 = vunpack.c.l.b16 %v2885
        %v2982 = vunpack.c.l.b16 %v2886
        %v2983 = vunpack.c.l.b16 %v2887
        %v2984 = vunpack.c.l.b16 %v2888
        %v2985 = vunpack.c.l.b16 %v2889
        %v2986 = vunpack.c.l.b16 %v2890
        %v2987 = vunpack.c.l.b16 %v2891
        %v2988 = vunpack.c.l.b16 %v2892
        %v2989 = vunpack.c.l.b16 %v2893
        %v2990 = vunpack.c.l.b16 %v2894
        %v2991 = vunpack.c.l.b16 %v2895
        %v2992 = vunpack.c.l.b16 %v2896
        %v2993 = vpack.c.b16 %v2946, %v2945
        %v2994 = vpack.c.b16 %v2947, %v2947
        %v2995 = vpack.c.b16 %v2949, %v2948
        %v2996 = vpack.c.b16 %v2950, %v2950
        %v2997 = vpack.c.b16 %v2952, %v2951
        %v2998 = vpack.c.b16 %v2953, %v2953
        %v2999 = vpack.c.b16 %v2955, %v2954
        %v3000 = vpack.c.b16 %v2956, %v2956
        %v3001 = vpack.c.b16 %v2958, %v2957
        %v3002 = vpack.c.b16 %v2959, %v2959
        %v3003 = vpack.c.b16 %v2961, %v2960
        %v3004 = vpack.c.b16 %v2962, %v2962
        %v3005 = vpack.c.b16 %v2964, %v2963
        %v3006 = vpack.c.b16 %v2965, %v2965
        %v3007 = vpack.c.b16 %v2967, %v2966
        %v3008 = vpack.c.b16 %v2968, %v2968
        %v3009 = vpack.c.b16 %v2970, %v2969
        %v3010 = vpack.c.b16 %v2971, %v2971
        %v3011 = vpack.c.b16 %v2973, %v2972
        %v3012 = vpack.c.b16 %v2974, %v2974
        %v3013 = vpack.c.b16 %v2976, %v2975
        %v3014 = vpack.c.b16 %v2977, %v2977
        %v3015 = vpack.c.b16 %v2979, %v2978
        %v3016 = vpack.c.b16 %v2980, %v2980
        %v3017 = vpack.c.b16 %v2982, %v2981
        %v3018 = vpack.c.b16 %v2983, %v2983
        %v3019 = vpack.c.b16 %v2985, %v2984
        %v3020 = vpack.c.b16 %v2986, %v2986
        %v3021 = vpack.c.b16 %v2988, %v2987
        %v3022 = vpack.c.b16 %v2989, %v2989
        %v3023 = vpack.c.b16 %v2991, %v2990
        %v3024 = vpack.c.b16 %v2992, %v2992
        %v3026 = vshrl.u32 %v2993, 16
        %v3028 = vshll.u32 %v2993, 16
        %v3030 = vrot.slane %v3028, 1
        %v3031 = vor.u32 %v3026, %v3030
        %v3033 = vshll.u32 %v2994, 16
        %v3035 = vrot.slane %v3033, 1
        %v3036 = vsel %vm2223, %v3031, %v3035
        %v3038 = vshrl.u32 %v2995, 16
        %v3040 = vshll.u32 %v2995, 16
        %v3042 = vrot.slane %v3040, 1
        %v3043 = vor.u32 %v3038, %v3042
        %v3045 = vshll.u32 %v2996, 16
        %v3047 = vrot.slane %v3045, 1
        %v3048 = vsel %vm2223, %v3043, %v3047
        %v3050 = vshrl.u32 %v2997, 16
        %v3052 = vshll.u32 %v2997, 16
        %v3054 = vrot.slane %v3052, 1
        %v3055 = vor.u32 %v3050, %v3054
        %v3057 = vshll.u32 %v2998, 16
        %v3059 = vrot.slane %v3057, 1
        %v3060 = vsel %vm2223, %v3055, %v3059
        %v3062 = vshrl.u32 %v2999, 16
        %v3064 = vshll.u32 %v2999, 16
        %v3066 = vrot.slane %v3064, 1
        %v3067 = vor.u32 %v3062, %v3066
        %v3069 = vshll.u32 %v3000, 16
        %v3071 = vrot.slane %v3069, 1
        %v3072 = vsel %vm2223, %v3067, %v3071
        %v3074 = vshrl.u32 %v3001, 16
        %v3076 = vshll.u32 %v3001, 16
        %v3078 = vrot.slane %v3076, 1
        %v3079 = vor.u32 %v3074, %v3078
        %v3081 = vshll.u32 %v3002, 16
        %v3083 = vrot.slane %v3081, 1
        %v3084 = vsel %vm2223, %v3079, %v3083
        %v3086 = vshrl.u32 %v3003, 16
        %v3088 = vshll.u32 %v3003, 16
        %v3090 = vrot.slane %v3088, 1
        %v3091 = vor.u32 %v3086, %v3090
        %v3093 = vshll.u32 %v3004, 16
        %v3095 = vrot.slane %v3093, 1
        %v3096 = vsel %vm2223, %v3091, %v3095
        %v3098 = vshrl.u32 %v3005, 16
        %v3100 = vshll.u32 %v3005, 16
        %v3102 = vrot.slane %v3100, 1
        %v3103 = vor.u32 %v3098, %v3102
        %v3105 = vshll.u32 %v3006, 16
        %v3107 = vrot.slane %v3105, 1
        %v3108 = vsel %vm2223, %v3103, %v3107
        %v3110 = vshrl.u32 %v3007, 16
        %v3112 = vshll.u32 %v3007, 16
        %v3114 = vrot.slane %v3112, 1
        %v3115 = vor.u32 %v3110, %v3114
        %v3117 = vshll.u32 %v3008, 16
        %v3119 = vrot.slane %v3117, 1
        %v3120 = vsel %vm2223, %v3115, %v3119
        %v3122 = vshrl.u32 %v3009, 16
        %v3124 = vshll.u32 %v3009, 16
        %v3126 = vrot.slane %v3124, 1
        %v3127 = vor.u32 %v3122, %v3126
        %v3129 = vshll.u32 %v3010, 16
        %v3131 = vrot.slane %v3129, 1
        %v3132 = vsel %vm2223, %v3127, %v3131
        %v3134 = vshrl.u32 %v3011, 16
        %v3136 = vshll.u32 %v3011, 16
        %v3138 = vrot.slane %v3136, 1
        %v3139 = vor.u32 %v3134, %v3138
        %v3141 = vshll.u32 %v3012, 16
        %v3143 = vrot.slane %v3141, 1
        %v3144 = vsel %vm2223, %v3139, %v3143
        %v3146 = vshrl.u32 %v3013, 16
        %v3148 = vshll.u32 %v3013, 16
        %v3150 = vrot.slane %v3148, 1
        %v3151 = vor.u32 %v3146, %v3150
        %v3153 = vshll.u32 %v3014, 16
        %v3155 = vrot.slane %v3153, 1
        %v3156 = vsel %vm2223, %v3151, %v3155
        %v3158 = vshrl.u32 %v3015, 16
        %v3160 = vshll.u32 %v3015, 16
        %v3162 = vrot.slane %v3160, 1
        %v3163 = vor.u32 %v3158, %v3162
        %v3165 = vshll.u32 %v3016, 16
        %v3167 = vrot.slane %v3165, 1
        %v3168 = vsel %vm2223, %v3163, %v3167
        %v3170 = vshrl.u32 %v3017, 16
        %v3172 = vshll.u32 %v3017, 16
        %v3174 = vrot.slane %v3172, 1
        %v3175 = vor.u32 %v3170, %v3174
        %v3177 = vshll.u32 %v3018, 16
        %v3179 = vrot.slane %v3177, 1
        %v3180 = vsel %vm2223, %v3175, %v3179
        %v3182 = vshrl.u32 %v3019, 16
        %v3184 = vshll.u32 %v3019, 16
        %v3186 = vrot.slane %v3184, 1
        %v3187 = vor.u32 %v3182, %v3186
        %v3189 = vshll.u32 %v3020, 16
        %v3191 = vrot.slane %v3189, 1
        %v3192 = vsel %vm2223, %v3187, %v3191
        %v3194 = vshrl.u32 %v3021, 16
        %v3196 = vshll.u32 %v3021, 16
        %v3198 = vrot.slane %v3196, 1
        %v3199 = vor.u32 %v3194, %v3198
        %v3201 = vshll.u32 %v3022, 16
        %v3203 = vrot.slane %v3201, 1
        %v3204 = vsel %vm2223, %v3199, %v3203
        %v3206 = vshrl.u32 %v3023, 16
        %v3208 = vshll.u32 %v3023, 16
        %v3210 = vrot.slane %v3208, 1
        %v3211 = vor.u32 %v3206, %v3210
        %v3213 = vshll.u32 %v3024, 16
        %v3215 = vrot.slane %v3213, 1
        %v3216 = vsel %vm2223, %v3211, %v3215
        %3233 = vst [vmem:[#allocation3 + $0x20] sm:$0xff] %v3036
        %3234 = vst [vmem:[#allocation3 + $0x68] sm:$0xff] %v3048
        %3235 = vst [vmem:[#allocation3 + $0xb0] sm:$0xff] %v3060
        %3236 = vst [vmem:[#allocation3 + $0xf8] sm:$0xff] %v3072
        %3237 = vst [vmem:[#allocation3 + $0x140] sm:$0xff] %v3084
        %3238 = vst [vmem:[#allocation3 + $0x188] sm:$0xff] %v3096
        %3239 = vst [vmem:[#allocation3 + $0x1d0] sm:$0xff] %v3108
        %3240 = vst [vmem:[#allocation3 + $0x218] sm:$0xff] %v3120
        %3241 = vst [vmem:[#allocation3 + $0x260] sm:$0xff] %v3132
        %3242 = vst [vmem:[#allocation3 + $0x2a8] sm:$0xff] %v3144
        %3243 = vst [vmem:[#allocation3 + $0x2f0] sm:$0xff] %v3156
        %3244 = vst [vmem:[#allocation3 + $0x338] sm:$0xff] %v3168
        %3245 = vst [vmem:[#allocation3 + $0x380] sm:$0xff] %v3180
        %3246 = vst [vmem:[#allocation3 + $0x3c8] sm:$0xff] %v3192
        %3247 = vst [vmem:[#allocation3 + $0x410] sm:$0xff] %v3204
        %3248 = vst [vmem:[#allocation3 + $0x458] sm:$0xff] %v3216
        %v3249 = vld [vmem:[%s1785] sm:$0xe]
        %v3250 = vld [vmem:[%s1785 + $0x4] sm:$0xf]
        %v3251 = vld [vmem:[%s1785 + $0x8] sm:$0x1]
        %v3252 = vld [vmem:[%s1785 + $0xc] sm:$0xe]
        %v3253 = vld [vmem:[%s1785 + $0x10] sm:$0xf]
        %v3254 = vld [vmem:[%s1785 + $0x14] sm:$0x1]
        %v3255 = vld [vmem:[%s1785 + $0x18] sm:$0xe]
        %v3256 = vld [vmem:[%s1785 + $0x1c] sm:$0xf]
        %v3257 = vld [vmem:[%s1785 + $0x20] sm:$0x1]
        %v3258 = vld [vmem:[%s1785 + $0x24] sm:$0xe]
        %v3259 = vld [vmem:[%s1785 + $0x28] sm:$0xf]
        %v3260 = vld [vmem:[%s1785 + $0x2c] sm:$0x1]
        %v3261 = vld [vmem:[%s1785 + $0x30] sm:$0xe]
        %v3262 = vld [vmem:[%s1785 + $0x34] sm:$0xf]
        %v3263 = vld [vmem:[%s1785 + $0x38] sm:$0x1]
        %v3264 = vld [vmem:[%s1785 + $0x3c] sm:$0xe]
        %v3265 = vld [vmem:[%s1785 + $0x40] sm:$0xf]
        %v3266 = vld [vmem:[%s1785 + $0x44] sm:$0x1]
        %v3267 = vld [vmem:[%s1785 + $0x48] sm:$0xe]
        %v3268 = vld [vmem:[%s1785 + $0x4c] sm:$0xf]
        %v3269 = vld [vmem:[%s1785 + $0x50] sm:$0x1]
        %v3270 = vld [vmem:[%s1785 + $0x54] sm:$0xe]
        %v3271 = vld [vmem:[%s1785 + $0x58] sm:$0xf]
        %v3272 = vld [vmem:[%s1785 + $0x5c] sm:$0x1]
        %v3273 = vld [vmem:[%s1785 + $0x60] sm:$0xe]
        %v3274 = vld [vmem:[%s1785 + $0x64] sm:$0xf]
        %v3275 = vld [vmem:[%s1785 + $0x68] sm:$0x1]
        %v3276 = vld [vmem:[%s1785 + $0x6c] sm:$0xe]
        %v3277 = vld [vmem:[%s1785 + $0x70] sm:$0xf]
        %v3278 = vld [vmem:[%s1785 + $0x74] sm:$0x1]
        %v3279 = vld [vmem:[%s1785 + $0x78] sm:$0xe]
        %v3280 = vld [vmem:[%s1785 + $0x7c] sm:$0xf]
        %v3281 = vld [vmem:[%s1785 + $0x80] sm:$0x1]
        %v3282 = vld [vmem:[%s1785 + $0x84] sm:$0xe]
        %v3283 = vld [vmem:[%s1785 + $0x88] sm:$0xf]
        %v3284 = vld [vmem:[%s1785 + $0x8c] sm:$0x1]
        %v3285 = vld [vmem:[%s1785 + $0x90] sm:$0xe]
        %v3286 = vld [vmem:[%s1785 + $0x94] sm:$0xf]
        %v3287 = vld [vmem:[%s1785 + $0x98] sm:$0x1]
        %v3288 = vld [vmem:[%s1785 + $0x9c] sm:$0xe]
        %v3289 = vld [vmem:[%s1785 + $0xa0] sm:$0xf]
        %v3290 = vld [vmem:[%s1785 + $0xa4] sm:$0x1]
        %v3291 = vld [vmem:[%s1785 + $0xa8] sm:$0xe]
        %v3292 = vld [vmem:[%s1785 + $0xac] sm:$0xf]
        %v3293 = vld [vmem:[%s1785 + $0xb0] sm:$0x1]
        %v3294 = vld [vmem:[%s1785 + $0xb4] sm:$0xe]
        %v3295 = vld [vmem:[%s1785 + $0xb8] sm:$0xf]
        %v3296 = vld [vmem:[%s1785 + $0xbc] sm:$0x1]
        %v3345 = vunpack.c.l.b16 %v3249
        %v3346 = vunpack.c.l.b16 %v3250
        %v3347 = vunpack.c.l.b16 %v3251
        %v3348 = vunpack.c.l.b16 %v3252
        %v3349 = vunpack.c.l.b16 %v3253
        %v3350 = vunpack.c.l.b16 %v3254
        %v3351 = vunpack.c.l.b16 %v3255
        %v3352 = vunpack.c.l.b16 %v3256
        %v3353 = vunpack.c.l.b16 %v3257
        %v3354 = vunpack.c.l.b16 %v3258
        %v3355 = vunpack.c.l.b16 %v3259
        %v3356 = vunpack.c.l.b16 %v3260
        %v3357 = vunpack.c.l.b16 %v3261
        %v3358 = vunpack.c.l.b16 %v3262
        %v3359 = vunpack.c.l.b16 %v3263
        %v3360 = vunpack.c.l.b16 %v3264
        %v3361 = vunpack.c.l.b16 %v3265
        %v3362 = vunpack.c.l.b16 %v3266
        %v3363 = vunpack.c.l.b16 %v3267
        %v3364 = vunpack.c.l.b16 %v3268
        %v3365 = vunpack.c.l.b16 %v3269
        %v3366 = vunpack.c.l.b16 %v3270
        %v3367 = vunpack.c.l.b16 %v3271
        %v3368 = vunpack.c.l.b16 %v3272
        %v3369 = vunpack.c.l.b16 %v3273
        %v3370 = vunpack.c.l.b16 %v3274
        %v3371 = vunpack.c.l.b16 %v3275
        %v3372 = vunpack.c.l.b16 %v3276
        %v3373 = vunpack.c.l.b16 %v3277
        %v3374 = vunpack.c.l.b16 %v3278
        %v3375 = vunpack.c.l.b16 %v3279
        %v3376 = vunpack.c.l.b16 %v3280
        %v3377 = vunpack.c.l.b16 %v3281
        %v3378 = vunpack.c.l.b16 %v3282
        %v3379 = vunpack.c.l.b16 %v3283
        %v3380 = vunpack.c.l.b16 %v3284
        %v3381 = vunpack.c.l.b16 %v3285
        %v3382 = vunpack.c.l.b16 %v3286
        %v3383 = vunpack.c.l.b16 %v3287
        %v3384 = vunpack.c.l.b16 %v3288
        %v3385 = vunpack.c.l.b16 %v3289
        %v3386 = vunpack.c.l.b16 %v3290
        %v3387 = vunpack.c.l.b16 %v3291
        %v3388 = vunpack.c.l.b16 %v3292
        %v3389 = vunpack.c.l.b16 %v3293
        %v3390 = vunpack.c.l.b16 %v3294
        %v3391 = vunpack.c.l.b16 %v3295
        %v3392 = vunpack.c.l.b16 %v3296
        %v3393 = vpack.c.b16 %v3346, %v3345
        %v3394 = vpack.c.b16 %v3347, %v3347
        %v3395 = vpack.c.b16 %v3349, %v3348
        %v3396 = vpack.c.b16 %v3350, %v3350
        %v3397 = vpack.c.b16 %v3352, %v3351
        %v3398 = vpack.c.b16 %v3353, %v3353
        %v3399 = vpack.c.b16 %v3355, %v3354
        %v3400 = vpack.c.b16 %v3356, %v3356
        %v3401 = vpack.c.b16 %v3358, %v3357
        %v3402 = vpack.c.b16 %v3359, %v3359
        %v3403 = vpack.c.b16 %v3361, %v3360
        %v3404 = vpack.c.b16 %v3362, %v3362
        %v3405 = vpack.c.b16 %v3364, %v3363
        %v3406 = vpack.c.b16 %v3365, %v3365
        %v3407 = vpack.c.b16 %v3367, %v3366
        %v3408 = vpack.c.b16 %v3368, %v3368
        %v3409 = vpack.c.b16 %v3370, %v3369
        %v3410 = vpack.c.b16 %v3371, %v3371
        %v3411 = vpack.c.b16 %v3373, %v3372
        %v3412 = vpack.c.b16 %v3374, %v3374
        %v3413 = vpack.c.b16 %v3376, %v3375
        %v3414 = vpack.c.b16 %v3377, %v3377
        %v3415 = vpack.c.b16 %v3379, %v3378
        %v3416 = vpack.c.b16 %v3380, %v3380
        %v3417 = vpack.c.b16 %v3382, %v3381
        %v3418 = vpack.c.b16 %v3383, %v3383
        %v3419 = vpack.c.b16 %v3385, %v3384
        %v3420 = vpack.c.b16 %v3386, %v3386
        %v3421 = vpack.c.b16 %v3388, %v3387
        %v3422 = vpack.c.b16 %v3389, %v3389
        %v3423 = vpack.c.b16 %v3391, %v3390
        %v3424 = vpack.c.b16 %v3392, %v3392
        %v3425 = vrot.slane %v3393, 1
        %v3426 = vrot.slane %v3394, 1
        %v3427 = vsel %vm2624, %v3425, %v3426
        %v3428 = vrot.slane %v3395, 1
        %v3429 = vrot.slane %v3396, 1
        %v3430 = vsel %vm2624, %v3428, %v3429
        %v3431 = vrot.slane %v3397, 1
        %v3432 = vrot.slane %v3398, 1
        %v3433 = vsel %vm2624, %v3431, %v3432
        %v3434 = vrot.slane %v3399, 1
        %v3435 = vrot.slane %v3400, 1
        %v3436 = vsel %vm2624, %v3434, %v3435
        %v3437 = vrot.slane %v3401, 1
        %v3438 = vrot.slane %v3402, 1
        %v3439 = vsel %vm2624, %v3437, %v3438
        %v3440 = vrot.slane %v3403, 1
        %v3441 = vrot.slane %v3404, 1
        %v3442 = vsel %vm2624, %v3440, %v3441
        %v3443 = vrot.slane %v3405, 1
        %v3444 = vrot.slane %v3406, 1
        %v3445 = vsel %vm2624, %v3443, %v3444
        %v3446 = vrot.slane %v3407, 1
        %v3447 = vrot.slane %v3408, 1
        %v3448 = vsel %vm2624, %v3446, %v3447
        %v3449 = vrot.slane %v3409, 1
        %v3450 = vrot.slane %v3410, 1
        %v3451 = vsel %vm2624, %v3449, %v3450
        %v3452 = vrot.slane %v3411, 1
        %v3453 = vrot.slane %v3412, 1
        %v3454 = vsel %vm2624, %v3452, %v3453
        %v3455 = vrot.slane %v3413, 1
        %v3456 = vrot.slane %v3414, 1
        %v3457 = vsel %vm2624, %v3455, %v3456
        %v3458 = vrot.slane %v3415, 1
        %v3459 = vrot.slane %v3416, 1
        %v3460 = vsel %vm2624, %v3458, %v3459
        %v3461 = vrot.slane %v3417, 1
        %v3462 = vrot.slane %v3418, 1
        %v3463 = vsel %vm2624, %v3461, %v3462
        %v3464 = vrot.slane %v3419, 1
        %v3465 = vrot.slane %v3420, 1
        %v3466 = vsel %vm2624, %v3464, %v3465
        %v3467 = vrot.slane %v3421, 1
        %v3468 = vrot.slane %v3422, 1
        %v3469 = vsel %vm2624, %v3467, %v3468
        %v3470 = vrot.slane %v3423, 1
        %v3471 = vrot.slane %v3424, 1
        %v3472 = vsel %vm2624, %v3470, %v3471
        %3489 = vst [vmem:[#allocation3 + $0x28] sm:$0xff] %v3427
        %3490 = vst [vmem:[#allocation3 + $0x70] sm:$0xff] %v3430
        %3491 = vst [vmem:[#allocation3 + $0xb8] sm:$0xff] %v3433
        %3492 = vst [vmem:[#allocation3 + $0x100] sm:$0xff] %v3436
        %3493 = vst [vmem:[#allocation3 + $0x148] sm:$0xff] %v3439
        %3494 = vst [vmem:[#allocation3 + $0x190] sm:$0xff] %v3442
        %3495 = vst [vmem:[#allocation3 + $0x1d8] sm:$0xff] %v3445
        %3496 = vst [vmem:[#allocation3 + $0x220] sm:$0xff] %v3448
        %3497 = vst [vmem:[#allocation3 + $0x268] sm:$0xff] %v3451
        %3498 = vst [vmem:[#allocation3 + $0x2b0] sm:$0xff] %v3454
        %3499 = vst [vmem:[#allocation3 + $0x2f8] sm:$0xff] %v3457
        %3500 = vst [vmem:[#allocation3 + $0x340] sm:$0xff] %v3460
        %3501 = vst [vmem:[#allocation3 + $0x388] sm:$0xff] %v3463
        %3502 = vst [vmem:[#allocation3 + $0x3d0] sm:$0xff] %v3466
        %3503 = vst [vmem:[#allocation3 + $0x418] sm:$0xff] %v3469
        %3504 = vst [vmem:[#allocation3 + $0x460] sm:$0xff] %v3472
        %s3505 = scalar_lea.vmem [#allocation2], 24
        %v3506 = vld [vmem:[%s3505] sm:$0xf]
        %v3507 = vld [vmem:[%s3505 + $0x4] sm:$0xf]
        %v3508 = vld [vmem:[%s3505 + $0xc] sm:$0xf]
        %v3509 = vld [vmem:[%s3505 + $0x10] sm:$0xf]
        %v3510 = vld [vmem:[%s3505 + $0x18] sm:$0xf]
        %v3511 = vld [vmem:[%s3505 + $0x1c] sm:$0xf]
        %v3512 = vld [vmem:[%s3505 + $0x24] sm:$0xf]
        %v3513 = vld [vmem:[%s3505 + $0x28] sm:$0xf]
        %v3514 = vld [vmem:[%s3505 + $0x30] sm:$0xf]
        %v3515 = vld [vmem:[%s3505 + $0x34] sm:$0xf]
        %v3516 = vld [vmem:[%s3505 + $0x3c] sm:$0xf]
        %v3517 = vld [vmem:[%s3505 + $0x40] sm:$0xf]
        %v3518 = vld [vmem:[%s3505 + $0x48] sm:$0xf]
        %v3519 = vld [vmem:[%s3505 + $0x4c] sm:$0xf]
        %v3520 = vld [vmem:[%s3505 + $0x54] sm:$0xf]
        %v3521 = vld [vmem:[%s3505 + $0x58] sm:$0xf]
        %v3522 = vld [vmem:[%s3505 + $0x60] sm:$0xf]
        %v3523 = vld [vmem:[%s3505 + $0x64] sm:$0xf]
        %v3524 = vld [vmem:[%s3505 + $0x6c] sm:$0xf]
        %v3525 = vld [vmem:[%s3505 + $0x70] sm:$0xf]
        %v3526 = vld [vmem:[%s3505 + $0x78] sm:$0xf]
        %v3527 = vld [vmem:[%s3505 + $0x7c] sm:$0xf]
        %v3528 = vld [vmem:[%s3505 + $0x84] sm:$0xf]
        %v3529 = vld [vmem:[%s3505 + $0x88] sm:$0xf]
        %v3530 = vld [vmem:[%s3505 + $0x90] sm:$0xf]
        %v3531 = vld [vmem:[%s3505 + $0x94] sm:$0xf]
        %v3532 = vld [vmem:[%s3505 + $0x9c] sm:$0xf]
        %v3533 = vld [vmem:[%s3505 + $0xa0] sm:$0xf]
        %v3534 = vld [vmem:[%s3505 + $0xa8] sm:$0xf]
        %v3535 = vld [vmem:[%s3505 + $0xac] sm:$0xf]
        %v3536 = vld [vmem:[%s3505 + $0xb4] sm:$0xf]
        %v3537 = vld [vmem:[%s3505 + $0xb8] sm:$0xf]
        %v3570 = vunpack.c.l.b16 %v3506
        %v3571 = vunpack.c.l.b16 %v3507
        %v3572 = vunpack.c.l.b16 %v3508
        %v3573 = vunpack.c.l.b16 %v3509
        %v3574 = vunpack.c.l.b16 %v3510
        %v3575 = vunpack.c.l.b16 %v3511
        %v3576 = vunpack.c.l.b16 %v3512
        %v3577 = vunpack.c.l.b16 %v3513
        %v3578 = vunpack.c.l.b16 %v3514
        %v3579 = vunpack.c.l.b16 %v3515
        %v3580 = vunpack.c.l.b16 %v3516
        %v3581 = vunpack.c.l.b16 %v3517
        %v3582 = vunpack.c.l.b16 %v3518
        %v3583 = vunpack.c.l.b16 %v3519
        %v3584 = vunpack.c.l.b16 %v3520
        %v3585 = vunpack.c.l.b16 %v3521
        %v3586 = vunpack.c.l.b16 %v3522
        %v3587 = vunpack.c.l.b16 %v3523
        %v3588 = vunpack.c.l.b16 %v3524
        %v3589 = vunpack.c.l.b16 %v3525
        %v3590 = vunpack.c.l.b16 %v3526
        %v3591 = vunpack.c.l.b16 %v3527
        %v3592 = vunpack.c.l.b16 %v3528
        %v3593 = vunpack.c.l.b16 %v3529
        %v3594 = vunpack.c.l.b16 %v3530
        %v3595 = vunpack.c.l.b16 %v3531
        %v3596 = vunpack.c.l.b16 %v3532
        %v3597 = vunpack.c.l.b16 %v3533
        %v3598 = vunpack.c.l.b16 %v3534
        %v3599 = vunpack.c.l.b16 %v3535
        %v3600 = vunpack.c.l.b16 %v3536
        %v3601 = vunpack.c.l.b16 %v3537
        %v3602 = vpack.c.b16 %v3571, %v3570
        %v3603 = vpack.c.b16 %v3573, %v3572
        %v3604 = vpack.c.b16 %v3575, %v3574
        %v3605 = vpack.c.b16 %v3577, %v3576
        %v3606 = vpack.c.b16 %v3579, %v3578
        %v3607 = vpack.c.b16 %v3581, %v3580
        %v3608 = vpack.c.b16 %v3583, %v3582
        %v3609 = vpack.c.b16 %v3585, %v3584
        %v3610 = vpack.c.b16 %v3587, %v3586
        %v3611 = vpack.c.b16 %v3589, %v3588
        %v3612 = vpack.c.b16 %v3591, %v3590
        %v3613 = vpack.c.b16 %v3593, %v3592
        %v3614 = vpack.c.b16 %v3595, %v3594
        %v3615 = vpack.c.b16 %v3597, %v3596
        %v3616 = vpack.c.b16 %v3599, %v3598
        %v3617 = vpack.c.b16 %v3601, %v3600
        %3634 = vst [vmem:[#allocation3 + $0x30] sm:$0xff] %v3602
        %3635 = vst [vmem:[#allocation3 + $0x78] sm:$0xff] %v3603
        %3636 = vst [vmem:[#allocation3 + $0xc0] sm:$0xff] %v3604
        %3637 = vst [vmem:[#allocation3 + $0x108] sm:$0xff] %v3605
        %3638 = vst [vmem:[#allocation3 + $0x150] sm:$0xff] %v3606
        %3639 = vst [vmem:[#allocation3 + $0x198] sm:$0xff] %v3607
        %3640 = vst [vmem:[#allocation3 + $0x1e0] sm:$0xff] %v3608
        %3641 = vst [vmem:[#allocation3 + $0x228] sm:$0xff] %v3609
        %3642 = vst [vmem:[#allocation3 + $0x270] sm:$0xff] %v3610
        %3643 = vst [vmem:[#allocation3 + $0x2b8] sm:$0xff] %v3611
        %3644 = vst [vmem:[#allocation3 + $0x300] sm:$0xff] %v3612
        %3645 = vst [vmem:[#allocation3 + $0x348] sm:$0xff] %v3613
        %3646 = vst [vmem:[#allocation3 + $0x390] sm:$0xff] %v3614
        %3647 = vst [vmem:[#allocation3 + $0x3d8] sm:$0xff] %v3615
        %3648 = vst [vmem:[#allocation3 + $0x420] sm:$0xff] %v3616
        %3649 = vst [vmem:[#allocation3 + $0x468] sm:$0xff] %v3617
        %v3650 = vld [vmem:[%s3505] sm:$0xf]
        %v3651 = vld [vmem:[%s3505 + $0x4] sm:$0xf]
        %v3652 = vld [vmem:[%s3505 + $0x8] sm:$0x1]
        %v3653 = vld [vmem:[%s3505 + $0xc] sm:$0xf]
        %v3654 = vld [vmem:[%s3505 + $0x10] sm:$0xf]
        %v3655 = vld [vmem:[%s3505 + $0x14] sm:$0x1]
        %v3656 = vld [vmem:[%s3505 + $0x18] sm:$0xf]
        %v3657 = vld [vmem:[%s3505 + $0x1c] sm:$0xf]
        %v3658 = vld [vmem:[%s3505 + $0x20] sm:$0x1]
        %v3659 = vld [vmem:[%s3505 + $0x24] sm:$0xf]
        %v3660 = vld [vmem:[%s3505 + $0x28] sm:$0xf]
        %v3661 = vld [vmem:[%s3505 + $0x2c] sm:$0x1]
        %v3662 = vld [vmem:[%s3505 + $0x30] sm:$0xf]
        %v3663 = vld [vmem:[%s3505 + $0x34] sm:$0xf]
        %v3664 = vld [vmem:[%s3505 + $0x38] sm:$0x1]
        %v3665 = vld [vmem:[%s3505 + $0x3c] sm:$0xf]
        %v3666 = vld [vmem:[%s3505 + $0x40] sm:$0xf]
        %v3667 = vld [vmem:[%s3505 + $0x44] sm:$0x1]
        %v3668 = vld [vmem:[%s3505 + $0x48] sm:$0xf]
        %v3669 = vld [vmem:[%s3505 + $0x4c] sm:$0xf]
        %v3670 = vld [vmem:[%s3505 + $0x50] sm:$0x1]
        %v3671 = vld [vmem:[%s3505 + $0x54] sm:$0xf]
        %v3672 = vld [vmem:[%s3505 + $0x58] sm:$0xf]
        %v3673 = vld [vmem:[%s3505 + $0x5c] sm:$0x1]
        %v3674 = vld [vmem:[%s3505 + $0x60] sm:$0xf]
        %v3675 = vld [vmem:[%s3505 + $0x64] sm:$0xf]
        %v3676 = vld [vmem:[%s3505 + $0x68] sm:$0x1]
        %v3677 = vld [vmem:[%s3505 + $0x6c] sm:$0xf]
        %v3678 = vld [vmem:[%s3505 + $0x70] sm:$0xf]
        %v3679 = vld [vmem:[%s3505 + $0x74] sm:$0x1]
        %v3680 = vld [vmem:[%s3505 + $0x78] sm:$0xf]
        %v3681 = vld [vmem:[%s3505 + $0x7c] sm:$0xf]
        %v3682 = vld [vmem:[%s3505 + $0x80] sm:$0x1]
        %v3683 = vld [vmem:[%s3505 + $0x84] sm:$0xf]
        %v3684 = vld [vmem:[%s3505 + $0x88] sm:$0xf]
        %v3685 = vld [vmem:[%s3505 + $0x8c] sm:$0x1]
        %v3686 = vld [vmem:[%s3505 + $0x90] sm:$0xf]
        %v3687 = vld [vmem:[%s3505 + $0x94] sm:$0xf]
        %v3688 = vld [vmem:[%s3505 + $0x98] sm:$0x1]
        %v3689 = vld [vmem:[%s3505 + $0x9c] sm:$0xf]
        %v3690 = vld [vmem:[%s3505 + $0xa0] sm:$0xf]
        %v3691 = vld [vmem:[%s3505 + $0xa4] sm:$0x1]
        %v3692 = vld [vmem:[%s3505 + $0xa8] sm:$0xf]
        %v3693 = vld [vmem:[%s3505 + $0xac] sm:$0xf]
        %v3694 = vld [vmem:[%s3505 + $0xb0] sm:$0x1]
        %v3695 = vld [vmem:[%s3505 + $0xb4] sm:$0xf]
        %v3696 = vld [vmem:[%s3505 + $0xb8] sm:$0xf]
        %v3697 = vld [vmem:[%s3505 + $0xbc] sm:$0x1]
        %v3746 = vunpack.c.l.b16 %v3650
        %v3747 = vunpack.c.l.b16 %v3651
        %v3748 = vunpack.c.l.b16 %v3652
        %v3749 = vunpack.c.l.b16 %v3653
        %v3750 = vunpack.c.l.b16 %v3654
        %v3751 = vunpack.c.l.b16 %v3655
        %v3752 = vunpack.c.l.b16 %v3656
        %v3753 = vunpack.c.l.b16 %v3657
        %v3754 = vunpack.c.l.b16 %v3658
        %v3755 = vunpack.c.l.b16 %v3659
        %v3756 = vunpack.c.l.b16 %v3660
        %v3757 = vunpack.c.l.b16 %v3661
        %v3758 = vunpack.c.l.b16 %v3662
        %v3759 = vunpack.c.l.b16 %v3663
        %v3760 = vunpack.c.l.b16 %v3664
        %v3761 = vunpack.c.l.b16 %v3665
        %v3762 = vunpack.c.l.b16 %v3666
        %v3763 = vunpack.c.l.b16 %v3667
        %v3764 = vunpack.c.l.b16 %v3668
        %v3765 = vunpack.c.l.b16 %v3669
        %v3766 = vunpack.c.l.b16 %v3670
        %v3767 = vunpack.c.l.b16 %v3671
        %v3768 = vunpack.c.l.b16 %v3672
        %v3769 = vunpack.c.l.b16 %v3673
        %v3770 = vunpack.c.l.b16 %v3674
        %v3771 = vunpack.c.l.b16 %v3675
        %v3772 = vunpack.c.l.b16 %v3676
        %v3773 = vunpack.c.l.b16 %v3677
        %v3774 = vunpack.c.l.b16 %v3678
        %v3775 = vunpack.c.l.b16 %v3679
        %v3776 = vunpack.c.l.b16 %v3680
        %v3777 = vunpack.c.l.b16 %v3681
        %v3778 = vunpack.c.l.b16 %v3682
        %v3779 = vunpack.c.l.b16 %v3683
        %v3780 = vunpack.c.l.b16 %v3684
        %v3781 = vunpack.c.l.b16 %v3685
        %v3782 = vunpack.c.l.b16 %v3686
        %v3783 = vunpack.c.l.b16 %v3687
        %v3784 = vunpack.c.l.b16 %v3688
        %v3785 = vunpack.c.l.b16 %v3689
        %v3786 = vunpack.c.l.b16 %v3690
        %v3787 = vunpack.c.l.b16 %v3691
        %v3788 = vunpack.c.l.b16 %v3692
        %v3789 = vunpack.c.l.b16 %v3693
        %v3790 = vunpack.c.l.b16 %v3694
        %v3791 = vunpack.c.l.b16 %v3695
        %v3792 = vunpack.c.l.b16 %v3696
        %v3793 = vunpack.c.l.b16 %v3697
        %v3794 = vpack.c.b16 %v3747, %v3746
        %v3795 = vpack.c.b16 %v3748, %v3748
        %v3796 = vpack.c.b16 %v3750, %v3749
        %v3797 = vpack.c.b16 %v3751, %v3751
        %v3798 = vpack.c.b16 %v3753, %v3752
        %v3799 = vpack.c.b16 %v3754, %v3754
        %v3800 = vpack.c.b16 %v3756, %v3755
        %v3801 = vpack.c.b16 %v3757, %v3757
        %v3802 = vpack.c.b16 %v3759, %v3758
        %v3803 = vpack.c.b16 %v3760, %v3760
        %v3804 = vpack.c.b16 %v3762, %v3761
        %v3805 = vpack.c.b16 %v3763, %v3763
        %v3806 = vpack.c.b16 %v3765, %v3764
        %v3807 = vpack.c.b16 %v3766, %v3766
        %v3808 = vpack.c.b16 %v3768, %v3767
        %v3809 = vpack.c.b16 %v3769, %v3769
        %v3810 = vpack.c.b16 %v3771, %v3770
        %v3811 = vpack.c.b16 %v3772, %v3772
        %v3812 = vpack.c.b16 %v3774, %v3773
        %v3813 = vpack.c.b16 %v3775, %v3775
        %v3814 = vpack.c.b16 %v3777, %v3776
        %v3815 = vpack.c.b16 %v3778, %v3778
        %v3816 = vpack.c.b16 %v3780, %v3779
        %v3817 = vpack.c.b16 %v3781, %v3781
        %v3818 = vpack.c.b16 %v3783, %v3782
        %v3819 = vpack.c.b16 %v3784, %v3784
        %v3820 = vpack.c.b16 %v3786, %v3785
        %v3821 = vpack.c.b16 %v3787, %v3787
        %v3822 = vpack.c.b16 %v3789, %v3788
        %v3823 = vpack.c.b16 %v3790, %v3790
        %v3824 = vpack.c.b16 %v3792, %v3791
        %v3825 = vpack.c.b16 %v3793, %v3793
        %v3827 = vshrl.u32 %v3794, 16
        %v3829 = vshll.u32 %v3794, 16
        %v3831 = vrot.slane %v3829, 1
        %v3832 = vor.u32 %v3827, %v3831
        %v3834 = vshll.u32 %v3795, 16
        %v3836 = vrot.slane %v3834, 1
        %v3837 = vsel %vm2223, %v3832, %v3836
        %v3839 = vshrl.u32 %v3796, 16
        %v3841 = vshll.u32 %v3796, 16
        %v3843 = vrot.slane %v3841, 1
        %v3844 = vor.u32 %v3839, %v3843
        %v3846 = vshll.u32 %v3797, 16
        %v3848 = vrot.slane %v3846, 1
        %v3849 = vsel %vm2223, %v3844, %v3848
        %v3851 = vshrl.u32 %v3798, 16
        %v3853 = vshll.u32 %v3798, 16
        %v3855 = vrot.slane %v3853, 1
        %v3856 = vor.u32 %v3851, %v3855
        %v3858 = vshll.u32 %v3799, 16
        %v3860 = vrot.slane %v3858, 1
        %v3861 = vsel %vm2223, %v3856, %v3860
        %v3863 = vshrl.u32 %v3800, 16
        %v3865 = vshll.u32 %v3800, 16
        %v3867 = vrot.slane %v3865, 1
        %v3868 = vor.u32 %v3863, %v3867
        %v3870 = vshll.u32 %v3801, 16
        %v3872 = vrot.slane %v3870, 1
        %v3873 = vsel %vm2223, %v3868, %v3872
        %v3875 = vshrl.u32 %v3802, 16
        %v3877 = vshll.u32 %v3802, 16
        %v3879 = vrot.slane %v3877, 1
        %v3880 = vor.u32 %v3875, %v3879
        %v3882 = vshll.u32 %v3803, 16
        %v3884 = vrot.slane %v3882, 1
        %v3885 = vsel %vm2223, %v3880, %v3884
        %v3887 = vshrl.u32 %v3804, 16
        %v3889 = vshll.u32 %v3804, 16
        %v3891 = vrot.slane %v3889, 1
        %v3892 = vor.u32 %v3887, %v3891
        %v3894 = vshll.u32 %v3805, 16
        %v3896 = vrot.slane %v3894, 1
        %v3897 = vsel %vm2223, %v3892, %v3896
        %v3899 = vshrl.u32 %v3806, 16
        %v3901 = vshll.u32 %v3806, 16
        %v3903 = vrot.slane %v3901, 1
        %v3904 = vor.u32 %v3899, %v3903
        %v3906 = vshll.u32 %v3807, 16
        %v3908 = vrot.slane %v3906, 1
        %v3909 = vsel %vm2223, %v3904, %v3908
        %v3911 = vshrl.u32 %v3808, 16
        %v3913 = vshll.u32 %v3808, 16
        %v3915 = vrot.slane %v3913, 1
        %v3916 = vor.u32 %v3911, %v3915
        %v3918 = vshll.u32 %v3809, 16
        %v3920 = vrot.slane %v3918, 1
        %v3921 = vsel %vm2223, %v3916, %v3920
        %v3923 = vshrl.u32 %v3810, 16
        %v3925 = vshll.u32 %v3810, 16
        %v3927 = vrot.slane %v3925, 1
        %v3928 = vor.u32 %v3923, %v3927
        %v3930 = vshll.u32 %v3811, 16
        %v3932 = vrot.slane %v3930, 1
        %v3933 = vsel %vm2223, %v3928, %v3932
        %v3935 = vshrl.u32 %v3812, 16
        %v3937 = vshll.u32 %v3812, 16
        %v3939 = vrot.slane %v3937, 1
        %v3940 = vor.u32 %v3935, %v3939
        %v3942 = vshll.u32 %v3813, 16
        %v3944 = vrot.slane %v3942, 1
        %v3945 = vsel %vm2223, %v3940, %v3944
        %v3947 = vshrl.u32 %v3814, 16
        %v3949 = vshll.u32 %v3814, 16
        %v3951 = vrot.slane %v3949, 1
        %v3952 = vor.u32 %v3947, %v3951
        %v3954 = vshll.u32 %v3815, 16
        %v3956 = vrot.slane %v3954, 1
        %v3957 = vsel %vm2223, %v3952, %v3956
        %v3959 = vshrl.u32 %v3816, 16
        %v3961 = vshll.u32 %v3816, 16
        %v3963 = vrot.slane %v3961, 1
        %v3964 = vor.u32 %v3959, %v3963
        %v3966 = vshll.u32 %v3817, 16
        %v3968 = vrot.slane %v3966, 1
        %v3969 = vsel %vm2223, %v3964, %v3968
        %v3971 = vshrl.u32 %v3818, 16
        %v3973 = vshll.u32 %v3818, 16
        %v3975 = vrot.slane %v3973, 1
        %v3976 = vor.u32 %v3971, %v3975
        %v3978 = vshll.u32 %v3819, 16
        %v3980 = vrot.slane %v3978, 1
        %v3981 = vsel %vm2223, %v3976, %v3980
        %v3983 = vshrl.u32 %v3820, 16
        %v3985 = vshll.u32 %v3820, 16
        %v3987 = vrot.slane %v3985, 1
        %v3988 = vor.u32 %v3983, %v3987
        %v3990 = vshll.u32 %v3821, 16
        %v3992 = vrot.slane %v3990, 1
        %v3993 = vsel %vm2223, %v3988, %v3992
        %v3995 = vshrl.u32 %v3822, 16
        %v3997 = vshll.u32 %v3822, 16
        %v3999 = vrot.slane %v3997, 1
        %v4000 = vor.u32 %v3995, %v3999
        %v4002 = vshll.u32 %v3823, 16
        %v4004 = vrot.slane %v4002, 1
        %v4005 = vsel %vm2223, %v4000, %v4004
        %v4007 = vshrl.u32 %v3824, 16
        %v4009 = vshll.u32 %v3824, 16
        %v4011 = vrot.slane %v4009, 1
        %v4012 = vor.u32 %v4007, %v4011
        %v4014 = vshll.u32 %v3825, 16
        %v4016 = vrot.slane %v4014, 1
        %v4017 = vsel %vm2223, %v4012, %v4016
        %4034 = vst [vmem:[#allocation3 + $0x38] sm:$0xff] %v3837
        %4035 = vst [vmem:[#allocation3 + $0x80] sm:$0xff] %v3849
        %4036 = vst [vmem:[#allocation3 + $0xc8] sm:$0xff] %v3861
        %4037 = vst [vmem:[#allocation3 + $0x110] sm:$0xff] %v3873
        %4038 = vst [vmem:[#allocation3 + $0x158] sm:$0xff] %v3885
        %4039 = vst [vmem:[#allocation3 + $0x1a0] sm:$0xff] %v3897
        %4040 = vst [vmem:[#allocation3 + $0x1e8] sm:$0xff] %v3909
        %4041 = vst [vmem:[#allocation3 + $0x230] sm:$0xff] %v3921
        %4042 = vst [vmem:[#allocation3 + $0x278] sm:$0xff] %v3933
        %4043 = vst [vmem:[#allocation3 + $0x2c0] sm:$0xff] %v3945
        %4044 = vst [vmem:[#allocation3 + $0x308] sm:$0xff] %v3957
        %4045 = vst [vmem:[#allocation3 + $0x350] sm:$0xff] %v3969
        %4046 = vst [vmem:[#allocation3 + $0x398] sm:$0xff] %v3981
        %4047 = vst [vmem:[#allocation3 + $0x3e0] sm:$0xff] %v3993
        %4048 = vst [vmem:[#allocation3 + $0x428] sm:$0xff] %v4005
        %4049 = vst [vmem:[#allocation3 + $0x470] sm:$0xff] %v4017
        %v4050 = vld [vmem:[%s3505] sm:$0xe]
        %v4051 = vld [vmem:[%s3505 + $0x4] sm:$0xf]
        %v4052 = vld [vmem:[%s3505 + $0x8] sm:$0x1]
        %v4053 = vld [vmem:[%s3505 + $0xc] sm:$0xe]
        %v4054 = vld [vmem:[%s3505 + $0x10] sm:$0xf]
        %v4055 = vld [vmem:[%s3505 + $0x14] sm:$0x1]
        %v4056 = vld [vmem:[%s3505 + $0x18] sm:$0xe]
        %v4057 = vld [vmem:[%s3505 + $0x1c] sm:$0xf]
        %v4058 = vld [vmem:[%s3505 + $0x20] sm:$0x1]
        %v4059 = vld [vmem:[%s3505 + $0x24] sm:$0xe]
        %v4060 = vld [vmem:[%s3505 + $0x28] sm:$0xf]
        %v4061 = vld [vmem:[%s3505 + $0x2c] sm:$0x1]
        %v4062 = vld [vmem:[%s3505 + $0x30] sm:$0xe]
        %v4063 = vld [vmem:[%s3505 + $0x34] sm:$0xf]
        %v4064 = vld [vmem:[%s3505 + $0x38] sm:$0x1]
        %v4065 = vld [vmem:[%s3505 + $0x3c] sm:$0xe]
        %v4066 = vld [vmem:[%s3505 + $0x40] sm:$0xf]
        %v4067 = vld [vmem:[%s3505 + $0x44] sm:$0x1]
        %v4068 = vld [vmem:[%s3505 + $0x48] sm:$0xe]
        %v4069 = vld [vmem:[%s3505 + $0x4c] sm:$0xf]
        %v4070 = vld [vmem:[%s3505 + $0x50] sm:$0x1]
        %v4071 = vld [vmem:[%s3505 + $0x54] sm:$0xe]
        %v4072 = vld [vmem:[%s3505 + $0x58] sm:$0xf]
        %v4073 = vld [vmem:[%s3505 + $0x5c] sm:$0x1]
        %v4074 = vld [vmem:[%s3505 + $0x60] sm:$0xe]
        %v4075 = vld [vmem:[%s3505 + $0x64] sm:$0xf]
        %v4076 = vld [vmem:[%s3505 + $0x68] sm:$0x1]
        %v4077 = vld [vmem:[%s3505 + $0x6c] sm:$0xe]
        %v4078 = vld [vmem:[%s3505 + $0x70] sm:$0xf]
        %v4079 = vld [vmem:[%s3505 + $0x74] sm:$0x1]
        %v4080 = vld [vmem:[%s3505 + $0x78] sm:$0xe]
        %v4081 = vld [vmem:[%s3505 + $0x7c] sm:$0xf]
        %v4082 = vld [vmem:[%s3505 + $0x80] sm:$0x1]
        %v4083 = vld [vmem:[%s3505 + $0x84] sm:$0xe]
        %v4084 = vld [vmem:[%s3505 + $0x88] sm:$0xf]
        %v4085 = vld [vmem:[%s3505 + $0x8c] sm:$0x1]
        %v4086 = vld [vmem:[%s3505 + $0x90] sm:$0xe]
        %v4087 = vld [vmem:[%s3505 + $0x94] sm:$0xf]
        %v4088 = vld [vmem:[%s3505 + $0x98] sm:$0x1]
        %v4089 = vld [vmem:[%s3505 + $0x9c] sm:$0xe]
        %v4090 = vld [vmem:[%s3505 + $0xa0] sm:$0xf]
        %v4091 = vld [vmem:[%s3505 + $0xa4] sm:$0x1]
        %v4092 = vld [vmem:[%s3505 + $0xa8] sm:$0xe]
        %v4093 = vld [vmem:[%s3505 + $0xac] sm:$0xf]
        %v4094 = vld [vmem:[%s3505 + $0xb0] sm:$0x1]
        %v4095 = vld [vmem:[%s3505 + $0xb4] sm:$0xe]
        %v4096 = vld [vmem:[%s3505 + $0xb8] sm:$0xf]
        %v4097 = vld [vmem:[%s3505 + $0xbc] sm:$0x1]
        %v4146 = vunpack.c.l.b16 %v4050
        %v4147 = vunpack.c.l.b16 %v4051
        %v4148 = vunpack.c.l.b16 %v4052
        %v4149 = vunpack.c.l.b16 %v4053
        %v4150 = vunpack.c.l.b16 %v4054
        %v4151 = vunpack.c.l.b16 %v4055
        %v4152 = vunpack.c.l.b16 %v4056
        %v4153 = vunpack.c.l.b16 %v4057
        %v4154 = vunpack.c.l.b16 %v4058
        %v4155 = vunpack.c.l.b16 %v4059
        %v4156 = vunpack.c.l.b16 %v4060
        %v4157 = vunpack.c.l.b16 %v4061
        %v4158 = vunpack.c.l.b16 %v4062
        %v4159 = vunpack.c.l.b16 %v4063
        %v4160 = vunpack.c.l.b16 %v4064
        %v4161 = vunpack.c.l.b16 %v4065
        %v4162 = vunpack.c.l.b16 %v4066
        %v4163 = vunpack.c.l.b16 %v4067
        %v4164 = vunpack.c.l.b16 %v4068
        %v4165 = vunpack.c.l.b16 %v4069
        %v4166 = vunpack.c.l.b16 %v4070
        %v4167 = vunpack.c.l.b16 %v4071
        %v4168 = vunpack.c.l.b16 %v4072
        %v4169 = vunpack.c.l.b16 %v4073
        %v4170 = vunpack.c.l.b16 %v4074
        %v4171 = vunpack.c.l.b16 %v4075
        %v4172 = vunpack.c.l.b16 %v4076
        %v4173 = vunpack.c.l.b16 %v4077
        %v4174 = vunpack.c.l.b16 %v4078
        %v4175 = vunpack.c.l.b16 %v4079
        %v4176 = vunpack.c.l.b16 %v4080
        %v4177 = vunpack.c.l.b16 %v4081
        %v4178 = vunpack.c.l.b16 %v4082
        %v4179 = vunpack.c.l.b16 %v4083
        %v4180 = vunpack.c.l.b16 %v4084
        %v4181 = vunpack.c.l.b16 %v4085
        %v4182 = vunpack.c.l.b16 %v4086
        %v4183 = vunpack.c.l.b16 %v4087
        %v4184 = vunpack.c.l.b16 %v4088
        %v4185 = vunpack.c.l.b16 %v4089
        %v4186 = vunpack.c.l.b16 %v4090
        %v4187 = vunpack.c.l.b16 %v4091
        %v4188 = vunpack.c.l.b16 %v4092
        %v4189 = vunpack.c.l.b16 %v4093
        %v4190 = vunpack.c.l.b16 %v4094
        %v4191 = vunpack.c.l.b16 %v4095
        %v4192 = vunpack.c.l.b16 %v4096
        %v4193 = vunpack.c.l.b16 %v4097
        %v4194 = vpack.c.b16 %v4147, %v4146
        %v4195 = vpack.c.b16 %v4148, %v4148
        %v4196 = vpack.c.b16 %v4150, %v4149
        %v4197 = vpack.c.b16 %v4151, %v4151
        %v4198 = vpack.c.b16 %v4153, %v4152
        %v4199 = vpack.c.b16 %v4154, %v4154
        %v4200 = vpack.c.b16 %v4156, %v4155
        %v4201 = vpack.c.b16 %v4157, %v4157
        %v4202 = vpack.c.b16 %v4159, %v4158
        %v4203 = vpack.c.b16 %v4160, %v4160
        %v4204 = vpack.c.b16 %v4162, %v4161
        %v4205 = vpack.c.b16 %v4163, %v4163
        %v4206 = vpack.c.b16 %v4165, %v4164
        %v4207 = vpack.c.b16 %v4166, %v4166
        %v4208 = vpack.c.b16 %v4168, %v4167
        %v4209 = vpack.c.b16 %v4169, %v4169
        %v4210 = vpack.c.b16 %v4171, %v4170
        %v4211 = vpack.c.b16 %v4172, %v4172
        %v4212 = vpack.c.b16 %v4174, %v4173
        %v4213 = vpack.c.b16 %v4175, %v4175
        %v4214 = vpack.c.b16 %v4177, %v4176
        %v4215 = vpack.c.b16 %v4178, %v4178
        %v4216 = vpack.c.b16 %v4180, %v4179
        %v4217 = vpack.c.b16 %v4181, %v4181
        %v4218 = vpack.c.b16 %v4183, %v4182
        %v4219 = vpack.c.b16 %v4184, %v4184
        %v4220 = vpack.c.b16 %v4186, %v4185
        %v4221 = vpack.c.b16 %v4187, %v4187
        %v4222 = vpack.c.b16 %v4189, %v4188
        %v4223 = vpack.c.b16 %v4190, %v4190
        %v4224 = vpack.c.b16 %v4192, %v4191
        %v4225 = vpack.c.b16 %v4193, %v4193
        %v4226 = vrot.slane %v4194, 1
        %v4227 = vrot.slane %v4195, 1
        %v4228 = vsel %vm2624, %v4226, %v4227
        %v4229 = vrot.slane %v4196, 1
        %v4230 = vrot.slane %v4197, 1
        %v4231 = vsel %vm2624, %v4229, %v4230
        %v4232 = vrot.slane %v4198, 1
        %v4233 = vrot.slane %v4199, 1
        %v4234 = vsel %vm2624, %v4232, %v4233
        %v4235 = vrot.slane %v4200, 1
        %v4236 = vrot.slane %v4201, 1
        %v4237 = vsel %vm2624, %v4235, %v4236
        %v4238 = vrot.slane %v4202, 1
        %v4239 = vrot.slane %v4203, 1
        %v4240 = vsel %vm2624, %v4238, %v4239
        %v4241 = vrot.slane %v4204, 1
        %v4242 = vrot.slane %v4205, 1
        %v4243 = vsel %vm2624, %v4241, %v4242
        %v4244 = vrot.slane %v4206, 1
        %v4245 = vrot.slane %v4207, 1
        %v4246 = vsel %vm2624, %v4244, %v4245
        %v4247 = vrot.slane %v4208, 1
        %v4248 = vrot.slane %v4209, 1
        %v4249 = vsel %vm2624, %v4247, %v4248
        %v4250 = vrot.slane %v4210, 1
        %v4251 = vrot.slane %v4211, 1
        %v4252 = vsel %vm2624, %v4250, %v4251
        %v4253 = vrot.slane %v4212, 1
        %v4254 = vrot.slane %v4213, 1
        %v4255 = vsel %vm2624, %v4253, %v4254
        %v4256 = vrot.slane %v4214, 1
        %v4257 = vrot.slane %v4215, 1
        %v4258 = vsel %vm2624, %v4256, %v4257
        %v4259 = vrot.slane %v4216, 1
        %v4260 = vrot.slane %v4217, 1
        %v4261 = vsel %vm2624, %v4259, %v4260
        %v4262 = vrot.slane %v4218, 1
        %v4263 = vrot.slane %v4219, 1
        %v4264 = vsel %vm2624, %v4262, %v4263
        %v4265 = vrot.slane %v4220, 1
        %v4266 = vrot.slane %v4221, 1
        %v4267 = vsel %vm2624, %v4265, %v4266
        %v4268 = vrot.slane %v4222, 1
        %v4269 = vrot.slane %v4223, 1
        %v4270 = vsel %vm2624, %v4268, %v4269
        %v4271 = vrot.slane %v4224, 1
        %v4272 = vrot.slane %v4225, 1
        %v4273 = vsel %vm2624, %v4271, %v4272
        %4290 = vst [vmem:[#allocation3 + $0x40] sm:$0xff] %v4228
        %4291 = vst [vmem:[#allocation3 + $0x88] sm:$0xff] %v4231
        %4292 = vst [vmem:[#allocation3 + $0xd0] sm:$0xff] %v4234
        %4293 = vst [vmem:[#allocation3 + $0x118] sm:$0xff] %v4237
        %4294 = vst [vmem:[#allocation3 + $0x160] sm:$0xff] %v4240
        %4295 = vst [vmem:[#allocation3 + $0x1a8] sm:$0xff] %v4243
        %4296 = vst [vmem:[#allocation3 + $0x1f0] sm:$0xff] %v4246
        %4297 = vst [vmem:[#allocation3 + $0x238] sm:$0xff] %v4249
        %4298 = vst [vmem:[#allocation3 + $0x280] sm:$0xff] %v4252
        %4299 = vst [vmem:[#allocation3 + $0x2c8] sm:$0xff] %v4255
        %4300 = vst [vmem:[#allocation3 + $0x310] sm:$0xff] %v4258
        %4301 = vst [vmem:[#allocation3 + $0x358] sm:$0xff] %v4261
        %4302 = vst [vmem:[#allocation3 + $0x3a0] sm:$0xff] %v4264
        %4303 = vst [vmem:[#allocation3 + $0x3e8] sm:$0xff] %v4267
        %4304 = vst [vmem:[#allocation3 + $0x430] sm:$0xff] %v4270
        %4305 = vst [vmem:[#allocation3 + $0x478] sm:$0xff] %v4273
        %v4306 = vld [vmem:[#allocation3] sm:$0xff]
        %v4307 = vld [vmem:[#allocation3 + $0x8] sm:$0xff]
        %v4308 = vld [vmem:[#allocation3 + $0x10] sm:$0xff]
        %v4309 = vld [vmem:[#allocation3 + $0x18] sm:$0xff]
        %v4310 = vld [vmem:[#allocation3 + $0x20] sm:$0xff]
        %v4311 = vld [vmem:[#allocation3 + $0x28] sm:$0xff]
        %v4312 = vld [vmem:[#allocation3 + $0x30] sm:$0xff]
        %v4313 = vld [vmem:[#allocation3 + $0x38] sm:$0xff]
        %v4314 = vld [vmem:[#allocation3 + $0x40] sm:$0xff]
        %v4315 = vld [vmem:[#allocation3 + $0x48] sm:$0xff]
        %v4316 = vld [vmem:[#allocation3 + $0x50] sm:$0xff]
        %v4317 = vld [vmem:[#allocation3 + $0x58] sm:$0xff]
        %v4318 = vld [vmem:[#allocation3 + $0x60] sm:$0xff]
        %v4319 = vld [vmem:[#allocation3 + $0x68] sm:$0xff]
        %v4320 = vld [vmem:[#allocation3 + $0x70] sm:$0xff]
        %v4321 = vld [vmem:[#allocation3 + $0x78] sm:$0xff]
        %v4322 = vld [vmem:[#allocation3 + $0x80] sm:$0xff]
        %v4323 = vld [vmem:[#allocation3 + $0x88] sm:$0xff]
        %v4324 = vld [vmem:[#allocation3 + $0x90] sm:$0xff]
        %v4325 = vld [vmem:[#allocation3 + $0x98] sm:$0xff]
        %v4326 = vld [vmem:[#allocation3 + $0xa0] sm:$0xff]
        %v4327 = vld [vmem:[#allocation3 + $0xa8] sm:$0xff]
        %v4328 = vld [vmem:[#allocation3 + $0xb0] sm:$0xff]
        %v4329 = vld [vmem:[#allocation3 + $0xb8] sm:$0xff]
        %v4330 = vld [vmem:[#allocation3 + $0xc0] sm:$0xff]
        %v4331 = vld [vmem:[#allocation3 + $0xc8] sm:$0xff]
        %v4332 = vld [vmem:[#allocation3 + $0xd0] sm:$0xff]
        %v4333 = vld [vmem:[#allocation3 + $0xd8] sm:$0xff]
        %v4334 = vld [vmem:[#allocation3 + $0xe0] sm:$0xff]
        %v4335 = vld [vmem:[#allocation3 + $0xe8] sm:$0xff]
        %v4336 = vld [vmem:[#allocation3 + $0xf0] sm:$0xff]
        %v4337 = vld [vmem:[#allocation3 + $0xf8] sm:$0xff]
        %v4338 = vld [vmem:[#allocation3 + $0x100] sm:$0xff]
        %v4339 = vld [vmem:[#allocation3 + $0x108] sm:$0xff]
        %v4340 = vld [vmem:[#allocation3 + $0x110] sm:$0xff]
        %v4341 = vld [vmem:[#allocation3 + $0x118] sm:$0xff]
        %v4342 = vld [vmem:[#allocation3 + $0x120] sm:$0xff]
        %v4343 = vld [vmem:[#allocation3 + $0x128] sm:$0xff]
        %v4344 = vld [vmem:[#allocation3 + $0x130] sm:$0xff]
        %v4345 = vld [vmem:[#allocation3 + $0x138] sm:$0xff]
        %v4346 = vld [vmem:[#allocation3 + $0x140] sm:$0xff]
        %v4347 = vld [vmem:[#allocation3 + $0x148] sm:$0xff]
        %v4348 = vld [vmem:[#allocation3 + $0x150] sm:$0xff]
        %v4349 = vld [vmem:[#allocation3 + $0x158] sm:$0xff]
        %v4350 = vld [vmem:[#allocation3 + $0x160] sm:$0xff]
        %v4351 = vld [vmem:[#allocation3 + $0x168] sm:$0xff]
        %v4352 = vld [vmem:[#allocation3 + $0x170] sm:$0xff]
        %v4353 = vld [vmem:[#allocation3 + $0x178] sm:$0xff]
        %v4354 = vld [vmem:[#allocation3 + $0x180] sm:$0xff]
        %v4355 = vld [vmem:[#allocation3 + $0x188] sm:$0xff]
        %v4356 = vld [vmem:[#allocation3 + $0x190] sm:$0xff]
        %v4357 = vld [vmem:[#allocation3 + $0x198] sm:$0xff]
        %v4358 = vld [vmem:[#allocation3 + $0x1a0] sm:$0xff]
        %v4359 = vld [vmem:[#allocation3 + $0x1a8] sm:$0xff]
        %v4360 = vld [vmem:[#allocation3 + $0x1b0] sm:$0xff]
        %v4361 = vld [vmem:[#allocation3 + $0x1b8] sm:$0xff]
        %v4362 = vld [vmem:[#allocation3 + $0x1c0] sm:$0xff]
        %v4363 = vld [vmem:[#allocation3 + $0x1c8] sm:$0xff]
        %v4364 = vld [vmem:[#allocation3 + $0x1d0] sm:$0xff]
        %v4365 = vld [vmem:[#allocation3 + $0x1d8] sm:$0xff]
        %v4366 = vld [vmem:[#allocation3 + $0x1e0] sm:$0xff]
        %v4367 = vld [vmem:[#allocation3 + $0x1e8] sm:$0xff]
        %v4368 = vld [vmem:[#allocation3 + $0x1f0] sm:$0xff]
        %v4369 = vld [vmem:[#allocation3 + $0x1f8] sm:$0xff]
        %v4370 = vld [vmem:[#allocation3 + $0x200] sm:$0xff]
        %v4371 = vld [vmem:[#allocation3 + $0x208] sm:$0xff]
        %v4372 = vld [vmem:[#allocation3 + $0x210] sm:$0xff]
        %v4373 = vld [vmem:[#allocation3 + $0x218] sm:$0xff]
        %v4374 = vld [vmem:[#allocation3 + $0x220] sm:$0xff]
        %v4375 = vld [vmem:[#allocation3 + $0x228] sm:$0xff]
        %v4376 = vld [vmem:[#allocation3 + $0x230] sm:$0xff]
        %v4377 = vld [vmem:[#allocation3 + $0x238] sm:$0xff]
        %v4378 = vld [vmem:[#allocation3 + $0x240] sm:$0xff]
        %v4379 = vld [vmem:[#allocation3 + $0x248] sm:$0xff]
        %v4380 = vld [vmem:[#allocation3 + $0x250] sm:$0xff]
        %v4381 = vld [vmem:[#allocation3 + $0x258] sm:$0xff]
        %v4382 = vld [vmem:[#allocation3 + $0x260] sm:$0xff]
        %v4383 = vld [vmem:[#allocation3 + $0x268] sm:$0xff]
        %v4384 = vld [vmem:[#allocation3 + $0x270] sm:$0xff]
        %v4385 = vld [vmem:[#allocation3 + $0x278] sm:$0xff]
        %v4386 = vld [vmem:[#allocation3 + $0x280] sm:$0xff]
        %v4387 = vld [vmem:[#allocation3 + $0x288] sm:$0xff]
        %v4388 = vld [vmem:[#allocation3 + $0x290] sm:$0xff]
        %v4389 = vld [vmem:[#allocation3 + $0x298] sm:$0xff]
        %v4390 = vld [vmem:[#allocation3 + $0x2a0] sm:$0xff]
        %v4391 = vld [vmem:[#allocation3 + $0x2a8] sm:$0xff]
        %v4392 = vld [vmem:[#allocation3 + $0x2b0] sm:$0xff]
        %v4393 = vld [vmem:[#allocation3 + $0x2b8] sm:$0xff]
        %v4394 = vld [vmem:[#allocation3 + $0x2c0] sm:$0xff]
        %v4395 = vld [vmem:[#allocation3 + $0x2c8] sm:$0xff]
        %v4396 = vld [vmem:[#allocation3 + $0x2d0] sm:$0xff]
        %v4397 = vld [vmem:[#allocation3 + $0x2d8] sm:$0xff]
        %v4398 = vld [vmem:[#allocation3 + $0x2e0] sm:$0xff]
        %v4399 = vld [vmem:[#allocation3 + $0x2e8] sm:$0xff]
        %v4400 = vld [vmem:[#allocation3 + $0x2f0] sm:$0xff]
        %v4401 = vld [vmem:[#allocation3 + $0x2f8] sm:$0xff]
        %v4402 = vld [vmem:[#allocation3 + $0x300] sm:$0xff]
        %v4403 = vld [vmem:[#allocation3 + $0x308] sm:$0xff]
        %v4404 = vld [vmem:[#allocation3 + $0x310] sm:$0xff]
        %v4405 = vld [vmem:[#allocation3 + $0x318] sm:$0xff]
        %v4406 = vld [vmem:[#allocation3 + $0x320] sm:$0xff]
        %v4407 = vld [vmem:[#allocation3 + $0x328] sm:$0xff]
        %v4408 = vld [vmem:[#allocation3 + $0x330] sm:$0xff]
        %v4409 = vld [vmem:[#allocation3 + $0x338] sm:$0xff]
        %v4410 = vld [vmem:[#allocation3 + $0x340] sm:$0xff]
        %v4411 = vld [vmem:[#allocation3 + $0x348] sm:$0xff]
        %v4412 = vld [vmem:[#allocation3 + $0x350] sm:$0xff]
        %v4413 = vld [vmem:[#allocation3 + $0x358] sm:$0xff]
        %v4414 = vld [vmem:[#allocation3 + $0x360] sm:$0xff]
        %v4415 = vld [vmem:[#allocation3 + $0x368] sm:$0xff]
        %v4416 = vld [vmem:[#allocation3 + $0x370] sm:$0xff]
        %v4417 = vld [vmem:[#allocation3 + $0x378] sm:$0xff]
        %v4418 = vld [vmem:[#allocation3 + $0x380] sm:$0xff]
        %v4419 = vld [vmem:[#allocation3 + $0x388] sm:$0xff]
        %v4420 = vld [vmem:[#allocation3 + $0x390] sm:$0xff]
        %v4421 = vld [vmem:[#allocation3 + $0x398] sm:$0xff]
        %v4422 = vld [vmem:[#allocation3 + $0x3a0] sm:$0xff]
        %v4423 = vld [vmem:[#allocation3 + $0x3a8] sm:$0xff]
        %v4424 = vld [vmem:[#allocation3 + $0x3b0] sm:$0xff]
        %v4425 = vld [vmem:[#allocation3 + $0x3b8] sm:$0xff]
        %v4426 = vld [vmem:[#allocation3 + $0x3c0] sm:$0xff]
        %v4427 = vld [vmem:[#allocation3 + $0x3c8] sm:$0xff]
        %v4428 = vld [vmem:[#allocation3 + $0x3d0] sm:$0xff]
        %v4429 = vld [vmem:[#allocation3 + $0x3d8] sm:$0xff]
        %v4430 = vld [vmem:[#allocation3 + $0x3e0] sm:$0xff]
        %v4431 = vld [vmem:[#allocation3 + $0x3e8] sm:$0xff]
        %v4432 = vld [vmem:[#allocation3 + $0x3f0] sm:$0xff]
        %v4433 = vld [vmem:[#allocation3 + $0x3f8] sm:$0xff]
        %v4434 = vld [vmem:[#allocation3 + $0x400] sm:$0xff]
        %v4435 = vld [vmem:[#allocation3 + $0x408] sm:$0xff]
        %v4436 = vld [vmem:[#allocation3 + $0x410] sm:$0xff]
        %v4437 = vld [vmem:[#allocation3 + $0x418] sm:$0xff]
        %v4438 = vld [vmem:[#allocation3 + $0x420] sm:$0xff]
        %v4439 = vld [vmem:[#allocation3 + $0x428] sm:$0xff]
        %v4440 = vld [vmem:[#allocation3 + $0x430] sm:$0xff]
        %v4441 = vld [vmem:[#allocation3 + $0x438] sm:$0xff]
        %v4442 = vld [vmem:[#allocation3 + $0x440] sm:$0xff]
        %v4443 = vld [vmem:[#allocation3 + $0x448] sm:$0xff]
        %v4444 = vld [vmem:[#allocation3 + $0x450] sm:$0xff]
        %v4445 = vld [vmem:[#allocation3 + $0x458] sm:$0xff]
        %v4446 = vld [vmem:[#allocation3 + $0x460] sm:$0xff]
        %v4447 = vld [vmem:[#allocation3 + $0x468] sm:$0xff]
        %v4448 = vld [vmem:[#allocation3 + $0x470] sm:$0xff]
        %v4449 = vld [vmem:[#allocation3 + $0x478] sm:$0xff]
        %v4450 = vld [vmem:[%s6] sm:$0xf]
        %v4451 = vld [vmem:[%s6 + $0x4] sm:$0xf]
        %v4452 = vld [vmem:[%s6 + $0x8] sm:$0xf]
        %v4453 = vld [vmem:[%s6 + $0xc] sm:$0xf]
        %v4454 = vld [vmem:[%s6 + $0x10] sm:$0xf]
        %v4455 = vld [vmem:[%s6 + $0x14] sm:$0xf]
        %v4456 = vld [vmem:[%s6 + $0x18] sm:$0xf]
        %v4457 = vld [vmem:[%s6 + $0x1c] sm:$0xf]
        %v4458 = vld [vmem:[%s6 + $0x20] sm:$0xf]
        %v4459 = vld [vmem:[%s6 + $0x24] sm:$0xf]
        %v4460 = vld [vmem:[%s6 + $0x28] sm:$0xf]
        %v4461 = vld [vmem:[%s6 + $0x2c] sm:$0xf]
        %v4462 = vld [vmem:[%s6 + $0x30] sm:$0xf]
        %v4463 = vld [vmem:[%s6 + $0x34] sm:$0xf]
        %v4464 = vld [vmem:[%s6 + $0x38] sm:$0xf]
        %v4465 = vld [vmem:[%s6 + $0x3c] sm:$0xf]
        %v4466 = vld [vmem:[%s6 + $0x40] sm:$0xf]
        %v4467 = vld [vmem:[%s6 + $0x44] sm:$0xf]
        %v4468 = vld [vmem:[%s6 + $0x48] sm:$0xf]
        %v4469 = vld [vmem:[%s6 + $0x4c] sm:$0xf]
        %v4470 = vld [vmem:[%s6 + $0x50] sm:$0xf]
        %v4471 = vld [vmem:[%s6 + $0x54] sm:$0xf]
        %v4472 = vld [vmem:[%s6 + $0x58] sm:$0xf]
        %v4473 = vld [vmem:[%s6 + $0x5c] sm:$0xf]
        %v4474 = vld [vmem:[%s6 + $0x60] sm:$0xf]
        %v4475 = vld [vmem:[%s6 + $0x64] sm:$0xf]
        %v4476 = vld [vmem:[%s6 + $0x68] sm:$0xf]
        %v4477 = vld [vmem:[%s6 + $0x6c] sm:$0xf]
        %v4478 = vld [vmem:[%s6 + $0x70] sm:$0xf]
        %v4479 = vld [vmem:[%s6 + $0x74] sm:$0xf]
        %v4480 = vld [vmem:[%s6 + $0x78] sm:$0xf]
        %v4481 = vld [vmem:[%s6 + $0x7c] sm:$0xf]
        %v4482 = vld [vmem:[%s6 + $0x80] sm:$0xf]
        %v4483 = vld [vmem:[%s6 + $0x84] sm:$0xf]
        %v4484 = vld [vmem:[%s6 + $0x88] sm:$0xf]
        %v4485 = vld [vmem:[%s6 + $0x8c] sm:$0xf]
        %v4486 = vld [vmem:[%s6 + $0x90] sm:$0xf]
        %v4487 = vld [vmem:[%s6 + $0x94] sm:$0xf]
        %v4488 = vld [vmem:[%s6 + $0x98] sm:$0xf]
        %v4489 = vld [vmem:[%s6 + $0x9c] sm:$0xf]
        %v4490 = vld [vmem:[%s6 + $0xa0] sm:$0xf]
        %v4491 = vld [vmem:[%s6 + $0xa4] sm:$0xf]
        %v4492 = vld [vmem:[%s6 + $0xa8] sm:$0xf]
        %v4493 = vld [vmem:[%s6 + $0xac] sm:$0xf]
        %v4494 = vld [vmem:[%s6 + $0xb0] sm:$0xf]
        %v4495 = vld [vmem:[%s6 + $0xb4] sm:$0xf]
        %v4496 = vld [vmem:[%s6 + $0xb8] sm:$0xf]
        %v4497 = vld [vmem:[%s6 + $0xbc] sm:$0xf]
        %v4498 = vld [vmem:[%s6 + $0xc0] sm:$0xf]
        %v4499 = vld [vmem:[%s6 + $0xc4] sm:$0xf]
        %v4500 = vld [vmem:[%s6 + $0xc8] sm:$0xf]
        %v4501 = vld [vmem:[%s6 + $0xcc] sm:$0xf]
        %v4502 = vld [vmem:[%s6 + $0xd0] sm:$0xf]
        %v4503 = vld [vmem:[%s6 + $0xd4] sm:$0xf]
        %v4504 = vld [vmem:[%s6 + $0xd8] sm:$0xf]
        %v4505 = vld [vmem:[%s6 + $0xdc] sm:$0xf]
        %v4506 = vld [vmem:[%s6 + $0xe0] sm:$0xf]
        %v4507 = vld [vmem:[%s6 + $0xe4] sm:$0xf]
        %v4508 = vld [vmem:[%s6 + $0xe8] sm:$0xf]
        %v4509 = vld [vmem:[%s6 + $0xec] sm:$0xf]
        %v4510 = vld [vmem:[%s6 + $0xf0] sm:$0xf]
        %v4511 = vld [vmem:[%s6 + $0xf4] sm:$0xf]
        %v4512 = vld [vmem:[%s6 + $0xf8] sm:$0xf]
        %v4513 = vld [vmem:[%s6 + $0xfc] sm:$0xf]
        %v4514 = vld [vmem:[%s6 + $0x100] sm:$0xf]
        %v4515 = vld [vmem:[%s6 + $0x104] sm:$0xf]
        %v4516 = vld [vmem:[%s6 + $0x108] sm:$0xf]
        %v4517 = vld [vmem:[%s6 + $0x10c] sm:$0xf]
        %v4518 = vld [vmem:[%s6 + $0x110] sm:$0xf]
        %v4519 = vld [vmem:[%s6 + $0x114] sm:$0xf]
        %v4520 = vld [vmem:[%s6 + $0x118] sm:$0xf]
        %v4521 = vld [vmem:[%s6 + $0x11c] sm:$0xf]
        %v4522 = vld [vmem:[%s6 + $0x120] sm:$0xf]
        %v4523 = vld [vmem:[%s6 + $0x124] sm:$0xf]
        %v4524 = vld [vmem:[%s6 + $0x128] sm:$0xf]
        %v4525 = vld [vmem:[%s6 + $0x12c] sm:$0xf]
        %v4526 = vld [vmem:[%s6 + $0x130] sm:$0xf]
        %v4527 = vld [vmem:[%s6 + $0x134] sm:$0xf]
        %v4528 = vld [vmem:[%s6 + $0x138] sm:$0xf]
        %v4529 = vld [vmem:[%s6 + $0x13c] sm:$0xf]
        %v4530 = vld [vmem:[%s6 + $0x140] sm:$0xf]
        %v4531 = vld [vmem:[%s6 + $0x144] sm:$0xf]
        %v4532 = vld [vmem:[%s6 + $0x148] sm:$0xf]
        %v4533 = vld [vmem:[%s6 + $0x14c] sm:$0xf]
        %v4534 = vld [vmem:[%s6 + $0x150] sm:$0xf]
        %v4535 = vld [vmem:[%s6 + $0x154] sm:$0xf]
        %v4536 = vld [vmem:[%s6 + $0x158] sm:$0xf]
        %v4537 = vld [vmem:[%s6 + $0x15c] sm:$0xf]
        %v4538 = vld [vmem:[%s6 + $0x160] sm:$0xf]
        %v4539 = vld [vmem:[%s6 + $0x164] sm:$0xf]
        %v4540 = vld [vmem:[%s6 + $0x168] sm:$0xf]
        %v4541 = vld [vmem:[%s6 + $0x16c] sm:$0xf]
        %v4542 = vld [vmem:[%s6 + $0x170] sm:$0xf]
        %v4543 = vld [vmem:[%s6 + $0x174] sm:$0xf]
        %v4544 = vld [vmem:[%s6 + $0x178] sm:$0xf]
        %v4545 = vld [vmem:[%s6 + $0x17c] sm:$0xf]
        %v4546 = vld [vmem:[%s6 + $0x180] sm:$0xf]
        %v4547 = vld [vmem:[%s6 + $0x184] sm:$0xf]
        %v4548 = vld [vmem:[%s6 + $0x188] sm:$0xf]
        %v4549 = vld [vmem:[%s6 + $0x18c] sm:$0xf]
        %v4550 = vld [vmem:[%s6 + $0x190] sm:$0xf]
        %v4551 = vld [vmem:[%s6 + $0x194] sm:$0xf]
        %v4552 = vld [vmem:[%s6 + $0x198] sm:$0xf]
        %v4553 = vld [vmem:[%s6 + $0x19c] sm:$0xf]
        %v4554 = vld [vmem:[%s6 + $0x1a0] sm:$0xf]
        %v4555 = vld [vmem:[%s6 + $0x1a4] sm:$0xf]
        %v4556 = vld [vmem:[%s6 + $0x1a8] sm:$0xf]
        %v4557 = vld [vmem:[%s6 + $0x1ac] sm:$0xf]
        %v4558 = vld [vmem:[%s6 + $0x1b0] sm:$0xf]
        %v4559 = vld [vmem:[%s6 + $0x1b4] sm:$0xf]
        %v4560 = vld [vmem:[%s6 + $0x1b8] sm:$0xf]
        %v4561 = vld [vmem:[%s6 + $0x1bc] sm:$0xf]
        %v4562 = vld [vmem:[%s6 + $0x1c0] sm:$0xf]
        %v4563 = vld [vmem:[%s6 + $0x1c4] sm:$0xf]
        %v4564 = vld [vmem:[%s6 + $0x1c8] sm:$0xf]
        %v4565 = vld [vmem:[%s6 + $0x1cc] sm:$0xf]
        %v4566 = vld [vmem:[%s6 + $0x1d0] sm:$0xf]
        %v4567 = vld [vmem:[%s6 + $0x1d4] sm:$0xf]
        %v4568 = vld [vmem:[%s6 + $0x1d8] sm:$0xf]
        %v4569 = vld [vmem:[%s6 + $0x1dc] sm:$0xf]
        %v4570 = vld [vmem:[%s6 + $0x1e0] sm:$0xf]
        %v4571 = vld [vmem:[%s6 + $0x1e4] sm:$0xf]
        %v4572 = vld [vmem:[%s6 + $0x1e8] sm:$0xf]
        %v4573 = vld [vmem:[%s6 + $0x1ec] sm:$0xf]
        %v4574 = vld [vmem:[%s6 + $0x1f0] sm:$0xf]
        %v4575 = vld [vmem:[%s6 + $0x1f4] sm:$0xf]
        %v4576 = vld [vmem:[%s6 + $0x1f8] sm:$0xf]
        %v4577 = vld [vmem:[%s6 + $0x1fc] sm:$0xf]
        %v4578 = vld [vmem:[%s6 + $0x200] sm:$0xf]
        %v4579 = vld [vmem:[%s6 + $0x204] sm:$0xf]
        %v4580 = vld [vmem:[%s6 + $0x208] sm:$0xf]
        %v4581 = vld [vmem:[%s6 + $0x20c] sm:$0xf]
        %v4582 = vld [vmem:[%s6 + $0x210] sm:$0xf]
        %v4583 = vld [vmem:[%s6 + $0x214] sm:$0xf]
        %v4584 = vld [vmem:[%s6 + $0x218] sm:$0xf]
        %v4585 = vld [vmem:[%s6 + $0x21c] sm:$0xf]
        %v4586 = vld [vmem:[%s6 + $0x220] sm:$0xf]
        %v4587 = vld [vmem:[%s6 + $0x224] sm:$0xf]
        %v4588 = vld [vmem:[%s6 + $0x228] sm:$0xf]
        %v4589 = vld [vmem:[%s6 + $0x22c] sm:$0xf]
        %v4590 = vld [vmem:[%s6 + $0x230] sm:$0xf]
        %v4591 = vld [vmem:[%s6 + $0x234] sm:$0xf]
        %v4592 = vld [vmem:[%s6 + $0x238] sm:$0xf]
        %v4593 = vld [vmem:[%s6 + $0x23c] sm:$0xf]
        %v4594 = vld [vmem:[%s533] sm:$0x1]
        %v4595 = vsub.f32 0.0, %v4594
        %v4596 = vmul.f32 %v4595, 1.442695
        %v4597 = vpow.pop %v4596
        %v4598 = vadd.f32 %v4597, 1.0
        %v4599 = vrcp.pop %v4598
        %v4600 = vmul.f32 %v4594, %v4599
        %v4601 = vld [vmem:[%s8] sm:$0xff]
        %v4602 = vld [vmem:[%s8 + $0x8] sm:$0xff]
        %v4603 = vld [vmem:[%s8 + $0x10] sm:$0xff]
        %v4604 = vld [vmem:[%s8 + $0x18] sm:$0xff]
        %v4605 = vld [vmem:[%s8 + $0x20] sm:$0xff]
        %v4606 = vld [vmem:[%s8 + $0x28] sm:$0xff]
        %v4607 = vld [vmem:[%s8 + $0x30] sm:$0xff]
        %v4608 = vld [vmem:[%s8 + $0x38] sm:$0xff]
        %v4609 = vld [vmem:[%s9] sm:$0x1]
        %vm4610 = vcmask 523264
        %v4612 = vsel %vm4610, %v4600, 0
        %4614 = vmatprep.subr.mxu0 0.0
        %4615 = vmatpush1.msra.mxu0 %v4601
        %4616 = vmatprep.subr.mxu0 0.0
        %4617 = vmatpush1.msra.mxu0 %v4602
        %4618 = vmatprep.subr.mxu0 0.0
        %4619 = vmatpush1.msra.mxu0 %v4603
        %4620 = vmatprep.subr.mxu0 0.0
        %4621 = vmatpush1.msra.mxu0 %v4604
        %4622 = vmatprep.subr.mxu0 0.0
        %4623 = vmatpush1.msra.mxu0 %v4605
        %4624 = vmatprep.subr.mxu0 0.0
        %4625 = vmatpush1.msra.mxu0 %v4606
        %4626 = vmatprep.subr.mxu0 0.0
        %4627 = vmatpush1.msra.mxu0 %v4607
        %4628 = vmatprep.subr.mxu0 0.0
        %4629 = vmatpush1.msra.mxu0 %v4608
        %4630 = vmatprep.subr.mxu0 0.0
        %4631 = vmatpush1.msra.mxu0 0.0
        %4632 = vmatprep.subr.mxu0 0.0
        %4633 = vmatpush1.msra.mxu0 0.0
        %4634 = vmatprep.subr.mxu0 0.0
        %4635 = vmatpush1.msra.mxu0 0.0
        %4636 = vmatprep.subr.mxu0 0.0
        %4637 = vmatpush1.msra.mxu0 0.0
        %4638 = vmatprep.subr.mxu0 0.0
        %4639 = vmatpush1.msra.mxu0 0.0
        %4640 = vmatprep.subr.mxu0 0.0
        %4641 = vmatpush1.msra.mxu0 0.0
        %4642 = vmatprep.subr.mxu0 0.0
        %4643 = vmatpush1.msra.mxu0 0.0
        %4644 = vmatprep.subr.mxu0 0.0
        %4645 = vmatpush1.msra.mxu0 0.0
        %4646 = vmatprep.subr.mxu0 0.0
        %4647 = vmatpush1.msra.mxu0 0.0
        %4648 = vmatprep.subr.mxu0 0.0
        %4649 = vmatpush1.msra.mxu0 0.0
        %4650 = vmatprep.subr.mxu0 0.0
        %4651 = vmatpush1.msra.mxu0 0.0
        %4652 = vmatprep.subr.mxu0 0.0
        %4653 = vmatpush1.msra.mxu0 0.0
        %4654 = vmatprep.subr.mxu0 0.0
        %4655 = vmatpush1.msra.mxu0 0.0
        %4656 = vmatprep.subr.mxu0 0.0
        %4657 = vmatpush1.msra.mxu0 0.0
        %4658 = vmatprep.subr.mxu0 0.0
        %4659 = vmatpush1.msra.mxu0 0.0
        %4660 = vmatprep.subr.mxu0 0.0
        %4661 = vmatpush1.msra.mxu0 0.0
        %4662 = vmatprep.subr.mxu0 0.0
        %4663 = vmatpush1.msra.mxu0 0.0
        %4664 = vmatprep.subr.mxu0 0.0
        %4665 = vmatpush1.msra.mxu0 0.0
        %4666 = vmatprep.subr.mxu0 0.0
        %4667 = vmatpush1.msra.mxu0 0.0
        %4668 = vmatprep.subr.mxu0 0.0
        %4669 = vmatpush1.msra.mxu0 0.0
        %4670 = vmatprep.subr.mxu0 0.0
        %4671 = vmatpush1.msra.mxu0 0.0
        %4672 = vmatprep.subr.mxu0 0.0
        %4673 = vmatpush1.msra.mxu0 0.0
        %4674 = vmatprep.subr.mxu0 0.0
        %4675 = vmatpush1.msra.mxu0 0.0
        %4676 = vmatprep.subr.mxu0 0.0
        %4677 = vmatpush1.msra.mxu0 0.0
        %4678 = vmatprep.mubr.f32.mxu0 0.0
        %4679 = vmatmul.mubr.f32.gmra.mrb[0].mxu0 %v4612
        %v4680 = vpop.f32.mrb[0].mxu0
        %v4681 = vadd.f32 %v4609, %v4680
        %v4682 = vpop.f32.mrb[0].mxu0
        %4683 = vdwg.mxu0
        %v4684 = vld [vmem:[%s7] sm:$0x1]
        %v4686 = vlaneseq
        %v4687 = vshrl.u32 %v4686, 7
        %v4688 = vsub.s32 0, %v4687
        %v4689 = vrot.slane %v4684, %v4688
        %v4835 = vunpack.c.l.b16 %v4450
        %v4836 = vunpack.c.l.b16 %v4451
        %v4837 = vunpack.c.l.b16 %v4452
        %v4838 = vunpack.c.l.b16 %v4453
        %v4839 = vunpack.c.l.b16 %v4454
        %v4840 = vunpack.c.l.b16 %v4455
        %v4841 = vunpack.c.l.b16 %v4456
        %v4842 = vunpack.c.l.b16 %v4457
        %v4843 = vunpack.c.l.b16 %v4458
        %v4844 = vunpack.c.l.b16 %v4459
        %v4845 = vunpack.c.l.b16 %v4460
        %v4846 = vunpack.c.l.b16 %v4461
        %v4847 = vunpack.c.l.b16 %v4462
        %v4848 = vunpack.c.l.b16 %v4463
        %v4849 = vunpack.c.l.b16 %v4464
        %v4850 = vunpack.c.l.b16 %v4465
        %v4851 = vunpack.c.l.b16 %v4466
        %v4852 = vunpack.c.l.b16 %v4467
        %v4853 = vunpack.c.l.b16 %v4468
        %v4854 = vunpack.c.l.b16 %v4469
        %v4855 = vunpack.c.l.b16 %v4470
        %v4856 = vunpack.c.l.b16 %v4471
        %v4857 = vunpack.c.l.b16 %v4472
        %v4858 = vunpack.c.l.b16 %v4473
        %v4859 = vunpack.c.l.b16 %v4474
        %v4860 = vunpack.c.l.b16 %v4475
        %v4861 = vunpack.c.l.b16 %v4476
        %v4862 = vunpack.c.l.b16 %v4477
        %v4863 = vunpack.c.l.b16 %v4478
        %v4864 = vunpack.c.l.b16 %v4479
        %v4865 = vunpack.c.l.b16 %v4480
        %v4866 = vunpack.c.l.b16 %v4481
        %v4867 = vunpack.c.l.b16 %v4482
        %v4868 = vunpack.c.l.b16 %v4483
        %v4869 = vunpack.c.l.b16 %v4484
        %v4870 = vunpack.c.l.b16 %v4485
        %v4871 = vunpack.c.l.b16 %v4486
        %v4872 = vunpack.c.l.b16 %v4487
        %v4873 = vunpack.c.l.b16 %v4488
        %v4874 = vunpack.c.l.b16 %v4489
        %v4875 = vunpack.c.l.b16 %v4490
        %v4876 = vunpack.c.l.b16 %v4491
        %v4877 = vunpack.c.l.b16 %v4492
        %v4878 = vunpack.c.l.b16 %v4493
        %v4879 = vunpack.c.l.b16 %v4494
        %v4880 = vunpack.c.l.b16 %v4495
        %v4881 = vunpack.c.l.b16 %v4496
        %v4882 = vunpack.c.l.b16 %v4497
        %v4883 = vunpack.c.l.b16 %v4498
        %v4884 = vunpack.c.l.b16 %v4499
        %v4885 = vunpack.c.l.b16 %v4500
        %v4886 = vunpack.c.l.b16 %v4501
        %v4887 = vunpack.c.l.b16 %v4502
        %v4888 = vunpack.c.l.b16 %v4503
        %v4889 = vunpack.c.l.b16 %v4504
        %v4890 = vunpack.c.l.b16 %v4505
        %v4891 = vunpack.c.l.b16 %v4506
        %v4892 = vunpack.c.l.b16 %v4507
        %v4893 = vunpack.c.l.b16 %v4508
        %v4894 = vunpack.c.l.b16 %v4509
        %v4895 = vunpack.c.l.b16 %v4510
        %v4896 = vunpack.c.l.b16 %v4511
        %v4897 = vunpack.c.l.b16 %v4512
        %v4898 = vunpack.c.l.b16 %v4513
        %v4899 = vunpack.c.l.b16 %v4514
        %v4900 = vunpack.c.l.b16 %v4515
        %v4901 = vunpack.c.l.b16 %v4516
        %v4902 = vunpack.c.l.b16 %v4517
        %v4903 = vunpack.c.l.b16 %v4518
        %v4904 = vunpack.c.l.b16 %v4519
        %v4905 = vunpack.c.l.b16 %v4520
        %v4906 = vunpack.c.l.b16 %v4521
        %v4907 = vunpack.c.l.b16 %v4522
        %v4908 = vunpack.c.l.b16 %v4523
        %v4909 = vunpack.c.l.b16 %v4524
        %v4910 = vunpack.c.l.b16 %v4525
        %v4911 = vunpack.c.l.b16 %v4526
        %v4912 = vunpack.c.l.b16 %v4527
        %v4913 = vunpack.c.l.b16 %v4528
        %v4914 = vunpack.c.l.b16 %v4529
        %v4915 = vunpack.c.l.b16 %v4530
        %v4916 = vunpack.c.l.b16 %v4531
        %v4917 = vunpack.c.l.b16 %v4532
        %v4918 = vunpack.c.l.b16 %v4533
        %v4919 = vunpack.c.l.b16 %v4534
        %v4920 = vunpack.c.l.b16 %v4535
        %v4921 = vunpack.c.l.b16 %v4536
        %v4922 = vunpack.c.l.b16 %v4537
        %v4923 = vunpack.c.l.b16 %v4538
        %v4924 = vunpack.c.l.b16 %v4539
        %v4925 = vunpack.c.l.b16 %v4540
        %v4926 = vunpack.c.l.b16 %v4541
        %v4927 = vunpack.c.l.b16 %v4542
        %v4928 = vunpack.c.l.b16 %v4543
        %v4929 = vunpack.c.l.b16 %v4544
        %v4930 = vunpack.c.l.b16 %v4545
        %v4931 = vunpack.c.l.b16 %v4546
        %v4932 = vunpack.c.l.b16 %v4547
        %v4933 = vunpack.c.l.b16 %v4548
        %v4934 = vunpack.c.l.b16 %v4549
        %v4935 = vunpack.c.l.b16 %v4550
        %v4936 = vunpack.c.l.b16 %v4551
        %v4937 = vunpack.c.l.b16 %v4552
        %v4938 = vunpack.c.l.b16 %v4553
        %v4939 = vunpack.c.l.b16 %v4554
        %v4940 = vunpack.c.l.b16 %v4555
        %v4941 = vunpack.c.l.b16 %v4556
        %v4942 = vunpack.c.l.b16 %v4557
        %v4943 = vunpack.c.l.b16 %v4558
        %v4944 = vunpack.c.l.b16 %v4559
        %v4945 = vunpack.c.l.b16 %v4560
        %v4946 = vunpack.c.l.b16 %v4561
        %v4947 = vunpack.c.l.b16 %v4562
        %v4948 = vunpack.c.l.b16 %v4563
        %v4949 = vunpack.c.l.b16 %v4564
        %v4950 = vunpack.c.l.b16 %v4565
        %v4951 = vunpack.c.l.b16 %v4566
        %v4952 = vunpack.c.l.b16 %v4567
        %v4953 = vunpack.c.l.b16 %v4568
        %v4954 = vunpack.c.l.b16 %v4569
        %v4955 = vunpack.c.l.b16 %v4570
        %v4956 = vunpack.c.l.b16 %v4571
        %v4957 = vunpack.c.l.b16 %v4572
        %v4958 = vunpack.c.l.b16 %v4573
        %v4959 = vunpack.c.l.b16 %v4574
        %v4960 = vunpack.c.l.b16 %v4575
        %v4961 = vunpack.c.l.b16 %v4576
        %v4962 = vunpack.c.l.b16 %v4577
        %v4963 = vunpack.c.l.b16 %v4578
        %v4964 = vunpack.c.l.b16 %v4579
        %v4965 = vunpack.c.l.b16 %v4580
        %v4966 = vunpack.c.l.b16 %v4581
        %v4967 = vunpack.c.l.b16 %v4582
        %v4968 = vunpack.c.l.b16 %v4583
        %v4969 = vunpack.c.l.b16 %v4584
        %v4970 = vunpack.c.l.b16 %v4585
        %v4971 = vunpack.c.l.b16 %v4586
        %v4972 = vunpack.c.l.b16 %v4587
        %v4973 = vunpack.c.l.b16 %v4588
        %v4974 = vunpack.c.l.b16 %v4589
        %v4975 = vunpack.c.l.b16 %v4590
        %v4976 = vunpack.c.l.b16 %v4591
        %v4977 = vunpack.c.l.b16 %v4592
        %v4978 = vunpack.c.l.b16 %v4593
        %v4979 = vpack.c.b16 %v4836, %v4835
        %v4980 = vpack.c.b16 %v4838, %v4837
        %v4981 = vpack.c.b16 %v4840, %v4839
        %v4982 = vpack.c.b16 %v4842, %v4841
        %v4983 = vpack.c.b16 %v4844, %v4843
        %v4984 = vpack.c.b16 %v4846, %v4845
        %v4985 = vpack.c.b16 %v4848, %v4847
        %v4986 = vpack.c.b16 %v4850, %v4849
        %v4987 = vpack.c.b16 %v4852, %v4851
        %v4988 = vpack.c.b16 %v4854, %v4853
        %v4989 = vpack.c.b16 %v4856, %v4855
        %v4990 = vpack.c.b16 %v4858, %v4857
        %v4991 = vpack.c.b16 %v4860, %v4859
        %v4992 = vpack.c.b16 %v4862, %v4861
        %v4993 = vpack.c.b16 %v4864, %v4863
        %v4994 = vpack.c.b16 %v4866, %v4865
        %v4995 = vpack.c.b16 %v4868, %v4867
        %v4996 = vpack.c.b16 %v4870, %v4869
        %v4997 = vpack.c.b16 %v4872, %v4871
        %v4998 = vpack.c.b16 %v4874, %v4873
        %v4999 = vpack.c.b16 %v4876, %v4875
        %v5000 = vpack.c.b16 %v4878, %v4877
        %v5001 = vpack.c.b16 %v4880, %v4879
        %v5002 = vpack.c.b16 %v4882, %v4881
        %v5003 = vpack.c.b16 %v4884, %v4883
        %v5004 = vpack.c.b16 %v4886, %v4885
        %v5005 = vpack.c.b16 %v4888, %v4887
        %v5006 = vpack.c.b16 %v4890, %v4889
        %v5007 = vpack.c.b16 %v4892, %v4891
        %v5008 = vpack.c.b16 %v4894, %v4893
        %v5009 = vpack.c.b16 %v4896, %v4895
        %v5010 = vpack.c.b16 %v4898, %v4897
        %v5011 = vpack.c.b16 %v4900, %v4899
        %v5012 = vpack.c.b16 %v4902, %v4901
        %v5013 = vpack.c.b16 %v4904, %v4903
        %v5014 = vpack.c.b16 %v4906, %v4905
        %v5015 = vpack.c.b16 %v4908, %v4907
        %v5016 = vpack.c.b16 %v4910, %v4909
        %v5017 = vpack.c.b16 %v4912, %v4911
        %v5018 = vpack.c.b16 %v4914, %v4913
        %v5019 = vpack.c.b16 %v4916, %v4915
        %v5020 = vpack.c.b16 %v4918, %v4917
        %v5021 = vpack.c.b16 %v4920, %v4919
        %v5022 = vpack.c.b16 %v4922, %v4921
        %v5023 = vpack.c.b16 %v4924, %v4923
        %v5024 = vpack.c.b16 %v4926, %v4925
        %v5025 = vpack.c.b16 %v4928, %v4927
        %v5026 = vpack.c.b16 %v4930, %v4929
        %v5027 = vpack.c.b16 %v4932, %v4931
        %v5028 = vpack.c.b16 %v4934, %v4933
        %v5029 = vpack.c.b16 %v4936, %v4935
        %v5030 = vpack.c.b16 %v4938, %v4937
        %v5031 = vpack.c.b16 %v4940, %v4939
        %v5032 = vpack.c.b16 %v4942, %v4941
        %v5033 = vpack.c.b16 %v4944, %v4943
        %v5034 = vpack.c.b16 %v4946, %v4945
        %v5035 = vpack.c.b16 %v4948, %v4947
        %v5036 = vpack.c.b16 %v4950, %v4949
        %v5037 = vpack.c.b16 %v4952, %v4951
        %v5038 = vpack.c.b16 %v4954, %v4953
        %v5039 = vpack.c.b16 %v4956, %v4955
        %v5040 = vpack.c.b16 %v4958, %v4957
        %v5041 = vpack.c.b16 %v4960, %v4959
        %v5042 = vpack.c.b16 %v4962, %v4961
        %v5043 = vpack.c.b16 %v4964, %v4963
        %v5044 = vpack.c.b16 %v4966, %v4965
        %v5045 = vpack.c.b16 %v4968, %v4967
        %v5046 = vpack.c.b16 %v4970, %v4969
        %v5047 = vpack.c.b16 %v4972, %v4971
        %v5048 = vpack.c.b16 %v4974, %v4973
        %v5049 = vpack.c.b16 %v4976, %v4975
        %v5050 = vpack.c.b16 %v4978, %v4977
        %5123 = vmatprep.subr.bf16.mxu0 0
        %5124 = vmatpush1.bf16.msra.mxu0 %v4979
        %5125 = vmatprep.subr.bf16.mxu0 0
        %5126 = vmatpush1.bf16.msra.mxu0 %v4980
        %5127 = vmatprep.subr.bf16.mxu0 0
        %5128 = vmatpush1.bf16.msra.mxu0 %v4981
        %5129 = vmatprep.subr.bf16.mxu0 0
        %5130 = vmatpush1.bf16.msra.mxu0 %v4982
        %5131 = vmatprep.subr.bf16.mxu0 0
        %5132 = vmatpush1.bf16.msra.mxu0 %v4983
        %5133 = vmatprep.subr.bf16.mxu0 0
        %5134 = vmatpush1.bf16.msra.mxu0 %v4984
        %5135 = vmatprep.subr.bf16.mxu0 0
        %5136 = vmatpush1.bf16.msra.mxu0 %v4985
        %5137 = vmatprep.subr.bf16.mxu0 0
        %5138 = vmatpush1.bf16.msra.mxu0 %v4986
        %5139 = vmatprep.subr.bf16.mxu0 0
        %5140 = vmatpush1.bf16.msra.mxu0 %v4987
        %5141 = vmatprep.subr.bf16.mxu0 0
        %5142 = vmatpush1.bf16.msra.mxu0 %v4988
        %5143 = vmatprep.subr.bf16.mxu0 0
        %5144 = vmatpush1.bf16.msra.mxu0 %v4989
        %5145 = vmatprep.subr.bf16.mxu0 0
        %5146 = vmatpush1.bf16.msra.mxu0 %v4990
        %5147 = vmatprep.subr.bf16.mxu0 0
        %5148 = vmatpush1.bf16.msra.mxu0 %v4991
        %5149 = vmatprep.subr.bf16.mxu0 0
        %5150 = vmatpush1.bf16.msra.mxu0 %v4992
        %5151 = vmatprep.subr.bf16.mxu0 0
        %5152 = vmatpush1.bf16.msra.mxu0 %v4993
        %5153 = vmatprep.subr.bf16.mxu0 0
        %5154 = vmatpush1.bf16.msra.mxu0 %v4994
        %5155 = vmatprep.mubr.bf16.mxu0 %v4307
        %5156 = vmatmul.mubr.bf16.gmra.mrb[0].mxu0 %v4306
        %v5157 = vpop.f32.mrb[0].mxu0
        %v5158 = vadd.f32 %v4689, %v5157
        %v5159 = vpop.f32.mrb[0].mxu0
        %v5160 = vpop.f32.mrb[0].mxu0
        %v5161 = vadd.f32 %v4689, %v5160
        %v5162 = vpop.f32.mrb[0].mxu0
        %5163 = vmatprep.mubr.bf16.mxu0 %v4316
        %5164 = vmatmul.mubr.bf16.gmra.mrb[0].mxu0 %v4315
        %v5165 = vpop.f32.mrb[0].mxu0
        %v5166 = vadd.f32 %v4689, %v5165
        %v5167 = vpop.f32.mrb[0].mxu0
        %v5168 = vpop.f32.mrb[0].mxu0
        %v5169 = vadd.f32 %v4689, %v5168
        %v5170 = vpop.f32.mrb[0].mxu0
        %5171 = vmatprep.mubr.bf16.mxu0 %v4325
        %5172 = vmatmul.mubr.bf16.gmra.mrb[0].mxu0 %v4324
        %v5173 = vpop.f32.mrb[0].mxu0
        %v5174 = vadd.f32 %v4689, %v5173
        %v5175 = vpop.f32.mrb[0].mxu0
        %v5176 = vpop.f32.mrb[0].mxu0
        %v5177 = vadd.f32 %v4689, %v5176
        %v5178 = vpop.f32.mrb[0].mxu0
        %5179 = vmatprep.mubr.bf16.mxu0 %v4334
        %5180 = vmatmul.mubr.bf16.gmra.mrb[0].mxu0 %v4333
        %v5181 = vpop.f32.mrb[0].mxu0
        %v5182 = vadd.f32 %v4689, %v5181
        %v5183 = vpop.f32.mrb[0].mxu0
        %v5184 = vpop.f32.mrb[0].mxu0
        %v5185 = vadd.f32 %v4689, %v5184
        %v5186 = vpop.f32.mrb[0].mxu0
        %5187 = vmatprep.mubr.bf16.mxu0 %v4343
        %5188 = vmatmul.mubr.bf16.gmra.mrb[0].mxu0 %v4342
        %v5189 = vpop.f32.mrb[0].mxu0
        %v5190 = vadd.f32 %v4689, %v5189
        %v5191 = vpop.f32.mrb[0].mxu0
        %v5192 = vpop.f32.mrb[0].mxu0
        %v5193 = vadd.f32 %v4689, %v5192
        %v5194 = vpop.f32.mrb[0].mxu0
        %5195 = vmatprep.mubr.bf16.mxu0 %v4352
        %5196 = vmatmul.mubr.bf16.gmra.mrb[0].mxu0 %v4351
        %v5197 = vpop.f32.mrb[0].mxu0
        %v5198 = vadd.f32 %v4689, %v5197
        %v5199 = vpop.f32.mrb[0].mxu0
        %v5200 = vpop.f32.mrb[0].mxu0
        %v5201 = vadd.f32 %v4689, %v5200
        %v5202 = vpop.f32.mrb[0].mxu0
        %5203 = vmatprep.mubr.bf16.mxu0 %v4361
        %5204 = vmatmul.mubr.bf16.gmra.mrb[0].mxu0 %v4360
        %v5205 = vpop.f32.mrb[0].mxu0
        %v5206 = vadd.f32 %v4689, %v5205
        %v5207 = vpop.f32.mrb[0].mxu0
        %v5208 = vpop.f32.mrb[0].mxu0
        %v5209 = vadd.f32 %v4689, %v5208
        %v5210 = vpop.f32.mrb[0].mxu0
        %5211 = vmatprep.mubr.bf16.mxu0 %v4370
        %5212 = vmatmul.mubr.bf16.gmra.mrb[0].mxu0 %v4369
        %v5213 = vpop.f32.mrb[0].mxu0
        %v5214 = vadd.f32 %v4689, %v5213
        %v5215 = vpop.f32.mrb[0].mxu0
        %v5216 = vpop.f32.mrb[0].mxu0
        %v5217 = vadd.f32 %v4689, %v5216
        %v5218 = vpop.f32.mrb[0].mxu0
        %5219 = vmatprep.mubr.bf16.mxu0 %v4379
        %5220 = vmatmul.mubr.bf16.gmra.mrb[0].mxu0 %v4378
        %v5221 = vpop.f32.mrb[0].mxu0
        %v5222 = vadd.f32 %v4689, %v5221
        %v5223 = vpop.f32.mrb[0].mxu0
        %v5224 = vpop.f32.mrb[0].mxu0
        %v5225 = vadd.f32 %v4689, %v5224
        %v5226 = vpop.f32.mrb[0].mxu0
        %5227 = vmatprep.mubr.bf16.mxu0 %v4388
        %5228 = vmatmul.mubr.bf16.gmra.mrb[0].mxu0 %v4387
        %v5229 = vpop.f32.mrb[0].mxu0
        %v5230 = vadd.f32 %v4689, %v5229
        %v5231 = vpop.f32.mrb[0].mxu0
        %v5232 = vpop.f32.mrb[0].mxu0
        %v5233 = vadd.f32 %v4689, %v5232
        %v5234 = vpop.f32.mrb[0].mxu0
        %5235 = vmatprep.mubr.bf16.mxu0 %v4397
        %5236 = vmatmul.mubr.bf16.gmra.mrb[0].mxu0 %v4396
        %v5237 = vpop.f32.mrb[0].mxu0
        %v5238 = vadd.f32 %v4689, %v5237
        %v5239 = vpop.f32.mrb[0].mxu0
        %v5240 = vpop.f32.mrb[0].mxu0
        %v5241 = vadd.f32 %v4689, %v5240
        %v5242 = vpop.f32.mrb[0].mxu0
        %5243 = vmatprep.mubr.bf16.mxu0 %v4406
        %5244 = vmatmul.mubr.bf16.gmra.mrb[0].mxu0 %v4405
        %v5245 = vpop.f32.mrb[0].mxu0
        %v5246 = vadd.f32 %v4689, %v5245
        %v5247 = vpop.f32.mrb[0].mxu0
        %v5248 = vpop.f32.mrb[0].mxu0
        %v5249 = vadd.f32 %v4689, %v5248
        %v5250 = vpop.f32.mrb[0].mxu0
        %5251 = vmatprep.mubr.bf16.mxu0 %v4415
        %5252 = vmatmul.mubr.bf16.gmra.mrb[0].mxu0 %v4414
        %v5253 = vpop.f32.mrb[0].mxu0
        %v5254 = vadd.f32 %v4689, %v5253
        %v5255 = vpop.f32.mrb[0].mxu0
        %v5256 = vpop.f32.mrb[0].mxu0
        %v5257 = vadd.f32 %v4689, %v5256
        %v5258 = vpop.f32.mrb[0].mxu0
        %5259 = vmatprep.mubr.bf16.mxu0 %v4424
        %5260 = vmatmul.mubr.bf16.gmra.mrb[0].mxu0 %v4423
        %v5261 = vpop.f32.mrb[0].mxu0
        %v5262 = vadd.f32 %v4689, %v5261
        %v5263 = vpop.f32.mrb[0].mxu0
        %v5264 = vpop.f32.mrb[0].mxu0
        %v5265 = vadd.f32 %v4689, %v5264
        %v5266 = vpop.f32.mrb[0].mxu0
        %5267 = vmatprep.mubr.bf16.mxu0 %v4433
        %5268 = vmatmul.mubr.bf16.gmra.mrb[0].mxu0 %v4432
        %v5269 = vpop.f32.mrb[0].mxu0
        %v5270 = vadd.f32 %v4689, %v5269
        %v5271 = vpop.f32.mrb[0].mxu0
        %v5272 = vpop.f32.mrb[0].mxu0
        %v5273 = vadd.f32 %v4689, %v5272
        %v5274 = vpop.f32.mrb[0].mxu0
        %5275 = vmatprep.mubr.bf16.mxu0 %v4442
        %5276 = vmatmul.mubr.bf16.gmra.mrb[0].mxu0 %v4441
        %v5277 = vpop.f32.mrb[0].mxu0
        %v5278 = vadd.f32 %v4689, %v5277
        %v5279 = vpop.f32.mrb[0].mxu0
        %v5280 = vpop.f32.mrb[0].mxu0
        %v5281 = vadd.f32 %v4689, %v5280
        %v5282 = vpop.f32.mrb[0].mxu0
        %5283 = vdwg.mxu0
        %5284 = vmatprep.subr.bf16.mxu0 0
        %5285 = vmatpush1.bf16.msra.mxu0 %v4995
        %5286 = vmatprep.subr.bf16.mxu0 0
        %5287 = vmatpush1.bf16.msra.mxu0 %v4996
        %5288 = vmatprep.subr.bf16.mxu0 0
        %5289 = vmatpush1.bf16.msra.mxu0 %v4997
        %5290 = vmatprep.subr.bf16.mxu0 0
        %5291 = vmatpush1.bf16.msra.mxu0 %v4998
        %5292 = vmatprep.subr.bf16.mxu0 0
        %5293 = vmatpush1.bf16.msra.mxu0 %v4999
        %5294 = vmatprep.subr.bf16.mxu0 0
        %5295 = vmatpush1.bf16.msra.mxu0 %v5000
        %5296 = vmatprep.subr.bf16.mxu0 0
        %5297 = vmatpush1.bf16.msra.mxu0 %v5001
        %5298 = vmatprep.subr.bf16.mxu0 0
        %5299 = vmatpush1.bf16.msra.mxu0 %v5002
        %5300 = vmatprep.subr.bf16.mxu0 0
        %5301 = vmatpush1.bf16.msra.mxu0 %v5003
        %5302 = vmatprep.subr.bf16.mxu0 0
        %5303 = vmatpush1.bf16.msra.mxu0 %v5004
        %5304 = vmatprep.subr.bf16.mxu0 0
        %5305 = vmatpush1.bf16.msra.mxu0 %v5005
        %5306 = vmatprep.subr.bf16.mxu0 0
        %5307 = vmatpush1.bf16.msra.mxu0 %v5006
        %5308 = vmatprep.subr.bf16.mxu0 0
        %5309 = vmatpush1.bf16.msra.mxu0 %v5007
        %5310 = vmatprep.subr.bf16.mxu0 0
        %5311 = vmatpush1.bf16.msra.mxu0 %v5008
        %5312 = vmatprep.subr.bf16.mxu0 0
        %5313 = vmatpush1.bf16.msra.mxu0 %v5009
        %5314 = vmatprep.subr.bf16.mxu0 0
        %5315 = vmatpush1.bf16.msra.mxu0 %v5010
        %5316 = vmatprep.mubr.bf16.mxu0 %v4309
        %5317 = vmatmul.mubr.bf16.gmra.mrb[0].mxu0 %v4308
        %v5318 = vpop.f32.mrb[0].mxu0
        %v5319 = vadd.f32 %v5158, %v5318
        %v5320 = vpop.f32.mrb[0].mxu0
        %v5321 = vpop.f32.mrb[0].mxu0
        %v5322 = vadd.f32 %v5161, %v5321
        %v5323 = vpop.f32.mrb[0].mxu0
        %5324 = vmatprep.mubr.bf16.mxu0 %v4318
        %5325 = vmatmul.mubr.bf16.gmra.mrb[0].mxu0 %v4317
        %v5326 = vpop.f32.mrb[0].mxu0
        %v5327 = vadd.f32 %v5166, %v5326
        %v5328 = vpop.f32.mrb[0].mxu0
        %v5329 = vpop.f32.mrb[0].mxu0
        %v5330 = vadd.f32 %v5169, %v5329
        %v5331 = vpop.f32.mrb[0].mxu0
        %5332 = vmatprep.mubr.bf16.mxu0 %v4327
        %5333 = vmatmul.mubr.bf16.gmra.mrb[0].mxu0 %v4326
        %v5334 = vpop.f32.mrb[0].mxu0
        %v5335 = vadd.f32 %v5174, %v5334
        %v5336 = vpop.f32.mrb[0].mxu0
        %v5337 = vpop.f32.mrb[0].mxu0
        %v5338 = vadd.f32 %v5177, %v5337
        %v5339 = vpop.f32.mrb[0].mxu0
        %5340 = vmatprep.mubr.bf16.mxu0 %v4336
        %5341 = vmatmul.mubr.bf16.gmra.mrb[0].mxu0 %v4335
        %v5342 = vpop.f32.mrb[0].mxu0
        %v5343 = vadd.f32 %v5182, %v5342
        %v5344 = vpop.f32.mrb[0].mxu0
        %v5345 = vpop.f32.mrb[0].mxu0
        %v5346 = vadd.f32 %v5185, %v5345
        %v5347 = vpop.f32.mrb[0].mxu0
        %5348 = vmatprep.mubr.bf16.mxu0 %v4345
        %5349 = vmatmul.mubr.bf16.gmra.mrb[0].mxu0 %v4344
        %v5350 = vpop.f32.mrb[0].mxu0
        %v5351 = vadd.f32 %v5190, %v5350
        %v5352 = vpop.f32.mrb[0].mxu0
        %v5353 = vpop.f32.mrb[0].mxu0
        %v5354 = vadd.f32 %v5193, %v5353
        %v5355 = vpop.f32.mrb[0].mxu0
        %5356 = vmatprep.mubr.bf16.mxu0 %v4354
        %5357 = vmatmul.mubr.bf16.gmra.mrb[0].mxu0 %v4353
        %v5358 = vpop.f32.mrb[0].mxu0
        %v5359 = vadd.f32 %v5198, %v5358
        %v5360 = vpop.f32.mrb[0].mxu0
        %v5361 = vpop.f32.mrb[0].mxu0
        %v5362 = vadd.f32 %v5201, %v5361
        %v5363 = vpop.f32.mrb[0].mxu0
        %5364 = vmatprep.mubr.bf16.mxu0 %v4363
        %5365 = vmatmul.mubr.bf16.gmra.mrb[0].mxu0 %v4362
        %v5366 = vpop.f32.mrb[0].mxu0
        %v5367 = vadd.f32 %v5206, %v5366
        %v5368 = vpop.f32.mrb[0].mxu0
        %v5369 = vpop.f32.mrb[0].mxu0
        %v5370 = vadd.f32 %v5209, %v5369
        %v5371 = vpop.f32.mrb[0].mxu0
        %5372 = vmatprep.mubr.bf16.mxu0 %v4372
        %5373 = vmatmul.mubr.bf16.gmra.mrb[0].mxu0 %v4371
        %v5374 = vpop.f32.mrb[0].mxu0
        %v5375 = vadd.f32 %v5214, %v5374
        %v5376 = vpop.f32.mrb[0].mxu0
        %v5377 = vpop.f32.mrb[0].mxu0
        %v5378 = vadd.f32 %v5217, %v5377
        %v5379 = vpop.f32.mrb[0].mxu0
        %5380 = vmatprep.mubr.bf16.mxu0 %v4381
        %5381 = vmatmul.mubr.bf16.gmra.mrb[0].mxu0 %v4380
        %v5382 = vpop.f32.mrb[0].mxu0
        %v5383 = vadd.f32 %v5222, %v5382
        %v5384 = vpop.f32.mrb[0].mxu0
        %v5385 = vpop.f32.mrb[0].mxu0
        %v5386 = vadd.f32 %v5225, %v5385
        %v5387 = vpop.f32.mrb[0].mxu0
        %5388 = vmatprep.mubr.bf16.mxu0 %v4390
        %5389 = vmatmul.mubr.bf16.gmra.mrb[0].mxu0 %v4389
        %v5390 = vpop.f32.mrb[0].mxu0
        %v5391 = vadd.f32 %v5230, %v5390
        %v5392 = vpop.f32.mrb[0].mxu0
        %v5393 = vpop.f32.mrb[0].mxu0
        %v5394 = vadd.f32 %v5233, %v5393
        %v5395 = vpop.f32.mrb[0].mxu0
        %5396 = vmatprep.mubr.bf16.mxu0 %v4399
        %5397 = vmatmul.mubr.bf16.gmra.mrb[0].mxu0 %v4398
        %v5398 = vpop.f32.mrb[0].mxu0
        %v5399 = vadd.f32 %v5238, %v5398
        %v5400 = vpop.f32.mrb[0].mxu0
        %v5401 = vpop.f32.mrb[0].mxu0
        %v5402 = vadd.f32 %v5241, %v5401
        %v5403 = vpop.f32.mrb[0].mxu0
        %5404 = vmatprep.mubr.bf16.mxu0 %v4408
        %5405 = vmatmul.mubr.bf16.gmra.mrb[0].mxu0 %v4407
        %v5406 = vpop.f32.mrb[0].mxu0
        %v5407 = vadd.f32 %v5246, %v5406
        %v5408 = vpop.f32.mrb[0].mxu0
        %v5409 = vpop.f32.mrb[0].mxu0
        %v5410 = vadd.f32 %v5249, %v5409
        %v5411 = vpop.f32.mrb[0].mxu0
        %5412 = vmatprep.mubr.bf16.mxu0 %v4417
        %5413 = vmatmul.mubr.bf16.gmra.mrb[0].mxu0 %v4416
        %v5414 = vpop.f32.mrb[0].mxu0
        %v5415 = vadd.f32 %v5254, %v5414
        %v5416 = vpop.f32.mrb[0].mxu0
        %v5417 = vpop.f32.mrb[0].mxu0
        %v5418 = vadd.f32 %v5257, %v5417
        %v5419 = vpop.f32.mrb[0].mxu0
        %5420 = vmatprep.mubr.bf16.mxu0 %v4426
        %5421 = vmatmul.mubr.bf16.gmra.mrb[0].mxu0 %v4425
        %v5422 = vpop.f32.mrb[0].mxu0
        %v5423 = vadd.f32 %v5262, %v5422
        %v5424 = vpop.f32.mrb[0].mxu0
        %v5425 = vpop.f32.mrb[0].mxu0
        %v5426 = vadd.f32 %v5265, %v5425
        %v5427 = vpop.f32.mrb[0].mxu0
        %5428 = vmatprep.mubr.bf16.mxu0 %v4435
        %5429 = vmatmul.mubr.bf16.gmra.mrb[0].mxu0 %v4434
        %v5430 = vpop.f32.mrb[0].mxu0
        %v5431 = vadd.f32 %v5270, %v5430
        %v5432 = vpop.f32.mrb[0].mxu0
        %v5433 = vpop.f32.mrb[0].mxu0
        %v5434 = vadd.f32 %v5273, %v5433
        %v5435 = vpop.f32.mrb[0].mxu0
        %5436 = vmatprep.mubr.bf16.mxu0 %v4444
        %5437 = vmatmul.mubr.bf16.gmra.mrb[0].mxu0 %v4443
        %v5438 = vpop.f32.mrb[0].mxu0
        %v5439 = vadd.f32 %v5278, %v5438
        %v5440 = vpop.f32.mrb[0].mxu0
        %v5441 = vpop.f32.mrb[0].mxu0
        %v5442 = vadd.f32 %v5281, %v5441
        %v5443 = vpop.f32.mrb[0].mxu0
        %5444 = vdwg.mxu0
        %5445 = vmatprep.subr.bf16.mxu0 0
        %5446 = vmatpush1.bf16.msra.mxu0 %v5011
        %5447 = vmatprep.subr.bf16.mxu0 0
        %5448 = vmatpush1.bf16.msra.mxu0 %v5012
        %5449 = vmatprep.subr.bf16.mxu0 0
        %5450 = vmatpush1.bf16.msra.mxu0 %v5013
        %5451 = vmatprep.subr.bf16.mxu0 0
        %5452 = vmatpush1.bf16.msra.mxu0 %v5014
        %5453 = vmatprep.subr.bf16.mxu0 0
        %5454 = vmatpush1.bf16.msra.mxu0 %v5015
        %5455 = vmatprep.subr.bf16.mxu0 0
        %5456 = vmatpush1.bf16.msra.mxu0 %v5016
        %5457 = vmatprep.subr.bf16.mxu0 0
        %5458 = vmatpush1.bf16.msra.mxu0 %v5017
        %5459 = vmatprep.subr.bf16.mxu0 0
        %5460 = vmatpush1.bf16.msra.mxu0 %v5018
        %5461 = vmatprep.subr.bf16.mxu0 0
        %5462 = vmatpush1.bf16.msra.mxu0 %v5019
        %5463 = vmatprep.subr.bf16.mxu0 0
        %5464 = vmatpush1.bf16.msra.mxu0 %v5020
        %5465 = vmatprep.subr.bf16.mxu0 0
        %5466 = vmatpush1.bf16.msra.mxu0 %v5021
        %5467 = vmatprep.subr.bf16.mxu0 0
        %5468 = vmatpush1.bf16.msra.mxu0 %v5022
        %5469 = vmatprep.subr.bf16.mxu0 0
        %5470 = vmatpush1.bf16.msra.mxu0 %v5023
        %5471 = vmatprep.subr.bf16.mxu0 0
        %5472 = vmatpush1.bf16.msra.mxu0 %v5024
        %5473 = vmatprep.subr.bf16.mxu0 0
        %5474 = vmatpush1.bf16.msra.mxu0 %v5025
        %5475 = vmatprep.subr.bf16.mxu0 0
        %5476 = vmatpush1.bf16.msra.mxu0 %v5026
        %5477 = vmatprep.mubr.bf16.mxu0 %v4311
        %5478 = vmatmul.mubr.bf16.gmra.mrb[0].mxu0 %v4310
        %v5479 = vpop.f32.mrb[0].mxu0
        %v5480 = vadd.f32 %v5319, %v5479
        %v5481 = vpop.f32.mrb[0].mxu0
        %v5482 = vpop.f32.mrb[0].mxu0
        %v5483 = vadd.f32 %v5322, %v5482
        %v5484 = vpop.f32.mrb[0].mxu0
        %5485 = vmatprep.mubr.bf16.mxu0 %v4320
        %5486 = vmatmul.mubr.bf16.gmra.mrb[0].mxu0 %v4319
        %v5487 = vpop.f32.mrb[0].mxu0
        %v5488 = vadd.f32 %v5327, %v5487
        %v5489 = vpop.f32.mrb[0].mxu0
        %v5490 = vpop.f32.mrb[0].mxu0
        %v5491 = vadd.f32 %v5330, %v5490
        %v5492 = vpop.f32.mrb[0].mxu0
        %5493 = vmatprep.mubr.bf16.mxu0 %v4329
        %5494 = vmatmul.mubr.bf16.gmra.mrb[0].mxu0 %v4328
        %v5495 = vpop.f32.mrb[0].mxu0
        %v5496 = vadd.f32 %v5335, %v5495
        %v5497 = vpop.f32.mrb[0].mxu0
        %v5498 = vpop.f32.mrb[0].mxu0
        %v5499 = vadd.f32 %v5338, %v5498
        %v5500 = vpop.f32.mrb[0].mxu0
        %5501 = vmatprep.mubr.bf16.mxu0 %v4338
        %5502 = vmatmul.mubr.bf16.gmra.mrb[0].mxu0 %v4337
        %v5503 = vpop.f32.mrb[0].mxu0
        %v5504 = vadd.f32 %v5343, %v5503
        %v5505 = vpop.f32.mrb[0].mxu0
        %v5506 = vpop.f32.mrb[0].mxu0
        %v5507 = vadd.f32 %v5346, %v5506
        %v5508 = vpop.f32.mrb[0].mxu0
        %5509 = vmatprep.mubr.bf16.mxu0 %v4347
        %5510 = vmatmul.mubr.bf16.gmra.mrb[0].mxu0 %v4346
        %v5511 = vpop.f32.mrb[0].mxu0
        %v5512 = vadd.f32 %v5351, %v5511
        %v5513 = vpop.f32.mrb[0].mxu0
        %v5514 = vpop.f32.mrb[0].mxu0
        %v5515 = vadd.f32 %v5354, %v5514
        %v5516 = vpop.f32.mrb[0].mxu0
        %5517 = vmatprep.mubr.bf16.mxu0 %v4356
        %5518 = vmatmul.mubr.bf16.gmra.mrb[0].mxu0 %v4355
        %v5519 = vpop.f32.mrb[0].mxu0
        %v5520 = vadd.f32 %v5359, %v5519
        %v5521 = vpop.f32.mrb[0].mxu0
        %v5522 = vpop.f32.mrb[0].mxu0
        %v5523 = vadd.f32 %v5362, %v5522
        %v5524 = vpop.f32.mrb[0].mxu0
        %5525 = vmatprep.mubr.bf16.mxu0 %v4365
        %5526 = vmatmul.mubr.bf16.gmra.mrb[0].mxu0 %v4364
        %v5527 = vpop.f32.mrb[0].mxu0
        %v5528 = vadd.f32 %v5367, %v5527
        %v5529 = vpop.f32.mrb[0].mxu0
        %v5530 = vpop.f32.mrb[0].mxu0
        %v5531 = vadd.f32 %v5370, %v5530
        %v5532 = vpop.f32.mrb[0].mxu0
        %5533 = vmatprep.mubr.bf16.mxu0 %v4374
        %5534 = vmatmul.mubr.bf16.gmra.mrb[0].mxu0 %v4373
        %v5535 = vpop.f32.mrb[0].mxu0
        %v5536 = vadd.f32 %v5375, %v5535
        %v5537 = vpop.f32.mrb[0].mxu0
        %v5538 = vpop.f32.mrb[0].mxu0
        %v5539 = vadd.f32 %v5378, %v5538
        %v5540 = vpop.f32.mrb[0].mxu0
        %5541 = vmatprep.mubr.bf16.mxu0 %v4383
        %5542 = vmatmul.mubr.bf16.gmra.mrb[0].mxu0 %v4382
        %v5543 = vpop.f32.mrb[0].mxu0
        %v5544 = vadd.f32 %v5383, %v5543
        %v5545 = vpop.f32.mrb[0].mxu0
        %v5546 = vpop.f32.mrb[0].mxu0
        %v5547 = vadd.f32 %v5386, %v5546
        %v5548 = vpop.f32.mrb[0].mxu0
        %5549 = vmatprep.mubr.bf16.mxu0 %v4392
        %5550 = vmatmul.mubr.bf16.gmra.mrb[0].mxu0 %v4391
        %v5551 = vpop.f32.mrb[0].mxu0
        %v5552 = vadd.f32 %v5391, %v5551
        %v5553 = vpop.f32.mrb[0].mxu0
        %v5554 = vpop.f32.mrb[0].mxu0
        %v5555 = vadd.f32 %v5394, %v5554
        %v5556 = vpop.f32.mrb[0].mxu0
        %5557 = vmatprep.mubr.bf16.mxu0 %v4401
        %5558 = vmatmul.mubr.bf16.gmra.mrb[0].mxu0 %v4400
        %v5559 = vpop.f32.mrb[0].mxu0
        %v5560 = vadd.f32 %v5399, %v5559
        %v5561 = vpop.f32.mrb[0].mxu0
        %v5562 = vpop.f32.mrb[0].mxu0
        %v5563 = vadd.f32 %v5402, %v5562
        %v5564 = vpop.f32.mrb[0].mxu0
        %5565 = vmatprep.mubr.bf16.mxu0 %v4410
        %5566 = vmatmul.mubr.bf16.gmra.mrb[0].mxu0 %v4409
        %v5567 = vpop.f32.mrb[0].mxu0
        %v5568 = vadd.f32 %v5407, %v5567
        %v5569 = vpop.f32.mrb[0].mxu0
        %v5570 = vpop.f32.mrb[0].mxu0
        %v5571 = vadd.f32 %v5410, %v5570
        %v5572 = vpop.f32.mrb[0].mxu0
        %5573 = vmatprep.mubr.bf16.mxu0 %v4419
        %5574 = vmatmul.mubr.bf16.gmra.mrb[0].mxu0 %v4418
        %v5575 = vpop.f32.mrb[0].mxu0
        %v5576 = vadd.f32 %v5415, %v5575
        %v5577 = vpop.f32.mrb[0].mxu0
        %v5578 = vpop.f32.mrb[0].mxu0
        %v5579 = vadd.f32 %v5418, %v5578
        %v5580 = vpop.f32.mrb[0].mxu0
        %5581 = vmatprep.mubr.bf16.mxu0 %v4428
        %5582 = vmatmul.mubr.bf16.gmra.mrb[0].mxu0 %v4427
        %v5583 = vpop.f32.mrb[0].mxu0
        %v5584 = vadd.f32 %v5423, %v5583
        %v5585 = vpop.f32.mrb[0].mxu0
        %v5586 = vpop.f32.mrb[0].mxu0
        %v5587 = vadd.f32 %v5426, %v5586
        %v5588 = vpop.f32.mrb[0].mxu0
        %5589 = vmatprep.mubr.bf16.mxu0 %v4437
        %5590 = vmatmul.mubr.bf16.gmra.mrb[0].mxu0 %v4436
        %v5591 = vpop.f32.mrb[0].mxu0
        %v5592 = vadd.f32 %v5431, %v5591
        %v5593 = vpop.f32.mrb[0].mxu0
        %v5594 = vpop.f32.mrb[0].mxu0
        %v5595 = vadd.f32 %v5434, %v5594
        %v5596 = vpop.f32.mrb[0].mxu0
        %5597 = vmatprep.mubr.bf16.mxu0 %v4446
        %5598 = vmatmul.mubr.bf16.gmra.mrb[0].mxu0 %v4445
        %v5599 = vpop.f32.mrb[0].mxu0
        %v5600 = vadd.f32 %v5439, %v5599
        %v5601 = vpop.f32.mrb[0].mxu0
        %v5602 = vpop.f32.mrb[0].mxu0
        %v5603 = vadd.f32 %v5442, %v5602
        %v5604 = vpop.f32.mrb[0].mxu0
        %5605 = vdwg.mxu0
        %5606 = vmatprep.subr.bf16.mxu0 0
        %5607 = vmatpush1.bf16.msra.mxu0 %v5027
        %5608 = vmatprep.subr.bf16.mxu0 0
        %5609 = vmatpush1.bf16.msra.mxu0 %v5028
        %5610 = vmatprep.subr.bf16.mxu0 0
        %5611 = vmatpush1.bf16.msra.mxu0 %v5029
        %5612 = vmatprep.subr.bf16.mxu0 0
        %5613 = vmatpush1.bf16.msra.mxu0 %v5030
        %5614 = vmatprep.subr.bf16.mxu0 0
        %5615 = vmatpush1.bf16.msra.mxu0 %v5031
        %5616 = vmatprep.subr.bf16.mxu0 0
        %5617 = vmatpush1.bf16.msra.mxu0 %v5032
        %5618 = vmatprep.subr.bf16.mxu0 0
        %5619 = vmatpush1.bf16.msra.mxu0 %v5033
        %5620 = vmatprep.subr.bf16.mxu0 0
        %5621 = vmatpush1.bf16.msra.mxu0 %v5034
        %5622 = vmatprep.subr.bf16.mxu0 0
        %5623 = vmatpush1.bf16.msra.mxu0 %v5035
        %5624 = vmatprep.subr.bf16.mxu0 0
        %5625 = vmatpush1.bf16.msra.mxu0 %v5036
        %5626 = vmatprep.subr.bf16.mxu0 0
        %5627 = vmatpush1.bf16.msra.mxu0 %v5037
        %5628 = vmatprep.subr.bf16.mxu0 0
        %5629 = vmatpush1.bf16.msra.mxu0 %v5038
        %5630 = vmatprep.subr.bf16.mxu0 0
        %5631 = vmatpush1.bf16.msra.mxu0 %v5039
        %5632 = vmatprep.subr.bf16.mxu0 0
        %5633 = vmatpush1.bf16.msra.mxu0 %v5040
        %5634 = vmatprep.subr.bf16.mxu0 0
        %5635 = vmatpush1.bf16.msra.mxu0 %v5041
        %5636 = vmatprep.subr.bf16.mxu0 0
        %5637 = vmatpush1.bf16.msra.mxu0 %v5042
        %5638 = vmatprep.mubr.bf16.mxu0 %v4313
        %5639 = vmatmul.mubr.bf16.gmra.mrb[0].mxu0 %v4312
        %v5640 = vpop.f32.mrb[0].mxu0
        %v5641 = vadd.f32 %v5480, %v5640
        %v5642 = vpop.f32.mrb[0].mxu0
        %v5643 = vpop.f32.mrb[0].mxu0
        %v5644 = vadd.f32 %v5483, %v5643
        %v5645 = vpop.f32.mrb[0].mxu0
        %5646 = vmatprep.mubr.bf16.mxu0 %v4322
        %5647 = vmatmul.mubr.bf16.gmra.mrb[0].mxu0 %v4321
        %v5648 = vpop.f32.mrb[0].mxu0
        %v5649 = vadd.f32 %v5488, %v5648
        %v5650 = vpop.f32.mrb[0].mxu0
        %v5651 = vpop.f32.mrb[0].mxu0
        %v5652 = vadd.f32 %v5491, %v5651
        %v5653 = vpop.f32.mrb[0].mxu0
        %5654 = vmatprep.mubr.bf16.mxu0 %v4331
        %5655 = vmatmul.mubr.bf16.gmra.mrb[0].mxu0 %v4330
        %v5656 = vpop.f32.mrb[0].mxu0
        %v5657 = vadd.f32 %v5496, %v5656
        %v5658 = vpop.f32.mrb[0].mxu0
        %v5659 = vpop.f32.mrb[0].mxu0
        %v5660 = vadd.f32 %v5499, %v5659
        %v5661 = vpop.f32.mrb[0].mxu0
        %5662 = vmatprep.mubr.bf16.mxu0 %v4340
        %5663 = vmatmul.mubr.bf16.gmra.mrb[0].mxu0 %v4339
        %v5664 = vpop.f32.mrb[0].mxu0
        %v5665 = vadd.f32 %v5504, %v5664
        %v5666 = vpop.f32.mrb[0].mxu0
        %v5667 = vpop.f32.mrb[0].mxu0
        %v5668 = vadd.f32 %v5507, %v5667
        %v5669 = vpop.f32.mrb[0].mxu0
        %5670 = vmatprep.mubr.bf16.mxu0 %v4349
        %5671 = vmatmul.mubr.bf16.gmra.mrb[0].mxu0 %v4348
        %v5672 = vpop.f32.mrb[0].mxu0
        %v5673 = vadd.f32 %v5512, %v5672
        %v5674 = vpop.f32.mrb[0].mxu0
        %v5675 = vpop.f32.mrb[0].mxu0
        %v5676 = vadd.f32 %v5515, %v5675
        %v5677 = vpop.f32.mrb[0].mxu0
        %5678 = vmatprep.mubr.bf16.mxu0 %v4358
        %5679 = vmatmul.mubr.bf16.gmra.mrb[0].mxu0 %v4357
        %v5680 = vpop.f32.mrb[0].mxu0
        %v5681 = vadd.f32 %v5520, %v5680
        %v5682 = vpop.f32.mrb[0].mxu0
        %v5683 = vpop.f32.mrb[0].mxu0
        %v5684 = vadd.f32 %v5523, %v5683
        %v5685 = vpop.f32.mrb[0].mxu0
        %5686 = vmatprep.mubr.bf16.mxu0 %v4367
        %5687 = vmatmul.mubr.bf16.gmra.mrb[0].mxu0 %v4366
        %v5688 = vpop.f32.mrb[0].mxu0
        %v5689 = vadd.f32 %v5528, %v5688
        %v5690 = vpop.f32.mrb[0].mxu0
        %v5691 = vpop.f32.mrb[0].mxu0
        %v5692 = vadd.f32 %v5531, %v5691
        %v5693 = vpop.f32.mrb[0].mxu0
        %5694 = vmatprep.mubr.bf16.mxu0 %v4376
        %5695 = vmatmul.mubr.bf16.gmra.mrb[0].mxu0 %v4375
        %v5696 = vpop.f32.mrb[0].mxu0
        %v5697 = vadd.f32 %v5536, %v5696
        %v5698 = vpop.f32.mrb[0].mxu0
        %v5699 = vpop.f32.mrb[0].mxu0
        %v5700 = vadd.f32 %v5539, %v5699
        %v5701 = vpop.f32.mrb[0].mxu0
        %5702 = vmatprep.mubr.bf16.mxu0 %v4385
        %5703 = vmatmul.mubr.bf16.gmra.mrb[0].mxu0 %v4384
        %v5704 = vpop.f32.mrb[0].mxu0
        %v5705 = vadd.f32 %v5544, %v5704
        %v5706 = vpop.f32.mrb[0].mxu0
        %v5707 = vpop.f32.mrb[0].mxu0
        %v5708 = vadd.f32 %v5547, %v5707
        %v5709 = vpop.f32.mrb[0].mxu0
        %5710 = vmatprep.mubr.bf16.mxu0 %v4394
        %5711 = vmatmul.mubr.bf16.gmra.mrb[0].mxu0 %v4393
        %v5712 = vpop.f32.mrb[0].mxu0
        %v5713 = vadd.f32 %v5552, %v5712
        %v5714 = vpop.f32.mrb[0].mxu0
        %v5715 = vpop.f32.mrb[0].mxu0
        %v5716 = vadd.f32 %v5555, %v5715
        %v5717 = vpop.f32.mrb[0].mxu0
        %5718 = vmatprep.mubr.bf16.mxu0 %v4403
        %5719 = vmatmul.mubr.bf16.gmra.mrb[0].mxu0 %v4402
        %v5720 = vpop.f32.mrb[0].mxu0
        %v5721 = vadd.f32 %v5560, %v5720
        %v5722 = vpop.f32.mrb[0].mxu0
        %v5723 = vpop.f32.mrb[0].mxu0
        %v5724 = vadd.f32 %v5563, %v5723
        %v5725 = vpop.f32.mrb[0].mxu0
        %5726 = vmatprep.mubr.bf16.mxu0 %v4412
        %5727 = vmatmul.mubr.bf16.gmra.mrb[0].mxu0 %v4411
        %v5728 = vpop.f32.mrb[0].mxu0
        %v5729 = vadd.f32 %v5568, %v5728
        %v5730 = vpop.f32.mrb[0].mxu0
        %v5731 = vpop.f32.mrb[0].mxu0
        %v5732 = vadd.f32 %v5571, %v5731
        %v5733 = vpop.f32.mrb[0].mxu0
        %5734 = vmatprep.mubr.bf16.mxu0 %v4421
        %5735 = vmatmul.mubr.bf16.gmra.mrb[0].mxu0 %v4420
        %v5736 = vpop.f32.mrb[0].mxu0
        %v5737 = vadd.f32 %v5576, %v5736
        %v5738 = vpop.f32.mrb[0].mxu0
        %v5739 = vpop.f32.mrb[0].mxu0
        %v5740 = vadd.f32 %v5579, %v5739
        %v5741 = vpop.f32.mrb[0].mxu0
        %5742 = vmatprep.mubr.bf16.mxu0 %v4430
        %5743 = vmatmul.mubr.bf16.gmra.mrb[0].mxu0 %v4429
        %v5744 = vpop.f32.mrb[0].mxu0
        %v5745 = vadd.f32 %v5584, %v5744
        %v5746 = vpop.f32.mrb[0].mxu0
        %v5747 = vpop.f32.mrb[0].mxu0
        %v5748 = vadd.f32 %v5587, %v5747
        %v5749 = vpop.f32.mrb[0].mxu0
        %5750 = vmatprep.mubr.bf16.mxu0 %v4439
        %5751 = vmatmul.mubr.bf16.gmra.mrb[0].mxu0 %v4438
        %v5752 = vpop.f32.mrb[0].mxu0
        %v5753 = vadd.f32 %v5592, %v5752
        %v5754 = vpop.f32.mrb[0].mxu0
        %v5755 = vpop.f32.mrb[0].mxu0
        %v5756 = vadd.f32 %v5595, %v5755
        %v5757 = vpop.f32.mrb[0].mxu0
        %5758 = vmatprep.mubr.bf16.mxu0 %v4448
        %5759 = vmatmul.mubr.bf16.gmra.mrb[0].mxu0 %v4447
        %v5760 = vpop.f32.mrb[0].mxu0
        %v5761 = vadd.f32 %v5600, %v5760
        %v5762 = vpop.f32.mrb[0].mxu0
        %v5763 = vpop.f32.mrb[0].mxu0
        %v5764 = vadd.f32 %v5603, %v5763
        %v5765 = vpop.f32.mrb[0].mxu0
        %5766 = vdwg.mxu0
        %5767 = vmatprep.subr.bf16.mxu0 0
        %5768 = vmatpush1.bf16.msra.mxu0 %v5043
        %5769 = vmatprep.subr.bf16.mxu0 0
        %5770 = vmatpush1.bf16.msra.mxu0 %v5044
        %5771 = vmatprep.subr.bf16.mxu0 0
        %5772 = vmatpush1.bf16.msra.mxu0 %v5045
        %5773 = vmatprep.subr.bf16.mxu0 0
        %5774 = vmatpush1.bf16.msra.mxu0 %v5046
        %5775 = vmatprep.subr.bf16.mxu0 0
        %5776 = vmatpush1.bf16.msra.mxu0 %v5047
        %5777 = vmatprep.subr.bf16.mxu0 0
        %5778 = vmatpush1.bf16.msra.mxu0 %v5048
        %5779 = vmatprep.subr.bf16.mxu0 0
        %5780 = vmatpush1.bf16.msra.mxu0 %v5049
        %5781 = vmatprep.subr.bf16.mxu0 0
        %5782 = vmatpush1.bf16.msra.mxu0 %v5050
        %5783 = vmatprep.subr.bf16.mxu0 0
        %5784 = vmatpush1.bf16.msra.mxu0 0
        %5785 = vmatprep.subr.bf16.mxu0 0
        %5786 = vmatpush1.bf16.msra.mxu0 0
        %5787 = vmatprep.subr.bf16.mxu0 0
        %5788 = vmatpush1.bf16.msra.mxu0 0
        %5789 = vmatprep.subr.bf16.mxu0 0
        %5790 = vmatpush1.bf16.msra.mxu0 0
        %5791 = vmatprep.subr.bf16.mxu0 0
        %5792 = vmatpush1.bf16.msra.mxu0 0
        %5793 = vmatprep.subr.bf16.mxu0 0
        %5794 = vmatpush1.bf16.msra.mxu0 0
        %5795 = vmatprep.subr.bf16.mxu0 0
        %5796 = vmatpush1.bf16.msra.mxu0 0
        %5797 = vmatprep.subr.bf16.mxu0 0
        %5798 = vmatpush1.bf16.msra.mxu0 0
        %5799 = vmatprep.mubr.bf16.mxu0 0
        %5800 = vmatmul.mubr.bf16.gmra.mrb[0].mxu0 %v4314
        %v5801 = vpop.f32.mrb[0].mxu0
        %v5802 = vadd.f32 %v5641, %v5801
        %v5803 = vpop.f32.mrb[0].mxu0
        %v5804 = vpop.f32.mrb[0].mxu0
        %v5805 = vadd.f32 %v5644, %v5804
        %v5806 = vpop.f32.mrb[0].mxu0
        %5807 = vmatprep.mubr.bf16.mxu0 0
        %5808 = vmatmul.mubr.bf16.gmra.mrb[0].mxu0 %v4323
        %v5809 = vpop.f32.mrb[0].mxu0
        %v5810 = vadd.f32 %v5649, %v5809
        %v5811 = vpop.f32.mrb[0].mxu0
        %v5812 = vpop.f32.mrb[0].mxu0
        %v5813 = vadd.f32 %v5652, %v5812
        %v5814 = vpop.f32.mrb[0].mxu0
        %5815 = vmatprep.mubr.bf16.mxu0 0
        %5816 = vmatmul.mubr.bf16.gmra.mrb[0].mxu0 %v4332
        %v5817 = vpop.f32.mrb[0].mxu0
        %v5818 = vadd.f32 %v5657, %v5817
        %v5819 = vpop.f32.mrb[0].mxu0
        %v5820 = vpop.f32.mrb[0].mxu0
        %v5821 = vadd.f32 %v5660, %v5820
        %v5822 = vpop.f32.mrb[0].mxu0
        %5823 = vmatprep.mubr.bf16.mxu0 0
        %5824 = vmatmul.mubr.bf16.gmra.mrb[0].mxu0 %v4341
        %v5825 = vpop.f32.mrb[0].mxu0
        %v5826 = vadd.f32 %v5665, %v5825
        %v5827 = vpop.f32.mrb[0].mxu0
        %v5828 = vpop.f32.mrb[0].mxu0
        %v5829 = vadd.f32 %v5668, %v5828
        %v5830 = vpop.f32.mrb[0].mxu0
        %5831 = vmatprep.mubr.bf16.mxu0 0
        %5832 = vmatmul.mubr.bf16.gmra.mrb[0].mxu0 %v4350
        %v5833 = vpop.f32.mrb[0].mxu0
        %v5834 = vadd.f32 %v5673, %v5833
        %v5835 = vpop.f32.mrb[0].mxu0
        %v5836 = vpop.f32.mrb[0].mxu0
        %v5837 = vadd.f32 %v5676, %v5836
        %v5838 = vpop.f32.mrb[0].mxu0
        %5839 = vmatprep.mubr.bf16.mxu0 0
        %5840 = vmatmul.mubr.bf16.gmra.mrb[0].mxu0 %v4359
        %v5841 = vpop.f32.mrb[0].mxu0
        %v5842 = vadd.f32 %v5681, %v5841
        %v5843 = vpop.f32.mrb[0].mxu0
        %v5844 = vpop.f32.mrb[0].mxu0
        %v5845 = vadd.f32 %v5684, %v5844
        %v5846 = vpop.f32.mrb[0].mxu0
        %5847 = vmatprep.mubr.bf16.mxu0 0
        %5848 = vmatmul.mubr.bf16.gmra.mrb[0].mxu0 %v4368
        %v5849 = vpop.f32.mrb[0].mxu0
        %v5850 = vadd.f32 %v5689, %v5849
        %v5851 = vpop.f32.mrb[0].mxu0
        %v5852 = vpop.f32.mrb[0].mxu0
        %v5853 = vadd.f32 %v5692, %v5852
        %v5854 = vpop.f32.mrb[0].mxu0
        %5855 = vmatprep.mubr.bf16.mxu0 0
        %5856 = vmatmul.mubr.bf16.gmra.mrb[0].mxu0 %v4377
        %v5857 = vpop.f32.mrb[0].mxu0
        %v5858 = vadd.f32 %v5697, %v5857
        %v5859 = vpop.f32.mrb[0].mxu0
        %v5860 = vpop.f32.mrb[0].mxu0
        %v5861 = vadd.f32 %v5700, %v5860
        %v5862 = vpop.f32.mrb[0].mxu0
        %5863 = vmatprep.mubr.bf16.mxu0 0
        %5864 = vmatmul.mubr.bf16.gmra.mrb[0].mxu0 %v4386
        %v5865 = vpop.f32.mrb[0].mxu0
        %v5866 = vadd.f32 %v5705, %v5865
        %v5867 = vpop.f32.mrb[0].mxu0
        %v5868 = vpop.f32.mrb[0].mxu0
        %v5869 = vadd.f32 %v5708, %v5868
        %v5870 = vpop.f32.mrb[0].mxu0
        %5871 = vmatprep.mubr.bf16.mxu0 0
        %5872 = vmatmul.mubr.bf16.gmra.mrb[0].mxu0 %v4395
        %v5873 = vpop.f32.mrb[0].mxu0
        %v5874 = vadd.f32 %v5713, %v5873
        %v5875 = vpop.f32.mrb[0].mxu0
        %v5876 = vpop.f32.mrb[0].mxu0
        %v5877 = vadd.f32 %v5716, %v5876
        %v5878 = vpop.f32.mrb[0].mxu0
        %5879 = vmatprep.mubr.bf16.mxu0 0
        %5880 = vmatmul.mubr.bf16.gmra.mrb[0].mxu0 %v4404
        %v5881 = vpop.f32.mrb[0].mxu0
        %v5882 = vadd.f32 %v5721, %v5881
        %v5883 = vpop.f32.mrb[0].mxu0
        %v5884 = vpop.f32.mrb[0].mxu0
        %v5885 = vadd.f32 %v5724, %v5884
        %v5886 = vpop.f32.mrb[0].mxu0
        %5887 = vmatprep.mubr.bf16.mxu0 0
        %5888 = vmatmul.mubr.bf16.gmra.mrb[0].mxu0 %v4413
        %v5889 = vpop.f32.mrb[0].mxu0
        %v5890 = vadd.f32 %v5729, %v5889
        %v5891 = vpop.f32.mrb[0].mxu0
        %v5892 = vpop.f32.mrb[0].mxu0
        %v5893 = vadd.f32 %v5732, %v5892
        %v5894 = vpop.f32.mrb[0].mxu0
        %5895 = vmatprep.mubr.bf16.mxu0 0
        %5896 = vmatmul.mubr.bf16.gmra.mrb[0].mxu0 %v4422
        %v5897 = vpop.f32.mrb[0].mxu0
        %v5898 = vadd.f32 %v5737, %v5897
        %v5899 = vpop.f32.mrb[0].mxu0
        %v5900 = vpop.f32.mrb[0].mxu0
        %v5901 = vadd.f32 %v5740, %v5900
        %v5902 = vpop.f32.mrb[0].mxu0
        %5903 = vmatprep.mubr.bf16.mxu0 0
        %5904 = vmatmul.mubr.bf16.gmra.mrb[0].mxu0 %v4431
        %v5905 = vpop.f32.mrb[0].mxu0
        %v5906 = vadd.f32 %v5745, %v5905
        %v5907 = vpop.f32.mrb[0].mxu0
        %v5908 = vpop.f32.mrb[0].mxu0
        %v5909 = vadd.f32 %v5748, %v5908
        %v5910 = vpop.f32.mrb[0].mxu0
        %5911 = vmatprep.mubr.bf16.mxu0 0
        %5912 = vmatmul.mubr.bf16.gmra.mrb[0].mxu0 %v4440
        %v5913 = vpop.f32.mrb[0].mxu0
        %v5914 = vadd.f32 %v5753, %v5913
        %v5915 = vpop.f32.mrb[0].mxu0
        %v5916 = vpop.f32.mrb[0].mxu0
        %v5917 = vadd.f32 %v5756, %v5916
        %v5918 = vpop.f32.mrb[0].mxu0
        %5919 = vmatprep.mubr.bf16.mxu0 0
        %5920 = vmatmul.mubr.bf16.gmra.mrb[0].mxu0 %v4449
        %v5921 = vpop.f32.mrb[0].mxu0
        %v5922 = vadd.f32 %v5761, %v5921
        %v5923 = vpop.f32.mrb[0].mxu0
        %v5924 = vpop.f32.mrb[0].mxu0
        %v5925 = vadd.f32 %v5764, %v5924
        %v5926 = vpop.f32.mrb[0].mxu0
        %5927 = vdwg.mxu0
        %v5928 = vlaneseq
        %v5929 = vshrl.u32 %v5928, 7
        %v5930 = vsub.s32 0, %v5929
        %v5931 = vrot.slane %v4681, %v5930
        %v5932 = vadd.f32 %v5802, %v5931
        %v5933 = vadd.f32 %v5805, %v5931
        %v5934 = vadd.f32 %v5810, %v5931
        %v5935 = vadd.f32 %v5813, %v5931
        %v5936 = vadd.f32 %v5818, %v5931
        %v5937 = vadd.f32 %v5821, %v5931
        %v5938 = vadd.f32 %v5826, %v5931
        %v5939 = vadd.f32 %v5829, %v5931
        %v5940 = vadd.f32 %v5834, %v5931
        %v5941 = vadd.f32 %v5837, %v5931
        %v5942 = vadd.f32 %v5842, %v5931
        %v5943 = vadd.f32 %v5845, %v5931
        %v5944 = vadd.f32 %v5850, %v5931
        %v5945 = vadd.f32 %v5853, %v5931
        %v5946 = vadd.f32 %v5858, %v5931
        %v5947 = vadd.f32 %v5861, %v5931
        %v5948 = vadd.f32 %v5866, %v5931
        %v5949 = vadd.f32 %v5869, %v5931
        %v5950 = vadd.f32 %v5874, %v5931
        %v5951 = vadd.f32 %v5877, %v5931
        %v5952 = vadd.f32 %v5882, %v5931
        %v5953 = vadd.f32 %v5885, %v5931
        %v5954 = vadd.f32 %v5890, %v5931
        %v5955 = vadd.f32 %v5893, %v5931
        %v5956 = vadd.f32 %v5898, %v5931
        %v5957 = vadd.f32 %v5901, %v5931
        %v5958 = vadd.f32 %v5906, %v5931
        %v5959 = vadd.f32 %v5909, %v5931
        %v5960 = vadd.f32 %v5914, %v5931
        %v5961 = vadd.f32 %v5917, %v5931
        %v5962 = vadd.f32 %v5922, %v5931
        %v5963 = vadd.f32 %v5925, %v5931
        %v5964 = vadd.f32 %v5932, %v5933
        %v5965 = vadd.f32 %v5964, %v5934
        %v5966 = vadd.f32 %v5965, %v5935
        %v5967 = vadd.f32 %v5966, %v5936
        %v5968 = vadd.f32 %v5967, %v5937
        %v5969 = vadd.f32 %v5968, %v5938
        %v5970 = vadd.f32 %v5969, %v5939
        %v5971 = vadd.f32 %v5970, %v5940
        %v5972 = vadd.f32 %v5971, %v5941
        %v5973 = vadd.f32 %v5972, %v5942
        %v5974 = vadd.f32 %v5973, %v5943
        %v5975 = vadd.f32 %v5974, %v5944
        %v5976 = vadd.f32 %v5975, %v5945
        %v5977 = vadd.f32 %v5976, %v5946
        %v5978 = vadd.f32 %v5977, %v5947
        %v5979 = vadd.f32 %v5978, %v5948
        %v5980 = vadd.f32 %v5979, %v5949
        %v5981 = vadd.f32 %v5980, %v5950
        %v5982 = vadd.f32 %v5981, %v5951
        %v5983 = vadd.f32 %v5982, %v5952
        %v5984 = vadd.f32 %v5983, %v5953
        %v5985 = vadd.f32 %v5984, %v5954
        %v5986 = vadd.f32 %v5985, %v5955
        %v5987 = vadd.f32 %v5986, %v5956
        %v5988 = vadd.f32 %v5987, %v5957
        %v5989 = vadd.f32 %v5988, %v5958
        %v5990 = vadd.f32 %v5989, %v5959
        %v5991 = vadd.f32 %v5990, %v5960
        %v5992 = vadd.f32 %v5991, %v5961
        %v5993 = vadd.f32 %v5992, %v5962
        %v5994 = vadd.f32 %v5993, %v5963
        %v5995 = vrot.slane %v5994, 4
        %v5996 = vadd.f32 %v5994, %v5995
        %v5997 = vrot.slane %v5996, 2
        %v5998 = vadd.f32 %v5996, %v5997
        %v5999 = vrot.slane %v5998, 1
        %v6000 = vadd.f32 %v5998, %v5999
        %v6001 = vld [vmem:[%s12] sm:$0xff]
        %v6002 = vld [vmem:[%s12 + $0x8] sm:$0xff]
        %v6003 = vld [vmem:[%s12 + $0x10] sm:$0xff]
        %v6004 = vld [vmem:[%s12 + $0x18] sm:$0xff]
        %v6005 = vld [vmem:[%s12 + $0x20] sm:$0xff]
        %v6006 = vld [vmem:[%s12 + $0x28] sm:$0xff]
        %v6007 = vld [vmem:[%s12 + $0x30] sm:$0xff]
        %v6008 = vld [vmem:[%s12 + $0x38] sm:$0xff]
        %v6009 = vld [vmem:[%s12 + $0x40] sm:$0xff]
        %v6010 = vld [vmem:[%s12 + $0x48] sm:$0xff]
        %v6011 = vld [vmem:[%s12 + $0x50] sm:$0xff]
        %v6012 = vld [vmem:[%s12 + $0x58] sm:$0xff]
        %v6013 = vld [vmem:[%s12 + $0x60] sm:$0xff]
        %v6014 = vld [vmem:[%s12 + $0x68] sm:$0xff]
        %v6015 = vld [vmem:[%s12 + $0x70] sm:$0xff]
        %v6016 = vld [vmem:[%s12 + $0x78] sm:$0xff]
        %6017 = vmatprep.subr.mxu0 0.0
        %6018 = vmatpush1.msra.mxu0 %v6001
        %6019 = vmatprep.subr.mxu0 0.0
        %6020 = vmatpush1.msra.mxu0 %v6002
        %6021 = vmatprep.subr.mxu0 0.0
        %6022 = vmatpush1.msra.mxu0 %v6003
        %6023 = vmatprep.subr.mxu0 0.0
        %6024 = vmatpush1.msra.mxu0 %v6004
        %6025 = vmatprep.subr.mxu0 0.0
        %6026 = vmatpush1.msra.mxu0 %v6005
        %6027 = vmatprep.subr.mxu0 0.0
        %6028 = vmatpush1.msra.mxu0 %v6006
        %6029 = vmatprep.subr.mxu0 0.0
        %6030 = vmatpush1.msra.mxu0 %v6007
        %6031 = vmatprep.subr.mxu0 0.0
        %6032 = vmatpush1.msra.mxu0 %v6008
        %6033 = vmatprep.subr.mxu0 0.0
        %6034 = vmatpush1.msra.mxu0 %v6009
        %6035 = vmatprep.subr.mxu0 0.0
        %6036 = vmatpush1.msra.mxu0 %v6010
        %6037 = vmatprep.subr.mxu0 0.0
        %6038 = vmatpush1.msra.mxu0 %v6011
        %6039 = vmatprep.subr.mxu0 0.0
        %6040 = vmatpush1.msra.mxu0 %v6012
        %6041 = vmatprep.subr.mxu0 0.0
        %6042 = vmatpush1.msra.mxu0 %v6013
        %6043 = vmatprep.subr.mxu0 0.0
        %6044 = vmatpush1.msra.mxu0 %v6014
        %6045 = vmatprep.subr.mxu0 0.0
        %6046 = vmatpush1.msra.mxu0 %v6015
        %6047 = vmatprep.subr.mxu0 0.0
        %6048 = vmatpush1.msra.mxu0 %v6016
        %6049 = vmatprep.subr.mxu0 0.0
        %6050 = vmatpush1.msra.mxu0 0.0
        %6051 = vmatprep.subr.mxu0 0.0
        %6052 = vmatpush1.msra.mxu0 0.0
        %6053 = vmatprep.subr.mxu0 0.0
        %6054 = vmatpush1.msra.mxu0 0.0
        %6055 = vmatprep.subr.mxu0 0.0
        %6056 = vmatpush1.msra.mxu0 0.0
        %6057 = vmatprep.subr.mxu0 0.0
        %6058 = vmatpush1.msra.mxu0 0.0
        %6059 = vmatprep.subr.mxu0 0.0
        %6060 = vmatpush1.msra.mxu0 0.0
        %6061 = vmatprep.subr.mxu0 0.0
        %6062 = vmatpush1.msra.mxu0 0.0
        %6063 = vmatprep.subr.mxu0 0.0
        %6064 = vmatpush1.msra.mxu0 0.0
        %6065 = vmatprep.subr.mxu0 0.0
        %6066 = vmatpush1.msra.mxu0 0.0
        %6067 = vmatprep.subr.mxu0 0.0
        %6068 = vmatpush1.msra.mxu0 0.0
        %6069 = vmatprep.subr.mxu0 0.0
        %6070 = vmatpush1.msra.mxu0 0.0
        %6071 = vmatprep.subr.mxu0 0.0
        %6072 = vmatpush1.msra.mxu0 0.0
        %6073 = vmatprep.subr.mxu0 0.0
        %6074 = vmatpush1.msra.mxu0 0.0
        %6075 = vmatprep.subr.mxu0 0.0
        %6076 = vmatpush1.msra.mxu0 0.0
        %6077 = vmatprep.subr.mxu0 0.0
        %6078 = vmatpush1.msra.mxu0 0.0
        %6079 = vmatprep.subr.mxu0 0.0
        %6080 = vmatpush1.msra.mxu0 0.0
        %6081 = vmatprep.mubr.f32.mxu0 0.0
        %6082 = vmatmul.mubr.f32.gmra.mrb[0].mxu0 %v6000
        %v6083 = vpop.f32.mrb[0].mxu0
        %v6084 = vadd.f32 0.0, %v6083
        %v6085 = vpop.f32.mrb[0].mxu0
        %6086 = vdwg.mxu0
        %v6087 = vld [vmem:[%s13] sm:$0xff]
        %v6088 = vld [vmem:[%s13 + $0x8] sm:$0xff]
        %v6089 = vld [vmem:[%s13 + $0x10] sm:$0xff]
        %v6090 = vld [vmem:[%s13 + $0x18] sm:$0xff]
        %v6092 = vsel %vm694, %v6084, 0
        %6094 = vmatprep.subr.mxu0 0.0
        %6095 = vmatpush1.msra.mxu0 %v6087
        %6096 = vmatprep.subr.mxu0 0.0
        %6097 = vmatpush1.msra.mxu0 %v6088
        %6098 = vmatprep.subr.mxu0 0.0
        %6099 = vmatpush1.msra.mxu0 %v6089
        %6100 = vmatprep.subr.mxu0 0.0
        %6101 = vmatpush1.msra.mxu0 %v6090
        %6102 = vmatprep.subr.mxu0 0.0
        %6103 = vmatpush1.msra.mxu0 0.0
        %6104 = vmatprep.subr.mxu0 0.0
        %6105 = vmatpush1.msra.mxu0 0.0
        %6106 = vmatprep.subr.mxu0 0.0
        %6107 = vmatpush1.msra.mxu0 0.0
        %6108 = vmatprep.subr.mxu0 0.0
        %6109 = vmatpush1.msra.mxu0 0.0
        %6110 = vmatprep.subr.mxu0 0.0
        %6111 = vmatpush1.msra.mxu0 0.0
        %6112 = vmatprep.subr.mxu0 0.0
        %6113 = vmatpush1.msra.mxu0 0.0
        %6114 = vmatprep.subr.mxu0 0.0
        %6115 = vmatpush1.msra.mxu0 0.0
        %6116 = vmatprep.subr.mxu0 0.0
        %6117 = vmatpush1.msra.mxu0 0.0
        %6118 = vmatprep.subr.mxu0 0.0
        %6119 = vmatpush1.msra.mxu0 0.0
        %6120 = vmatprep.subr.mxu0 0.0
        %6121 = vmatpush1.msra.mxu0 0.0
        %6122 = vmatprep.subr.mxu0 0.0
        %6123 = vmatpush1.msra.mxu0 0.0
        %6124 = vmatprep.subr.mxu0 0.0
        %6125 = vmatpush1.msra.mxu0 0.0
        %6126 = vmatprep.subr.mxu0 0.0
        %6127 = vmatpush1.msra.mxu0 0.0
        %6128 = vmatprep.subr.mxu0 0.0
        %6129 = vmatpush1.msra.mxu0 0.0
        %6130 = vmatprep.subr.mxu0 0.0
        %6131 = vmatpush1.msra.mxu0 0.0
        %6132 = vmatprep.subr.mxu0 0.0
        %6133 = vmatpush1.msra.mxu0 0.0
        %6134 = vmatprep.subr.mxu0 0.0
        %6135 = vmatpush1.msra.mxu0 0.0
        %6136 = vmatprep.subr.mxu0 0.0
        %6137 = vmatpush1.msra.mxu0 0.0
        %6138 = vmatprep.subr.mxu0 0.0
        %6139 = vmatpush1.msra.mxu0 0.0
        %6140 = vmatprep.subr.mxu0 0.0
        %6141 = vmatpush1.msra.mxu0 0.0
        %6142 = vmatprep.subr.mxu0 0.0
        %6143 = vmatpush1.msra.mxu0 0.0
        %6144 = vmatprep.subr.mxu0 0.0
        %6145 = vmatpush1.msra.mxu0 0.0
        %6146 = vmatprep.subr.mxu0 0.0
        %6147 = vmatpush1.msra.mxu0 0.0
        %6148 = vmatprep.subr.mxu0 0.0
        %6149 = vmatpush1.msra.mxu0 0.0
        %6150 = vmatprep.subr.mxu0 0.0
        %6151 = vmatpush1.msra.mxu0 0.0
        %6152 = vmatprep.subr.mxu0 0.0
        %6153 = vmatpush1.msra.mxu0 0.0
        %6154 = vmatprep.subr.mxu0 0.0
        %6155 = vmatpush1.msra.mxu0 0.0
        %6156 = vmatprep.subr.mxu0 0.0
        %6157 = vmatpush1.msra.mxu0 0.0
        %6158 = vmatprep.mubr.f32.mxu0 0.0
        %6159 = vmatmul.mubr.f32.gmra.mrb[0].mxu0 %v6092
        %v6160 = vpop.f32.mrb[0].mxu0
        %v6161 = vadd.f32 0.0, %v6160
        %v6162 = vpop.f32.mrb[0].mxu0
        %6163 = vdwg.mxu0
        %v6164 = vlaneseq
        %v6165 = vshrl.u32 %v6164, 7
        %v6166 = vsub.s32 0, %v6165
        %v6167 = vrot.slane %v6161, %v6166
        %v6168 = vsub.f32 %v5932, %v6167
        %v6169 = vsub.f32 %v5933, %v6167
        %v6170 = vsub.f32 %v5934, %v6167
        %v6171 = vsub.f32 %v5935, %v6167
        %v6172 = vsub.f32 %v5936, %v6167
        %v6173 = vsub.f32 %v5937, %v6167
        %v6174 = vsub.f32 %v5938, %v6167
        %v6175 = vsub.f32 %v5939, %v6167
        %v6176 = vsub.f32 %v5940, %v6167
        %v6177 = vsub.f32 %v5941, %v6167
        %v6178 = vsub.f32 %v5942, %v6167
        %v6179 = vsub.f32 %v5943, %v6167
        %v6180 = vsub.f32 %v5944, %v6167
        %v6181 = vsub.f32 %v5945, %v6167
        %v6182 = vsub.f32 %v5946, %v6167
        %v6183 = vsub.f32 %v5947, %v6167
        %v6184 = vsub.f32 %v5948, %v6167
        %v6185 = vsub.f32 %v5949, %v6167
        %v6186 = vsub.f32 %v5950, %v6167
        %v6187 = vsub.f32 %v5951, %v6167
        %v6188 = vsub.f32 %v5952, %v6167
        %v6189 = vsub.f32 %v5953, %v6167
        %v6190 = vsub.f32 %v5954, %v6167
        %v6191 = vsub.f32 %v5955, %v6167
        %v6192 = vsub.f32 %v5956, %v6167
        %v6193 = vsub.f32 %v5957, %v6167
        %v6194 = vsub.f32 %v5958, %v6167
        %v6195 = vsub.f32 %v5959, %v6167
        %v6196 = vsub.f32 %v5960, %v6167
        %v6197 = vsub.f32 %v5961, %v6167
        %v6198 = vsub.f32 %v5962, %v6167
        %v6199 = vsub.f32 %v5963, %v6167
        %v6200 = vmul.f32 %v6168, %v6168
        %v6201 = vmul.f32 %v6169, %v6169
        %v6202 = vmul.f32 %v6170, %v6170
        %v6203 = vmul.f32 %v6171, %v6171
        %v6204 = vmul.f32 %v6172, %v6172
        %v6205 = vmul.f32 %v6173, %v6173
        %v6206 = vmul.f32 %v6174, %v6174
        %v6207 = vmul.f32 %v6175, %v6175
        %v6208 = vmul.f32 %v6176, %v6176
        %v6209 = vmul.f32 %v6177, %v6177
        %v6210 = vmul.f32 %v6178, %v6178
        %v6211 = vmul.f32 %v6179, %v6179
        %v6212 = vmul.f32 %v6180, %v6180
        %v6213 = vmul.f32 %v6181, %v6181
        %v6214 = vmul.f32 %v6182, %v6182
        %v6215 = vmul.f32 %v6183, %v6183
        %v6216 = vmul.f32 %v6184, %v6184
        %v6217 = vmul.f32 %v6185, %v6185
        %v6218 = vmul.f32 %v6186, %v6186
        %v6219 = vmul.f32 %v6187, %v6187
        %v6220 = vmul.f32 %v6188, %v6188
        %v6221 = vmul.f32 %v6189, %v6189
        %v6222 = vmul.f32 %v6190, %v6190
        %v6223 = vmul.f32 %v6191, %v6191
        %v6224 = vmul.f32 %v6192, %v6192
        %v6225 = vmul.f32 %v6193, %v6193
        %v6226 = vmul.f32 %v6194, %v6194
        %v6227 = vmul.f32 %v6195, %v6195
        %v6228 = vmul.f32 %v6196, %v6196
        %v6229 = vmul.f32 %v6197, %v6197
        %v6230 = vmul.f32 %v6198, %v6198
        %v6231 = vmul.f32 %v6199, %v6199
        %v6232 = vadd.f32 %v6200, %v6201
        %v6233 = vadd.f32 %v6232, %v6202
        %v6234 = vadd.f32 %v6233, %v6203
        %v6235 = vadd.f32 %v6234, %v6204
        %v6236 = vadd.f32 %v6235, %v6205
        %v6237 = vadd.f32 %v6236, %v6206
        %v6238 = vadd.f32 %v6237, %v6207
        %v6239 = vadd.f32 %v6238, %v6208
        %v6240 = vadd.f32 %v6239, %v6209
        %v6241 = vadd.f32 %v6240, %v6210
        %v6242 = vadd.f32 %v6241, %v6211
        %v6243 = vadd.f32 %v6242, %v6212
        %v6244 = vadd.f32 %v6243, %v6213
        %v6245 = vadd.f32 %v6244, %v6214
        %v6246 = vadd.f32 %v6245, %v6215
        %v6247 = vadd.f32 %v6246, %v6216
        %v6248 = vadd.f32 %v6247, %v6217
        %v6249 = vadd.f32 %v6248, %v6218
        %v6250 = vadd.f32 %v6249, %v6219
        %v6251 = vadd.f32 %v6250, %v6220
        %v6252 = vadd.f32 %v6251, %v6221
        %v6253 = vadd.f32 %v6252, %v6222
        %v6254 = vadd.f32 %v6253, %v6223
        %v6255 = vadd.f32 %v6254, %v6224
        %v6256 = vadd.f32 %v6255, %v6225
        %v6257 = vadd.f32 %v6256, %v6226
        %v6258 = vadd.f32 %v6257, %v6227
        %v6259 = vadd.f32 %v6258, %v6228
        %v6260 = vadd.f32 %v6259, %v6229
        %v6261 = vadd.f32 %v6260, %v6230
        %v6262 = vadd.f32 %v6261, %v6231
        %v6263 = vrot.slane %v6262, 4
        %v6264 = vadd.f32 %v6262, %v6263
        %v6265 = vrot.slane %v6264, 2
        %v6266 = vadd.f32 %v6264, %v6265
        %v6267 = vrot.slane %v6266, 1
        %v6268 = vadd.f32 %v6266, %v6267
        %6269 = vmatprep.subr.mxu0 0.0
        %6270 = vmatpush1.msra.mxu0 %v6001
        %6271 = vmatprep.subr.mxu0 0.0
        %6272 = vmatpush1.msra.mxu0 %v6002
        %6273 = vmatprep.subr.mxu0 0.0
        %6274 = vmatpush1.msra.mxu0 %v6003
        %6275 = vmatprep.subr.mxu0 0.0
        %6276 = vmatpush1.msra.mxu0 %v6004
        %6277 = vmatprep.subr.mxu0 0.0
        %6278 = vmatpush1.msra.mxu0 %v6005
        %6279 = vmatprep.subr.mxu0 0.0
        %6280 = vmatpush1.msra.mxu0 %v6006
        %6281 = vmatprep.subr.mxu0 0.0
        %6282 = vmatpush1.msra.mxu0 %v6007
        %6283 = vmatprep.subr.mxu0 0.0
        %6284 = vmatpush1.msra.mxu0 %v6008
        %6285 = vmatprep.subr.mxu0 0.0
        %6286 = vmatpush1.msra.mxu0 %v6009
        %6287 = vmatprep.subr.mxu0 0.0
        %6288 = vmatpush1.msra.mxu0 %v6010
        %6289 = vmatprep.subr.mxu0 0.0
        %6290 = vmatpush1.msra.mxu0 %v6011
        %6291 = vmatprep.subr.mxu0 0.0
        %6292 = vmatpush1.msra.mxu0 %v6012
        %6293 = vmatprep.subr.mxu0 0.0
        %6294 = vmatpush1.msra.mxu0 %v6013
        %6295 = vmatprep.subr.mxu0 0.0
        %6296 = vmatpush1.msra.mxu0 %v6014
        %6297 = vmatprep.subr.mxu0 0.0
        %6298 = vmatpush1.msra.mxu0 %v6015
        %6299 = vmatprep.subr.mxu0 0.0
        %6300 = vmatpush1.msra.mxu0 %v6016
        %6301 = vmatprep.subr.mxu0 0.0
        %6302 = vmatpush1.msra.mxu0 0.0
        %6303 = vmatprep.subr.mxu0 0.0
        %6304 = vmatpush1.msra.mxu0 0.0
        %6305 = vmatprep.subr.mxu0 0.0
        %6306 = vmatpush1.msra.mxu0 0.0
        %6307 = vmatprep.subr.mxu0 0.0
        %6308 = vmatpush1.msra.mxu0 0.0
        %6309 = vmatprep.subr.mxu0 0.0
        %6310 = vmatpush1.msra.mxu0 0.0
        %6311 = vmatprep.subr.mxu0 0.0
        %6312 = vmatpush1.msra.mxu0 0.0
        %6313 = vmatprep.subr.mxu0 0.0
        %6314 = vmatpush1.msra.mxu0 0.0
        %6315 = vmatprep.subr.mxu0 0.0
        %6316 = vmatpush1.msra.mxu0 0.0
        %6317 = vmatprep.subr.mxu0 0.0
        %6318 = vmatpush1.msra.mxu0 0.0
        %6319 = vmatprep.subr.mxu0 0.0
        %6320 = vmatpush1.msra.mxu0 0.0
        %6321 = vmatprep.subr.mxu0 0.0
        %6322 = vmatpush1.msra.mxu0 0.0
        %6323 = vmatprep.subr.mxu0 0.0
        %6324 = vmatpush1.msra.mxu0 0.0
        %6325 = vmatprep.subr.mxu0 0.0
        %6326 = vmatpush1.msra.mxu0 0.0
        %6327 = vmatprep.subr.mxu0 0.0
        %6328 = vmatpush1.msra.mxu0 0.0
        %6329 = vmatprep.subr.mxu0 0.0
        %6330 = vmatpush1.msra.mxu0 0.0
        %6331 = vmatprep.subr.mxu0 0.0
        %6332 = vmatpush1.msra.mxu0 0.0
        %6333 = vmatprep.mubr.f32.mxu0 0.0
        %6334 = vmatmul.mubr.f32.gmra.mrb[0].mxu0 %v6268
        %v6335 = vpop.f32.mrb[0].mxu0
        %v6336 = vadd.f32 0.0, %v6335
        %v6337 = vpop.f32.mrb[0].mxu0
        %6338 = vdwg.mxu0
        %v6340 = vsel %vm694, %v6336, 0
        %6342 = vmatprep.subr.mxu0 0.0
        %6343 = vmatpush1.msra.mxu0 %v6087
        %6344 = vmatprep.subr.mxu0 0.0
        %6345 = vmatpush1.msra.mxu0 %v6088
        %6346 = vmatprep.subr.mxu0 0.0
        %6347 = vmatpush1.msra.mxu0 %v6089
        %6348 = vmatprep.subr.mxu0 0.0
        %6349 = vmatpush1.msra.mxu0 %v6090
        %6350 = vmatprep.subr.mxu0 0.0
        %6351 = vmatpush1.msra.mxu0 0.0
        %6352 = vmatprep.subr.mxu0 0.0
        %6353 = vmatpush1.msra.mxu0 0.0
        %6354 = vmatprep.subr.mxu0 0.0
        %6355 = vmatpush1.msra.mxu0 0.0
        %6356 = vmatprep.subr.mxu0 0.0
        %6357 = vmatpush1.msra.mxu0 0.0
        %6358 = vmatprep.subr.mxu0 0.0
        %6359 = vmatpush1.msra.mxu0 0.0
        %6360 = vmatprep.subr.mxu0 0.0
        %6361 = vmatpush1.msra.mxu0 0.0
        %6362 = vmatprep.subr.mxu0 0.0
        %6363 = vmatpush1.msra.mxu0 0.0
        %6364 = vmatprep.subr.mxu0 0.0
        %6365 = vmatpush1.msra.mxu0 0.0
        %6366 = vmatprep.subr.mxu0 0.0
        %6367 = vmatpush1.msra.mxu0 0.0
        %6368 = vmatprep.subr.mxu0 0.0
        %6369 = vmatpush1.msra.mxu0 0.0
        %6370 = vmatprep.subr.mxu0 0.0
        %6371 = vmatpush1.msra.mxu0 0.0
        %6372 = vmatprep.subr.mxu0 0.0
        %6373 = vmatpush1.msra.mxu0 0.0
        %6374 = vmatprep.subr.mxu0 0.0
        %6375 = vmatpush1.msra.mxu0 0.0
        %6376 = vmatprep.subr.mxu0 0.0
        %6377 = vmatpush1.msra.mxu0 0.0
        %6378 = vmatprep.subr.mxu0 0.0
        %6379 = vmatpush1.msra.mxu0 0.0
        %6380 = vmatprep.subr.mxu0 0.0
        %6381 = vmatpush1.msra.mxu0 0.0
        %6382 = vmatprep.subr.mxu0 0.0
        %6383 = vmatpush1.msra.mxu0 0.0
        %6384 = vmatprep.subr.mxu0 0.0
        %6385 = vmatpush1.msra.mxu0 0.0
        %6386 = vmatprep.subr.mxu0 0.0
        %6387 = vmatpush1.msra.mxu0 0.0
        %6388 = vmatprep.subr.mxu0 0.0
        %6389 = vmatpush1.msra.mxu0 0.0
        %6390 = vmatprep.subr.mxu0 0.0
        %6391 = vmatpush1.msra.mxu0 0.0
        %6392 = vmatprep.subr.mxu0 0.0
        %6393 = vmatpush1.msra.mxu0 0.0
        %6394 = vmatprep.subr.mxu0 0.0
        %6395 = vmatpush1.msra.mxu0 0.0
        %6396 = vmatprep.subr.mxu0 0.0
        %6397 = vmatpush1.msra.mxu0 0.0
        %6398 = vmatprep.subr.mxu0 0.0
        %6399 = vmatpush1.msra.mxu0 0.0
        %6400 = vmatprep.subr.mxu0 0.0
        %6401 = vmatpush1.msra.mxu0 0.0
        %6402 = vmatprep.subr.mxu0 0.0
        %6403 = vmatpush1.msra.mxu0 0.0
        %6404 = vmatprep.subr.mxu0 0.0
        %6405 = vmatpush1.msra.mxu0 0.0
        %6406 = vmatprep.mubr.f32.mxu0 0.0
        %6407 = vmatmul.mubr.f32.gmra.mrb[0].mxu0 %v6340
        %v6408 = vpop.f32.mrb[0].mxu0
        %v6409 = vadd.f32 1e-05, %v6408
        %v6410 = vpop.f32.mrb[0].mxu0
        %6411 = vdwg.mxu0
        %v6412 = vrsqrt.pop %v6409
        %v6413 = vlaneseq
        %v6414 = vshrl.u32 %v6413, 7
        %v6415 = vsub.s32 0, %v6414
        %v6416 = vrot.slane %v6412, %v6415
        %v6417 = vmul.f32 %v6168, %v6416
        %v6418 = vmul.f32 %v6169, %v6416
        %v6419 = vmul.f32 %v6170, %v6416
        %v6420 = vmul.f32 %v6171, %v6416
        %v6421 = vmul.f32 %v6172, %v6416
        %v6422 = vmul.f32 %v6173, %v6416
        %v6423 = vmul.f32 %v6174, %v6416
        %v6424 = vmul.f32 %v6175, %v6416
        %v6425 = vmul.f32 %v6176, %v6416
        %v6426 = vmul.f32 %v6177, %v6416
        %v6427 = vmul.f32 %v6178, %v6416
        %v6428 = vmul.f32 %v6179, %v6416
        %v6429 = vmul.f32 %v6180, %v6416
        %v6430 = vmul.f32 %v6181, %v6416
        %v6431 = vmul.f32 %v6182, %v6416
        %v6432 = vmul.f32 %v6183, %v6416
        %v6433 = vmul.f32 %v6184, %v6416
        %v6434 = vmul.f32 %v6185, %v6416
        %v6435 = vmul.f32 %v6186, %v6416
        %v6436 = vmul.f32 %v6187, %v6416
        %v6437 = vmul.f32 %v6188, %v6416
        %v6438 = vmul.f32 %v6189, %v6416
        %v6439 = vmul.f32 %v6190, %v6416
        %v6440 = vmul.f32 %v6191, %v6416
        %v6441 = vmul.f32 %v6192, %v6416
        %v6442 = vmul.f32 %v6193, %v6416
        %v6443 = vmul.f32 %v6194, %v6416
        %v6444 = vmul.f32 %v6195, %v6416
        %v6445 = vmul.f32 %v6196, %v6416
        %v6446 = vmul.f32 %v6197, %v6416
        %v6447 = vmul.f32 %v6198, %v6416
        %v6448 = vmul.f32 %v6199, %v6416
        %v6449 = vld [vmem:[%s10] sm:$0x1]
        %v6451 = vlaneseq
        %v6452 = vshrl.u32 %v6451, 7
        %v6453 = vsub.s32 0, %v6452
        %v6454 = vrot.slane %v6449, %v6453
        %v6456 = vmul.f32 %v6417, %v6454
        %v6457 = vmul.f32 %v6418, %v6454
        %v6458 = vmul.f32 %v6419, %v6454
        %v6459 = vmul.f32 %v6420, %v6454
        %v6460 = vmul.f32 %v6421, %v6454
        %v6461 = vmul.f32 %v6422, %v6454
        %v6462 = vmul.f32 %v6423, %v6454
        %v6463 = vmul.f32 %v6424, %v6454
        %v6464 = vmul.f32 %v6425, %v6454
        %v6465 = vmul.f32 %v6426, %v6454
        %v6466 = vmul.f32 %v6427, %v6454
        %v6467 = vmul.f32 %v6428, %v6454
        %v6468 = vmul.f32 %v6429, %v6454
        %v6469 = vmul.f32 %v6430, %v6454
        %v6470 = vmul.f32 %v6431, %v6454
        %v6471 = vmul.f32 %v6432, %v6454
        %v6472 = vmul.f32 %v6433, %v6454
        %v6473 = vmul.f32 %v6434, %v6454
        %v6474 = vmul.f32 %v6435, %v6454
        %v6475 = vmul.f32 %v6436, %v6454
        %v6476 = vmul.f32 %v6437, %v6454
        %v6477 = vmul.f32 %v6438, %v6454
        %v6478 = vmul.f32 %v6439, %v6454
        %v6479 = vmul.f32 %v6440, %v6454
        %v6480 = vmul.f32 %v6441, %v6454
        %v6481 = vmul.f32 %v6442, %v6454
        %v6482 = vmul.f32 %v6443, %v6454
        %v6483 = vmul.f32 %v6444, %v6454
        %v6484 = vmul.f32 %v6445, %v6454
        %v6485 = vmul.f32 %v6446, %v6454
        %v6486 = vmul.f32 %v6447, %v6454
        %v6487 = vmul.f32 %v6448, %v6454
        %v6488 = vld [vmem:[%s11] sm:$0x1]
        %v6490 = vlaneseq
        %v6491 = vshrl.u32 %v6490, 7
        %v6492 = vsub.s32 0, %v6491
        %v6493 = vrot.slane %v6488, %v6492
        %v6495 = vadd.f32 %v6456, %v6493
        %v6496 = vadd.f32 %v6457, %v6493
        %v6497 = vadd.f32 %v6458, %v6493
        %v6498 = vadd.f32 %v6459, %v6493
        %v6499 = vadd.f32 %v6460, %v6493
        %v6500 = vadd.f32 %v6461, %v6493
        %v6501 = vadd.f32 %v6462, %v6493
        %v6502 = vadd.f32 %v6463, %v6493
        %v6503 = vadd.f32 %v6464, %v6493
        %v6504 = vadd.f32 %v6465, %v6493
        %v6505 = vadd.f32 %v6466, %v6493
        %v6506 = vadd.f32 %v6467, %v6493
        %v6507 = vadd.f32 %v6468, %v6493
        %v6508 = vadd.f32 %v6469, %v6493
        %v6509 = vadd.f32 %v6470, %v6493
        %v6510 = vadd.f32 %v6471, %v6493
        %v6511 = vadd.f32 %v6472, %v6493
        %v6512 = vadd.f32 %v6473, %v6493
        %v6513 = vadd.f32 %v6474, %v6493
        %v6514 = vadd.f32 %v6475, %v6493
        %v6515 = vadd.f32 %v6476, %v6493
        %v6516 = vadd.f32 %v6477, %v6493
        %v6517 = vadd.f32 %v6478, %v6493
        %v6518 = vadd.f32 %v6479, %v6493
        %v6519 = vadd.f32 %v6480, %v6493
        %v6520 = vadd.f32 %v6481, %v6493
        %v6521 = vadd.f32 %v6482, %v6493
        %v6522 = vadd.f32 %v6483, %v6493
        %v6523 = vadd.f32 %v6484, %v6493
        %v6524 = vadd.f32 %v6485, %v6493
        %v6525 = vadd.f32 %v6486, %v6493
        %v6526 = vadd.f32 %v6487, %v6493
        %v6527 = vsub.f32 0.0, %v6495
        %v6528 = vsub.f32 0.0, %v6496
        %v6529 = vsub.f32 0.0, %v6497
        %v6530 = vsub.f32 0.0, %v6498
        %v6531 = vsub.f32 0.0, %v6499
        %v6532 = vsub.f32 0.0, %v6500
        %v6533 = vsub.f32 0.0, %v6501
        %v6534 = vsub.f32 0.0, %v6502
        %v6535 = vsub.f32 0.0, %v6503
        %v6536 = vsub.f32 0.0, %v6504
        %v6537 = vsub.f32 0.0, %v6505
        %v6538 = vsub.f32 0.0, %v6506
        %v6539 = vsub.f32 0.0, %v6507
        %v6540 = vsub.f32 0.0, %v6508
        %v6541 = vsub.f32 0.0, %v6509
        %v6542 = vsub.f32 0.0, %v6510
        %v6543 = vsub.f32 0.0, %v6511
        %v6544 = vsub.f32 0.0, %v6512
        %v6545 = vsub.f32 0.0, %v6513
        %v6546 = vsub.f32 0.0, %v6514
        %v6547 = vsub.f32 0.0, %v6515
        %v6548 = vsub.f32 0.0, %v6516
        %v6549 = vsub.f32 0.0, %v6517
        %v6550 = vsub.f32 0.0, %v6518
        %v6551 = vsub.f32 0.0, %v6519
        %v6552 = vsub.f32 0.0, %v6520
        %v6553 = vsub.f32 0.0, %v6521
        %v6554 = vsub.f32 0.0, %v6522
        %v6555 = vsub.f32 0.0, %v6523
        %v6556 = vsub.f32 0.0, %v6524
        %v6557 = vsub.f32 0.0, %v6525
        %v6558 = vsub.f32 0.0, %v6526
        %v6559 = vmul.f32 %v6527, 1.442695
        %v6560 = vpow.pop %v6559
        %v6561 = vmul.f32 %v6528, 1.442695
        %v6562 = vpow.pop %v6561
        %v6563 = vmul.f32 %v6529, 1.442695
        %v6564 = vpow.pop %v6563
        %v6565 = vmul.f32 %v6530, 1.442695
        %v6566 = vpow.pop %v6565
        %v6567 = vmul.f32 %v6531, 1.442695
        %v6568 = vpow.pop %v6567
        %v6569 = vmul.f32 %v6532, 1.442695
        %v6570 = vpow.pop %v6569
        %v6571 = vmul.f32 %v6533, 1.442695
        %v6572 = vpow.pop %v6571
        %v6573 = vmul.f32 %v6534, 1.442695
        %v6574 = vpow.pop %v6573
        %v6575 = vmul.f32 %v6535, 1.442695
        %v6576 = vpow.pop %v6575
        %v6577 = vmul.f32 %v6536, 1.442695
        %v6578 = vpow.pop %v6577
        %v6579 = vmul.f32 %v6537, 1.442695
        %v6580 = vpow.pop %v6579
        %v6581 = vmul.f32 %v6538, 1.442695
        %v6582 = vpow.pop %v6581
        %v6583 = vmul.f32 %v6539, 1.442695
        %v6584 = vpow.pop %v6583
        %v6585 = vmul.f32 %v6540, 1.442695
        %v6586 = vpow.pop %v6585
        %v6587 = vmul.f32 %v6541, 1.442695
        %v6588 = vpow.pop %v6587
        %v6589 = vmul.f32 %v6542, 1.442695
        %v6590 = vpow.pop %v6589
        %v6591 = vmul.f32 %v6543, 1.442695
        %v6592 = vpow.pop %v6591
        %v6593 = vmul.f32 %v6544, 1.442695
        %v6594 = vpow.pop %v6593
        %v6595 = vmul.f32 %v6545, 1.442695
        %v6596 = vpow.pop %v6595
        %v6597 = vmul.f32 %v6546, 1.442695
        %v6598 = vpow.pop %v6597
        %v6599 = vmul.f32 %v6547, 1.442695
        %v6600 = vpow.pop %v6599
        %v6601 = vmul.f32 %v6548, 1.442695
        %v6602 = vpow.pop %v6601
        %v6603 = vmul.f32 %v6549, 1.442695
        %v6604 = vpow.pop %v6603
        %v6605 = vmul.f32 %v6550, 1.442695
        %v6606 = vpow.pop %v6605
        %v6607 = vmul.f32 %v6551, 1.442695
        %v6608 = vpow.pop %v6607
        %v6609 = vmul.f32 %v6552, 1.442695
        %v6610 = vpow.pop %v6609
        %v6611 = vmul.f32 %v6553, 1.442695
        %v6612 = vpow.pop %v6611
        %v6613 = vmul.f32 %v6554, 1.442695
        %v6614 = vpow.pop %v6613
        %v6615 = vmul.f32 %v6555, 1.442695
        %v6616 = vpow.pop %v6615
        %v6617 = vmul.f32 %v6556, 1.442695
        %v6618 = vpow.pop %v6617
        %v6619 = vmul.f32 %v6557, 1.442695
        %v6620 = vpow.pop %v6619
        %v6621 = vmul.f32 %v6558, 1.442695
        %v6622 = vpow.pop %v6621
        %v6623 = vadd.f32 %v6560, 1.0
        %v6624 = vadd.f32 %v6562, 1.0
        %v6625 = vadd.f32 %v6564, 1.0
        %v6626 = vadd.f32 %v6566, 1.0
        %v6627 = vadd.f32 %v6568, 1.0
        %v6628 = vadd.f32 %v6570, 1.0
        %v6629 = vadd.f32 %v6572, 1.0
        %v6630 = vadd.f32 %v6574, 1.0
        %v6631 = vadd.f32 %v6576, 1.0
        %v6632 = vadd.f32 %v6578, 1.0
        %v6633 = vadd.f32 %v6580, 1.0
        %v6634 = vadd.f32 %v6582, 1.0
        %v6635 = vadd.f32 %v6584, 1.0
        %v6636 = vadd.f32 %v6586, 1.0
        %v6637 = vadd.f32 %v6588, 1.0
        %v6638 = vadd.f32 %v6590, 1.0
        %v6639 = vadd.f32 %v6592, 1.0
        %v6640 = vadd.f32 %v6594, 1.0
        %v6641 = vadd.f32 %v6596, 1.0
        %v6642 = vadd.f32 %v6598, 1.0
        %v6643 = vadd.f32 %v6600, 1.0
        %v6644 = vadd.f32 %v6602, 1.0
        %v6645 = vadd.f32 %v6604, 1.0
        %v6646 = vadd.f32 %v6606, 1.0
        %v6647 = vadd.f32 %v6608, 1.0
        %v6648 = vadd.f32 %v6610, 1.0
        %v6649 = vadd.f32 %v6612, 1.0
        %v6650 = vadd.f32 %v6614, 1.0
        %v6651 = vadd.f32 %v6616, 1.0
        %v6652 = vadd.f32 %v6618, 1.0
        %v6653 = vadd.f32 %v6620, 1.0
        %v6654 = vadd.f32 %v6622, 1.0
        %v6655 = vrcp.pop %v6623
        %v6656 = vrcp.pop %v6624
        %v6657 = vrcp.pop %v6625
        %v6658 = vrcp.pop %v6626
        %v6659 = vrcp.pop %v6627
        %v6660 = vrcp.pop %v6628
        %v6661 = vrcp.pop %v6629
        %v6662 = vrcp.pop %v6630
        %v6663 = vrcp.pop %v6631
        %v6664 = vrcp.pop %v6632
        %v6665 = vrcp.pop %v6633
        %v6666 = vrcp.pop %v6634
        %v6667 = vrcp.pop %v6635
        %v6668 = vrcp.pop %v6636
        %v6669 = vrcp.pop %v6637
        %v6670 = vrcp.pop %v6638
        %v6671 = vrcp.pop %v6639
        %v6672 = vrcp.pop %v6640
        %v6673 = vrcp.pop %v6641
        %v6674 = vrcp.pop %v6642
        %v6675 = vrcp.pop %v6643
        %v6676 = vrcp.pop %v6644
        %v6677 = vrcp.pop %v6645
        %v6678 = vrcp.pop %v6646
        %v6679 = vrcp.pop %v6647
        %v6680 = vrcp.pop %v6648
        %v6681 = vrcp.pop %v6649
        %v6682 = vrcp.pop %v6650
        %v6683 = vrcp.pop %v6651
        %v6684 = vrcp.pop %v6652
        %v6685 = vrcp.pop %v6653
        %v6686 = vrcp.pop %v6654
        %v6687 = vmul.f32 %v6495, %v6655
        %v6688 = vmul.f32 %v6496, %v6656
        %v6689 = vmul.f32 %v6497, %v6657
        %v6690 = vmul.f32 %v6498, %v6658
        %v6691 = vmul.f32 %v6499, %v6659
        %v6692 = vmul.f32 %v6500, %v6660
        %v6693 = vmul.f32 %v6501, %v6661
        %v6694 = vmul.f32 %v6502, %v6662
        %v6695 = vmul.f32 %v6503, %v6663
        %v6696 = vmul.f32 %v6504, %v6664
        %v6697 = vmul.f32 %v6505, %v6665
        %v6698 = vmul.f32 %v6506, %v6666
        %v6699 = vmul.f32 %v6507, %v6667
        %v6700 = vmul.f32 %v6508, %v6668
        %v6701 = vmul.f32 %v6509, %v6669
        %v6702 = vmul.f32 %v6510, %v6670
        %v6703 = vmul.f32 %v6511, %v6671
        %v6704 = vmul.f32 %v6512, %v6672
        %v6705 = vmul.f32 %v6513, %v6673
        %v6706 = vmul.f32 %v6514, %v6674
        %v6707 = vmul.f32 %v6515, %v6675
        %v6708 = vmul.f32 %v6516, %v6676
        %v6709 = vmul.f32 %v6517, %v6677
        %v6710 = vmul.f32 %v6518, %v6678
        %v6711 = vmul.f32 %v6519, %v6679
        %v6712 = vmul.f32 %v6520, %v6680
        %v6713 = vmul.f32 %v6521, %v6681
        %v6714 = vmul.f32 %v6522, %v6682
        %v6715 = vmul.f32 %v6523, %v6683
        %v6716 = vmul.f32 %v6524, %v6684
        %v6717 = vmul.f32 %v6525, %v6685
        %v6718 = vmul.f32 %v6526, %v6686
        %6719 = vst [vmem:[#allocation4] sm:$0xf] 0
        %6720 = vst [vmem:[#allocation4 + $0x4] sm:$0xf] 0
        %6721 = vst [vmem:[#allocation4 + $0x8] sm:$0x1] 0
        %s6722 = scalar_lea.vmem [#allocation4], 204
        %6723 = vst [vmem:[%s6722] sm:$0xf] 0
        %6724 = vst [vmem:[%s6722 + $0x4] sm:$0xf] 0
        %6725 = vst [vmem:[%s6722 + $0x8] sm:$0x1] 0
        %6726 = vst [vmem:[#allocation4] sm:$0x1] 0
        %6727 = vst [vmem:[#allocation4 + $0xc] sm:$0x1] 0
        %6728 = vst [vmem:[#allocation4 + $0x18] sm:$0x1] 0
        %6729 = vst [vmem:[#allocation4 + $0x24] sm:$0x1] 0
        %6730 = vst [vmem:[#allocation4 + $0x30] sm:$0x1] 0
        %6731 = vst [vmem:[#allocation4 + $0x3c] sm:$0x1] 0
        %6732 = vst [vmem:[#allocation4 + $0x48] sm:$0x1] 0
        %6733 = vst [vmem:[#allocation4 + $0x54] sm:$0x1] 0
        %6734 = vst [vmem:[#allocation4 + $0x60] sm:$0x1] 0
        %6735 = vst [vmem:[#allocation4 + $0x6c] sm:$0x1] 0
        %6736 = vst [vmem:[#allocation4 + $0x78] sm:$0x1] 0
        %6737 = vst [vmem:[#allocation4 + $0x84] sm:$0x1] 0
        %6738 = vst [vmem:[#allocation4 + $0x90] sm:$0x1] 0
        %6739 = vst [vmem:[#allocation4 + $0x9c] sm:$0x1] 0
        %6740 = vst [vmem:[#allocation4 + $0xa8] sm:$0x1] 0
        %6741 = vst [vmem:[#allocation4 + $0xb4] sm:$0x1] 0
        %6742 = vst [vmem:[#allocation4 + $0xc0] sm:$0x1] 0
        %6743 = vst [vmem:[#allocation4 + $0xcc] sm:$0x1] 0
        %6744 = vst [vmem:[#allocation4 + $0x8] sm:$0x1] 0
        %6745 = vst [vmem:[#allocation4 + $0x14] sm:$0x1] 0
        %6746 = vst [vmem:[#allocation4 + $0x20] sm:$0x1] 0
        %6747 = vst [vmem:[#allocation4 + $0x2c] sm:$0x1] 0
        %6748 = vst [vmem:[#allocation4 + $0x38] sm:$0x1] 0
        %6749 = vst [vmem:[#allocation4 + $0x44] sm:$0x1] 0
        %6750 = vst [vmem:[#allocation4 + $0x50] sm:$0x1] 0
        %6751 = vst [vmem:[#allocation4 + $0x5c] sm:$0x1] 0
        %6752 = vst [vmem:[#allocation4 + $0x68] sm:$0x1] 0
        %6753 = vst [vmem:[#allocation4 + $0x74] sm:$0x1] 0
        %6754 = vst [vmem:[#allocation4 + $0x80] sm:$0x1] 0
        %6755 = vst [vmem:[#allocation4 + $0x8c] sm:$0x1] 0
        %6756 = vst [vmem:[#allocation4 + $0x98] sm:$0x1] 0
        %6757 = vst [vmem:[#allocation4 + $0xa4] sm:$0x1] 0
        %6758 = vst [vmem:[#allocation4 + $0xb0] sm:$0x1] 0
        %6759 = vst [vmem:[#allocation4 + $0xbc] sm:$0x1] 0
        %6760 = vst [vmem:[#allocation4 + $0xc8] sm:$0x1] 0
        %6761 = vst [vmem:[#allocation4 + $0xd4] sm:$0x1] 0
        %v6762 = vpack.c.bf16 %v6688, %v6687
        %v6763 = vpack.c.bf16 %v6690, %v6689
        %v6764 = vpack.c.bf16 %v6692, %v6691
        %v6765 = vpack.c.bf16 %v6694, %v6693
        %v6766 = vpack.c.bf16 %v6696, %v6695
        %v6767 = vpack.c.bf16 %v6698, %v6697
        %v6768 = vpack.c.bf16 %v6700, %v6699
        %v6769 = vpack.c.bf16 %v6702, %v6701
        %v6770 = vpack.c.bf16 %v6704, %v6703
        %v6771 = vpack.c.bf16 %v6706, %v6705
        %v6772 = vpack.c.bf16 %v6708, %v6707
        %v6773 = vpack.c.bf16 %v6710, %v6709
        %v6774 = vpack.c.bf16 %v6712, %v6711
        %v6775 = vpack.c.bf16 %v6714, %v6713
        %v6776 = vpack.c.bf16 %v6716, %v6715
        %v6777 = vpack.c.bf16 %v6718, %v6717
        %v6794 = vunpack.c.l.b16 %v6762
        %v6795 = vunpack.c.h.b16 %v6762
        %v6796 = vunpack.c.l.b16 %v6763
        %v6797 = vunpack.c.h.b16 %v6763
        %v6798 = vunpack.c.l.b16 %v6764
        %v6799 = vunpack.c.h.b16 %v6764
        %v6800 = vunpack.c.l.b16 %v6765
        %v6801 = vunpack.c.h.b16 %v6765
        %v6802 = vunpack.c.l.b16 %v6766
        %v6803 = vunpack.c.h.b16 %v6766
        %v6804 = vunpack.c.l.b16 %v6767
        %v6805 = vunpack.c.h.b16 %v6767
        %v6806 = vunpack.c.l.b16 %v6768
        %v6807 = vunpack.c.h.b16 %v6768
        %v6808 = vunpack.c.l.b16 %v6769
        %v6809 = vunpack.c.h.b16 %v6769
        %v6810 = vunpack.c.l.b16 %v6770
        %v6811 = vunpack.c.h.b16 %v6770
        %v6812 = vunpack.c.l.b16 %v6771
        %v6813 = vunpack.c.h.b16 %v6771
        %v6814 = vunpack.c.l.b16 %v6772
        %v6815 = vunpack.c.h.b16 %v6772
        %v6816 = vunpack.c.l.b16 %v6773
        %v6817 = vunpack.c.h.b16 %v6773
        %v6818 = vunpack.c.l.b16 %v6774
        %v6819 = vunpack.c.h.b16 %v6774
        %v6820 = vunpack.c.l.b16 %v6775
        %v6821 = vunpack.c.h.b16 %v6775
        %v6822 = vunpack.c.l.b16 %v6776
        %v6823 = vunpack.c.h.b16 %v6776
        %v6824 = vunpack.c.l.b16 %v6777
        %v6825 = vunpack.c.h.b16 %v6777
        %v6826 = vpack.c.b16 %v6794, %v6794
        %v6827 = vpack.c.b16 %v6795, %v6795
        %v6828 = vpack.c.b16 %v6796, %v6796
        %v6829 = vpack.c.b16 %v6797, %v6797
        %v6830 = vpack.c.b16 %v6798, %v6798
        %v6831 = vpack.c.b16 %v6799, %v6799
        %v6832 = vpack.c.b16 %v6800, %v6800
        %v6833 = vpack.c.b16 %v6801, %v6801
        %v6834 = vpack.c.b16 %v6802, %v6802
        %v6835 = vpack.c.b16 %v6803, %v6803
        %v6836 = vpack.c.b16 %v6804, %v6804
        %v6837 = vpack.c.b16 %v6805, %v6805
        %v6838 = vpack.c.b16 %v6806, %v6806
        %v6839 = vpack.c.b16 %v6807, %v6807
        %v6840 = vpack.c.b16 %v6808, %v6808
        %v6841 = vpack.c.b16 %v6809, %v6809
        %v6842 = vpack.c.b16 %v6810, %v6810
        %v6843 = vpack.c.b16 %v6811, %v6811
        %v6844 = vpack.c.b16 %v6812, %v6812
        %v6845 = vpack.c.b16 %v6813, %v6813
        %v6846 = vpack.c.b16 %v6814, %v6814
        %v6847 = vpack.c.b16 %v6815, %v6815
        %v6848 = vpack.c.b16 %v6816, %v6816
        %v6849 = vpack.c.b16 %v6817, %v6817
        %v6850 = vpack.c.b16 %v6818, %v6818
        %v6851 = vpack.c.b16 %v6819, %v6819
        %v6852 = vpack.c.b16 %v6820, %v6820
        %v6853 = vpack.c.b16 %v6821, %v6821
        %v6854 = vpack.c.b16 %v6822, %v6822
        %v6855 = vpack.c.b16 %v6823, %v6823
        %v6856 = vpack.c.b16 %v6824, %v6824
        %v6857 = vpack.c.b16 %v6825, %v6825
        %v6859 = vshrl.u32 %v6826, 16
        %v6861 = vrot.slane %v6859, 7
        %v6862 = vshll.u32 %v6826, 16
        %v6864 = vor.u32 %v6861, %v6862
        %v6865 = vrot.slane %v6861, 4
        %v6867 = vshrl.u32 %v6827, 16
        %v6869 = vrot.slane %v6867, 7
        %v6870 = vshll.u32 %v6827, 16
        %v6872 = vor.u32 %v6869, %v6870
        %v6873 = vsel %vm1464, %v6865, %v6872
        %v6874 = vrot.slane %v6869, 4
        %v6876 = vshrl.u32 %v6828, 16
        %v6878 = vrot.slane %v6876, 7
        %v6879 = vshll.u32 %v6828, 16
        %v6881 = vor.u32 %v6878, %v6879
        %v6882 = vrot.slane %v6878, 4
        %v6884 = vshrl.u32 %v6829, 16
        %v6886 = vrot.slane %v6884, 7
        %v6887 = vshll.u32 %v6829, 16
        %v6889 = vor.u32 %v6886, %v6887
        %v6890 = vsel %vm1464, %v6882, %v6889
        %v6891 = vrot.slane %v6886, 4
        %v6893 = vshrl.u32 %v6830, 16
        %v6895 = vrot.slane %v6893, 7
        %v6896 = vshll.u32 %v6830, 16
        %v6898 = vor.u32 %v6895, %v6896
        %v6899 = vrot.slane %v6895, 4
        %v6901 = vshrl.u32 %v6831, 16
        %v6903 = vrot.slane %v6901, 7
        %v6904 = vshll.u32 %v6831, 16
        %v6906 = vor.u32 %v6903, %v6904
        %v6907 = vsel %vm1464, %v6899, %v6906
        %v6908 = vrot.slane %v6903, 4
        %v6910 = vshrl.u32 %v6832, 16
        %v6912 = vrot.slane %v6910, 7
        %v6913 = vshll.u32 %v6832, 16
        %v6915 = vor.u32 %v6912, %v6913
        %v6916 = vrot.slane %v6912, 4
        %v6918 = vshrl.u32 %v6833, 16
        %v6920 = vrot.slane %v6918, 7
        %v6921 = vshll.u32 %v6833, 16
        %v6923 = vor.u32 %v6920, %v6921
        %v6924 = vsel %vm1464, %v6916, %v6923
        %v6925 = vrot.slane %v6920, 4
        %v6927 = vshrl.u32 %v6834, 16
        %v6929 = vrot.slane %v6927, 7
        %v6930 = vshll.u32 %v6834, 16
        %v6932 = vor.u32 %v6929, %v6930
        %v6933 = vrot.slane %v6929, 4
        %v6935 = vshrl.u32 %v6835, 16
        %v6937 = vrot.slane %v6935, 7
        %v6938 = vshll.u32 %v6835, 16
        %v6940 = vor.u32 %v6937, %v6938
        %v6941 = vsel %vm1464, %v6933, %v6940
        %v6942 = vrot.slane %v6937, 4
        %v6944 = vshrl.u32 %v6836, 16
        %v6946 = vrot.slane %v6944, 7
        %v6947 = vshll.u32 %v6836, 16
        %v6949 = vor.u32 %v6946, %v6947
        %v6950 = vrot.slane %v6946, 4
        %v6952 = vshrl.u32 %v6837, 16
        %v6954 = vrot.slane %v6952, 7
        %v6955 = vshll.u32 %v6837, 16
        %v6957 = vor.u32 %v6954, %v6955
        %v6958 = vsel %vm1464, %v6950, %v6957
        %v6959 = vrot.slane %v6954, 4
        %v6961 = vshrl.u32 %v6838, 16
        %v6963 = vrot.slane %v6961, 7
        %v6964 = vshll.u32 %v6838, 16
        %v6966 = vor.u32 %v6963, %v6964
        %v6967 = vrot.slane %v6963, 4
        %v6969 = vshrl.u32 %v6839, 16
        %v6971 = vrot.slane %v6969, 7
        %v6972 = vshll.u32 %v6839, 16
        %v6974 = vor.u32 %v6971, %v6972
        %v6975 = vsel %vm1464, %v6967, %v6974
        %v6976 = vrot.slane %v6971, 4
        %v6978 = vshrl.u32 %v6840, 16
        %v6980 = vrot.slane %v6978, 7
        %v6981 = vshll.u32 %v6840, 16
        %v6983 = vor.u32 %v6980, %v6981
        %v6984 = vrot.slane %v6980, 4
        %v6986 = vshrl.u32 %v6841, 16
        %v6988 = vrot.slane %v6986, 7
        %v6989 = vshll.u32 %v6841, 16
        %v6991 = vor.u32 %v6988, %v6989
        %v6992 = vsel %vm1464, %v6984, %v6991
        %v6993 = vrot.slane %v6988, 4
        %v6995 = vshrl.u32 %v6842, 16
        %v6997 = vrot.slane %v6995, 7
        %v6998 = vshll.u32 %v6842, 16
        %v7000 = vor.u32 %v6997, %v6998
        %v7001 = vrot.slane %v6997, 4
        %v7003 = vshrl.u32 %v6843, 16
        %v7005 = vrot.slane %v7003, 7
        %v7006 = vshll.u32 %v6843, 16
        %v7008 = vor.u32 %v7005, %v7006
        %v7009 = vsel %vm1464, %v7001, %v7008
        %v7010 = vrot.slane %v7005, 4
        %v7012 = vshrl.u32 %v6844, 16
        %v7014 = vrot.slane %v7012, 7
        %v7015 = vshll.u32 %v6844, 16
        %v7017 = vor.u32 %v7014, %v7015
        %v7018 = vrot.slane %v7014, 4
        %v7020 = vshrl.u32 %v6845, 16
        %v7022 = vrot.slane %v7020, 7
        %v7023 = vshll.u32 %v6845, 16
        %v7025 = vor.u32 %v7022, %v7023
        %v7026 = vsel %vm1464, %v7018, %v7025
        %v7027 = vrot.slane %v7022, 4
        %v7029 = vshrl.u32 %v6846, 16
        %v7031 = vrot.slane %v7029, 7
        %v7032 = vshll.u32 %v6846, 16
        %v7034 = vor.u32 %v7031, %v7032
        %v7035 = vrot.slane %v7031, 4
        %v7037 = vshrl.u32 %v6847, 16
        %v7039 = vrot.slane %v7037, 7
        %v7040 = vshll.u32 %v6847, 16
        %v7042 = vor.u32 %v7039, %v7040
        %v7043 = vsel %vm1464, %v7035, %v7042
        %v7044 = vrot.slane %v7039, 4
        %v7046 = vshrl.u32 %v6848, 16
        %v7048 = vrot.slane %v7046, 7
        %v7049 = vshll.u32 %v6848, 16
        %v7051 = vor.u32 %v7048, %v7049
        %v7052 = vrot.slane %v7048, 4
        %v7054 = vshrl.u32 %v6849, 16
        %v7056 = vrot.slane %v7054, 7
        %v7057 = vshll.u32 %v6849, 16
        %v7059 = vor.u32 %v7056, %v7057
        %v7060 = vsel %vm1464, %v7052, %v7059
        %v7061 = vrot.slane %v7056, 4
        %v7063 = vshrl.u32 %v6850, 16
        %v7065 = vrot.slane %v7063, 7
        %v7066 = vshll.u32 %v6850, 16
        %v7068 = vor.u32 %v7065, %v7066
        %v7069 = vrot.slane %v7065, 4
        %v7071 = vshrl.u32 %v6851, 16
        %v7073 = vrot.slane %v7071, 7
        %v7074 = vshll.u32 %v6851, 16
        %v7076 = vor.u32 %v7073, %v7074
        %v7077 = vsel %vm1464, %v7069, %v7076
        %v7078 = vrot.slane %v7073, 4
        %v7080 = vshrl.u32 %v6852, 16
        %v7082 = vrot.slane %v7080, 7
        %v7083 = vshll.u32 %v6852, 16
        %v7085 = vor.u32 %v7082, %v7083
        %v7086 = vrot.slane %v7082, 4
        %v7088 = vshrl.u32 %v6853, 16
        %v7090 = vrot.slane %v7088, 7
        %v7091 = vshll.u32 %v6853, 16
        %v7093 = vor.u32 %v7090, %v7091
        %v7094 = vsel %vm1464, %v7086, %v7093
        %v7095 = vrot.slane %v7090, 4
        %v7097 = vshrl.u32 %v6854, 16
        %v7099 = vrot.slane %v7097, 7
        %v7100 = vshll.u32 %v6854, 16
        %v7102 = vor.u32 %v7099, %v7100
        %v7103 = vrot.slane %v7099, 4
        %v7105 = vshrl.u32 %v6855, 16
        %v7107 = vrot.slane %v7105, 7
        %v7108 = vshll.u32 %v6855, 16
        %v7110 = vor.u32 %v7107, %v7108
        %v7111 = vsel %vm1464, %v7103, %v7110
        %v7112 = vrot.slane %v7107, 4
        %v7114 = vshrl.u32 %v6856, 16
        %v7116 = vrot.slane %v7114, 7
        %v7117 = vshll.u32 %v6856, 16
        %v7119 = vor.u32 %v7116, %v7117
        %v7120 = vrot.slane %v7116, 4
        %v7122 = vshrl.u32 %v6857, 16
        %v7124 = vrot.slane %v7122, 7
        %v7125 = vshll.u32 %v6857, 16
        %v7127 = vor.u32 %v7124, %v7125
        %v7128 = vsel %vm1464, %v7120, %v7127
        %v7129 = vrot.slane %v7124, 4
        %s7178 = scalar_lea.vmem [#allocation4], 12
        %v7179 = vld [vmem:[%s7178] sm:$0xf]
        %v7180 = vsel %vm1788, %v6864, %v7179
        %7181 = vst [vmem:[%s7178] sm:$0xf] %v7180
        %7182 = vst [vmem:[%s7178 + $0x4] sm:$0xf] %v6873
        %v7183 = vld [vmem:[%s7178 + $0x8] sm:$0x1]
        %v7184 = vsel %vm1794, %v6874, %v7183
        %7185 = vst [vmem:[%s7178 + $0x8] sm:$0x1] %v7184
        %v7186 = vld [vmem:[%s7178 + $0xc] sm:$0xf]
        %v7187 = vsel %vm1788, %v6881, %v7186
        %7188 = vst [vmem:[%s7178 + $0xc] sm:$0xf] %v7187
        %7189 = vst [vmem:[%s7178 + $0x10] sm:$0xf] %v6890
        %v7190 = vld [vmem:[%s7178 + $0x14] sm:$0x1]
        %v7191 = vsel %vm1794, %v6891, %v7190
        %7192 = vst [vmem:[%s7178 + $0x14] sm:$0x1] %v7191
        %v7193 = vld [vmem:[%s7178 + $0x18] sm:$0xf]
        %v7194 = vsel %vm1788, %v6898, %v7193
        %7195 = vst [vmem:[%s7178 + $0x18] sm:$0xf] %v7194
        %7196 = vst [vmem:[%s7178 + $0x1c] sm:$0xf] %v6907
        %v7197 = vld [vmem:[%s7178 + $0x20] sm:$0x1]
        %v7198 = vsel %vm1794, %v6908, %v7197
        %7199 = vst [vmem:[%s7178 + $0x20] sm:$0x1] %v7198
        %v7200 = vld [vmem:[%s7178 + $0x24] sm:$0xf]
        %v7201 = vsel %vm1788, %v6915, %v7200
        %7202 = vst [vmem:[%s7178 + $0x24] sm:$0xf] %v7201
        %7203 = vst [vmem:[%s7178 + $0x28] sm:$0xf] %v6924
        %v7204 = vld [vmem:[%s7178 + $0x2c] sm:$0x1]
        %v7205 = vsel %vm1794, %v6925, %v7204
        %7206 = vst [vmem:[%s7178 + $0x2c] sm:$0x1] %v7205
        %v7207 = vld [vmem:[%s7178 + $0x30] sm:$0xf]
        %v7208 = vsel %vm1788, %v6932, %v7207
        %7209 = vst [vmem:[%s7178 + $0x30] sm:$0xf] %v7208
        %7210 = vst [vmem:[%s7178 + $0x34] sm:$0xf] %v6941
        %v7211 = vld [vmem:[%s7178 + $0x38] sm:$0x1]
        %v7212 = vsel %vm1794, %v6942, %v7211
        %7213 = vst [vmem:[%s7178 + $0x38] sm:$0x1] %v7212
        %v7214 = vld [vmem:[%s7178 + $0x3c] sm:$0xf]
        %v7215 = vsel %vm1788, %v6949, %v7214
        %7216 = vst [vmem:[%s7178 + $0x3c] sm:$0xf] %v7215
        %7217 = vst [vmem:[%s7178 + $0x40] sm:$0xf] %v6958
        %v7218 = vld [vmem:[%s7178 + $0x44] sm:$0x1]
        %v7219 = vsel %vm1794, %v6959, %v7218
        %7220 = vst [vmem:[%s7178 + $0x44] sm:$0x1] %v7219
        %v7221 = vld [vmem:[%s7178 + $0x48] sm:$0xf]
        %v7222 = vsel %vm1788, %v6966, %v7221
        %7223 = vst [vmem:[%s7178 + $0x48] sm:$0xf] %v7222
        %7224 = vst [vmem:[%s7178 + $0x4c] sm:$0xf] %v6975
        %v7225 = vld [vmem:[%s7178 + $0x50] sm:$0x1]
        %v7226 = vsel %vm1794, %v6976, %v7225
        %7227 = vst [vmem:[%s7178 + $0x50] sm:$0x1] %v7226
        %v7228 = vld [vmem:[%s7178 + $0x54] sm:$0xf]
        %v7229 = vsel %vm1788, %v6983, %v7228
        %7230 = vst [vmem:[%s7178 + $0x54] sm:$0xf] %v7229
        %7231 = vst [vmem:[%s7178 + $0x58] sm:$0xf] %v6992
        %v7232 = vld [vmem:[%s7178 + $0x5c] sm:$0x1]
        %v7233 = vsel %vm1794, %v6993, %v7232
        %7234 = vst [vmem:[%s7178 + $0x5c] sm:$0x1] %v7233
        %v7235 = vld [vmem:[%s7178 + $0x60] sm:$0xf]
        %v7236 = vsel %vm1788, %v7000, %v7235
        %7237 = vst [vmem:[%s7178 + $0x60] sm:$0xf] %v7236
        %7238 = vst [vmem:[%s7178 + $0x64] sm:$0xf] %v7009
        %v7239 = vld [vmem:[%s7178 + $0x68] sm:$0x1]
        %v7240 = vsel %vm1794, %v7010, %v7239
        %7241 = vst [vmem:[%s7178 + $0x68] sm:$0x1] %v7240
        %v7242 = vld [vmem:[%s7178 + $0x6c] sm:$0xf]
        %v7243 = vsel %vm1788, %v7017, %v7242
        %7244 = vst [vmem:[%s7178 + $0x6c] sm:$0xf] %v7243
        %7245 = vst [vmem:[%s7178 + $0x70] sm:$0xf] %v7026
        %v7246 = vld [vmem:[%s7178 + $0x74] sm:$0x1]
        %v7247 = vsel %vm1794, %v7027, %v7246
        %7248 = vst [vmem:[%s7178 + $0x74] sm:$0x1] %v7247
        %v7249 = vld [vmem:[%s7178 + $0x78] sm:$0xf]
        %v7250 = vsel %vm1788, %v7034, %v7249
        %7251 = vst [vmem:[%s7178 + $0x78] sm:$0xf] %v7250
        %7252 = vst [vmem:[%s7178 + $0x7c] sm:$0xf] %v7043
        %v7253 = vld [vmem:[%s7178 + $0x80] sm:$0x1]
        %v7254 = vsel %vm1794, %v7044, %v7253
        %7255 = vst [vmem:[%s7178 + $0x80] sm:$0x1] %v7254
        %v7256 = vld [vmem:[%s7178 + $0x84] sm:$0xf]
        %v7257 = vsel %vm1788, %v7051, %v7256
        %7258 = vst [vmem:[%s7178 + $0x84] sm:$0xf] %v7257
        %7259 = vst [vmem:[%s7178 + $0x88] sm:$0xf] %v7060
        %v7260 = vld [vmem:[%s7178 + $0x8c] sm:$0x1]
        %v7261 = vsel %vm1794, %v7061, %v7260
        %7262 = vst [vmem:[%s7178 + $0x8c] sm:$0x1] %v7261
        %v7263 = vld [vmem:[%s7178 + $0x90] sm:$0xf]
        %v7264 = vsel %vm1788, %v7068, %v7263
        %7265 = vst [vmem:[%s7178 + $0x90] sm:$0xf] %v7264
        %7266 = vst [vmem:[%s7178 + $0x94] sm:$0xf] %v7077
        %v7267 = vld [vmem:[%s7178 + $0x98] sm:$0x1]
        %v7268 = vsel %vm1794, %v7078, %v7267
        %7269 = vst [vmem:[%s7178 + $0x98] sm:$0x1] %v7268
        %v7270 = vld [vmem:[%s7178 + $0x9c] sm:$0xf]
        %v7271 = vsel %vm1788, %v7085, %v7270
        %7272 = vst [vmem:[%s7178 + $0x9c] sm:$0xf] %v7271
        %7273 = vst [vmem:[%s7178 + $0xa0] sm:$0xf] %v7094
        %v7274 = vld [vmem:[%s7178 + $0xa4] sm:$0x1]
        %v7275 = vsel %vm1794, %v7095, %v7274
        %7276 = vst [vmem:[%s7178 + $0xa4] sm:$0x1] %v7275
        %v7277 = vld [vmem:[%s7178 + $0xa8] sm:$0xf]
        %v7278 = vsel %vm1788, %v7102, %v7277
        %7279 = vst [vmem:[%s7178 + $0xa8] sm:$0xf] %v7278
        %7280 = vst [vmem:[%s7178 + $0xac] sm:$0xf] %v7111
        %v7281 = vld [vmem:[%s7178 + $0xb0] sm:$0x1]
        %v7282 = vsel %vm1794, %v7112, %v7281
        %7283 = vst [vmem:[%s7178 + $0xb0] sm:$0x1] %v7282
        %v7284 = vld [vmem:[%s7178 + $0xb4] sm:$0xf]
        %v7285 = vsel %vm1788, %v7119, %v7284
        %7286 = vst [vmem:[%s7178 + $0xb4] sm:$0xf] %v7285
        %7287 = vst [vmem:[%s7178 + $0xb8] sm:$0xf] %v7128
        %v7288 = vld [vmem:[%s7178 + $0xbc] sm:$0x1]
        %v7289 = vsel %vm1794, %v7129, %v7288
        %7290 = vst [vmem:[%s7178 + $0xbc] sm:$0x1] %v7289
        %v7291 = vld [vmem:[#allocation4] sm:$0xf]
        %v7292 = vld [vmem:[#allocation4 + $0x4] sm:$0xf]
        %v7293 = vld [vmem:[#allocation4 + $0xc] sm:$0xf]
        %v7294 = vld [vmem:[#allocation4 + $0x10] sm:$0xf]
        %v7295 = vld [vmem:[#allocation4 + $0x18] sm:$0xf]
        %v7296 = vld [vmem:[#allocation4 + $0x1c] sm:$0xf]
        %v7297 = vld [vmem:[#allocation4 + $0x24] sm:$0xf]
        %v7298 = vld [vmem:[#allocation4 + $0x28] sm:$0xf]
        %v7299 = vld [vmem:[#allocation4 + $0x30] sm:$0xf]
        %v7300 = vld [vmem:[#allocation4 + $0x34] sm:$0xf]
        %v7301 = vld [vmem:[#allocation4 + $0x3c] sm:$0xf]
        %v7302 = vld [vmem:[#allocation4 + $0x40] sm:$0xf]
        %v7303 = vld [vmem:[#allocation4 + $0x48] sm:$0xf]
        %v7304 = vld [vmem:[#allocation4 + $0x4c] sm:$0xf]
        %v7305 = vld [vmem:[#allocation4 + $0x54] sm:$0xf]
        %v7306 = vld [vmem:[#allocation4 + $0x58] sm:$0xf]
        %v7307 = vld [vmem:[#allocation4 + $0x60] sm:$0xf]
        %v7308 = vld [vmem:[#allocation4 + $0x64] sm:$0xf]
        %v7309 = vld [vmem:[#allocation4 + $0x6c] sm:$0xf]
        %v7310 = vld [vmem:[#allocation4 + $0x70] sm:$0xf]
        %v7311 = vld [vmem:[#allocation4 + $0x78] sm:$0xf]
        %v7312 = vld [vmem:[#allocation4 + $0x7c] sm:$0xf]
        %v7313 = vld [vmem:[#allocation4 + $0x84] sm:$0xf]
        %v7314 = vld [vmem:[#allocation4 + $0x88] sm:$0xf]
        %v7315 = vld [vmem:[#allocation4 + $0x90] sm:$0xf]
        %v7316 = vld [vmem:[#allocation4 + $0x94] sm:$0xf]
        %v7317 = vld [vmem:[#allocation4 + $0x9c] sm:$0xf]
        %v7318 = vld [vmem:[#allocation4 + $0xa0] sm:$0xf]
        %v7319 = vld [vmem:[#allocation4 + $0xa8] sm:$0xf]
        %v7320 = vld [vmem:[#allocation4 + $0xac] sm:$0xf]
        %v7321 = vld [vmem:[#allocation4 + $0xb4] sm:$0xf]
        %v7322 = vld [vmem:[#allocation4 + $0xb8] sm:$0xf]
        %v7355 = vunpack.c.l.b16 %v7291
        %v7356 = vunpack.c.l.b16 %v7292
        %v7357 = vunpack.c.l.b16 %v7293
        %v7358 = vunpack.c.l.b16 %v7294
        %v7359 = vunpack.c.l.b16 %v7295
        %v7360 = vunpack.c.l.b16 %v7296
        %v7361 = vunpack.c.l.b16 %v7297
        %v7362 = vunpack.c.l.b16 %v7298
        %v7363 = vunpack.c.l.b16 %v7299
        %v7364 = vunpack.c.l.b16 %v7300
        %v7365 = vunpack.c.l.b16 %v7301
        %v7366 = vunpack.c.l.b16 %v7302
        %v7367 = vunpack.c.l.b16 %v7303
        %v7368 = vunpack.c.l.b16 %v7304
        %v7369 = vunpack.c.l.b16 %v7305
        %v7370 = vunpack.c.l.b16 %v7306
        %v7371 = vunpack.c.l.b16 %v7307
        %v7372 = vunpack.c.l.b16 %v7308
        %v7373 = vunpack.c.l.b16 %v7309
        %v7374 = vunpack.c.l.b16 %v7310
        %v7375 = vunpack.c.l.b16 %v7311
        %v7376 = vunpack.c.l.b16 %v7312
        %v7377 = vunpack.c.l.b16 %v7313
        %v7378 = vunpack.c.l.b16 %v7314
        %v7379 = vunpack.c.l.b16 %v7315
        %v7380 = vunpack.c.l.b16 %v7316
        %v7381 = vunpack.c.l.b16 %v7317
        %v7382 = vunpack.c.l.b16 %v7318
        %v7383 = vunpack.c.l.b16 %v7319
        %v7384 = vunpack.c.l.b16 %v7320
        %v7385 = vunpack.c.l.b16 %v7321
        %v7386 = vunpack.c.l.b16 %v7322
        %v7387 = vpack.c.b16 %v7356, %v7355
        %v7388 = vpack.c.b16 %v7358, %v7357
        %v7389 = vpack.c.b16 %v7360, %v7359
        %v7390 = vpack.c.b16 %v7362, %v7361
        %v7391 = vpack.c.b16 %v7364, %v7363
        %v7392 = vpack.c.b16 %v7366, %v7365
        %v7393 = vpack.c.b16 %v7368, %v7367
        %v7394 = vpack.c.b16 %v7370, %v7369
        %v7395 = vpack.c.b16 %v7372, %v7371
        %v7396 = vpack.c.b16 %v7374, %v7373
        %v7397 = vpack.c.b16 %v7376, %v7375
        %v7398 = vpack.c.b16 %v7378, %v7377
        %v7399 = vpack.c.b16 %v7380, %v7379
        %v7400 = vpack.c.b16 %v7382, %v7381
        %v7401 = vpack.c.b16 %v7384, %v7383
        %v7402 = vpack.c.b16 %v7386, %v7385
        %7419 = vst [vmem:[#allocation5] sm:$0xff] %v7387
        %7420 = vst [vmem:[#allocation5 + $0x50] sm:$0xff] %v7388
        %7421 = vst [vmem:[#allocation5 + $0xa0] sm:$0xff] %v7389
        %7422 = vst [vmem:[#allocation5 + $0xf0] sm:$0xff] %v7390
        %7423 = vst [vmem:[#allocation5 + $0x140] sm:$0xff] %v7391
        %7424 = vst [vmem:[#allocation5 + $0x190] sm:$0xff] %v7392
        %7425 = vst [vmem:[#allocation5 + $0x1e0] sm:$0xff] %v7393
        %7426 = vst [vmem:[#allocation5 + $0x230] sm:$0xff] %v7394
        %7427 = vst [vmem:[#allocation5 + $0x280] sm:$0xff] %v7395
        %7428 = vst [vmem:[#allocation5 + $0x2d0] sm:$0xff] %v7396
        %7429 = vst [vmem:[#allocation5 + $0x320] sm:$0xff] %v7397
        %7430 = vst [vmem:[#allocation5 + $0x370] sm:$0xff] %v7398
        %7431 = vst [vmem:[#allocation5 + $0x3c0] sm:$0xff] %v7399
        %7432 = vst [vmem:[#allocation5 + $0x410] sm:$0xff] %v7400
        %7433 = vst [vmem:[#allocation5 + $0x460] sm:$0xff] %v7401
        %7434 = vst [vmem:[#allocation5 + $0x4b0] sm:$0xff] %v7402
        %v7435 = vld [vmem:[#allocation4] sm:$0xf]
        %v7436 = vld [vmem:[#allocation4 + $0x4] sm:$0xf]
        %v7437 = vld [vmem:[#allocation4 + $0x8] sm:$0x1]
        %v7438 = vld [vmem:[#allocation4 + $0xc] sm:$0xf]
        %v7439 = vld [vmem:[#allocation4 + $0x10] sm:$0xf]
        %v7440 = vld [vmem:[#allocation4 + $0x14] sm:$0x1]
        %v7441 = vld [vmem:[#allocation4 + $0x18] sm:$0xf]
        %v7442 = vld [vmem:[#allocation4 + $0x1c] sm:$0xf]
        %v7443 = vld [vmem:[#allocation4 + $0x20] sm:$0x1]
        %v7444 = vld [vmem:[#allocation4 + $0x24] sm:$0xf]
        %v7445 = vld [vmem:[#allocation4 + $0x28] sm:$0xf]
        %v7446 = vld [vmem:[#allocation4 + $0x2c] sm:$0x1]
        %v7447 = vld [vmem:[#allocation4 + $0x30] sm:$0xf]
        %v7448 = vld [vmem:[#allocation4 + $0x34] sm:$0xf]
        %v7449 = vld [vmem:[#allocation4 + $0x38] sm:$0x1]
        %v7450 = vld [vmem:[#allocation4 + $0x3c] sm:$0xf]
        %v7451 = vld [vmem:[#allocation4 + $0x40] sm:$0xf]
        %v7452 = vld [vmem:[#allocation4 + $0x44] sm:$0x1]
        %v7453 = vld [vmem:[#allocation4 + $0x48] sm:$0xf]
        %v7454 = vld [vmem:[#allocation4 + $0x4c] sm:$0xf]
        %v7455 = vld [vmem:[#allocation4 + $0x50] sm:$0x1]
        %v7456 = vld [vmem:[#allocation4 + $0x54] sm:$0xf]
        %v7457 = vld [vmem:[#allocation4 + $0x58] sm:$0xf]
        %v7458 = vld [vmem:[#allocation4 + $0x5c] sm:$0x1]
        %v7459 = vld [vmem:[#allocation4 + $0x60] sm:$0xf]
        %v7460 = vld [vmem:[#allocation4 + $0x64] sm:$0xf]
        %v7461 = vld [vmem:[#allocation4 + $0x68] sm:$0x1]
        %v7462 = vld [vmem:[#allocation4 + $0x6c] sm:$0xf]
        %v7463 = vld [vmem:[#allocation4 + $0x70] sm:$0xf]
        %v7464 = vld [vmem:[#allocation4 + $0x74] sm:$0x1]
        %v7465 = vld [vmem:[#allocation4 + $0x78] sm:$0xf]
        %v7466 = vld [vmem:[#allocation4 + $0x7c] sm:$0xf]
        %v7467 = vld [vmem:[#allocation4 + $0x80] sm:$0x1]
        %v7468 = vld [vmem:[#allocation4 + $0x84] sm:$0xf]
        %v7469 = vld [vmem:[#allocation4 + $0x88] sm:$0xf]
        %v7470 = vld [vmem:[#allocation4 + $0x8c] sm:$0x1]
        %v7471 = vld [vmem:[#allocation4 + $0x90] sm:$0xf]
        %v7472 = vld [vmem:[#allocation4 + $0x94] sm:$0xf]
        %v7473 = vld [vmem:[#allocation4 + $0x98] sm:$0x1]
        %v7474 = vld [vmem:[#allocation4 + $0x9c] sm:$0xf]
        %v7475 = vld [vmem:[#allocation4 + $0xa0] sm:$0xf]
        %v7476 = vld [vmem:[#allocation4 + $0xa4] sm:$0x1]
        %v7477 = vld [vmem:[#allocation4 + $0xa8] sm:$0xf]
        %v7478 = vld [vmem:[#allocation4 + $0xac] sm:$0xf]
        %v7479 = vld [vmem:[#allocation4 + $0xb0] sm:$0x1]
        %v7480 = vld [vmem:[#allocation4 + $0xb4] sm:$0xf]
        %v7481 = vld [vmem:[#allocation4 + $0xb8] sm:$0xf]
        %v7482 = vld [vmem:[#allocation4 + $0xbc] sm:$0x1]
        %v7531 = vunpack.c.l.b16 %v7435
        %v7532 = vunpack.c.l.b16 %v7436
        %v7533 = vunpack.c.l.b16 %v7437
        %v7534 = vunpack.c.l.b16 %v7438
        %v7535 = vunpack.c.l.b16 %v7439
        %v7536 = vunpack.c.l.b16 %v7440
        %v7537 = vunpack.c.l.b16 %v7441
        %v7538 = vunpack.c.l.b16 %v7442
        %v7539 = vunpack.c.l.b16 %v7443
        %v7540 = vunpack.c.l.b16 %v7444
        %v7541 = vunpack.c.l.b16 %v7445
        %v7542 = vunpack.c.l.b16 %v7446
        %v7543 = vunpack.c.l.b16 %v7447
        %v7544 = vunpack.c.l.b16 %v7448
        %v7545 = vunpack.c.l.b16 %v7449
        %v7546 = vunpack.c.l.b16 %v7450
        %v7547 = vunpack.c.l.b16 %v7451
        %v7548 = vunpack.c.l.b16 %v7452
        %v7549 = vunpack.c.l.b16 %v7453
        %v7550 = vunpack.c.l.b16 %v7454
        %v7551 = vunpack.c.l.b16 %v7455
        %v7552 = vunpack.c.l.b16 %v7456
        %v7553 = vunpack.c.l.b16 %v7457
        %v7554 = vunpack.c.l.b16 %v7458
        %v7555 = vunpack.c.l.b16 %v7459
        %v7556 = vunpack.c.l.b16 %v7460
        %v7557 = vunpack.c.l.b16 %v7461
        %v7558 = vunpack.c.l.b16 %v7462
        %v7559 = vunpack.c.l.b16 %v7463
        %v7560 = vunpack.c.l.b16 %v7464
        %v7561 = vunpack.c.l.b16 %v7465
        %v7562 = vunpack.c.l.b16 %v7466
        %v7563 = vunpack.c.l.b16 %v7467
        %v7564 = vunpack.c.l.b16 %v7468
        %v7565 = vunpack.c.l.b16 %v7469
        %v7566 = vunpack.c.l.b16 %v7470
        %v7567 = vunpack.c.l.b16 %v7471
        %v7568 = vunpack.c.l.b16 %v7472
        %v7569 = vunpack.c.l.b16 %v7473
        %v7570 = vunpack.c.l.b16 %v7474
        %v7571 = vunpack.c.l.b16 %v7475
        %v7572 = vunpack.c.l.b16 %v7476
        %v7573 = vunpack.c.l.b16 %v7477
        %v7574 = vunpack.c.l.b16 %v7478
        %v7575 = vunpack.c.l.b16 %v7479
        %v7576 = vunpack.c.l.b16 %v7480
        %v7577 = vunpack.c.l.b16 %v7481
        %v7578 = vunpack.c.l.b16 %v7482
        %v7579 = vpack.c.b16 %v7532, %v7531
        %v7580 = vpack.c.b16 %v7533, %v7533
        %v7581 = vpack.c.b16 %v7535, %v7534
        %v7582 = vpack.c.b16 %v7536, %v7536
        %v7583 = vpack.c.b16 %v7538, %v7537
        %v7584 = vpack.c.b16 %v7539, %v7539
        %v7585 = vpack.c.b16 %v7541, %v7540
        %v7586 = vpack.c.b16 %v7542, %v7542
        %v7587 = vpack.c.b16 %v7544, %v7543
        %v7588 = vpack.c.b16 %v7545, %v7545
        %v7589 = vpack.c.b16 %v7547, %v7546
        %v7590 = vpack.c.b16 %v7548, %v7548
        %v7591 = vpack.c.b16 %v7550, %v7549
        %v7592 = vpack.c.b16 %v7551, %v7551
        %v7593 = vpack.c.b16 %v7553, %v7552
        %v7594 = vpack.c.b16 %v7554, %v7554
        %v7595 = vpack.c.b16 %v7556, %v7555
        %v7596 = vpack.c.b16 %v7557, %v7557
        %v7597 = vpack.c.b16 %v7559, %v7558
        %v7598 = vpack.c.b16 %v7560, %v7560
        %v7599 = vpack.c.b16 %v7562, %v7561
        %v7600 = vpack.c.b16 %v7563, %v7563
        %v7601 = vpack.c.b16 %v7565, %v7564
        %v7602 = vpack.c.b16 %v7566, %v7566
        %v7603 = vpack.c.b16 %v7568, %v7567
        %v7604 = vpack.c.b16 %v7569, %v7569
        %v7605 = vpack.c.b16 %v7571, %v7570
        %v7606 = vpack.c.b16 %v7572, %v7572
        %v7607 = vpack.c.b16 %v7574, %v7573
        %v7608 = vpack.c.b16 %v7575, %v7575
        %v7609 = vpack.c.b16 %v7577, %v7576
        %v7610 = vpack.c.b16 %v7578, %v7578
        %v7612 = vshrl.u32 %v7579, 16
        %v7614 = vshll.u32 %v7579, 16
        %v7616 = vrot.slane %v7614, 1
        %v7617 = vor.u32 %v7612, %v7616
        %v7619 = vshll.u32 %v7580, 16
        %v7621 = vrot.slane %v7619, 1
        %v7622 = vsel %vm2223, %v7617, %v7621
        %v7624 = vshrl.u32 %v7581, 16
        %v7626 = vshll.u32 %v7581, 16
        %v7628 = vrot.slane %v7626, 1
        %v7629 = vor.u32 %v7624, %v7628
        %v7631 = vshll.u32 %v7582, 16
        %v7633 = vrot.slane %v7631, 1
        %v7634 = vsel %vm2223, %v7629, %v7633
        %v7636 = vshrl.u32 %v7583, 16
        %v7638 = vshll.u32 %v7583, 16
        %v7640 = vrot.slane %v7638, 1
        %v7641 = vor.u32 %v7636, %v7640
        %v7643 = vshll.u32 %v7584, 16
        %v7645 = vrot.slane %v7643, 1
        %v7646 = vsel %vm2223, %v7641, %v7645
        %v7648 = vshrl.u32 %v7585, 16
        %v7650 = vshll.u32 %v7585, 16
        %v7652 = vrot.slane %v7650, 1
        %v7653 = vor.u32 %v7648, %v7652
        %v7655 = vshll.u32 %v7586, 16
        %v7657 = vrot.slane %v7655, 1
        %v7658 = vsel %vm2223, %v7653, %v7657
        %v7660 = vshrl.u32 %v7587, 16
        %v7662 = vshll.u32 %v7587, 16
        %v7664 = vrot.slane %v7662, 1
        %v7665 = vor.u32 %v7660, %v7664
        %v7667 = vshll.u32 %v7588, 16
        %v7669 = vrot.slane %v7667, 1
        %v7670 = vsel %vm2223, %v7665, %v7669
        %v7672 = vshrl.u32 %v7589, 16
        %v7674 = vshll.u32 %v7589, 16
        %v7676 = vrot.slane %v7674, 1
        %v7677 = vor.u32 %v7672, %v7676
        %v7679 = vshll.u32 %v7590, 16
        %v7681 = vrot.slane %v7679, 1
        %v7682 = vsel %vm2223, %v7677, %v7681
        %v7684 = vshrl.u32 %v7591, 16
        %v7686 = vshll.u32 %v7591, 16
        %v7688 = vrot.slane %v7686, 1
        %v7689 = vor.u32 %v7684, %v7688
        %v7691 = vshll.u32 %v7592, 16
        %v7693 = vrot.slane %v7691, 1
        %v7694 = vsel %vm2223, %v7689, %v7693
        %v7696 = vshrl.u32 %v7593, 16
        %v7698 = vshll.u32 %v7593, 16
        %v7700 = vrot.slane %v7698, 1
        %v7701 = vor.u32 %v7696, %v7700
        %v7703 = vshll.u32 %v7594, 16
        %v7705 = vrot.slane %v7703, 1
        %v7706 = vsel %vm2223, %v7701, %v7705
        %v7708 = vshrl.u32 %v7595, 16
        %v7710 = vshll.u32 %v7595, 16
        %v7712 = vrot.slane %v7710, 1
        %v7713 = vor.u32 %v7708, %v7712
        %v7715 = vshll.u32 %v7596, 16
        %v7717 = vrot.slane %v7715, 1
        %v7718 = vsel %vm2223, %v7713, %v7717
        %v7720 = vshrl.u32 %v7597, 16
        %v7722 = vshll.u32 %v7597, 16
        %v7724 = vrot.slane %v7722, 1
        %v7725 = vor.u32 %v7720, %v7724
        %v7727 = vshll.u32 %v7598, 16
        %v7729 = vrot.slane %v7727, 1
        %v7730 = vsel %vm2223, %v7725, %v7729
        %v7732 = vshrl.u32 %v7599, 16
        %v7734 = vshll.u32 %v7599, 16
        %v7736 = vrot.slane %v7734, 1
        %v7737 = vor.u32 %v7732, %v7736
        %v7739 = vshll.u32 %v7600, 16
        %v7741 = vrot.slane %v7739, 1
        %v7742 = vsel %vm2223, %v7737, %v7741
        %v7744 = vshrl.u32 %v7601, 16
        %v7746 = vshll.u32 %v7601, 16
        %v7748 = vrot.slane %v7746, 1
        %v7749 = vor.u32 %v7744, %v7748
        %v7751 = vshll.u32 %v7602, 16
        %v7753 = vrot.slane %v7751, 1
        %v7754 = vsel %vm2223, %v7749, %v7753
        %v7756 = vshrl.u32 %v7603, 16
        %v7758 = vshll.u32 %v7603, 16
        %v7760 = vrot.slane %v7758, 1
        %v7761 = vor.u32 %v7756, %v7760
        %v7763 = vshll.u32 %v7604, 16
        %v7765 = vrot.slane %v7763, 1
        %v7766 = vsel %vm2223, %v7761, %v7765
        %v7768 = vshrl.u32 %v7605, 16
        %v7770 = vshll.u32 %v7605, 16
        %v7772 = vrot.slane %v7770, 1
        %v7773 = vor.u32 %v7768, %v7772
        %v7775 = vshll.u32 %v7606, 16
        %v7777 = vrot.slane %v7775, 1
        %v7778 = vsel %vm2223, %v7773, %v7777
        %v7780 = vshrl.u32 %v7607, 16
        %v7782 = vshll.u32 %v7607, 16
        %v7784 = vrot.slane %v7782, 1
        %v7785 = vor.u32 %v7780, %v7784
        %v7787 = vshll.u32 %v7608, 16
        %v7789 = vrot.slane %v7787, 1
        %v7790 = vsel %vm2223, %v7785, %v7789
        %v7792 = vshrl.u32 %v7609, 16
        %v7794 = vshll.u32 %v7609, 16
        %v7796 = vrot.slane %v7794, 1
        %v7797 = vor.u32 %v7792, %v7796
        %v7799 = vshll.u32 %v7610, 16
        %v7801 = vrot.slane %v7799, 1
        %v7802 = vsel %vm2223, %v7797, %v7801
        %7819 = vst [vmem:[#allocation5 + $0x8] sm:$0xff] %v7622
        %7820 = vst [vmem:[#allocation5 + $0x58] sm:$0xff] %v7634
        %7821 = vst [vmem:[#allocation5 + $0xa8] sm:$0xff] %v7646
        %7822 = vst [vmem:[#allocation5 + $0xf8] sm:$0xff] %v7658
        %7823 = vst [vmem:[#allocation5 + $0x148] sm:$0xff] %v7670
        %7824 = vst [vmem:[#allocation5 + $0x198] sm:$0xff] %v7682
        %7825 = vst [vmem:[#allocation5 + $0x1e8] sm:$0xff] %v7694
        %7826 = vst [vmem:[#allocation5 + $0x238] sm:$0xff] %v7706
        %7827 = vst [vmem:[#allocation5 + $0x288] sm:$0xff] %v7718
        %7828 = vst [vmem:[#allocation5 + $0x2d8] sm:$0xff] %v7730
        %7829 = vst [vmem:[#allocation5 + $0x328] sm:$0xff] %v7742
        %7830 = vst [vmem:[#allocation5 + $0x378] sm:$0xff] %v7754
        %7831 = vst [vmem:[#allocation5 + $0x3c8] sm:$0xff] %v7766
        %7832 = vst [vmem:[#allocation5 + $0x418] sm:$0xff] %v7778
        %7833 = vst [vmem:[#allocation5 + $0x468] sm:$0xff] %v7790
        %7834 = vst [vmem:[#allocation5 + $0x4b8] sm:$0xff] %v7802
        %v7835 = vld [vmem:[#allocation4] sm:$0xe]
        %v7836 = vld [vmem:[#allocation4 + $0x4] sm:$0xf]
        %v7837 = vld [vmem:[#allocation4 + $0x8] sm:$0x1]
        %v7838 = vld [vmem:[#allocation4 + $0xc] sm:$0xe]
        %v7839 = vld [vmem:[#allocation4 + $0x10] sm:$0xf]
        %v7840 = vld [vmem:[#allocation4 + $0x14] sm:$0x1]
        %v7841 = vld [vmem:[#allocation4 + $0x18] sm:$0xe]
        %v7842 = vld [vmem:[#allocation4 + $0x1c] sm:$0xf]
        %v7843 = vld [vmem:[#allocation4 + $0x20] sm:$0x1]
        %v7844 = vld [vmem:[#allocation4 + $0x24] sm:$0xe]
        %v7845 = vld [vmem:[#allocation4 + $0x28] sm:$0xf]
        %v7846 = vld [vmem:[#allocation4 + $0x2c] sm:$0x1]
        %v7847 = vld [vmem:[#allocation4 + $0x30] sm:$0xe]
        %v7848 = vld [vmem:[#allocation4 + $0x34] sm:$0xf]
        %v7849 = vld [vmem:[#allocation4 + $0x38] sm:$0x1]
        %v7850 = vld [vmem:[#allocation4 + $0x3c] sm:$0xe]
        %v7851 = vld [vmem:[#allocation4 + $0x40] sm:$0xf]
        %v7852 = vld [vmem:[#allocation4 + $0x44] sm:$0x1]
        %v7853 = vld [vmem:[#allocation4 + $0x48] sm:$0xe]
        %v7854 = vld [vmem:[#allocation4 + $0x4c] sm:$0xf]
        %v7855 = vld [vmem:[#allocation4 + $0x50] sm:$0x1]
        %v7856 = vld [vmem:[#allocation4 + $0x54] sm:$0xe]
        %v7857 = vld [vmem:[#allocation4 + $0x58] sm:$0xf]
        %v7858 = vld [vmem:[#allocation4 + $0x5c] sm:$0x1]
        %v7859 = vld [vmem:[#allocation4 + $0x60] sm:$0xe]
        %v7860 = vld [vmem:[#allocation4 + $0x64] sm:$0xf]
        %v7861 = vld [vmem:[#allocation4 + $0x68] sm:$0x1]
        %v7862 = vld [vmem:[#allocation4 + $0x6c] sm:$0xe]
        %v7863 = vld [vmem:[#allocation4 + $0x70] sm:$0xf]
        %v7864 = vld [vmem:[#allocation4 + $0x74] sm:$0x1]
        %v7865 = vld [vmem:[#allocation4 + $0x78] sm:$0xe]
        %v7866 = vld [vmem:[#allocation4 + $0x7c] sm:$0xf]
        %v7867 = vld [vmem:[#allocation4 + $0x80] sm:$0x1]
        %v7868 = vld [vmem:[#allocation4 + $0x84] sm:$0xe]
        %v7869 = vld [vmem:[#allocation4 + $0x88] sm:$0xf]
        %v7870 = vld [vmem:[#allocation4 + $0x8c] sm:$0x1]
        %v7871 = vld [vmem:[#allocation4 + $0x90] sm:$0xe]
        %v7872 = vld [vmem:[#allocation4 + $0x94] sm:$0xf]
        %v7873 = vld [vmem:[#allocation4 + $0x98] sm:$0x1]
        %v7874 = vld [vmem:[#allocation4 + $0x9c] sm:$0xe]
        %v7875 = vld [vmem:[#allocation4 + $0xa0] sm:$0xf]
        %v7876 = vld [vmem:[#allocation4 + $0xa4] sm:$0x1]
        %v7877 = vld [vmem:[#allocation4 + $0xa8] sm:$0xe]
        %v7878 = vld [vmem:[#allocation4 + $0xac] sm:$0xf]
        %v7879 = vld [vmem:[#allocation4 + $0xb0] sm:$0x1]
        %v7880 = vld [vmem:[#allocation4 + $0xb4] sm:$0xe]
        %v7881 = vld [vmem:[#allocation4 + $0xb8] sm:$0xf]
        %v7882 = vld [vmem:[#allocation4 + $0xbc] sm:$0x1]
        %v7931 = vunpack.c.l.b16 %v7835
        %v7932 = vunpack.c.l.b16 %v7836
        %v7933 = vunpack.c.l.b16 %v7837
        %v7934 = vunpack.c.l.b16 %v7838
        %v7935 = vunpack.c.l.b16 %v7839
        %v7936 = vunpack.c.l.b16 %v7840
        %v7937 = vunpack.c.l.b16 %v7841
        %v7938 = vunpack.c.l.b16 %v7842
        %v7939 = vunpack.c.l.b16 %v7843
        %v7940 = vunpack.c.l.b16 %v7844
        %v7941 = vunpack.c.l.b16 %v7845
        %v7942 = vunpack.c.l.b16 %v7846
        %v7943 = vunpack.c.l.b16 %v7847
        %v7944 = vunpack.c.l.b16 %v7848
        %v7945 = vunpack.c.l.b16 %v7849
        %v7946 = vunpack.c.l.b16 %v7850
        %v7947 = vunpack.c.l.b16 %v7851
        %v7948 = vunpack.c.l.b16 %v7852
        %v7949 = vunpack.c.l.b16 %v7853
        %v7950 = vunpack.c.l.b16 %v7854
        %v7951 = vunpack.c.l.b16 %v7855
        %v7952 = vunpack.c.l.b16 %v7856
        %v7953 = vunpack.c.l.b16 %v7857
        %v7954 = vunpack.c.l.b16 %v7858
        %v7955 = vunpack.c.l.b16 %v7859
        %v7956 = vunpack.c.l.b16 %v7860
        %v7957 = vunpack.c.l.b16 %v7861
        %v7958 = vunpack.c.l.b16 %v7862
        %v7959 = vunpack.c.l.b16 %v7863
        %v7960 = vunpack.c.l.b16 %v7864
        %v7961 = vunpack.c.l.b16 %v7865
        %v7962 = vunpack.c.l.b16 %v7866
        %v7963 = vunpack.c.l.b16 %v7867
        %v7964 = vunpack.c.l.b16 %v7868
        %v7965 = vunpack.c.l.b16 %v7869
        %v7966 = vunpack.c.l.b16 %v7870
        %v7967 = vunpack.c.l.b16 %v7871
        %v7968 = vunpack.c.l.b16 %v7872
        %v7969 = vunpack.c.l.b16 %v7873
        %v7970 = vunpack.c.l.b16 %v7874
        %v7971 = vunpack.c.l.b16 %v7875
        %v7972 = vunpack.c.l.b16 %v7876
        %v7973 = vunpack.c.l.b16 %v7877
        %v7974 = vunpack.c.l.b16 %v7878
        %v7975 = vunpack.c.l.b16 %v7879
        %v7976 = vunpack.c.l.b16 %v7880
        %v7977 = vunpack.c.l.b16 %v7881
        %v7978 = vunpack.c.l.b16 %v7882
        %v7979 = vpack.c.b16 %v7932, %v7931
        %v7980 = vpack.c.b16 %v7933, %v7933
        %v7981 = vpack.c.b16 %v7935, %v7934
        %v7982 = vpack.c.b16 %v7936, %v7936
        %v7983 = vpack.c.b16 %v7938, %v7937
        %v7984 = vpack.c.b16 %v7939, %v7939
        %v7985 = vpack.c.b16 %v7941, %v7940
        %v7986 = vpack.c.b16 %v7942, %v7942
        %v7987 = vpack.c.b16 %v7944, %v7943
        %v7988 = vpack.c.b16 %v7945, %v7945
        %v7989 = vpack.c.b16 %v7947, %v7946
        %v7990 = vpack.c.b16 %v7948, %v7948
        %v7991 = vpack.c.b16 %v7950, %v7949
        %v7992 = vpack.c.b16 %v7951, %v7951
        %v7993 = vpack.c.b16 %v7953, %v7952
        %v7994 = vpack.c.b16 %v7954, %v7954
        %v7995 = vpack.c.b16 %v7956, %v7955
        %v7996 = vpack.c.b16 %v7957, %v7957
        %v7997 = vpack.c.b16 %v7959, %v7958
        %v7998 = vpack.c.b16 %v7960, %v7960
        %v7999 = vpack.c.b16 %v7962, %v7961
        %v8000 = vpack.c.b16 %v7963, %v7963
        %v8001 = vpack.c.b16 %v7965, %v7964
        %v8002 = vpack.c.b16 %v7966, %v7966
        %v8003 = vpack.c.b16 %v7968, %v7967
        %v8004 = vpack.c.b16 %v7969, %v7969
        %v8005 = vpack.c.b16 %v7971, %v7970
        %v8006 = vpack.c.b16 %v7972, %v7972
        %v8007 = vpack.c.b16 %v7974, %v7973
        %v8008 = vpack.c.b16 %v7975, %v7975
        %v8009 = vpack.c.b16 %v7977, %v7976
        %v8010 = vpack.c.b16 %v7978, %v7978
        %v8011 = vrot.slane %v7979, 1
        %v8012 = vrot.slane %v7980, 1
        %v8013 = vsel %vm2624, %v8011, %v8012
        %v8014 = vrot.slane %v7981, 1
        %v8015 = vrot.slane %v7982, 1
        %v8016 = vsel %vm2624, %v8014, %v8015
        %v8017 = vrot.slane %v7983, 1
        %v8018 = vrot.slane %v7984, 1
        %v8019 = vsel %vm2624, %v8017, %v8018
        %v8020 = vrot.slane %v7985, 1
        %v8021 = vrot.slane %v7986, 1
        %v8022 = vsel %vm2624, %v8020, %v8021
        %v8023 = vrot.slane %v7987, 1
        %v8024 = vrot.slane %v7988, 1
        %v8025 = vsel %vm2624, %v8023, %v8024
        %v8026 = vrot.slane %v7989, 1
        %v8027 = vrot.slane %v7990, 1
        %v8028 = vsel %vm2624, %v8026, %v8027
        %v8029 = vrot.slane %v7991, 1
        %v8030 = vrot.slane %v7992, 1
        %v8031 = vsel %vm2624, %v8029, %v8030
        %v8032 = vrot.slane %v7993, 1
        %v8033 = vrot.slane %v7994, 1
        %v8034 = vsel %vm2624, %v8032, %v8033
        %v8035 = vrot.slane %v7995, 1
        %v8036 = vrot.slane %v7996, 1
        %v8037 = vsel %vm2624, %v8035, %v8036
        %v8038 = vrot.slane %v7997, 1
        %v8039 = vrot.slane %v7998, 1
        %v8040 = vsel %vm2624, %v8038, %v8039
        %v8041 = vrot.slane %v7999, 1
        %v8042 = vrot.slane %v8000, 1
        %v8043 = vsel %vm2624, %v8041, %v8042
        %v8044 = vrot.slane %v8001, 1
        %v8045 = vrot.slane %v8002, 1
        %v8046 = vsel %vm2624, %v8044, %v8045
        %v8047 = vrot.slane %v8003, 1
        %v8048 = vrot.slane %v8004, 1
        %v8049 = vsel %vm2624, %v8047, %v8048
        %v8050 = vrot.slane %v8005, 1
        %v8051 = vrot.slane %v8006, 1
        %v8052 = vsel %vm2624, %v8050, %v8051
        %v8053 = vrot.slane %v8007, 1
        %v8054 = vrot.slane %v8008, 1
        %v8055 = vsel %vm2624, %v8053, %v8054
        %v8056 = vrot.slane %v8009, 1
        %v8057 = vrot.slane %v8010, 1
        %v8058 = vsel %vm2624, %v8056, %v8057
        %8075 = vst [vmem:[#allocation5 + $0x10] sm:$0xff] %v8013
        %8076 = vst [vmem:[#allocation5 + $0x60] sm:$0xff] %v8016
        %8077 = vst [vmem:[#allocation5 + $0xb0] sm:$0xff] %v8019
        %8078 = vst [vmem:[#allocation5 + $0x100] sm:$0xff] %v8022
        %8079 = vst [vmem:[#allocation5 + $0x150] sm:$0xff] %v8025
        %8080 = vst [vmem:[#allocation5 + $0x1a0] sm:$0xff] %v8028
        %8081 = vst [vmem:[#allocation5 + $0x1f0] sm:$0xff] %v8031
        %8082 = vst [vmem:[#allocation5 + $0x240] sm:$0xff] %v8034
        %8083 = vst [vmem:[#allocation5 + $0x290] sm:$0xff] %v8037
        %8084 = vst [vmem:[#allocation5 + $0x2e0] sm:$0xff] %v8040
        %8085 = vst [vmem:[#allocation5 + $0x330] sm:$0xff] %v8043
        %8086 = vst [vmem:[#allocation5 + $0x380] sm:$0xff] %v8046
        %8087 = vst [vmem:[#allocation5 + $0x3d0] sm:$0xff] %v8049
        %8088 = vst [vmem:[#allocation5 + $0x420] sm:$0xff] %v8052
        %8089 = vst [vmem:[#allocation5 + $0x470] sm:$0xff] %v8055
        %8090 = vst [vmem:[#allocation5 + $0x4c0] sm:$0xff] %v8058
        %v8091 = vld [vmem:[%s7178] sm:$0xf]
        %v8092 = vld [vmem:[%s7178 + $0x4] sm:$0xf]
        %v8093 = vld [vmem:[%s7178 + $0xc] sm:$0xf]
        %v8094 = vld [vmem:[%s7178 + $0x10] sm:$0xf]
        %v8095 = vld [vmem:[%s7178 + $0x18] sm:$0xf]
        %v8096 = vld [vmem:[%s7178 + $0x1c] sm:$0xf]
        %v8097 = vld [vmem:[%s7178 + $0x24] sm:$0xf]
        %v8098 = vld [vmem:[%s7178 + $0x28] sm:$0xf]
        %v8099 = vld [vmem:[%s7178 + $0x30] sm:$0xf]
        %v8100 = vld [vmem:[%s7178 + $0x34] sm:$0xf]
        %v8101 = vld [vmem:[%s7178 + $0x3c] sm:$0xf]
        %v8102 = vld [vmem:[%s7178 + $0x40] sm:$0xf]
        %v8103 = vld [vmem:[%s7178 + $0x48] sm:$0xf]
        %v8104 = vld [vmem:[%s7178 + $0x4c] sm:$0xf]
        %v8105 = vld [vmem:[%s7178 + $0x54] sm:$0xf]
        %v8106 = vld [vmem:[%s7178 + $0x58] sm:$0xf]
        %v8107 = vld [vmem:[%s7178 + $0x60] sm:$0xf]
        %v8108 = vld [vmem:[%s7178 + $0x64] sm:$0xf]
        %v8109 = vld [vmem:[%s7178 + $0x6c] sm:$0xf]
        %v8110 = vld [vmem:[%s7178 + $0x70] sm:$0xf]
        %v8111 = vld [vmem:[%s7178 + $0x78] sm:$0xf]
        %v8112 = vld [vmem:[%s7178 + $0x7c] sm:$0xf]
        %v8113 = vld [vmem:[%s7178 + $0x84] sm:$0xf]
        %v8114 = vld [vmem:[%s7178 + $0x88] sm:$0xf]
        %v8115 = vld [vmem:[%s7178 + $0x90] sm:$0xf]
        %v8116 = vld [vmem:[%s7178 + $0x94] sm:$0xf]
        %v8117 = vld [vmem:[%s7178 + $0x9c] sm:$0xf]
        %v8118 = vld [vmem:[%s7178 + $0xa0] sm:$0xf]
        %v8119 = vld [vmem:[%s7178 + $0xa8] sm:$0xf]
        %v8120 = vld [vmem:[%s7178 + $0xac] sm:$0xf]
        %v8121 = vld [vmem:[%s7178 + $0xb4] sm:$0xf]
        %v8122 = vld [vmem:[%s7178 + $0xb8] sm:$0xf]
        %v8155 = vunpack.c.l.b16 %v8091
        %v8156 = vunpack.c.l.b16 %v8092
        %v8157 = vunpack.c.l.b16 %v8093
        %v8158 = vunpack.c.l.b16 %v8094
        %v8159 = vunpack.c.l.b16 %v8095
        %v8160 = vunpack.c.l.b16 %v8096
        %v8161 = vunpack.c.l.b16 %v8097
        %v8162 = vunpack.c.l.b16 %v8098
        %v8163 = vunpack.c.l.b16 %v8099
        %v8164 = vunpack.c.l.b16 %v8100
        %v8165 = vunpack.c.l.b16 %v8101
        %v8166 = vunpack.c.l.b16 %v8102
        %v8167 = vunpack.c.l.b16 %v8103
        %v8168 = vunpack.c.l.b16 %v8104
        %v8169 = vunpack.c.l.b16 %v8105
        %v8170 = vunpack.c.l.b16 %v8106
        %v8171 = vunpack.c.l.b16 %v8107
        %v8172 = vunpack.c.l.b16 %v8108
        %v8173 = vunpack.c.l.b16 %v8109
        %v8174 = vunpack.c.l.b16 %v8110
        %v8175 = vunpack.c.l.b16 %v8111
        %v8176 = vunpack.c.l.b16 %v8112
        %v8177 = vunpack.c.l.b16 %v8113
        %v8178 = vunpack.c.l.b16 %v8114
        %v8179 = vunpack.c.l.b16 %v8115
        %v8180 = vunpack.c.l.b16 %v8116
        %v8181 = vunpack.c.l.b16 %v8117
        %v8182 = vunpack.c.l.b16 %v8118
        %v8183 = vunpack.c.l.b16 %v8119
        %v8184 = vunpack.c.l.b16 %v8120
        %v8185 = vunpack.c.l.b16 %v8121
        %v8186 = vunpack.c.l.b16 %v8122
        %v8187 = vpack.c.b16 %v8156, %v8155
        %v8188 = vpack.c.b16 %v8158, %v8157
        %v8189 = vpack.c.b16 %v8160, %v8159
        %v8190 = vpack.c.b16 %v8162, %v8161
        %v8191 = vpack.c.b16 %v8164, %v8163
        %v8192 = vpack.c.b16 %v8166, %v8165
        %v8193 = vpack.c.b16 %v8168, %v8167
        %v8194 = vpack.c.b16 %v8170, %v8169
        %v8195 = vpack.c.b16 %v8172, %v8171
        %v8196 = vpack.c.b16 %v8174, %v8173
        %v8197 = vpack.c.b16 %v8176, %v8175
        %v8198 = vpack.c.b16 %v8178, %v8177
        %v8199 = vpack.c.b16 %v8180, %v8179
        %v8200 = vpack.c.b16 %v8182, %v8181
        %v8201 = vpack.c.b16 %v8184, %v8183
        %v8202 = vpack.c.b16 %v8186, %v8185
        %8219 = vst [vmem:[#allocation5 + $0x18] sm:$0xff] %v8187
        %8220 = vst [vmem:[#allocation5 + $0x68] sm:$0xff] %v8188
        %8221 = vst [vmem:[#allocation5 + $0xb8] sm:$0xff] %v8189
        %8222 = vst [vmem:[#allocation5 + $0x108] sm:$0xff] %v8190
        %8223 = vst [vmem:[#allocation5 + $0x158] sm:$0xff] %v8191
        %8224 = vst [vmem:[#allocation5 + $0x1a8] sm:$0xff] %v8192
        %8225 = vst [vmem:[#allocation5 + $0x1f8] sm:$0xff] %v8193
        %8226 = vst [vmem:[#allocation5 + $0x248] sm:$0xff] %v8194
        %8227 = vst [vmem:[#allocation5 + $0x298] sm:$0xff] %v8195
        %8228 = vst [vmem:[#allocation5 + $0x2e8] sm:$0xff] %v8196
        %8229 = vst [vmem:[#allocation5 + $0x338] sm:$0xff] %v8197
        %8230 = vst [vmem:[#allocation5 + $0x388] sm:$0xff] %v8198
        %8231 = vst [vmem:[#allocation5 + $0x3d8] sm:$0xff] %v8199
        %8232 = vst [vmem:[#allocation5 + $0x428] sm:$0xff] %v8200
        %8233 = vst [vmem:[#allocation5 + $0x478] sm:$0xff] %v8201
        %8234 = vst [vmem:[#allocation5 + $0x4c8] sm:$0xff] %v8202
        %v8235 = vld [vmem:[%s7178] sm:$0xf]
        %v8236 = vld [vmem:[%s7178 + $0x4] sm:$0xf]
        %v8237 = vld [vmem:[%s7178 + $0x8] sm:$0x1]
        %v8238 = vld [vmem:[%s7178 + $0xc] sm:$0xf]
        %v8239 = vld [vmem:[%s7178 + $0x10] sm:$0xf]
        %v8240 = vld [vmem:[%s7178 + $0x14] sm:$0x1]
        %v8241 = vld [vmem:[%s7178 + $0x18] sm:$0xf]
        %v8242 = vld [vmem:[%s7178 + $0x1c] sm:$0xf]
        %v8243 = vld [vmem:[%s7178 + $0x20] sm:$0x1]
        %v8244 = vld [vmem:[%s7178 + $0x24] sm:$0xf]
        %v8245 = vld [vmem:[%s7178 + $0x28] sm:$0xf]
        %v8246 = vld [vmem:[%s7178 + $0x2c] sm:$0x1]
        %v8247 = vld [vmem:[%s7178 + $0x30] sm:$0xf]
        %v8248 = vld [vmem:[%s7178 + $0x34] sm:$0xf]
        %v8249 = vld [vmem:[%s7178 + $0x38] sm:$0x1]
        %v8250 = vld [vmem:[%s7178 + $0x3c] sm:$0xf]
        %v8251 = vld [vmem:[%s7178 + $0x40] sm:$0xf]
        %v8252 = vld [vmem:[%s7178 + $0x44] sm:$0x1]
        %v8253 = vld [vmem:[%s7178 + $0x48] sm:$0xf]
        %v8254 = vld [vmem:[%s7178 + $0x4c] sm:$0xf]
        %v8255 = vld [vmem:[%s7178 + $0x50] sm:$0x1]
        %v8256 = vld [vmem:[%s7178 + $0x54] sm:$0xf]
        %v8257 = vld [vmem:[%s7178 + $0x58] sm:$0xf]
        %v8258 = vld [vmem:[%s7178 + $0x5c] sm:$0x1]
        %v8259 = vld [vmem:[%s7178 + $0x60] sm:$0xf]
        %v8260 = vld [vmem:[%s7178 + $0x64] sm:$0xf]
        %v8261 = vld [vmem:[%s7178 + $0x68] sm:$0x1]
        %v8262 = vld [vmem:[%s7178 + $0x6c] sm:$0xf]
        %v8263 = vld [vmem:[%s7178 + $0x70] sm:$0xf]
        %v8264 = vld [vmem:[%s7178 + $0x74] sm:$0x1]
        %v8265 = vld [vmem:[%s7178 + $0x78] sm:$0xf]
        %v8266 = vld [vmem:[%s7178 + $0x7c] sm:$0xf]
        %v8267 = vld [vmem:[%s7178 + $0x80] sm:$0x1]
        %v8268 = vld [vmem:[%s7178 + $0x84] sm:$0xf]
        %v8269 = vld [vmem:[%s7178 + $0x88] sm:$0xf]
        %v8270 = vld [vmem:[%s7178 + $0x8c] sm:$0x1]
        %v8271 = vld [vmem:[%s7178 + $0x90] sm:$0xf]
        %v8272 = vld [vmem:[%s7178 + $0x94] sm:$0xf]
        %v8273 = vld [vmem:[%s7178 + $0x98] sm:$0x1]
        %v8274 = vld [vmem:[%s7178 + $0x9c] sm:$0xf]
        %v8275 = vld [vmem:[%s7178 + $0xa0] sm:$0xf]
        %v8276 = vld [vmem:[%s7178 + $0xa4] sm:$0x1]
        %v8277 = vld [vmem:[%s7178 + $0xa8] sm:$0xf]
        %v8278 = vld [vmem:[%s7178 + $0xac] sm:$0xf]
        %v8279 = vld [vmem:[%s7178 + $0xb0] sm:$0x1]
        %v8280 = vld [vmem:[%s7178 + $0xb4] sm:$0xf]
        %v8281 = vld [vmem:[%s7178 + $0xb8] sm:$0xf]
        %v8282 = vld [vmem:[%s7178 + $0xbc] sm:$0x1]
        %v8331 = vunpack.c.l.b16 %v8235
        %v8332 = vunpack.c.l.b16 %v8236
        %v8333 = vunpack.c.l.b16 %v8237
        %v8334 = vunpack.c.l.b16 %v8238
        %v8335 = vunpack.c.l.b16 %v8239
        %v8336 = vunpack.c.l.b16 %v8240
        %v8337 = vunpack.c.l.b16 %v8241
        %v8338 = vunpack.c.l.b16 %v8242
        %v8339 = vunpack.c.l.b16 %v8243
        %v8340 = vunpack.c.l.b16 %v8244
        %v8341 = vunpack.c.l.b16 %v8245
        %v8342 = vunpack.c.l.b16 %v8246
        %v8343 = vunpack.c.l.b16 %v8247
        %v8344 = vunpack.c.l.b16 %v8248
        %v8345 = vunpack.c.l.b16 %v8249
        %v8346 = vunpack.c.l.b16 %v8250
        %v8347 = vunpack.c.l.b16 %v8251
        %v8348 = vunpack.c.l.b16 %v8252
        %v8349 = vunpack.c.l.b16 %v8253
        %v8350 = vunpack.c.l.b16 %v8254
        %v8351 = vunpack.c.l.b16 %v8255
        %v8352 = vunpack.c.l.b16 %v8256
        %v8353 = vunpack.c.l.b16 %v8257
        %v8354 = vunpack.c.l.b16 %v8258
        %v8355 = vunpack.c.l.b16 %v8259
        %v8356 = vunpack.c.l.b16 %v8260
        %v8357 = vunpack.c.l.b16 %v8261
        %v8358 = vunpack.c.l.b16 %v8262
        %v8359 = vunpack.c.l.b16 %v8263
        %v8360 = vunpack.c.l.b16 %v8264
        %v8361 = vunpack.c.l.b16 %v8265
        %v8362 = vunpack.c.l.b16 %v8266
        %v8363 = vunpack.c.l.b16 %v8267
        %v8364 = vunpack.c.l.b16 %v8268
        %v8365 = vunpack.c.l.b16 %v8269
        %v8366 = vunpack.c.l.b16 %v8270
        %v8367 = vunpack.c.l.b16 %v8271
        %v8368 = vunpack.c.l.b16 %v8272
        %v8369 = vunpack.c.l.b16 %v8273
        %v8370 = vunpack.c.l.b16 %v8274
        %v8371 = vunpack.c.l.b16 %v8275
        %v8372 = vunpack.c.l.b16 %v8276
        %v8373 = vunpack.c.l.b16 %v8277
        %v8374 = vunpack.c.l.b16 %v8278
        %v8375 = vunpack.c.l.b16 %v8279
        %v8376 = vunpack.c.l.b16 %v8280
        %v8377 = vunpack.c.l.b16 %v8281
        %v8378 = vunpack.c.l.b16 %v8282
        %v8379 = vpack.c.b16 %v8332, %v8331
        %v8380 = vpack.c.b16 %v8333, %v8333
        %v8381 = vpack.c.b16 %v8335, %v8334
        %v8382 = vpack.c.b16 %v8336, %v8336
        %v8383 = vpack.c.b16 %v8338, %v8337
        %v8384 = vpack.c.b16 %v8339, %v8339
        %v8385 = vpack.c.b16 %v8341, %v8340
        %v8386 = vpack.c.b16 %v8342, %v8342
        %v8387 = vpack.c.b16 %v8344, %v8343
        %v8388 = vpack.c.b16 %v8345, %v8345
        %v8389 = vpack.c.b16 %v8347, %v8346
        %v8390 = vpack.c.b16 %v8348, %v8348
        %v8391 = vpack.c.b16 %v8350, %v8349
        %v8392 = vpack.c.b16 %v8351, %v8351
        %v8393 = vpack.c.b16 %v8353, %v8352
        %v8394 = vpack.c.b16 %v8354, %v8354
        %v8395 = vpack.c.b16 %v8356, %v8355
        %v8396 = vpack.c.b16 %v8357, %v8357
        %v8397 = vpack.c.b16 %v8359, %v8358
        %v8398 = vpack.c.b16 %v8360, %v8360
        %v8399 = vpack.c.b16 %v8362, %v8361
        %v8400 = vpack.c.b16 %v8363, %v8363
        %v8401 = vpack.c.b16 %v8365, %v8364
        %v8402 = vpack.c.b16 %v8366, %v8366
        %v8403 = vpack.c.b16 %v8368, %v8367
        %v8404 = vpack.c.b16 %v8369, %v8369
        %v8405 = vpack.c.b16 %v8371, %v8370
        %v8406 = vpack.c.b16 %v8372, %v8372
        %v8407 = vpack.c.b16 %v8374, %v8373
        %v8408 = vpack.c.b16 %v8375, %v8375
        %v8409 = vpack.c.b16 %v8377, %v8376
        %v8410 = vpack.c.b16 %v8378, %v8378
        %v8412 = vshrl.u32 %v8379, 16
        %v8414 = vshll.u32 %v8379, 16
        %v8416 = vrot.slane %v8414, 1
        %v8417 = vor.u32 %v8412, %v8416
        %v8419 = vshll.u32 %v8380, 16
        %v8421 = vrot.slane %v8419, 1
        %v8422 = vsel %vm2223, %v8417, %v8421
        %v8424 = vshrl.u32 %v8381, 16
        %v8426 = vshll.u32 %v8381, 16
        %v8428 = vrot.slane %v8426, 1
        %v8429 = vor.u32 %v8424, %v8428
        %v8431 = vshll.u32 %v8382, 16
        %v8433 = vrot.slane %v8431, 1
        %v8434 = vsel %vm2223, %v8429, %v8433
        %v8436 = vshrl.u32 %v8383, 16
        %v8438 = vshll.u32 %v8383, 16
        %v8440 = vrot.slane %v8438, 1
        %v8441 = vor.u32 %v8436, %v8440
        %v8443 = vshll.u32 %v8384, 16
        %v8445 = vrot.slane %v8443, 1
        %v8446 = vsel %vm2223, %v8441, %v8445
        %v8448 = vshrl.u32 %v8385, 16
        %v8450 = vshll.u32 %v8385, 16
        %v8452 = vrot.slane %v8450, 1
        %v8453 = vor.u32 %v8448, %v8452
        %v8455 = vshll.u32 %v8386, 16
        %v8457 = vrot.slane %v8455, 1
        %v8458 = vsel %vm2223, %v8453, %v8457
        %v8460 = vshrl.u32 %v8387, 16
        %v8462 = vshll.u32 %v8387, 16
        %v8464 = vrot.slane %v8462, 1
        %v8465 = vor.u32 %v8460, %v8464
        %v8467 = vshll.u32 %v8388, 16
        %v8469 = vrot.slane %v8467, 1
        %v8470 = vsel %vm2223, %v8465, %v8469
        %v8472 = vshrl.u32 %v8389, 16
        %v8474 = vshll.u32 %v8389, 16
        %v8476 = vrot.slane %v8474, 1
        %v8477 = vor.u32 %v8472, %v8476
        %v8479 = vshll.u32 %v8390, 16
        %v8481 = vrot.slane %v8479, 1
        %v8482 = vsel %vm2223, %v8477, %v8481
        %v8484 = vshrl.u32 %v8391, 16
        %v8486 = vshll.u32 %v8391, 16
        %v8488 = vrot.slane %v8486, 1
        %v8489 = vor.u32 %v8484, %v8488
        %v8491 = vshll.u32 %v8392, 16
        %v8493 = vrot.slane %v8491, 1
        %v8494 = vsel %vm2223, %v8489, %v8493
        %v8496 = vshrl.u32 %v8393, 16
        %v8498 = vshll.u32 %v8393, 16
        %v8500 = vrot.slane %v8498, 1
        %v8501 = vor.u32 %v8496, %v8500
        %v8503 = vshll.u32 %v8394, 16
        %v8505 = vrot.slane %v8503, 1
        %v8506 = vsel %vm2223, %v8501, %v8505
        %v8508 = vshrl.u32 %v8395, 16
        %v8510 = vshll.u32 %v8395, 16
        %v8512 = vrot.slane %v8510, 1
        %v8513 = vor.u32 %v8508, %v8512
        %v8515 = vshll.u32 %v8396, 16
        %v8517 = vrot.slane %v8515, 1
        %v8518 = vsel %vm2223, %v8513, %v8517
        %v8520 = vshrl.u32 %v8397, 16
        %v8522 = vshll.u32 %v8397, 16
        %v8524 = vrot.slane %v8522, 1
        %v8525 = vor.u32 %v8520, %v8524
        %v8527 = vshll.u32 %v8398, 16
        %v8529 = vrot.slane %v8527, 1
        %v8530 = vsel %vm2223, %v8525, %v8529
        %v8532 = vshrl.u32 %v8399, 16
        %v8534 = vshll.u32 %v8399, 16
        %v8536 = vrot.slane %v8534, 1
        %v8537 = vor.u32 %v8532, %v8536
        %v8539 = vshll.u32 %v8400, 16
        %v8541 = vrot.slane %v8539, 1
        %v8542 = vsel %vm2223, %v8537, %v8541
        %v8544 = vshrl.u32 %v8401, 16
        %v8546 = vshll.u32 %v8401, 16
        %v8548 = vrot.slane %v8546, 1
        %v8549 = vor.u32 %v8544, %v8548
        %v8551 = vshll.u32 %v8402, 16
        %v8553 = vrot.slane %v8551, 1
        %v8554 = vsel %vm2223, %v8549, %v8553
        %v8556 = vshrl.u32 %v8403, 16
        %v8558 = vshll.u32 %v8403, 16
        %v8560 = vrot.slane %v8558, 1
        %v8561 = vor.u32 %v8556, %v8560
        %v8563 = vshll.u32 %v8404, 16
        %v8565 = vrot.slane %v8563, 1
        %v8566 = vsel %vm2223, %v8561, %v8565
        %v8568 = vshrl.u32 %v8405, 16
        %v8570 = vshll.u32 %v8405, 16
        %v8572 = vrot.slane %v8570, 1
        %v8573 = vor.u32 %v8568, %v8572
        %v8575 = vshll.u32 %v8406, 16
        %v8577 = vrot.slane %v8575, 1
        %v8578 = vsel %vm2223, %v8573, %v8577
        %v8580 = vshrl.u32 %v8407, 16
        %v8582 = vshll.u32 %v8407, 16
        %v8584 = vrot.slane %v8582, 1
        %v8585 = vor.u32 %v8580, %v8584
        %v8587 = vshll.u32 %v8408, 16
        %v8589 = vrot.slane %v8587, 1
        %v8590 = vsel %vm2223, %v8585, %v8589
        %v8592 = vshrl.u32 %v8409, 16
        %v8594 = vshll.u32 %v8409, 16
        %v8596 = vrot.slane %v8594, 1
        %v8597 = vor.u32 %v8592, %v8596
        %v8599 = vshll.u32 %v8410, 16
        %v8601 = vrot.slane %v8599, 1
        %v8602 = vsel %vm2223, %v8597, %v8601
        %8619 = vst [vmem:[#allocation5 + $0x20] sm:$0xff] %v8422
        %8620 = vst [vmem:[#allocation5 + $0x70] sm:$0xff] %v8434
        %8621 = vst [vmem:[#allocation5 + $0xc0] sm:$0xff] %v8446
        %8622 = vst [vmem:[#allocation5 + $0x110] sm:$0xff] %v8458
        %8623 = vst [vmem:[#allocation5 + $0x160] sm:$0xff] %v8470
        %8624 = vst [vmem:[#allocation5 + $0x1b0] sm:$0xff] %v8482
        %8625 = vst [vmem:[#allocation5 + $0x200] sm:$0xff] %v8494
        %8626 = vst [vmem:[#allocation5 + $0x250] sm:$0xff] %v8506
        %8627 = vst [vmem:[#allocation5 + $0x2a0] sm:$0xff] %v8518
        %8628 = vst [vmem:[#allocation5 + $0x2f0] sm:$0xff] %v8530
        %8629 = vst [vmem:[#allocation5 + $0x340] sm:$0xff] %v8542
        %8630 = vst [vmem:[#allocation5 + $0x390] sm:$0xff] %v8554
        %8631 = vst [vmem:[#allocation5 + $0x3e0] sm:$0xff] %v8566
        %8632 = vst [vmem:[#allocation5 + $0x430] sm:$0xff] %v8578
        %8633 = vst [vmem:[#allocation5 + $0x480] sm:$0xff] %v8590
        %8634 = vst [vmem:[#allocation5 + $0x4d0] sm:$0xff] %v8602
        %v8635 = vld [vmem:[%s7178] sm:$0xe]
        %v8636 = vld [vmem:[%s7178 + $0x4] sm:$0xf]
        %v8637 = vld [vmem:[%s7178 + $0x8] sm:$0x1]
        %v8638 = vld [vmem:[%s7178 + $0xc] sm:$0xe]
        %v8639 = vld [vmem:[%s7178 + $0x10] sm:$0xf]
        %v8640 = vld [vmem:[%s7178 + $0x14] sm:$0x1]
        %v8641 = vld [vmem:[%s7178 + $0x18] sm:$0xe]
        %v8642 = vld [vmem:[%s7178 + $0x1c] sm:$0xf]
        %v8643 = vld [vmem:[%s7178 + $0x20] sm:$0x1]
        %v8644 = vld [vmem:[%s7178 + $0x24] sm:$0xe]
        %v8645 = vld [vmem:[%s7178 + $0x28] sm:$0xf]
        %v8646 = vld [vmem:[%s7178 + $0x2c] sm:$0x1]
        %v8647 = vld [vmem:[%s7178 + $0x30] sm:$0xe]
        %v8648 = vld [vmem:[%s7178 + $0x34] sm:$0xf]
        %v8649 = vld [vmem:[%s7178 + $0x38] sm:$0x1]
        %v8650 = vld [vmem:[%s7178 + $0x3c] sm:$0xe]
        %v8651 = vld [vmem:[%s7178 + $0x40] sm:$0xf]
        %v8652 = vld [vmem:[%s7178 + $0x44] sm:$0x1]
        %v8653 = vld [vmem:[%s7178 + $0x48] sm:$0xe]
        %v8654 = vld [vmem:[%s7178 + $0x4c] sm:$0xf]
        %v8655 = vld [vmem:[%s7178 + $0x50] sm:$0x1]
        %v8656 = vld [vmem:[%s7178 + $0x54] sm:$0xe]
        %v8657 = vld [vmem:[%s7178 + $0x58] sm:$0xf]
        %v8658 = vld [vmem:[%s7178 + $0x5c] sm:$0x1]
        %v8659 = vld [vmem:[%s7178 + $0x60] sm:$0xe]
        %v8660 = vld [vmem:[%s7178 + $0x64] sm:$0xf]
        %v8661 = vld [vmem:[%s7178 + $0x68] sm:$0x1]
        %v8662 = vld [vmem:[%s7178 + $0x6c] sm:$0xe]
        %v8663 = vld [vmem:[%s7178 + $0x70] sm:$0xf]
        %v8664 = vld [vmem:[%s7178 + $0x74] sm:$0x1]
        %v8665 = vld [vmem:[%s7178 + $0x78] sm:$0xe]
        %v8666 = vld [vmem:[%s7178 + $0x7c] sm:$0xf]
        %v8667 = vld [vmem:[%s7178 + $0x80] sm:$0x1]
        %v8668 = vld [vmem:[%s7178 + $0x84] sm:$0xe]
        %v8669 = vld [vmem:[%s7178 + $0x88] sm:$0xf]
        %v8670 = vld [vmem:[%s7178 + $0x8c] sm:$0x1]
        %v8671 = vld [vmem:[%s7178 + $0x90] sm:$0xe]
        %v8672 = vld [vmem:[%s7178 + $0x94] sm:$0xf]
        %v8673 = vld [vmem:[%s7178 + $0x98] sm:$0x1]
        %v8674 = vld [vmem:[%s7178 + $0x9c] sm:$0xe]
        %v8675 = vld [vmem:[%s7178 + $0xa0] sm:$0xf]
        %v8676 = vld [vmem:[%s7178 + $0xa4] sm:$0x1]
        %v8677 = vld [vmem:[%s7178 + $0xa8] sm:$0xe]
        %v8678 = vld [vmem:[%s7178 + $0xac] sm:$0xf]
        %v8679 = vld [vmem:[%s7178 + $0xb0] sm:$0x1]
        %v8680 = vld [vmem:[%s7178 + $0xb4] sm:$0xe]
        %v8681 = vld [vmem:[%s7178 + $0xb8] sm:$0xf]
        %v8682 = vld [vmem:[%s7178 + $0xbc] sm:$0x1]
        %v8731 = vunpack.c.l.b16 %v8635
        %v8732 = vunpack.c.l.b16 %v8636
        %v8733 = vunpack.c.l.b16 %v8637
        %v8734 = vunpack.c.l.b16 %v8638
        %v8735 = vunpack.c.l.b16 %v8639
        %v8736 = vunpack.c.l.b16 %v8640
        %v8737 = vunpack.c.l.b16 %v8641
        %v8738 = vunpack.c.l.b16 %v8642
        %v8739 = vunpack.c.l.b16 %v8643
        %v8740 = vunpack.c.l.b16 %v8644
        %v8741 = vunpack.c.l.b16 %v8645
        %v8742 = vunpack.c.l.b16 %v8646
        %v8743 = vunpack.c.l.b16 %v8647
        %v8744 = vunpack.c.l.b16 %v8648
        %v8745 = vunpack.c.l.b16 %v8649
        %v8746 = vunpack.c.l.b16 %v8650
        %v8747 = vunpack.c.l.b16 %v8651
        %v8748 = vunpack.c.l.b16 %v8652
        %v8749 = vunpack.c.l.b16 %v8653
        %v8750 = vunpack.c.l.b16 %v8654
        %v8751 = vunpack.c.l.b16 %v8655
        %v8752 = vunpack.c.l.b16 %v8656
        %v8753 = vunpack.c.l.b16 %v8657
        %v8754 = vunpack.c.l.b16 %v8658
        %v8755 = vunpack.c.l.b16 %v8659
        %v8756 = vunpack.c.l.b16 %v8660
        %v8757 = vunpack.c.l.b16 %v8661
        %v8758 = vunpack.c.l.b16 %v8662
        %v8759 = vunpack.c.l.b16 %v8663
        %v8760 = vunpack.c.l.b16 %v8664
        %v8761 = vunpack.c.l.b16 %v8665
        %v8762 = vunpack.c.l.b16 %v8666
        %v8763 = vunpack.c.l.b16 %v8667
        %v8764 = vunpack.c.l.b16 %v8668
        %v8765 = vunpack.c.l.b16 %v8669
        %v8766 = vunpack.c.l.b16 %v8670
        %v8767 = vunpack.c.l.b16 %v8671
        %v8768 = vunpack.c.l.b16 %v8672
        %v8769 = vunpack.c.l.b16 %v8673
        %v8770 = vunpack.c.l.b16 %v8674
        %v8771 = vunpack.c.l.b16 %v8675
        %v8772 = vunpack.c.l.b16 %v8676
        %v8773 = vunpack.c.l.b16 %v8677
        %v8774 = vunpack.c.l.b16 %v8678
        %v8775 = vunpack.c.l.b16 %v8679
        %v8776 = vunpack.c.l.b16 %v8680
        %v8777 = vunpack.c.l.b16 %v8681
        %v8778 = vunpack.c.l.b16 %v8682
        %v8779 = vpack.c.b16 %v8732, %v8731
        %v8780 = vpack.c.b16 %v8733, %v8733
        %v8781 = vpack.c.b16 %v8735, %v8734
        %v8782 = vpack.c.b16 %v8736, %v8736
        %v8783 = vpack.c.b16 %v8738, %v8737
        %v8784 = vpack.c.b16 %v8739, %v8739
        %v8785 = vpack.c.b16 %v8741, %v8740
        %v8786 = vpack.c.b16 %v8742, %v8742
        %v8787 = vpack.c.b16 %v8744, %v8743
        %v8788 = vpack.c.b16 %v8745, %v8745
        %v8789 = vpack.c.b16 %v8747, %v8746
        %v8790 = vpack.c.b16 %v8748, %v8748
        %v8791 = vpack.c.b16 %v8750, %v8749
        %v8792 = vpack.c.b16 %v8751, %v8751
        %v8793 = vpack.c.b16 %v8753, %v8752
        %v8794 = vpack.c.b16 %v8754, %v8754
        %v8795 = vpack.c.b16 %v8756, %v8755
        %v8796 = vpack.c.b16 %v8757, %v8757
        %v8797 = vpack.c.b16 %v8759, %v8758
        %v8798 = vpack.c.b16 %v8760, %v8760
        %v8799 = vpack.c.b16 %v8762, %v8761
        %v8800 = vpack.c.b16 %v8763, %v8763
        %v8801 = vpack.c.b16 %v8765, %v8764
        %v8802 = vpack.c.b16 %v8766, %v8766
        %v8803 = vpack.c.b16 %v8768, %v8767
        %v8804 = vpack.c.b16 %v8769, %v8769
        %v8805 = vpack.c.b16 %v8771, %v8770
        %v8806 = vpack.c.b16 %v8772, %v8772
        %v8807 = vpack.c.b16 %v8774, %v8773
        %v8808 = vpack.c.b16 %v8775, %v8775
        %v8809 = vpack.c.b16 %v8777, %v8776
        %v8810 = vpack.c.b16 %v8778, %v8778
        %v8811 = vrot.slane %v8779, 1
        %v8812 = vrot.slane %v8780, 1
        %v8813 = vsel %vm2624, %v8811, %v8812
        %v8814 = vrot.slane %v8781, 1
        %v8815 = vrot.slane %v8782, 1
        %v8816 = vsel %vm2624, %v8814, %v8815
        %v8817 = vrot.slane %v8783, 1
        %v8818 = vrot.slane %v8784, 1
        %v8819 = vsel %vm2624, %v8817, %v8818
        %v8820 = vrot.slane %v8785, 1
        %v8821 = vrot.slane %v8786, 1
        %v8822 = vsel %vm2624, %v8820, %v8821
        %v8823 = vrot.slane %v8787, 1
        %v8824 = vrot.slane %v8788, 1
        %v8825 = vsel %vm2624, %v8823, %v8824
        %v8826 = vrot.slane %v8789, 1
        %v8827 = vrot.slane %v8790, 1
        %v8828 = vsel %vm2624, %v8826, %v8827
        %v8829 = vrot.slane %v8791, 1
        %v8830 = vrot.slane %v8792, 1
        %v8831 = vsel %vm2624, %v8829, %v8830
        %v8832 = vrot.slane %v8793, 1
        %v8833 = vrot.slane %v8794, 1
        %v8834 = vsel %vm2624, %v8832, %v8833
        %v8835 = vrot.slane %v8795, 1
        %v8836 = vrot.slane %v8796, 1
        %v8837 = vsel %vm2624, %v8835, %v8836
        %v8838 = vrot.slane %v8797, 1
        %v8839 = vrot.slane %v8798, 1
        %v8840 = vsel %vm2624, %v8838, %v8839
        %v8841 = vrot.slane %v8799, 1
        %v8842 = vrot.slane %v8800, 1
        %v8843 = vsel %vm2624, %v8841, %v8842
        %v8844 = vrot.slane %v8801, 1
        %v8845 = vrot.slane %v8802, 1
        %v8846 = vsel %vm2624, %v8844, %v8845
        %v8847 = vrot.slane %v8803, 1
        %v8848 = vrot.slane %v8804, 1
        %v8849 = vsel %vm2624, %v8847, %v8848
        %v8850 = vrot.slane %v8805, 1
        %v8851 = vrot.slane %v8806, 1
        %v8852 = vsel %vm2624, %v8850, %v8851
        %v8853 = vrot.slane %v8807, 1
        %v8854 = vrot.slane %v8808, 1
        %v8855 = vsel %vm2624, %v8853, %v8854
        %v8856 = vrot.slane %v8809, 1
        %v8857 = vrot.slane %v8810, 1
        %v8858 = vsel %vm2624, %v8856, %v8857
        %8875 = vst [vmem:[#allocation5 + $0x28] sm:$0xff] %v8813
        %8876 = vst [vmem:[#allocation5 + $0x78] sm:$0xff] %v8816
        %8877 = vst [vmem:[#allocation5 + $0xc8] sm:$0xff] %v8819
        %8878 = vst [vmem:[#allocation5 + $0x118] sm:$0xff] %v8822
        %8879 = vst [vmem:[#allocation5 + $0x168] sm:$0xff] %v8825
        %8880 = vst [vmem:[#allocation5 + $0x1b8] sm:$0xff] %v8828
        %8881 = vst [vmem:[#allocation5 + $0x208] sm:$0xff] %v8831
        %8882 = vst [vmem:[#allocation5 + $0x258] sm:$0xff] %v8834
        %8883 = vst [vmem:[#allocation5 + $0x2a8] sm:$0xff] %v8837
        %8884 = vst [vmem:[#allocation5 + $0x2f8] sm:$0xff] %v8840
        %8885 = vst [vmem:[#allocation5 + $0x348] sm:$0xff] %v8843
        %8886 = vst [vmem:[#allocation5 + $0x398] sm:$0xff] %v8846
        %8887 = vst [vmem:[#allocation5 + $0x3e8] sm:$0xff] %v8849
        %8888 = vst [vmem:[#allocation5 + $0x438] sm:$0xff] %v8852
        %8889 = vst [vmem:[#allocation5 + $0x488] sm:$0xff] %v8855
        %8890 = vst [vmem:[#allocation5 + $0x4d8] sm:$0xff] %v8858
        %s8891 = scalar_lea.vmem [#allocation4], 24
        %v8892 = vld [vmem:[%s8891] sm:$0xf]
        %v8893 = vld [vmem:[%s8891 + $0x4] sm:$0xf]
        %v8894 = vld [vmem:[%s8891 + $0xc] sm:$0xf]
        %v8895 = vld [vmem:[%s8891 + $0x10] sm:$0xf]
        %v8896 = vld [vmem:[%s8891 + $0x18] sm:$0xf]
        %v8897 = vld [vmem:[%s8891 + $0x1c] sm:$0xf]
        %v8898 = vld [vmem:[%s8891 + $0x24] sm:$0xf]
        %v8899 = vld [vmem:[%s8891 + $0x28] sm:$0xf]
        %v8900 = vld [vmem:[%s8891 + $0x30] sm:$0xf]
        %v8901 = vld [vmem:[%s8891 + $0x34] sm:$0xf]
        %v8902 = vld [vmem:[%s8891 + $0x3c] sm:$0xf]
        %v8903 = vld [vmem:[%s8891 + $0x40] sm:$0xf]
        %v8904 = vld [vmem:[%s8891 + $0x48] sm:$0xf]
        %v8905 = vld [vmem:[%s8891 + $0x4c] sm:$0xf]
        %v8906 = vld [vmem:[%s8891 + $0x54] sm:$0xf]
        %v8907 = vld [vmem:[%s8891 + $0x58] sm:$0xf]
        %v8908 = vld [vmem:[%s8891 + $0x60] sm:$0xf]
        %v8909 = vld [vmem:[%s8891 + $0x64] sm:$0xf]
        %v8910 = vld [vmem:[%s8891 + $0x6c] sm:$0xf]
        %v8911 = vld [vmem:[%s8891 + $0x70] sm:$0xf]
        %v8912 = vld [vmem:[%s8891 + $0x78] sm:$0xf]
        %v8913 = vld [vmem:[%s8891 + $0x7c] sm:$0xf]
        %v8914 = vld [vmem:[%s8891 + $0x84] sm:$0xf]
        %v8915 = vld [vmem:[%s8891 + $0x88] sm:$0xf]
        %v8916 = vld [vmem:[%s8891 + $0x90] sm:$0xf]
        %v8917 = vld [vmem:[%s8891 + $0x94] sm:$0xf]
        %v8918 = vld [vmem:[%s8891 + $0x9c] sm:$0xf]
        %v8919 = vld [vmem:[%s8891 + $0xa0] sm:$0xf]
        %v8920 = vld [vmem:[%s8891 + $0xa8] sm:$0xf]
        %v8921 = vld [vmem:[%s8891 + $0xac] sm:$0xf]
        %v8922 = vld [vmem:[%s8891 + $0xb4] sm:$0xf]
        %v8923 = vld [vmem:[%s8891 + $0xb8] sm:$0xf]
        %v8956 = vunpack.c.l.b16 %v8892
        %v8957 = vunpack.c.l.b16 %v8893
        %v8958 = vunpack.c.l.b16 %v8894
        %v8959 = vunpack.c.l.b16 %v8895
        %v8960 = vunpack.c.l.b16 %v8896
        %v8961 = vunpack.c.l.b16 %v8897
        %v8962 = vunpack.c.l.b16 %v8898
        %v8963 = vunpack.c.l.b16 %v8899
        %v8964 = vunpack.c.l.b16 %v8900
        %v8965 = vunpack.c.l.b16 %v8901
        %v8966 = vunpack.c.l.b16 %v8902
        %v8967 = vunpack.c.l.b16 %v8903
        %v8968 = vunpack.c.l.b16 %v8904
        %v8969 = vunpack.c.l.b16 %v8905
        %v8970 = vunpack.c.l.b16 %v8906
        %v8971 = vunpack.c.l.b16 %v8907
        %v8972 = vunpack.c.l.b16 %v8908
        %v8973 = vunpack.c.l.b16 %v8909
        %v8974 = vunpack.c.l.b16 %v8910
        %v8975 = vunpack.c.l.b16 %v8911
        %v8976 = vunpack.c.l.b16 %v8912
        %v8977 = vunpack.c.l.b16 %v8913
        %v8978 = vunpack.c.l.b16 %v8914
        %v8979 = vunpack.c.l.b16 %v8915
        %v8980 = vunpack.c.l.b16 %v8916
        %v8981 = vunpack.c.l.b16 %v8917
        %v8982 = vunpack.c.l.b16 %v8918
        %v8983 = vunpack.c.l.b16 %v8919
        %v8984 = vunpack.c.l.b16 %v8920
        %v8985 = vunpack.c.l.b16 %v8921
        %v8986 = vunpack.c.l.b16 %v8922
        %v8987 = vunpack.c.l.b16 %v8923
        %v8988 = vpack.c.b16 %v8957, %v8956
        %v8989 = vpack.c.b16 %v8959, %v8958
        %v8990 = vpack.c.b16 %v8961, %v8960
        %v8991 = vpack.c.b16 %v8963, %v8962
        %v8992 = vpack.c.b16 %v8965, %v8964
        %v8993 = vpack.c.b16 %v8967, %v8966
        %v8994 = vpack.c.b16 %v8969, %v8968
        %v8995 = vpack.c.b16 %v8971, %v8970
        %v8996 = vpack.c.b16 %v8973, %v8972
        %v8997 = vpack.c.b16 %v8975, %v8974
        %v8998 = vpack.c.b16 %v8977, %v8976
        %v8999 = vpack.c.b16 %v8979, %v8978
        %v9000 = vpack.c.b16 %v8981, %v8980
        %v9001 = vpack.c.b16 %v8983, %v8982
        %v9002 = vpack.c.b16 %v8985, %v8984
        %v9003 = vpack.c.b16 %v8987, %v8986
        %9020 = vst [vmem:[#allocation5 + $0x30] sm:$0xff] %v8988
        %9021 = vst [vmem:[#allocation5 + $0x80] sm:$0xff] %v8989
        %9022 = vst [vmem:[#allocation5 + $0xd0] sm:$0xff] %v8990
        %9023 = vst [vmem:[#allocation5 + $0x120] sm:$0xff] %v8991
        %9024 = vst [vmem:[#allocation5 + $0x170] sm:$0xff] %v8992
        %9025 = vst [vmem:[#allocation5 + $0x1c0] sm:$0xff] %v8993
        %9026 = vst [vmem:[#allocation5 + $0x210] sm:$0xff] %v8994
        %9027 = vst [vmem:[#allocation5 + $0x260] sm:$0xff] %v8995
        %9028 = vst [vmem:[#allocation5 + $0x2b0] sm:$0xff] %v8996
        %9029 = vst [vmem:[#allocation5 + $0x300] sm:$0xff] %v8997
        %9030 = vst [vmem:[#allocation5 + $0x350] sm:$0xff] %v8998
        %9031 = vst [vmem:[#allocation5 + $0x3a0] sm:$0xff] %v8999
        %9032 = vst [vmem:[#allocation5 + $0x3f0] sm:$0xff] %v9000
        %9033 = vst [vmem:[#allocation5 + $0x440] sm:$0xff] %v9001
        %9034 = vst [vmem:[#allocation5 + $0x490] sm:$0xff] %v9002
        %9035 = vst [vmem:[#allocation5 + $0x4e0] sm:$0xff] %v9003
        %v9036 = vld [vmem:[%s8891] sm:$0xf]
        %v9037 = vld [vmem:[%s8891 + $0x4] sm:$0xf]
        %v9038 = vld [vmem:[%s8891 + $0x8] sm:$0x1]
        %v9039 = vld [vmem:[%s8891 + $0xc] sm:$0xf]
        %v9040 = vld [vmem:[%s8891 + $0x10] sm:$0xf]
        %v9041 = vld [vmem:[%s8891 + $0x14] sm:$0x1]
        %v9042 = vld [vmem:[%s8891 + $0x18] sm:$0xf]
        %v9043 = vld [vmem:[%s8891 + $0x1c] sm:$0xf]
        %v9044 = vld [vmem:[%s8891 + $0x20] sm:$0x1]
        %v9045 = vld [vmem:[%s8891 + $0x24] sm:$0xf]
        %v9046 = vld [vmem:[%s8891 + $0x28] sm:$0xf]
        %v9047 = vld [vmem:[%s8891 + $0x2c] sm:$0x1]
        %v9048 = vld [vmem:[%s8891 + $0x30] sm:$0xf]
        %v9049 = vld [vmem:[%s8891 + $0x34] sm:$0xf]
        %v9050 = vld [vmem:[%s8891 + $0x38] sm:$0x1]
        %v9051 = vld [vmem:[%s8891 + $0x3c] sm:$0xf]
        %v9052 = vld [vmem:[%s8891 + $0x40] sm:$0xf]
        %v9053 = vld [vmem:[%s8891 + $0x44] sm:$0x1]
        %v9054 = vld [vmem:[%s8891 + $0x48] sm:$0xf]
        %v9055 = vld [vmem:[%s8891 + $0x4c] sm:$0xf]
        %v9056 = vld [vmem:[%s8891 + $0x50] sm:$0x1]
        %v9057 = vld [vmem:[%s8891 + $0x54] sm:$0xf]
        %v9058 = vld [vmem:[%s8891 + $0x58] sm:$0xf]
        %v9059 = vld [vmem:[%s8891 + $0x5c] sm:$0x1]
        %v9060 = vld [vmem:[%s8891 + $0x60] sm:$0xf]
        %v9061 = vld [vmem:[%s8891 + $0x64] sm:$0xf]
        %v9062 = vld [vmem:[%s8891 + $0x68] sm:$0x1]
        %v9063 = vld [vmem:[%s8891 + $0x6c] sm:$0xf]
        %v9064 = vld [vmem:[%s8891 + $0x70] sm:$0xf]
        %v9065 = vld [vmem:[%s8891 + $0x74] sm:$0x1]
        %v9066 = vld [vmem:[%s8891 + $0x78] sm:$0xf]
        %v9067 = vld [vmem:[%s8891 + $0x7c] sm:$0xf]
        %v9068 = vld [vmem:[%s8891 + $0x80] sm:$0x1]
        %v9069 = vld [vmem:[%s8891 + $0x84] sm:$0xf]
        %v9070 = vld [vmem:[%s8891 + $0x88] sm:$0xf]
        %v9071 = vld [vmem:[%s8891 + $0x8c] sm:$0x1]
        %v9072 = vld [vmem:[%s8891 + $0x90] sm:$0xf]
        %v9073 = vld [vmem:[%s8891 + $0x94] sm:$0xf]
        %v9074 = vld [vmem:[%s8891 + $0x98] sm:$0x1]
        %v9075 = vld [vmem:[%s8891 + $0x9c] sm:$0xf]
        %v9076 = vld [vmem:[%s8891 + $0xa0] sm:$0xf]
        %v9077 = vld [vmem:[%s8891 + $0xa4] sm:$0x1]
        %v9078 = vld [vmem:[%s8891 + $0xa8] sm:$0xf]
        %v9079 = vld [vmem:[%s8891 + $0xac] sm:$0xf]
        %v9080 = vld [vmem:[%s8891 + $0xb0] sm:$0x1]
        %v9081 = vld [vmem:[%s8891 + $0xb4] sm:$0xf]
        %v9082 = vld [vmem:[%s8891 + $0xb8] sm:$0xf]
        %v9083 = vld [vmem:[%s8891 + $0xbc] sm:$0x1]
        %v9132 = vunpack.c.l.b16 %v9036
        %v9133 = vunpack.c.l.b16 %v9037
        %v9134 = vunpack.c.l.b16 %v9038
        %v9135 = vunpack.c.l.b16 %v9039
        %v9136 = vunpack.c.l.b16 %v9040
        %v9137 = vunpack.c.l.b16 %v9041
        %v9138 = vunpack.c.l.b16 %v9042
        %v9139 = vunpack.c.l.b16 %v9043
        %v9140 = vunpack.c.l.b16 %v9044
        %v9141 = vunpack.c.l.b16 %v9045
        %v9142 = vunpack.c.l.b16 %v9046
        %v9143 = vunpack.c.l.b16 %v9047
        %v9144 = vunpack.c.l.b16 %v9048
        %v9145 = vunpack.c.l.b16 %v9049
        %v9146 = vunpack.c.l.b16 %v9050
        %v9147 = vunpack.c.l.b16 %v9051
        %v9148 = vunpack.c.l.b16 %v9052
        %v9149 = vunpack.c.l.b16 %v9053
        %v9150 = vunpack.c.l.b16 %v9054
        %v9151 = vunpack.c.l.b16 %v9055
        %v9152 = vunpack.c.l.b16 %v9056
        %v9153 = vunpack.c.l.b16 %v9057
        %v9154 = vunpack.c.l.b16 %v9058
        %v9155 = vunpack.c.l.b16 %v9059
        %v9156 = vunpack.c.l.b16 %v9060
        %v9157 = vunpack.c.l.b16 %v9061
        %v9158 = vunpack.c.l.b16 %v9062
        %v9159 = vunpack.c.l.b16 %v9063
        %v9160 = vunpack.c.l.b16 %v9064
        %v9161 = vunpack.c.l.b16 %v9065
        %v9162 = vunpack.c.l.b16 %v9066
        %v9163 = vunpack.c.l.b16 %v9067
        %v9164 = vunpack.c.l.b16 %v9068
        %v9165 = vunpack.c.l.b16 %v9069
        %v9166 = vunpack.c.l.b16 %v9070
        %v9167 = vunpack.c.l.b16 %v9071
        %v9168 = vunpack.c.l.b16 %v9072
        %v9169 = vunpack.c.l.b16 %v9073
        %v9170 = vunpack.c.l.b16 %v9074
        %v9171 = vunpack.c.l.b16 %v9075
        %v9172 = vunpack.c.l.b16 %v9076
        %v9173 = vunpack.c.l.b16 %v9077
        %v9174 = vunpack.c.l.b16 %v9078
        %v9175 = vunpack.c.l.b16 %v9079
        %v9176 = vunpack.c.l.b16 %v9080
        %v9177 = vunpack.c.l.b16 %v9081
        %v9178 = vunpack.c.l.b16 %v9082
        %v9179 = vunpack.c.l.b16 %v9083
        %v9180 = vpack.c.b16 %v9133, %v9132
        %v9181 = vpack.c.b16 %v9134, %v9134
        %v9182 = vpack.c.b16 %v9136, %v9135
        %v9183 = vpack.c.b16 %v9137, %v9137
        %v9184 = vpack.c.b16 %v9139, %v9138
        %v9185 = vpack.c.b16 %v9140, %v9140
        %v9186 = vpack.c.b16 %v9142, %v9141
        %v9187 = vpack.c.b16 %v9143, %v9143
        %v9188 = vpack.c.b16 %v9145, %v9144
        %v9189 = vpack.c.b16 %v9146, %v9146
        %v9190 = vpack.c.b16 %v9148, %v9147
        %v9191 = vpack.c.b16 %v9149, %v9149
        %v9192 = vpack.c.b16 %v9151, %v9150
        %v9193 = vpack.c.b16 %v9152, %v9152
        %v9194 = vpack.c.b16 %v9154, %v9153
        %v9195 = vpack.c.b16 %v9155, %v9155
        %v9196 = vpack.c.b16 %v9157, %v9156
        %v9197 = vpack.c.b16 %v9158, %v9158
        %v9198 = vpack.c.b16 %v9160, %v9159
        %v9199 = vpack.c.b16 %v9161, %v9161
        %v9200 = vpack.c.b16 %v9163, %v9162
        %v9201 = vpack.c.b16 %v9164, %v9164
        %v9202 = vpack.c.b16 %v9166, %v9165
        %v9203 = vpack.c.b16 %v9167, %v9167
        %v9204 = vpack.c.b16 %v9169, %v9168
        %v9205 = vpack.c.b16 %v9170, %v9170
        %v9206 = vpack.c.b16 %v9172, %v9171
        %v9207 = vpack.c.b16 %v9173, %v9173
        %v9208 = vpack.c.b16 %v9175, %v9174
        %v9209 = vpack.c.b16 %v9176, %v9176
        %v9210 = vpack.c.b16 %v9178, %v9177
        %v9211 = vpack.c.b16 %v9179, %v9179
        %v9213 = vshrl.u32 %v9180, 16
        %v9215 = vshll.u32 %v9180, 16
        %v9217 = vrot.slane %v9215, 1
        %v9218 = vor.u32 %v9213, %v9217
        %v9220 = vshll.u32 %v9181, 16
        %v9222 = vrot.slane %v9220, 1
        %v9223 = vsel %vm2223, %v9218, %v9222
        %v9225 = vshrl.u32 %v9182, 16
        %v9227 = vshll.u32 %v9182, 16
        %v9229 = vrot.slane %v9227, 1
        %v9230 = vor.u32 %v9225, %v9229
        %v9232 = vshll.u32 %v9183, 16
        %v9234 = vrot.slane %v9232, 1
        %v9235 = vsel %vm2223, %v9230, %v9234
        %v9237 = vshrl.u32 %v9184, 16
        %v9239 = vshll.u32 %v9184, 16
        %v9241 = vrot.slane %v9239, 1
        %v9242 = vor.u32 %v9237, %v9241
        %v9244 = vshll.u32 %v9185, 16
        %v9246 = vrot.slane %v9244, 1
        %v9247 = vsel %vm2223, %v9242, %v9246
        %v9249 = vshrl.u32 %v9186, 16
        %v9251 = vshll.u32 %v9186, 16
        %v9253 = vrot.slane %v9251, 1
        %v9254 = vor.u32 %v9249, %v9253
        %v9256 = vshll.u32 %v9187, 16
        %v9258 = vrot.slane %v9256, 1
        %v9259 = vsel %vm2223, %v9254, %v9258
        %v9261 = vshrl.u32 %v9188, 16
        %v9263 = vshll.u32 %v9188, 16
        %v9265 = vrot.slane %v9263, 1
        %v9266 = vor.u32 %v9261, %v9265
        %v9268 = vshll.u32 %v9189, 16
        %v9270 = vrot.slane %v9268, 1
        %v9271 = vsel %vm2223, %v9266, %v9270
        %v9273 = vshrl.u32 %v9190, 16
        %v9275 = vshll.u32 %v9190, 16
        %v9277 = vrot.slane %v9275, 1
        %v9278 = vor.u32 %v9273, %v9277
        %v9280 = vshll.u32 %v9191, 16
        %v9282 = vrot.slane %v9280, 1
        %v9283 = vsel %vm2223, %v9278, %v9282
        %v9285 = vshrl.u32 %v9192, 16
        %v9287 = vshll.u32 %v9192, 16
        %v9289 = vrot.slane %v9287, 1
        %v9290 = vor.u32 %v9285, %v9289
        %v9292 = vshll.u32 %v9193, 16
        %v9294 = vrot.slane %v9292, 1
        %v9295 = vsel %vm2223, %v9290, %v9294
        %v9297 = vshrl.u32 %v9194, 16
        %v9299 = vshll.u32 %v9194, 16
        %v9301 = vrot.slane %v9299, 1
        %v9302 = vor.u32 %v9297, %v9301
        %v9304 = vshll.u32 %v9195, 16
        %v9306 = vrot.slane %v9304, 1
        %v9307 = vsel %vm2223, %v9302, %v9306
        %v9309 = vshrl.u32 %v9196, 16
        %v9311 = vshll.u32 %v9196, 16
        %v9313 = vrot.slane %v9311, 1
        %v9314 = vor.u32 %v9309, %v9313
        %v9316 = vshll.u32 %v9197, 16
        %v9318 = vrot.slane %v9316, 1
        %v9319 = vsel %vm2223, %v9314, %v9318
        %v9321 = vshrl.u32 %v9198, 16
        %v9323 = vshll.u32 %v9198, 16
        %v9325 = vrot.slane %v9323, 1
        %v9326 = vor.u32 %v9321, %v9325
        %v9328 = vshll.u32 %v9199, 16
        %v9330 = vrot.slane %v9328, 1
        %v9331 = vsel %vm2223, %v9326, %v9330
        %v9333 = vshrl.u32 %v9200, 16
        %v9335 = vshll.u32 %v9200, 16
        %v9337 = vrot.slane %v9335, 1
        %v9338 = vor.u32 %v9333, %v9337
        %v9340 = vshll.u32 %v9201, 16
        %v9342 = vrot.slane %v9340, 1
        %v9343 = vsel %vm2223, %v9338, %v9342
        %v9345 = vshrl.u32 %v9202, 16
        %v9347 = vshll.u32 %v9202, 16
        %v9349 = vrot.slane %v9347, 1
        %v9350 = vor.u32 %v9345, %v9349
        %v9352 = vshll.u32 %v9203, 16
        %v9354 = vrot.slane %v9352, 1
        %v9355 = vsel %vm2223, %v9350, %v9354
        %v9357 = vshrl.u32 %v9204, 16
        %v9359 = vshll.u32 %v9204, 16
        %v9361 = vrot.slane %v9359, 1
        %v9362 = vor.u32 %v9357, %v9361
        %v9364 = vshll.u32 %v9205, 16
        %v9366 = vrot.slane %v9364, 1
        %v9367 = vsel %vm2223, %v9362, %v9366
        %v9369 = vshrl.u32 %v9206, 16
        %v9371 = vshll.u32 %v9206, 16
        %v9373 = vrot.slane %v9371, 1
        %v9374 = vor.u32 %v9369, %v9373
        %v9376 = vshll.u32 %v9207, 16
        %v9378 = vrot.slane %v9376, 1
        %v9379 = vsel %vm2223, %v9374, %v9378
        %v9381 = vshrl.u32 %v9208, 16
        %v9383 = vshll.u32 %v9208, 16
        %v9385 = vrot.slane %v9383, 1
        %v9386 = vor.u32 %v9381, %v9385
        %v9388 = vshll.u32 %v9209, 16
        %v9390 = vrot.slane %v9388, 1
        %v9391 = vsel %vm2223, %v9386, %v9390
        %v9393 = vshrl.u32 %v9210, 16
        %v9395 = vshll.u32 %v9210, 16
        %v9397 = vrot.slane %v9395, 1
        %v9398 = vor.u32 %v9393, %v9397
        %v9400 = vshll.u32 %v9211, 16
        %v9402 = vrot.slane %v9400, 1
        %v9403 = vsel %vm2223, %v9398, %v9402
        %9420 = vst [vmem:[#allocation5 + $0x38] sm:$0xff] %v9223
        %9421 = vst [vmem:[#allocation5 + $0x88] sm:$0xff] %v9235
        %9422 = vst [vmem:[#allocation5 + $0xd8] sm:$0xff] %v9247
        %9423 = vst [vmem:[#allocation5 + $0x128] sm:$0xff] %v9259
        %9424 = vst [vmem:[#allocation5 + $0x178] sm:$0xff] %v9271
        %9425 = vst [vmem:[#allocation5 + $0x1c8] sm:$0xff] %v9283
        %9426 = vst [vmem:[#allocation5 + $0x218] sm:$0xff] %v9295
        %9427 = vst [vmem:[#allocation5 + $0x268] sm:$0xff] %v9307
        %9428 = vst [vmem:[#allocation5 + $0x2b8] sm:$0xff] %v9319
        %9429 = vst [vmem:[#allocation5 + $0x308] sm:$0xff] %v9331
        %9430 = vst [vmem:[#allocation5 + $0x358] sm:$0xff] %v9343
        %9431 = vst [vmem:[#allocation5 + $0x3a8] sm:$0xff] %v9355
        %9432 = vst [vmem:[#allocation5 + $0x3f8] sm:$0xff] %v9367
        %9433 = vst [vmem:[#allocation5 + $0x448] sm:$0xff] %v9379
        %9434 = vst [vmem:[#allocation5 + $0x498] sm:$0xff] %v9391
        %9435 = vst [vmem:[#allocation5 + $0x4e8] sm:$0xff] %v9403
        %v9436 = vld [vmem:[%s8891] sm:$0xe]
        %v9437 = vld [vmem:[%s8891 + $0x4] sm:$0xf]
        %v9438 = vld [vmem:[%s8891 + $0x8] sm:$0x1]
        %v9439 = vld [vmem:[%s8891 + $0xc] sm:$0xe]
        %v9440 = vld [vmem:[%s8891 + $0x10] sm:$0xf]
        %v9441 = vld [vmem:[%s8891 + $0x14] sm:$0x1]
        %v9442 = vld [vmem:[%s8891 + $0x18] sm:$0xe]
        %v9443 = vld [vmem:[%s8891 + $0x1c] sm:$0xf]
        %v9444 = vld [vmem:[%s8891 + $0x20] sm:$0x1]
        %v9445 = vld [vmem:[%s8891 + $0x24] sm:$0xe]
        %v9446 = vld [vmem:[%s8891 + $0x28] sm:$0xf]
        %v9447 = vld [vmem:[%s8891 + $0x2c] sm:$0x1]
        %v9448 = vld [vmem:[%s8891 + $0x30] sm:$0xe]
        %v9449 = vld [vmem:[%s8891 + $0x34] sm:$0xf]
        %v9450 = vld [vmem:[%s8891 + $0x38] sm:$0x1]
        %v9451 = vld [vmem:[%s8891 + $0x3c] sm:$0xe]
        %v9452 = vld [vmem:[%s8891 + $0x40] sm:$0xf]
        %v9453 = vld [vmem:[%s8891 + $0x44] sm:$0x1]
        %v9454 = vld [vmem:[%s8891 + $0x48] sm:$0xe]
        %v9455 = vld [vmem:[%s8891 + $0x4c] sm:$0xf]
        %v9456 = vld [vmem:[%s8891 + $0x50] sm:$0x1]
        %v9457 = vld [vmem:[%s8891 + $0x54] sm:$0xe]
        %v9458 = vld [vmem:[%s8891 + $0x58] sm:$0xf]
        %v9459 = vld [vmem:[%s8891 + $0x5c] sm:$0x1]
        %v9460 = vld [vmem:[%s8891 + $0x60] sm:$0xe]
        %v9461 = vld [vmem:[%s8891 + $0x64] sm:$0xf]
        %v9462 = vld [vmem:[%s8891 + $0x68] sm:$0x1]
        %v9463 = vld [vmem:[%s8891 + $0x6c] sm:$0xe]
        %v9464 = vld [vmem:[%s8891 + $0x70] sm:$0xf]
        %v9465 = vld [vmem:[%s8891 + $0x74] sm:$0x1]
        %v9466 = vld [vmem:[%s8891 + $0x78] sm:$0xe]
        %v9467 = vld [vmem:[%s8891 + $0x7c] sm:$0xf]
        %v9468 = vld [vmem:[%s8891 + $0x80] sm:$0x1]
        %v9469 = vld [vmem:[%s8891 + $0x84] sm:$0xe]
        %v9470 = vld [vmem:[%s8891 + $0x88] sm:$0xf]
        %v9471 = vld [vmem:[%s8891 + $0x8c] sm:$0x1]
        %v9472 = vld [vmem:[%s8891 + $0x90] sm:$0xe]
        %v9473 = vld [vmem:[%s8891 + $0x94] sm:$0xf]
        %v9474 = vld [vmem:[%s8891 + $0x98] sm:$0x1]
        %v9475 = vld [vmem:[%s8891 + $0x9c] sm:$0xe]
        %v9476 = vld [vmem:[%s8891 + $0xa0] sm:$0xf]
        %v9477 = vld [vmem:[%s8891 + $0xa4] sm:$0x1]
        %v9478 = vld [vmem:[%s8891 + $0xa8] sm:$0xe]
        %v9479 = vld [vmem:[%s8891 + $0xac] sm:$0xf]
        %v9480 = vld [vmem:[%s8891 + $0xb0] sm:$0x1]
        %v9481 = vld [vmem:[%s8891 + $0xb4] sm:$0xe]
        %v9482 = vld [vmem:[%s8891 + $0xb8] sm:$0xf]
        %v9483 = vld [vmem:[%s8891 + $0xbc] sm:$0x1]
        %v9532 = vunpack.c.l.b16 %v9436
        %v9533 = vunpack.c.l.b16 %v9437
        %v9534 = vunpack.c.l.b16 %v9438
        %v9535 = vunpack.c.l.b16 %v9439
        %v9536 = vunpack.c.l.b16 %v9440
        %v9537 = vunpack.c.l.b16 %v9441
        %v9538 = vunpack.c.l.b16 %v9442
        %v9539 = vunpack.c.l.b16 %v9443
        %v9540 = vunpack.c.l.b16 %v9444
        %v9541 = vunpack.c.l.b16 %v9445
        %v9542 = vunpack.c.l.b16 %v9446
        %v9543 = vunpack.c.l.b16 %v9447
        %v9544 = vunpack.c.l.b16 %v9448
        %v9545 = vunpack.c.l.b16 %v9449
        %v9546 = vunpack.c.l.b16 %v9450
        %v9547 = vunpack.c.l.b16 %v9451
        %v9548 = vunpack.c.l.b16 %v9452
        %v9549 = vunpack.c.l.b16 %v9453
        %v9550 = vunpack.c.l.b16 %v9454
        %v9551 = vunpack.c.l.b16 %v9455
        %v9552 = vunpack.c.l.b16 %v9456
        %v9553 = vunpack.c.l.b16 %v9457
        %v9554 = vunpack.c.l.b16 %v9458
        %v9555 = vunpack.c.l.b16 %v9459
        %v9556 = vunpack.c.l.b16 %v9460
        %v9557 = vunpack.c.l.b16 %v9461
        %v9558 = vunpack.c.l.b16 %v9462
        %v9559 = vunpack.c.l.b16 %v9463
        %v9560 = vunpack.c.l.b16 %v9464
        %v9561 = vunpack.c.l.b16 %v9465
        %v9562 = vunpack.c.l.b16 %v9466
        %v9563 = vunpack.c.l.b16 %v9467
        %v9564 = vunpack.c.l.b16 %v9468
        %v9565 = vunpack.c.l.b16 %v9469
        %v9566 = vunpack.c.l.b16 %v9470
        %v9567 = vunpack.c.l.b16 %v9471
        %v9568 = vunpack.c.l.b16 %v9472
        %v9569 = vunpack.c.l.b16 %v9473
        %v9570 = vunpack.c.l.b16 %v9474
        %v9571 = vunpack.c.l.b16 %v9475
        %v9572 = vunpack.c.l.b16 %v9476
        %v9573 = vunpack.c.l.b16 %v9477
        %v9574 = vunpack.c.l.b16 %v9478
        %v9575 = vunpack.c.l.b16 %v9479
        %v9576 = vunpack.c.l.b16 %v9480
        %v9577 = vunpack.c.l.b16 %v9481
        %v9578 = vunpack.c.l.b16 %v9482
        %v9579 = vunpack.c.l.b16 %v9483
        %v9580 = vpack.c.b16 %v9533, %v9532
        %v9581 = vpack.c.b16 %v9534, %v9534
        %v9582 = vpack.c.b16 %v9536, %v9535
        %v9583 = vpack.c.b16 %v9537, %v9537
        %v9584 = vpack.c.b16 %v9539, %v9538
        %v9585 = vpack.c.b16 %v9540, %v9540
        %v9586 = vpack.c.b16 %v9542, %v9541
        %v9587 = vpack.c.b16 %v9543, %v9543
        %v9588 = vpack.c.b16 %v9545, %v9544
        %v9589 = vpack.c.b16 %v9546, %v9546
        %v9590 = vpack.c.b16 %v9548, %v9547
        %v9591 = vpack.c.b16 %v9549, %v9549
        %v9592 = vpack.c.b16 %v9551, %v9550
        %v9593 = vpack.c.b16 %v9552, %v9552
        %v9594 = vpack.c.b16 %v9554, %v9553
        %v9595 = vpack.c.b16 %v9555, %v9555
        %v9596 = vpack.c.b16 %v9557, %v9556
        %v9597 = vpack.c.b16 %v9558, %v9558
        %v9598 = vpack.c.b16 %v9560, %v9559
        %v9599 = vpack.c.b16 %v9561, %v9561
        %v9600 = vpack.c.b16 %v9563, %v9562
        %v9601 = vpack.c.b16 %v9564, %v9564
        %v9602 = vpack.c.b16 %v9566, %v9565
        %v9603 = vpack.c.b16 %v9567, %v9567
        %v9604 = vpack.c.b16 %v9569, %v9568
        %v9605 = vpack.c.b16 %v9570, %v9570
        %v9606 = vpack.c.b16 %v9572, %v9571
        %v9607 = vpack.c.b16 %v9573, %v9573
        %v9608 = vpack.c.b16 %v9575, %v9574
        %v9609 = vpack.c.b16 %v9576, %v9576
        %v9610 = vpack.c.b16 %v9578, %v9577
        %v9611 = vpack.c.b16 %v9579, %v9579
        %v9612 = vrot.slane %v9580, 1
        %v9613 = vrot.slane %v9581, 1
        %v9614 = vsel %vm2624, %v9612, %v9613
        %v9615 = vrot.slane %v9582, 1
        %v9616 = vrot.slane %v9583, 1
        %v9617 = vsel %vm2624, %v9615, %v9616
        %v9618 = vrot.slane %v9584, 1
        %v9619 = vrot.slane %v9585, 1
        %v9620 = vsel %vm2624, %v9618, %v9619
        %v9621 = vrot.slane %v9586, 1
        %v9622 = vrot.slane %v9587, 1
        %v9623 = vsel %vm2624, %v9621, %v9622
        %v9624 = vrot.slane %v9588, 1
        %v9625 = vrot.slane %v9589, 1
        %v9626 = vsel %vm2624, %v9624, %v9625
        %v9627 = vrot.slane %v9590, 1
        %v9628 = vrot.slane %v9591, 1
        %v9629 = vsel %vm2624, %v9627, %v9628
        %v9630 = vrot.slane %v9592, 1
        %v9631 = vrot.slane %v9593, 1
        %v9632 = vsel %vm2624, %v9630, %v9631
        %v9633 = vrot.slane %v9594, 1
        %v9634 = vrot.slane %v9595, 1
        %v9635 = vsel %vm2624, %v9633, %v9634
        %v9636 = vrot.slane %v9596, 1
        %v9637 = vrot.slane %v9597, 1
        %v9638 = vsel %vm2624, %v9636, %v9637
        %v9639 = vrot.slane %v9598, 1
        %v9640 = vrot.slane %v9599, 1
        %v9641 = vsel %vm2624, %v9639, %v9640
        %v9642 = vrot.slane %v9600, 1
        %v9643 = vrot.slane %v9601, 1
        %v9644 = vsel %vm2624, %v9642, %v9643
        %v9645 = vrot.slane %v9602, 1
        %v9646 = vrot.slane %v9603, 1
        %v9647 = vsel %vm2624, %v9645, %v9646
        %v9648 = vrot.slane %v9604, 1
        %v9649 = vrot.slane %v9605, 1
        %v9650 = vsel %vm2624, %v9648, %v9649
        %v9651 = vrot.slane %v9606, 1
        %v9652 = vrot.slane %v9607, 1
        %v9653 = vsel %vm2624, %v9651, %v9652
        %v9654 = vrot.slane %v9608, 1
        %v9655 = vrot.slane %v9609, 1
        %v9656 = vsel %vm2624, %v9654, %v9655
        %v9657 = vrot.slane %v9610, 1
        %v9658 = vrot.slane %v9611, 1
        %v9659 = vsel %vm2624, %v9657, %v9658
        %9676 = vst [vmem:[#allocation5 + $0x40] sm:$0xff] %v9614
        %9677 = vst [vmem:[#allocation5 + $0x90] sm:$0xff] %v9617
        %9678 = vst [vmem:[#allocation5 + $0xe0] sm:$0xff] %v9620
        %9679 = vst [vmem:[#allocation5 + $0x130] sm:$0xff] %v9623
        %9680 = vst [vmem:[#allocation5 + $0x180] sm:$0xff] %v9626
        %9681 = vst [vmem:[#allocation5 + $0x1d0] sm:$0xff] %v9629
        %9682 = vst [vmem:[#allocation5 + $0x220] sm:$0xff] %v9632
        %9683 = vst [vmem:[#allocation5 + $0x270] sm:$0xff] %v9635
        %9684 = vst [vmem:[#allocation5 + $0x2c0] sm:$0xff] %v9638
        %9685 = vst [vmem:[#allocation5 + $0x310] sm:$0xff] %v9641
        %9686 = vst [vmem:[#allocation5 + $0x360] sm:$0xff] %v9644
        %9687 = vst [vmem:[#allocation5 + $0x3b0] sm:$0xff] %v9647
        %9688 = vst [vmem:[#allocation5 + $0x400] sm:$0xff] %v9650
        %9689 = vst [vmem:[#allocation5 + $0x450] sm:$0xff] %v9653
        %9690 = vst [vmem:[#allocation5 + $0x4a0] sm:$0xff] %v9656
        %9691 = vst [vmem:[#allocation5 + $0x4f0] sm:$0xff] %v9659
        %v9692 = vpack.c.bf16 %v536, %v535
        %v9693 = vpack.c.bf16 %v538, %v537
        %v9694 = vpack.c.bf16 %v540, %v539
        %v9695 = vpack.c.bf16 %v542, %v541
        %v9696 = vpack.c.bf16 %v544, %v543
        %v9697 = vpack.c.bf16 %v546, %v545
        %v9698 = vpack.c.bf16 %v548, %v547
        %v9699 = vpack.c.bf16 %v550, %v549
        %v9700 = vpack.c.bf16 %v552, %v551
        %v9701 = vpack.c.bf16 %v554, %v553
        %v9702 = vpack.c.bf16 %v556, %v555
        %v9703 = vpack.c.bf16 %v558, %v557
        %v9704 = vpack.c.bf16 %v560, %v559
        %v9705 = vpack.c.bf16 %v562, %v561
        %v9706 = vpack.c.bf16 %v564, %v563
        %v9707 = vpack.c.bf16 %v566, %v565
        %9708 = vst [vmem:[#allocation5 + $0x48] sm:$0xff] %v9692
        %9709 = vst [vmem:[#allocation5 + $0x98] sm:$0xff] %v9693
        %9710 = vst [vmem:[#allocation5 + $0xe8] sm:$0xff] %v9694
        %9711 = vst [vmem:[#allocation5 + $0x138] sm:$0xff] %v9695
        %9712 = vst [vmem:[#allocation5 + $0x188] sm:$0xff] %v9696
        %9713 = vst [vmem:[#allocation5 + $0x1d8] sm:$0xff] %v9697
        %9714 = vst [vmem:[#allocation5 + $0x228] sm:$0xff] %v9698
        %9715 = vst [vmem:[#allocation5 + $0x278] sm:$0xff] %v9699
        %9716 = vst [vmem:[#allocation5 + $0x2c8] sm:$0xff] %v9700
        %9717 = vst [vmem:[#allocation5 + $0x318] sm:$0xff] %v9701
        %9718 = vst [vmem:[#allocation5 + $0x368] sm:$0xff] %v9702
        %9719 = vst [vmem:[#allocation5 + $0x3b8] sm:$0xff] %v9703
        %9720 = vst [vmem:[#allocation5 + $0x408] sm:$0xff] %v9704
        %9721 = vst [vmem:[#allocation5 + $0x458] sm:$0xff] %v9705
        %9722 = vst [vmem:[#allocation5 + $0x4a8] sm:$0xff] %v9706
        %9723 = vst [vmem:[#allocation5 + $0x4f8] sm:$0xff] %v9707
        %v9724 = vld [vmem:[#allocation5] sm:$0xff]
        %v9725 = vld [vmem:[#allocation5 + $0x8] sm:$0xff]
        %v9726 = vld [vmem:[#allocation5 + $0x10] sm:$0xff]
        %v9727 = vld [vmem:[#allocation5 + $0x18] sm:$0xff]
        %v9728 = vld [vmem:[#allocation5 + $0x20] sm:$0xff]
        %v9729 = vld [vmem:[#allocation5 + $0x28] sm:$0xff]
        %v9730 = vld [vmem:[#allocation5 + $0x30] sm:$0xff]
        %v9731 = vld [vmem:[#allocation5 + $0x38] sm:$0xff]
        %v9732 = vld [vmem:[#allocation5 + $0x40] sm:$0xff]
        %v9733 = vld [vmem:[#allocation5 + $0x48] sm:$0xff]
        %v9734 = vld [vmem:[#allocation5 + $0x50] sm:$0xff]
        %v9735 = vld [vmem:[#allocation5 + $0x58] sm:$0xff]
        %v9736 = vld [vmem:[#allocation5 + $0x60] sm:$0xff]
        %v9737 = vld [vmem:[#allocation5 + $0x68] sm:$0xff]
        %v9738 = vld [vmem:[#allocation5 + $0x70] sm:$0xff]
        %v9739 = vld [vmem:[#allocation5 + $0x78] sm:$0xff]
        %v9740 = vld [vmem:[#allocation5 + $0x80] sm:$0xff]
        %v9741 = vld [vmem:[#allocation5 + $0x88] sm:$0xff]
        %v9742 = vld [vmem:[#allocation5 + $0x90] sm:$0xff]
        %v9743 = vld [vmem:[#allocation5 + $0x98] sm:$0xff]
        %v9744 = vld [vmem:[#allocation5 + $0xa0] sm:$0xff]
        %v9745 = vld [vmem:[#allocation5 + $0xa8] sm:$0xff]
        %v9746 = vld [vmem:[#allocation5 + $0xb0] sm:$0xff]
        %v9747 = vld [vmem:[#allocation5 + $0xb8] sm:$0xff]
        %v9748 = vld [vmem:[#allocation5 + $0xc0] sm:$0xff]
        %v9749 = vld [vmem:[#allocation5 + $0xc8] sm:$0xff]
        %v9750 = vld [vmem:[#allocation5 + $0xd0] sm:$0xff]
        %v9751 = vld [vmem:[#allocation5 + $0xd8] sm:$0xff]
        %v9752 = vld [vmem:[#allocation5 + $0xe0] sm:$0xff]
        %v9753 = vld [vmem:[#allocation5 + $0xe8] sm:$0xff]
        %v9754 = vld [vmem:[#allocation5 + $0xf0] sm:$0xff]
        %v9755 = vld [vmem:[#allocation5 + $0xf8] sm:$0xff]
        %v9756 = vld [vmem:[#allocation5 + $0x100] sm:$0xff]
        %v9757 = vld [vmem:[#allocation5 + $0x108] sm:$0xff]
        %v9758 = vld [vmem:[#allocation5 + $0x110] sm:$0xff]
        %v9759 = vld [vmem:[#allocation5 + $0x118] sm:$0xff]
        %v9760 = vld [vmem:[#allocation5 + $0x120] sm:$0xff]
        %v9761 = vld [vmem:[#allocation5 + $0x128] sm:$0xff]
        %v9762 = vld [vmem:[#allocation5 + $0x130] sm:$0xff]
        %v9763 = vld [vmem:[#allocation5 + $0x138] sm:$0xff]
        %v9764 = vld [vmem:[#allocation5 + $0x140] sm:$0xff]
        %v9765 = vld [vmem:[#allocation5 + $0x148] sm:$0xff]
        %v9766 = vld [vmem:[#allocation5 + $0x150] sm:$0xff]
        %v9767 = vld [vmem:[#allocation5 + $0x158] sm:$0xff]
        %v9768 = vld [vmem:[#allocation5 + $0x160] sm:$0xff]
        %v9769 = vld [vmem:[#allocation5 + $0x168] sm:$0xff]
        %v9770 = vld [vmem:[#allocation5 + $0x170] sm:$0xff]
        %v9771 = vld [vmem:[#allocation5 + $0x178] sm:$0xff]
        %v9772 = vld [vmem:[#allocation5 + $0x180] sm:$0xff]
        %v9773 = vld [vmem:[#allocation5 + $0x188] sm:$0xff]
        %v9774 = vld [vmem:[#allocation5 + $0x190] sm:$0xff]
        %v9775 = vld [vmem:[#allocation5 + $0x198] sm:$0xff]
        %v9776 = vld [vmem:[#allocation5 + $0x1a0] sm:$0xff]
        %v9777 = vld [vmem:[#allocation5 + $0x1a8] sm:$0xff]
        %v9778 = vld [vmem:[#allocation5 + $0x1b0] sm:$0xff]
        %v9779 = vld [vmem:[#allocation5 + $0x1b8] sm:$0xff]
        %v9780 = vld [vmem:[#allocation5 + $0x1c0] sm:$0xff]
        %v9781 = vld [vmem:[#allocation5 + $0x1c8] sm:$0xff]
        %v9782 = vld [vmem:[#allocation5 + $0x1d0] sm:$0xff]
        %v9783 = vld [vmem:[#allocation5 + $0x1d8] sm:$0xff]
        %v9784 = vld [vmem:[#allocation5 + $0x1e0] sm:$0xff]
        %v9785 = vld [vmem:[#allocation5 + $0x1e8] sm:$0xff]
        %v9786 = vld [vmem:[#allocation5 + $0x1f0] sm:$0xff]
        %v9787 = vld [vmem:[#allocation5 + $0x1f8] sm:$0xff]
        %v9788 = vld [vmem:[#allocation5 + $0x200] sm:$0xff]
        %v9789 = vld [vmem:[#allocation5 + $0x208] sm:$0xff]
        %v9790 = vld [vmem:[#allocation5 + $0x210] sm:$0xff]
        %v9791 = vld [vmem:[#allocation5 + $0x218] sm:$0xff]
        %v9792 = vld [vmem:[#allocation5 + $0x220] sm:$0xff]
        %v9793 = vld [vmem:[#allocation5 + $0x228] sm:$0xff]
        %v9794 = vld [vmem:[#allocation5 + $0x230] sm:$0xff]
        %v9795 = vld [vmem:[#allocation5 + $0x238] sm:$0xff]
        %v9796 = vld [vmem:[#allocation5 + $0x240] sm:$0xff]
        %v9797 = vld [vmem:[#allocation5 + $0x248] sm:$0xff]
        %v9798 = vld [vmem:[#allocation5 + $0x250] sm:$0xff]
        %v9799 = vld [vmem:[#allocation5 + $0x258] sm:$0xff]
        %v9800 = vld [vmem:[#allocation5 + $0x260] sm:$0xff]
        %v9801 = vld [vmem:[#allocation5 + $0x268] sm:$0xff]
        %v9802 = vld [vmem:[#allocation5 + $0x270] sm:$0xff]
        %v9803 = vld [vmem:[#allocation5 + $0x278] sm:$0xff]
        %v9804 = vld [vmem:[#allocation5 + $0x280] sm:$0xff]
        %v9805 = vld [vmem:[#allocation5 + $0x288] sm:$0xff]
        %v9806 = vld [vmem:[#allocation5 + $0x290] sm:$0xff]
        %v9807 = vld [vmem:[#allocation5 + $0x298] sm:$0xff]
        %v9808 = vld [vmem:[#allocation5 + $0x2a0] sm:$0xff]
        %v9809 = vld [vmem:[#allocation5 + $0x2a8] sm:$0xff]
        %v9810 = vld [vmem:[#allocation5 + $0x2b0] sm:$0xff]
        %v9811 = vld [vmem:[#allocation5 + $0x2b8] sm:$0xff]
        %v9812 = vld [vmem:[#allocation5 + $0x2c0] sm:$0xff]
        %v9813 = vld [vmem:[#allocation5 + $0x2c8] sm:$0xff]
        %v9814 = vld [vmem:[#allocation5 + $0x2d0] sm:$0xff]
        %v9815 = vld [vmem:[#allocation5 + $0x2d8] sm:$0xff]
        %v9816 = vld [vmem:[#allocation5 + $0x2e0] sm:$0xff]
        %v9817 = vld [vmem:[#allocation5 + $0x2e8] sm:$0xff]
        %v9818 = vld [vmem:[#allocation5 + $0x2f0] sm:$0xff]
        %v9819 = vld [vmem:[#allocation5 + $0x2f8] sm:$0xff]
        %v9820 = vld [vmem:[#allocation5 + $0x300] sm:$0xff]
        %v9821 = vld [vmem:[#allocation5 + $0x308] sm:$0xff]
        %v9822 = vld [vmem:[#allocation5 + $0x310] sm:$0xff]
        %v9823 = vld [vmem:[#allocation5 + $0x318] sm:$0xff]
        %v9824 = vld [vmem:[#allocation5 + $0x320] sm:$0xff]
        %v9825 = vld [vmem:[#allocation5 + $0x328] sm:$0xff]
        %v9826 = vld [vmem:[#allocation5 + $0x330] sm:$0xff]
        %v9827 = vld [vmem:[#allocation5 + $0x338] sm:$0xff]
        %v9828 = vld [vmem:[#allocation5 + $0x340] sm:$0xff]
        %v9829 = vld [vmem:[#allocation5 + $0x348] sm:$0xff]
        %v9830 = vld [vmem:[#allocation5 + $0x350] sm:$0xff]
        %v9831 = vld [vmem:[#allocation5 + $0x358] sm:$0xff]
        %v9832 = vld [vmem:[#allocation5 + $0x360] sm:$0xff]
        %v9833 = vld [vmem:[#allocation5 + $0x368] sm:$0xff]
        %v9834 = vld [vmem:[#allocation5 + $0x370] sm:$0xff]
        %v9835 = vld [vmem:[#allocation5 + $0x378] sm:$0xff]
        %v9836 = vld [vmem:[#allocation5 + $0x380] sm:$0xff]
        %v9837 = vld [vmem:[#allocation5 + $0x388] sm:$0xff]
        %v9838 = vld [vmem:[#allocation5 + $0x390] sm:$0xff]
        %v9839 = vld [vmem:[#allocation5 + $0x398] sm:$0xff]
        %v9840 = vld [vmem:[#allocation5 + $0x3a0] sm:$0xff]
        %v9841 = vld [vmem:[#allocation5 + $0x3a8] sm:$0xff]
        %v9842 = vld [vmem:[#allocation5 + $0x3b0] sm:$0xff]
        %v9843 = vld [vmem:[#allocation5 + $0x3b8] sm:$0xff]
        %v9844 = vld [vmem:[#allocation5 + $0x3c0] sm:$0xff]
        %v9845 = vld [vmem:[#allocation5 + $0x3c8] sm:$0xff]
        %v9846 = vld [vmem:[#allocation5 + $0x3d0] sm:$0xff]
        %v9847 = vld [vmem:[#allocation5 + $0x3d8] sm:$0xff]
        %v9848 = vld [vmem:[#allocation5 + $0x3e0] sm:$0xff]
        %v9849 = vld [vmem:[#allocation5 + $0x3e8] sm:$0xff]
        %v9850 = vld [vmem:[#allocation5 + $0x3f0] sm:$0xff]
        %v9851 = vld [vmem:[#allocation5 + $0x3f8] sm:$0xff]
        %v9852 = vld [vmem:[#allocation5 + $0x400] sm:$0xff]
        %v9853 = vld [vmem:[#allocation5 + $0x408] sm:$0xff]
        %v9854 = vld [vmem:[#allocation5 + $0x410] sm:$0xff]
        %v9855 = vld [vmem:[#allocation5 + $0x418] sm:$0xff]
        %v9856 = vld [vmem:[#allocation5 + $0x420] sm:$0xff]
        %v9857 = vld [vmem:[#allocation5 + $0x428] sm:$0xff]
        %v9858 = vld [vmem:[#allocation5 + $0x430] sm:$0xff]
        %v9859 = vld [vmem:[#allocation5 + $0x438] sm:$0xff]
        %v9860 = vld [vmem:[#allocation5 + $0x440] sm:$0xff]
        %v9861 = vld [vmem:[#allocation5 + $0x448] sm:$0xff]
        %v9862 = vld [vmem:[#allocation5 + $0x450] sm:$0xff]
        %v9863 = vld [vmem:[#allocation5 + $0x458] sm:$0xff]
        %v9864 = vld [vmem:[#allocation5 + $0x460] sm:$0xff]
        %v9865 = vld [vmem:[#allocation5 + $0x468] sm:$0xff]
        %v9866 = vld [vmem:[#allocation5 + $0x470] sm:$0xff]
        %v9867 = vld [vmem:[#allocation5 + $0x478] sm:$0xff]
        %v9868 = vld [vmem:[#allocation5 + $0x480] sm:$0xff]
        %v9869 = vld [vmem:[#allocation5 + $0x488] sm:$0xff]
        %v9870 = vld [vmem:[#allocation5 + $0x490] sm:$0xff]
        %v9871 = vld [vmem:[#allocation5 + $0x498] sm:$0xff]
        %v9872 = vld [vmem:[#allocation5 + $0x4a0] sm:$0xff]
        %v9873 = vld [vmem:[#allocation5 + $0x4a8] sm:$0xff]
        %v9874 = vld [vmem:[#allocation5 + $0x4b0] sm:$0xff]
        %v9875 = vld [vmem:[#allocation5 + $0x4b8] sm:$0xff]
        %v9876 = vld [vmem:[#allocation5 + $0x4c0] sm:$0xff]
        %v9877 = vld [vmem:[#allocation5 + $0x4c8] sm:$0xff]
        %v9878 = vld [vmem:[#allocation5 + $0x4d0] sm:$0xff]
        %v9879 = vld [vmem:[#allocation5 + $0x4d8] sm:$0xff]
        %v9880 = vld [vmem:[#allocation5 + $0x4e0] sm:$0xff]
        %v9881 = vld [vmem:[#allocation5 + $0x4e8] sm:$0xff]
        %v9882 = vld [vmem:[#allocation5 + $0x4f0] sm:$0xff]
        %v9883 = vld [vmem:[#allocation5 + $0x4f8] sm:$0xff]
        %v9884 = vld [vmem:[%s14] sm:$0xf]
        %v9885 = vld [vmem:[%s14 + $0x4] sm:$0xf]
        %v9886 = vld [vmem:[%s14 + $0x8] sm:$0xf]
        %v9887 = vld [vmem:[%s14 + $0xc] sm:$0xf]
        %v9888 = vld [vmem:[%s14 + $0x10] sm:$0xf]
        %v9889 = vld [vmem:[%s14 + $0x14] sm:$0xf]
        %v9890 = vld [vmem:[%s14 + $0x18] sm:$0xf]
        %v9891 = vld [vmem:[%s14 + $0x1c] sm:$0xf]
        %v9892 = vld [vmem:[%s14 + $0x20] sm:$0xf]
        %v9893 = vld [vmem:[%s14 + $0x24] sm:$0xf]
        %v9894 = vld [vmem:[%s14 + $0x28] sm:$0xf]
        %v9895 = vld [vmem:[%s14 + $0x2c] sm:$0xf]
        %v9896 = vld [vmem:[%s14 + $0x30] sm:$0xf]
        %v9897 = vld [vmem:[%s14 + $0x34] sm:$0xf]
        %v9898 = vld [vmem:[%s14 + $0x38] sm:$0xf]
        %v9899 = vld [vmem:[%s14 + $0x3c] sm:$0xf]
        %v9900 = vld [vmem:[%s14 + $0x40] sm:$0xf]
        %v9901 = vld [vmem:[%s14 + $0x44] sm:$0xf]
        %v9902 = vld [vmem:[%s14 + $0x48] sm:$0xf]
        %v9903 = vld [vmem:[%s14 + $0x4c] sm:$0xf]
        %v9904 = vld [vmem:[%s14 + $0x50] sm:$0xf]
        %v9905 = vld [vmem:[%s14 + $0x54] sm:$0xf]
        %v9906 = vld [vmem:[%s14 + $0x58] sm:$0xf]
        %v9907 = vld [vmem:[%s14 + $0x5c] sm:$0xf]
        %v9908 = vld [vmem:[%s14 + $0x60] sm:$0xf]
        %v9909 = vld [vmem:[%s14 + $0x64] sm:$0xf]
        %v9910 = vld [vmem:[%s14 + $0x68] sm:$0xf]
        %v9911 = vld [vmem:[%s14 + $0x6c] sm:$0xf]
        %v9912 = vld [vmem:[%s14 + $0x70] sm:$0xf]
        %v9913 = vld [vmem:[%s14 + $0x74] sm:$0xf]
        %v9914 = vld [vmem:[%s14 + $0x78] sm:$0xf]
        %v9915 = vld [vmem:[%s14 + $0x7c] sm:$0xf]
        %v9916 = vld [vmem:[%s14 + $0x80] sm:$0xf]
        %v9917 = vld [vmem:[%s14 + $0x84] sm:$0xf]
        %v9918 = vld [vmem:[%s14 + $0x88] sm:$0xf]
        %v9919 = vld [vmem:[%s14 + $0x8c] sm:$0xf]
        %v9920 = vld [vmem:[%s14 + $0x90] sm:$0xf]
        %v9921 = vld [vmem:[%s14 + $0x94] sm:$0xf]
        %v9922 = vld [vmem:[%s14 + $0x98] sm:$0xf]
        %v9923 = vld [vmem:[%s14 + $0x9c] sm:$0xf]
        %v9924 = vld [vmem:[%s14 + $0xa0] sm:$0xf]
        %v9925 = vld [vmem:[%s14 + $0xa4] sm:$0xf]
        %v9926 = vld [vmem:[%s14 + $0xa8] sm:$0xf]
        %v9927 = vld [vmem:[%s14 + $0xac] sm:$0xf]
        %v9928 = vld [vmem:[%s14 + $0xb0] sm:$0xf]
        %v9929 = vld [vmem:[%s14 + $0xb4] sm:$0xf]
        %v9930 = vld [vmem:[%s14 + $0xb8] sm:$0xf]
        %v9931 = vld [vmem:[%s14 + $0xbc] sm:$0xf]
        %v9932 = vld [vmem:[%s14 + $0xc0] sm:$0xf]
        %v9933 = vld [vmem:[%s14 + $0xc4] sm:$0xf]
        %v9934 = vld [vmem:[%s14 + $0xc8] sm:$0xf]
        %v9935 = vld [vmem:[%s14 + $0xcc] sm:$0xf]
        %v9936 = vld [vmem:[%s14 + $0xd0] sm:$0xf]
        %v9937 = vld [vmem:[%s14 + $0xd4] sm:$0xf]
        %v9938 = vld [vmem:[%s14 + $0xd8] sm:$0xf]
        %v9939 = vld [vmem:[%s14 + $0xdc] sm:$0xf]
        %v9940 = vld [vmem:[%s14 + $0xe0] sm:$0xf]
        %v9941 = vld [vmem:[%s14 + $0xe4] sm:$0xf]
        %v9942 = vld [vmem:[%s14 + $0xe8] sm:$0xf]
        %v9943 = vld [vmem:[%s14 + $0xec] sm:$0xf]
        %v9944 = vld [vmem:[%s14 + $0xf0] sm:$0xf]
        %v9945 = vld [vmem:[%s14 + $0xf4] sm:$0xf]
        %v9946 = vld [vmem:[%s14 + $0xf8] sm:$0xf]
        %v9947 = vld [vmem:[%s14 + $0xfc] sm:$0xf]
        %v9948 = vld [vmem:[%s14 + $0x100] sm:$0xf]
        %v9949 = vld [vmem:[%s14 + $0x104] sm:$0xf]
        %v9950 = vld [vmem:[%s14 + $0x108] sm:$0xf]
        %v9951 = vld [vmem:[%s14 + $0x10c] sm:$0xf]
        %v9952 = vld [vmem:[%s14 + $0x110] sm:$0xf]
        %v9953 = vld [vmem:[%s14 + $0x114] sm:$0xf]
        %v9954 = vld [vmem:[%s14 + $0x118] sm:$0xf]
        %v9955 = vld [vmem:[%s14 + $0x11c] sm:$0xf]
        %v9956 = vld [vmem:[%s14 + $0x120] sm:$0xf]
        %v9957 = vld [vmem:[%s14 + $0x124] sm:$0xf]
        %v9958 = vld [vmem:[%s14 + $0x128] sm:$0xf]
        %v9959 = vld [vmem:[%s14 + $0x12c] sm:$0xf]
        %v9960 = vld [vmem:[%s14 + $0x130] sm:$0xf]
        %v9961 = vld [vmem:[%s14 + $0x134] sm:$0xf]
        %v9962 = vld [vmem:[%s14 + $0x138] sm:$0xf]
        %v9963 = vld [vmem:[%s14 + $0x13c] sm:$0xf]
        %v9964 = vld [vmem:[%s14 + $0x140] sm:$0xf]
        %v9965 = vld [vmem:[%s14 + $0x144] sm:$0xf]
        %v9966 = vld [vmem:[%s14 + $0x148] sm:$0xf]
        %v9967 = vld [vmem:[%s14 + $0x14c] sm:$0xf]
        %v9968 = vld [vmem:[%s14 + $0x150] sm:$0xf]
        %v9969 = vld [vmem:[%s14 + $0x154] sm:$0xf]
        %v9970 = vld [vmem:[%s14 + $0x158] sm:$0xf]
        %v9971 = vld [vmem:[%s14 + $0x15c] sm:$0xf]
        %v9972 = vld [vmem:[%s14 + $0x160] sm:$0xf]
        %v9973 = vld [vmem:[%s14 + $0x164] sm:$0xf]
        %v9974 = vld [vmem:[%s14 + $0x168] sm:$0xf]
        %v9975 = vld [vmem:[%s14 + $0x16c] sm:$0xf]
        %v9976 = vld [vmem:[%s14 + $0x170] sm:$0xf]
        %v9977 = vld [vmem:[%s14 + $0x174] sm:$0xf]
        %v9978 = vld [vmem:[%s14 + $0x178] sm:$0xf]
        %v9979 = vld [vmem:[%s14 + $0x17c] sm:$0xf]
        %v9980 = vld [vmem:[%s14 + $0x180] sm:$0xf]
        %v9981 = vld [vmem:[%s14 + $0x184] sm:$0xf]
        %v9982 = vld [vmem:[%s14 + $0x188] sm:$0xf]
        %v9983 = vld [vmem:[%s14 + $0x18c] sm:$0xf]
        %v9984 = vld [vmem:[%s14 + $0x190] sm:$0xf]
        %v9985 = vld [vmem:[%s14 + $0x194] sm:$0xf]
        %v9986 = vld [vmem:[%s14 + $0x198] sm:$0xf]
        %v9987 = vld [vmem:[%s14 + $0x19c] sm:$0xf]
        %v9988 = vld [vmem:[%s14 + $0x1a0] sm:$0xf]
        %v9989 = vld [vmem:[%s14 + $0x1a4] sm:$0xf]
        %v9990 = vld [vmem:[%s14 + $0x1a8] sm:$0xf]
        %v9991 = vld [vmem:[%s14 + $0x1ac] sm:$0xf]
        %v9992 = vld [vmem:[%s14 + $0x1b0] sm:$0xf]
        %v9993 = vld [vmem:[%s14 + $0x1b4] sm:$0xf]
        %v9994 = vld [vmem:[%s14 + $0x1b8] sm:$0xf]
        %v9995 = vld [vmem:[%s14 + $0x1bc] sm:$0xf]
        %v9996 = vld [vmem:[%s14 + $0x1c0] sm:$0xf]
        %v9997 = vld [vmem:[%s14 + $0x1c4] sm:$0xf]
        %v9998 = vld [vmem:[%s14 + $0x1c8] sm:$0xf]
        %v9999 = vld [vmem:[%s14 + $0x1cc] sm:$0xf]
        %v10000 = vld [vmem:[%s14 + $0x1d0] sm:$0xf]
        %v10001 = vld [vmem:[%s14 + $0x1d4] sm:$0xf]
        %v10002 = vld [vmem:[%s14 + $0x1d8] sm:$0xf]
        %v10003 = vld [vmem:[%s14 + $0x1dc] sm:$0xf]
        %v10004 = vld [vmem:[%s14 + $0x1e0] sm:$0xf]
        %v10005 = vld [vmem:[%s14 + $0x1e4] sm:$0xf]
        %v10006 = vld [vmem:[%s14 + $0x1e8] sm:$0xf]
        %v10007 = vld [vmem:[%s14 + $0x1ec] sm:$0xf]
        %v10008 = vld [vmem:[%s14 + $0x1f0] sm:$0xf]
        %v10009 = vld [vmem:[%s14 + $0x1f4] sm:$0xf]
        %v10010 = vld [vmem:[%s14 + $0x1f8] sm:$0xf]
        %v10011 = vld [vmem:[%s14 + $0x1fc] sm:$0xf]
        %v10012 = vld [vmem:[%s14 + $0x200] sm:$0xf]
        %v10013 = vld [vmem:[%s14 + $0x204] sm:$0xf]
        %v10014 = vld [vmem:[%s14 + $0x208] sm:$0xf]
        %v10015 = vld [vmem:[%s14 + $0x20c] sm:$0xf]
        %v10016 = vld [vmem:[%s14 + $0x210] sm:$0xf]
        %v10017 = vld [vmem:[%s14 + $0x214] sm:$0xf]
        %v10018 = vld [vmem:[%s14 + $0x218] sm:$0xf]
        %v10019 = vld [vmem:[%s14 + $0x21c] sm:$0xf]
        %v10020 = vld [vmem:[%s14 + $0x220] sm:$0xf]
        %v10021 = vld [vmem:[%s14 + $0x224] sm:$0xf]
        %v10022 = vld [vmem:[%s14 + $0x228] sm:$0xf]
        %v10023 = vld [vmem:[%s14 + $0x22c] sm:$0xf]
        %v10024 = vld [vmem:[%s14 + $0x230] sm:$0xf]
        %v10025 = vld [vmem:[%s14 + $0x234] sm:$0xf]
        %v10026 = vld [vmem:[%s14 + $0x238] sm:$0xf]
        %v10027 = vld [vmem:[%s14 + $0x23c] sm:$0xf]
        %v10028 = vld [vmem:[%s14 + $0x240] sm:$0xf]
        %v10029 = vld [vmem:[%s14 + $0x244] sm:$0xf]
        %v10030 = vld [vmem:[%s14 + $0x248] sm:$0xf]
        %v10031 = vld [vmem:[%s14 + $0x24c] sm:$0xf]
        %v10032 = vld [vmem:[%s14 + $0x250] sm:$0xf]
        %v10033 = vld [vmem:[%s14 + $0x254] sm:$0xf]
        %v10034 = vld [vmem:[%s14 + $0x258] sm:$0xf]
        %v10035 = vld [vmem:[%s14 + $0x25c] sm:$0xf]
        %v10036 = vld [vmem:[%s14 + $0x260] sm:$0xf]
        %v10037 = vld [vmem:[%s14 + $0x264] sm:$0xf]
        %v10038 = vld [vmem:[%s14 + $0x268] sm:$0xf]
        %v10039 = vld [vmem:[%s14 + $0x26c] sm:$0xf]
        %v10040 = vld [vmem:[%s14 + $0x270] sm:$0xf]
        %v10041 = vld [vmem:[%s14 + $0x274] sm:$0xf]
        %v10042 = vld [vmem:[%s14 + $0x278] sm:$0xf]
        %v10043 = vld [vmem:[%s14 + $0x27c] sm:$0xf]
        %v10044 = vld [vmem:[%s15] sm:$0x1]
        %v10046 = vlaneseq
        %v10047 = vshrl.u32 %v10046, 7
        %v10048 = vsub.s32 0, %v10047
        %v10049 = vrot.slane %v10044, %v10048
        %v10211 = vunpack.c.l.b16 %v9884
        %v10212 = vunpack.c.l.b16 %v9885
        %v10213 = vunpack.c.l.b16 %v9886
        %v10214 = vunpack.c.l.b16 %v9887
        %v10215 = vunpack.c.l.b16 %v9888
        %v10216 = vunpack.c.l.b16 %v9889
        %v10217 = vunpack.c.l.b16 %v9890
        %v10218 = vunpack.c.l.b16 %v9891
        %v10219 = vunpack.c.l.b16 %v9892
        %v10220 = vunpack.c.l.b16 %v9893
        %v10221 = vunpack.c.l.b16 %v9894
        %v10222 = vunpack.c.l.b16 %v9895
        %v10223 = vunpack.c.l.b16 %v9896
        %v10224 = vunpack.c.l.b16 %v9897
        %v10225 = vunpack.c.l.b16 %v9898
        %v10226 = vunpack.c.l.b16 %v9899
        %v10227 = vunpack.c.l.b16 %v9900
        %v10228 = vunpack.c.l.b16 %v9901
        %v10229 = vunpack.c.l.b16 %v9902
        %v10230 = vunpack.c.l.b16 %v9903
        %v10231 = vunpack.c.l.b16 %v9904
        %v10232 = vunpack.c.l.b16 %v9905
        %v10233 = vunpack.c.l.b16 %v9906
        %v10234 = vunpack.c.l.b16 %v9907
        %v10235 = vunpack.c.l.b16 %v9908
        %v10236 = vunpack.c.l.b16 %v9909
        %v10237 = vunpack.c.l.b16 %v9910
        %v10238 = vunpack.c.l.b16 %v9911
        %v10239 = vunpack.c.l.b16 %v9912
        %v10240 = vunpack.c.l.b16 %v9913
        %v10241 = vunpack.c.l.b16 %v9914
        %v10242 = vunpack.c.l.b16 %v9915
        %v10243 = vunpack.c.l.b16 %v9916
        %v10244 = vunpack.c.l.b16 %v9917
        %v10245 = vunpack.c.l.b16 %v9918
        %v10246 = vunpack.c.l.b16 %v9919
        %v10247 = vunpack.c.l.b16 %v9920
        %v10248 = vunpack.c.l.b16 %v9921
        %v10249 = vunpack.c.l.b16 %v9922
        %v10250 = vunpack.c.l.b16 %v9923
        %v10251 = vunpack.c.l.b16 %v9924
        %v10252 = vunpack.c.l.b16 %v9925
        %v10253 = vunpack.c.l.b16 %v9926
        %v10254 = vunpack.c.l.b16 %v9927
        %v10255 = vunpack.c.l.b16 %v9928
        %v10256 = vunpack.c.l.b16 %v9929
        %v10257 = vunpack.c.l.b16 %v9930
        %v10258 = vunpack.c.l.b16 %v9931
        %v10259 = vunpack.c.l.b16 %v9932
        %v10260 = vunpack.c.l.b16 %v9933
        %v10261 = vunpack.c.l.b16 %v9934
        %v10262 = vunpack.c.l.b16 %v9935
        %v10263 = vunpack.c.l.b16 %v9936
        %v10264 = vunpack.c.l.b16 %v9937
        %v10265 = vunpack.c.l.b16 %v9938
        %v10266 = vunpack.c.l.b16 %v9939
        %v10267 = vunpack.c.l.b16 %v9940
        %v10268 = vunpack.c.l.b16 %v9941
        %v10269 = vunpack.c.l.b16 %v9942
        %v10270 = vunpack.c.l.b16 %v9943
        %v10271 = vunpack.c.l.b16 %v9944
        %v10272 = vunpack.c.l.b16 %v9945
        %v10273 = vunpack.c.l.b16 %v9946
        %v10274 = vunpack.c.l.b16 %v9947
        %v10275 = vunpack.c.l.b16 %v9948
        %v10276 = vunpack.c.l.b16 %v9949
        %v10277 = vunpack.c.l.b16 %v9950
        %v10278 = vunpack.c.l.b16 %v9951
        %v10279 = vunpack.c.l.b16 %v9952
        %v10280 = vunpack.c.l.b16 %v9953
        %v10281 = vunpack.c.l.b16 %v9954
        %v10282 = vunpack.c.l.b16 %v9955
        %v10283 = vunpack.c.l.b16 %v9956
        %v10284 = vunpack.c.l.b16 %v9957
        %v10285 = vunpack.c.l.b16 %v9958
        %v10286 = vunpack.c.l.b16 %v9959
        %v10287 = vunpack.c.l.b16 %v9960
        %v10288 = vunpack.c.l.b16 %v9961
        %v10289 = vunpack.c.l.b16 %v9962
        %v10290 = vunpack.c.l.b16 %v9963
        %v10291 = vunpack.c.l.b16 %v9964
        %v10292 = vunpack.c.l.b16 %v9965
        %v10293 = vunpack.c.l.b16 %v9966
        %v10294 = vunpack.c.l.b16 %v9967
        %v10295 = vunpack.c.l.b16 %v9968
        %v10296 = vunpack.c.l.b16 %v9969
        %v10297 = vunpack.c.l.b16 %v9970
        %v10298 = vunpack.c.l.b16 %v9971
        %v10299 = vunpack.c.l.b16 %v9972
        %v10300 = vunpack.c.l.b16 %v9973
        %v10301 = vunpack.c.l.b16 %v9974
        %v10302 = vunpack.c.l.b16 %v9975
        %v10303 = vunpack.c.l.b16 %v9976
        %v10304 = vunpack.c.l.b16 %v9977
        %v10305 = vunpack.c.l.b16 %v9978
        %v10306 = vunpack.c.l.b16 %v9979
        %v10307 = vunpack.c.l.b16 %v9980
        %v10308 = vunpack.c.l.b16 %v9981
        %v10309 = vunpack.c.l.b16 %v9982
        %v10310 = vunpack.c.l.b16 %v9983
        %v10311 = vunpack.c.l.b16 %v9984
        %v10312 = vunpack.c.l.b16 %v9985
        %v10313 = vunpack.c.l.b16 %v9986
        %v10314 = vunpack.c.l.b16 %v9987
        %v10315 = vunpack.c.l.b16 %v9988
        %v10316 = vunpack.c.l.b16 %v9989
        %v10317 = vunpack.c.l.b16 %v9990
        %v10318 = vunpack.c.l.b16 %v9991
        %v10319 = vunpack.c.l.b16 %v9992
        %v10320 = vunpack.c.l.b16 %v9993
        %v10321 = vunpack.c.l.b16 %v9994
        %v10322 = vunpack.c.l.b16 %v9995
        %v10323 = vunpack.c.l.b16 %v9996
        %v10324 = vunpack.c.l.b16 %v9997
        %v10325 = vunpack.c.l.b16 %v9998
        %v10326 = vunpack.c.l.b16 %v9999
        %v10327 = vunpack.c.l.b16 %v10000
        %v10328 = vunpack.c.l.b16 %v10001
        %v10329 = vunpack.c.l.b16 %v10002
        %v10330 = vunpack.c.l.b16 %v10003
        %v10331 = vunpack.c.l.b16 %v10004
        %v10332 = vunpack.c.l.b16 %v10005
        %v10333 = vunpack.c.l.b16 %v10006
        %v10334 = vunpack.c.l.b16 %v10007
        %v10335 = vunpack.c.l.b16 %v10008
        %v10336 = vunpack.c.l.b16 %v10009
        %v10337 = vunpack.c.l.b16 %v10010
        %v10338 = vunpack.c.l.b16 %v10011
        %v10339 = vunpack.c.l.b16 %v10012
        %v10340 = vunpack.c.l.b16 %v10013
        %v10341 = vunpack.c.l.b16 %v10014
        %v10342 = vunpack.c.l.b16 %v10015
        %v10343 = vunpack.c.l.b16 %v10016
        %v10344 = vunpack.c.l.b16 %v10017
        %v10345 = vunpack.c.l.b16 %v10018
        %v10346 = vunpack.c.l.b16 %v10019
        %v10347 = vunpack.c.l.b16 %v10020
        %v10348 = vunpack.c.l.b16 %v10021
        %v10349 = vunpack.c.l.b16 %v10022
        %v10350 = vunpack.c.l.b16 %v10023
        %v10351 = vunpack.c.l.b16 %v10024
        %v10352 = vunpack.c.l.b16 %v10025
        %v10353 = vunpack.c.l.b16 %v10026
        %v10354 = vunpack.c.l.b16 %v10027
        %v10355 = vunpack.c.l.b16 %v10028
        %v10356 = vunpack.c.l.b16 %v10029
        %v10357 = vunpack.c.l.b16 %v10030
        %v10358 = vunpack.c.l.b16 %v10031
        %v10359 = vunpack.c.l.b16 %v10032
        %v10360 = vunpack.c.l.b16 %v10033
        %v10361 = vunpack.c.l.b16 %v10034
        %v10362 = vunpack.c.l.b16 %v10035
        %v10363 = vunpack.c.l.b16 %v10036
        %v10364 = vunpack.c.l.b16 %v10037
        %v10365 = vunpack.c.l.b16 %v10038
        %v10366 = vunpack.c.l.b16 %v10039
        %v10367 = vunpack.c.l.b16 %v10040
        %v10368 = vunpack.c.l.b16 %v10041
        %v10369 = vunpack.c.l.b16 %v10042
        %v10370 = vunpack.c.l.b16 %v10043
        %v10371 = vpack.c.b16 %v10212, %v10211
        %v10372 = vpack.c.b16 %v10214, %v10213
        %v10373 = vpack.c.b16 %v10216, %v10215
        %v10374 = vpack.c.b16 %v10218, %v10217
        %v10375 = vpack.c.b16 %v10220, %v10219
        %v10376 = vpack.c.b16 %v10222, %v10221
        %v10377 = vpack.c.b16 %v10224, %v10223
        %v10378 = vpack.c.b16 %v10226, %v10225
        %v10379 = vpack.c.b16 %v10228, %v10227
        %v10380 = vpack.c.b16 %v10230, %v10229
        %v10381 = vpack.c.b16 %v10232, %v10231
        %v10382 = vpack.c.b16 %v10234, %v10233
        %v10383 = vpack.c.b16 %v10236, %v10235
        %v10384 = vpack.c.b16 %v10238, %v10237
        %v10385 = vpack.c.b16 %v10240, %v10239
        %v10386 = vpack.c.b16 %v10242, %v10241
        %v10387 = vpack.c.b16 %v10244, %v10243
        %v10388 = vpack.c.b16 %v10246, %v10245
        %v10389 = vpack.c.b16 %v10248, %v10247
        %v10390 = vpack.c.b16 %v10250, %v10249
        %v10391 = vpack.c.b16 %v10252, %v10251
        %v10392 = vpack.c.b16 %v10254, %v10253
        %v10393 = vpack.c.b16 %v10256, %v10255
        %v10394 = vpack.c.b16 %v10258, %v10257
        %v10395 = vpack.c.b16 %v10260, %v10259
        %v10396 = vpack.c.b16 %v10262, %v10261
        %v10397 = vpack.c.b16 %v10264, %v10263
        %v10398 = vpack.c.b16 %v10266, %v10265
        %v10399 = vpack.c.b16 %v10268, %v10267
        %v10400 = vpack.c.b16 %v10270, %v10269
        %v10401 = vpack.c.b16 %v10272, %v10271
        %v10402 = vpack.c.b16 %v10274, %v10273
        %v10403 = vpack.c.b16 %v10276, %v10275
        %v10404 = vpack.c.b16 %v10278, %v10277
        %v10405 = vpack.c.b16 %v10280, %v10279
        %v10406 = vpack.c.b16 %v10282, %v10281
        %v10407 = vpack.c.b16 %v10284, %v10283
        %v10408 = vpack.c.b16 %v10286, %v10285
        %v10409 = vpack.c.b16 %v10288, %v10287
        %v10410 = vpack.c.b16 %v10290, %v10289
        %v10411 = vpack.c.b16 %v10292, %v10291
        %v10412 = vpack.c.b16 %v10294, %v10293
        %v10413 = vpack.c.b16 %v10296, %v10295
        %v10414 = vpack.c.b16 %v10298, %v10297
        %v10415 = vpack.c.b16 %v10300, %v10299
        %v10416 = vpack.c.b16 %v10302, %v10301
        %v10417 = vpack.c.b16 %v10304, %v10303
        %v10418 = vpack.c.b16 %v10306, %v10305
        %v10419 = vpack.c.b16 %v10308, %v10307
        %v10420 = vpack.c.b16 %v10310, %v10309
        %v10421 = vpack.c.b16 %v10312, %v10311
        %v10422 = vpack.c.b16 %v10314, %v10313
        %v10423 = vpack.c.b16 %v10316, %v10315
        %v10424 = vpack.c.b16 %v10318, %v10317
        %v10425 = vpack.c.b16 %v10320, %v10319
        %v10426 = vpack.c.b16 %v10322, %v10321
        %v10427 = vpack.c.b16 %v10324, %v10323
        %v10428 = vpack.c.b16 %v10326, %v10325
        %v10429 = vpack.c.b16 %v10328, %v10327
        %v10430 = vpack.c.b16 %v10330, %v10329
        %v10431 = vpack.c.b16 %v10332, %v10331
        %v10432 = vpack.c.b16 %v10334, %v10333
        %v10433 = vpack.c.b16 %v10336, %v10335
        %v10434 = vpack.c.b16 %v10338, %v10337
        %v10435 = vpack.c.b16 %v10340, %v10339
        %v10436 = vpack.c.b16 %v10342, %v10341
        %v10437 = vpack.c.b16 %v10344, %v10343
        %v10438 = vpack.c.b16 %v10346, %v10345
        %v10439 = vpack.c.b16 %v10348, %v10347
        %v10440 = vpack.c.b16 %v10350, %v10349
        %v10441 = vpack.c.b16 %v10352, %v10351
        %v10442 = vpack.c.b16 %v10354, %v10353
        %v10443 = vpack.c.b16 %v10356, %v10355
        %v10444 = vpack.c.b16 %v10358, %v10357
        %v10445 = vpack.c.b16 %v10360, %v10359
        %v10446 = vpack.c.b16 %v10362, %v10361
        %v10447 = vpack.c.b16 %v10364, %v10363
        %v10448 = vpack.c.b16 %v10366, %v10365
        %v10449 = vpack.c.b16 %v10368, %v10367
        %v10450 = vpack.c.b16 %v10370, %v10369
        %10531 = vmatprep.subr.bf16.mxu0 0
        %10532 = vmatpush1.bf16.msra.mxu0 %v10371
        %10533 = vmatprep.subr.bf16.mxu0 0
        %10534 = vmatpush1.bf16.msra.mxu0 %v10372
        %10535 = vmatprep.subr.bf16.mxu0 0
        %10536 = vmatpush1.bf16.msra.mxu0 %v10373
        %10537 = vmatprep.subr.bf16.mxu0 0
        %10538 = vmatpush1.bf16.msra.mxu0 %v10374
        %10539 = vmatprep.subr.bf16.mxu0 0
        %10540 = vmatpush1.bf16.msra.mxu0 %v10375
        %10541 = vmatprep.subr.bf16.mxu0 0
        %10542 = vmatpush1.bf16.msra.mxu0 %v10376
        %10543 = vmatprep.subr.bf16.mxu0 0
        %10544 = vmatpush1.bf16.msra.mxu0 %v10377
        %10545 = vmatprep.subr.bf16.mxu0 0
        %10546 = vmatpush1.bf16.msra.mxu0 %v10378
        %10547 = vmatprep.subr.bf16.mxu0 0
        %10548 = vmatpush1.bf16.msra.mxu0 %v10379
        %10549 = vmatprep.subr.bf16.mxu0 0
        %10550 = vmatpush1.bf16.msra.mxu0 %v10380
        %10551 = vmatprep.subr.bf16.mxu0 0
        %10552 = vmatpush1.bf16.msra.mxu0 %v10381
        %10553 = vmatprep.subr.bf16.mxu0 0
        %10554 = vmatpush1.bf16.msra.mxu0 %v10382
        %10555 = vmatprep.subr.bf16.mxu0 0
        %10556 = vmatpush1.bf16.msra.mxu0 %v10383
        %10557 = vmatprep.subr.bf16.mxu0 0
        %10558 = vmatpush1.bf16.msra.mxu0 %v10384
        %10559 = vmatprep.subr.bf16.mxu0 0
        %10560 = vmatpush1.bf16.msra.mxu0 %v10385
        %10561 = vmatprep.subr.bf16.mxu0 0
        %10562 = vmatpush1.bf16.msra.mxu0 %v10386
        %10563 = vmatprep.mubr.bf16.mxu0 %v9725
        %10564 = vmatmul.mubr.bf16.gmra.mrb[0].mxu0 %v9724
        %v10565 = vpop.f32.mrb[0].mxu0
        %v10566 = vadd.f32 %v10049, %v10565
        %v10567 = vpop.f32.mrb[0].mxu0
        %v10568 = vpop.f32.mrb[0].mxu0
        %v10569 = vadd.f32 %v10049, %v10568
        %v10570 = vpop.f32.mrb[0].mxu0
        %10571 = vmatprep.mubr.bf16.mxu0 %v9735
        %10572 = vmatmul.mubr.bf16.gmra.mrb[0].mxu0 %v9734
        %v10573 = vpop.f32.mrb[0].mxu0
        %v10574 = vadd.f32 %v10049, %v10573
        %v10575 = vpop.f32.mrb[0].mxu0
        %v10576 = vpop.f32.mrb[0].mxu0
        %v10577 = vadd.f32 %v10049, %v10576
        %v10578 = vpop.f32.mrb[0].mxu0
        %10579 = vmatprep.mubr.bf16.mxu0 %v9745
        %10580 = vmatmul.mubr.bf16.gmra.mrb[0].mxu0 %v9744
        %v10581 = vpop.f32.mrb[0].mxu0
        %v10582 = vadd.f32 %v10049, %v10581
        %v10583 = vpop.f32.mrb[0].mxu0
        %v10584 = vpop.f32.mrb[0].mxu0
        %v10585 = vadd.f32 %v10049, %v10584
        %v10586 = vpop.f32.mrb[0].mxu0
        %10587 = vmatprep.mubr.bf16.mxu0 %v9755
        %10588 = vmatmul.mubr.bf16.gmra.mrb[0].mxu0 %v9754
        %v10589 = vpop.f32.mrb[0].mxu0
        %v10590 = vadd.f32 %v10049, %v10589
        %v10591 = vpop.f32.mrb[0].mxu0
        %v10592 = vpop.f32.mrb[0].mxu0
        %v10593 = vadd.f32 %v10049, %v10592
        %v10594 = vpop.f32.mrb[0].mxu0
        %10595 = vmatprep.mubr.bf16.mxu0 %v9765
        %10596 = vmatmul.mubr.bf16.gmra.mrb[0].mxu0 %v9764
        %v10597 = vpop.f32.mrb[0].mxu0
        %v10598 = vadd.f32 %v10049, %v10597
        %v10599 = vpop.f32.mrb[0].mxu0
        %v10600 = vpop.f32.mrb[0].mxu0
        %v10601 = vadd.f32 %v10049, %v10600
        %v10602 = vpop.f32.mrb[0].mxu0
        %10603 = vmatprep.mubr.bf16.mxu0 %v9775
        %10604 = vmatmul.mubr.bf16.gmra.mrb[0].mxu0 %v9774
        %v10605 = vpop.f32.mrb[0].mxu0
        %v10606 = vadd.f32 %v10049, %v10605
        %v10607 = vpop.f32.mrb[0].mxu0
        %v10608 = vpop.f32.mrb[0].mxu0
        %v10609 = vadd.f32 %v10049, %v10608
        %v10610 = vpop.f32.mrb[0].mxu0
        %10611 = vmatprep.mubr.bf16.mxu0 %v9785
        %10612 = vmatmul.mubr.bf16.gmra.mrb[0].mxu0 %v9784
        %v10613 = vpop.f32.mrb[0].mxu0
        %v10614 = vadd.f32 %v10049, %v10613
        %v10615 = vpop.f32.mrb[0].mxu0
        %v10616 = vpop.f32.mrb[0].mxu0
        %v10617 = vadd.f32 %v10049, %v10616
        %v10618 = vpop.f32.mrb[0].mxu0
        %10619 = vmatprep.mubr.bf16.mxu0 %v9795
        %10620 = vmatmul.mubr.bf16.gmra.mrb[0].mxu0 %v9794
        %v10621 = vpop.f32.mrb[0].mxu0
        %v10622 = vadd.f32 %v10049, %v10621
        %v10623 = vpop.f32.mrb[0].mxu0
        %v10624 = vpop.f32.mrb[0].mxu0
        %v10625 = vadd.f32 %v10049, %v10624
        %v10626 = vpop.f32.mrb[0].mxu0
        %10627 = vmatprep.mubr.bf16.mxu0 %v9805
        %10628 = vmatmul.mubr.bf16.gmra.mrb[0].mxu0 %v9804
        %v10629 = vpop.f32.mrb[0].mxu0
        %v10630 = vadd.f32 %v10049, %v10629
        %v10631 = vpop.f32.mrb[0].mxu0
        %v10632 = vpop.f32.mrb[0].mxu0
        %v10633 = vadd.f32 %v10049, %v10632
        %v10634 = vpop.f32.mrb[0].mxu0
        %10635 = vmatprep.mubr.bf16.mxu0 %v9815
        %10636 = vmatmul.mubr.bf16.gmra.mrb[0].mxu0 %v9814
        %v10637 = vpop.f32.mrb[0].mxu0
        %v10638 = vadd.f32 %v10049, %v10637
        %v10639 = vpop.f32.mrb[0].mxu0
        %v10640 = vpop.f32.mrb[0].mxu0
        %v10641 = vadd.f32 %v10049, %v10640
        %v10642 = vpop.f32.mrb[0].mxu0
        %10643 = vmatprep.mubr.bf16.mxu0 %v9825
        %10644 = vmatmul.mubr.bf16.gmra.mrb[0].mxu0 %v9824
        %v10645 = vpop.f32.mrb[0].mxu0
        %v10646 = vadd.f32 %v10049, %v10645
        %v10647 = vpop.f32.mrb[0].mxu0
        %v10648 = vpop.f32.mrb[0].mxu0
        %v10649 = vadd.f32 %v10049, %v10648
        %v10650 = vpop.f32.mrb[0].mxu0
        %10651 = vmatprep.mubr.bf16.mxu0 %v9835
        %10652 = vmatmul.mubr.bf16.gmra.mrb[0].mxu0 %v9834
        %v10653 = vpop.f32.mrb[0].mxu0
        %v10654 = vadd.f32 %v10049, %v10653
        %v10655 = vpop.f32.mrb[0].mxu0
        %v10656 = vpop.f32.mrb[0].mxu0
        %v10657 = vadd.f32 %v10049, %v10656
        %v10658 = vpop.f32.mrb[0].mxu0
        %10659 = vmatprep.mubr.bf16.mxu0 %v9845
        %10660 = vmatmul.mubr.bf16.gmra.mrb[0].mxu0 %v9844
        %v10661 = vpop.f32.mrb[0].mxu0
        %v10662 = vadd.f32 %v10049, %v10661
        %v10663 = vpop.f32.mrb[0].mxu0
        %v10664 = vpop.f32.mrb[0].mxu0
        %v10665 = vadd.f32 %v10049, %v10664
        %v10666 = vpop.f32.mrb[0].mxu0
        %10667 = vmatprep.mubr.bf16.mxu0 %v9855
        %10668 = vmatmul.mubr.bf16.gmra.mrb[0].mxu0 %v9854
        %v10669 = vpop.f32.mrb[0].mxu0
        %v10670 = vadd.f32 %v10049, %v10669
        %v10671 = vpop.f32.mrb[0].mxu0
        %v10672 = vpop.f32.mrb[0].mxu0
        %v10673 = vadd.f32 %v10049, %v10672
        %v10674 = vpop.f32.mrb[0].mxu0
        %10675 = vmatprep.mubr.bf16.mxu0 %v9865
        %10676 = vmatmul.mubr.bf16.gmra.mrb[0].mxu0 %v9864
        %v10677 = vpop.f32.mrb[0].mxu0
        %v10678 = vadd.f32 %v10049, %v10677
        %v10679 = vpop.f32.mrb[0].mxu0
        %v10680 = vpop.f32.mrb[0].mxu0
        %v10681 = vadd.f32 %v10049, %v10680
        %v10682 = vpop.f32.mrb[0].mxu0
        %10683 = vmatprep.mubr.bf16.mxu0 %v9875
        %10684 = vmatmul.mubr.bf16.gmra.mrb[0].mxu0 %v9874
        %v10685 = vpop.f32.mrb[0].mxu0
        %v10686 = vadd.f32 %v10049, %v10685
        %v10687 = vpop.f32.mrb[0].mxu0
        %v10688 = vpop.f32.mrb[0].mxu0
        %v10689 = vadd.f32 %v10049, %v10688
        %v10690 = vpop.f32.mrb[0].mxu0
        %10691 = vdwg.mxu0
        %10692 = vmatprep.subr.bf16.mxu0 0
        %10693 = vmatpush1.bf16.msra.mxu0 %v10387
        %10694 = vmatprep.subr.bf16.mxu0 0
        %10695 = vmatpush1.bf16.msra.mxu0 %v10388
        %10696 = vmatprep.subr.bf16.mxu0 0
        %10697 = vmatpush1.bf16.msra.mxu0 %v10389
        %10698 = vmatprep.subr.bf16.mxu0 0
        %10699 = vmatpush1.bf16.msra.mxu0 %v10390
        %10700 = vmatprep.subr.bf16.mxu0 0
        %10701 = vmatpush1.bf16.msra.mxu0 %v10391
        %10702 = vmatprep.subr.bf16.mxu0 0
        %10703 = vmatpush1.bf16.msra.mxu0 %v10392
        %10704 = vmatprep.subr.bf16.mxu0 0
        %10705 = vmatpush1.bf16.msra.mxu0 %v10393
        %10706 = vmatprep.subr.bf16.mxu0 0
        %10707 = vmatpush1.bf16.msra.mxu0 %v10394
        %10708 = vmatprep.subr.bf16.mxu0 0
        %10709 = vmatpush1.bf16.msra.mxu0 %v10395
        %10710 = vmatprep.subr.bf16.mxu0 0
        %10711 = vmatpush1.bf16.msra.mxu0 %v10396
        %10712 = vmatprep.subr.bf16.mxu0 0
        %10713 = vmatpush1.bf16.msra.mxu0 %v10397
        %10714 = vmatprep.subr.bf16.mxu0 0
        %10715 = vmatpush1.bf16.msra.mxu0 %v10398
        %10716 = vmatprep.subr.bf16.mxu0 0
        %10717 = vmatpush1.bf16.msra.mxu0 %v10399
        %10718 = vmatprep.subr.bf16.mxu0 0
        %10719 = vmatpush1.bf16.msra.mxu0 %v10400
        %10720 = vmatprep.subr.bf16.mxu0 0
        %10721 = vmatpush1.bf16.msra.mxu0 %v10401
        %10722 = vmatprep.subr.bf16.mxu0 0
        %10723 = vmatpush1.bf16.msra.mxu0 %v10402
        %10724 = vmatprep.mubr.bf16.mxu0 %v9727
        %10725 = vmatmul.mubr.bf16.gmra.mrb[0].mxu0 %v9726
        %v10726 = vpop.f32.mrb[0].mxu0
        %v10727 = vadd.f32 %v10566, %v10726
        %v10728 = vpop.f32.mrb[0].mxu0
        %v10729 = vpop.f32.mrb[0].mxu0
        %v10730 = vadd.f32 %v10569, %v10729
        %v10731 = vpop.f32.mrb[0].mxu0
        %10732 = vmatprep.mubr.bf16.mxu0 %v9737
        %10733 = vmatmul.mubr.bf16.gmra.mrb[0].mxu0 %v9736
        %v10734 = vpop.f32.mrb[0].mxu0
        %v10735 = vadd.f32 %v10574, %v10734
        %v10736 = vpop.f32.mrb[0].mxu0
        %v10737 = vpop.f32.mrb[0].mxu0
        %v10738 = vadd.f32 %v10577, %v10737
        %v10739 = vpop.f32.mrb[0].mxu0
        %10740 = vmatprep.mubr.bf16.mxu0 %v9747
        %10741 = vmatmul.mubr.bf16.gmra.mrb[0].mxu0 %v9746
        %v10742 = vpop.f32.mrb[0].mxu0
        %v10743 = vadd.f32 %v10582, %v10742
        %v10744 = vpop.f32.mrb[0].mxu0
        %v10745 = vpop.f32.mrb[0].mxu0
        %v10746 = vadd.f32 %v10585, %v10745
        %v10747 = vpop.f32.mrb[0].mxu0
        %10748 = vmatprep.mubr.bf16.mxu0 %v9757
        %10749 = vmatmul.mubr.bf16.gmra.mrb[0].mxu0 %v9756
        %v10750 = vpop.f32.mrb[0].mxu0
        %v10751 = vadd.f32 %v10590, %v10750
        %v10752 = vpop.f32.mrb[0].mxu0
        %v10753 = vpop.f32.mrb[0].mxu0
        %v10754 = vadd.f32 %v10593, %v10753
        %v10755 = vpop.f32.mrb[0].mxu0
        %10756 = vmatprep.mubr.bf16.mxu0 %v9767
        %10757 = vmatmul.mubr.bf16.gmra.mrb[0].mxu0 %v9766
        %v10758 = vpop.f32.mrb[0].mxu0
        %v10759 = vadd.f32 %v10598, %v10758
        %v10760 = vpop.f32.mrb[0].mxu0
        %v10761 = vpop.f32.mrb[0].mxu0
        %v10762 = vadd.f32 %v10601, %v10761
        %v10763 = vpop.f32.mrb[0].mxu0
        %10764 = vmatprep.mubr.bf16.mxu0 %v9777
        %10765 = vmatmul.mubr.bf16.gmra.mrb[0].mxu0 %v9776
        %v10766 = vpop.f32.mrb[0].mxu0
        %v10767 = vadd.f32 %v10606, %v10766
        %v10768 = vpop.f32.mrb[0].mxu0
        %v10769 = vpop.f32.mrb[0].mxu0
        %v10770 = vadd.f32 %v10609, %v10769
        %v10771 = vpop.f32.mrb[0].mxu0
        %10772 = vmatprep.mubr.bf16.mxu0 %v9787
        %10773 = vmatmul.mubr.bf16.gmra.mrb[0].mxu0 %v9786
        %v10774 = vpop.f32.mrb[0].mxu0
        %v10775 = vadd.f32 %v10614, %v10774
        %v10776 = vpop.f32.mrb[0].mxu0
        %v10777 = vpop.f32.mrb[0].mxu0
        %v10778 = vadd.f32 %v10617, %v10777
        %v10779 = vpop.f32.mrb[0].mxu0
        %10780 = vmatprep.mubr.bf16.mxu0 %v9797
        %10781 = vmatmul.mubr.bf16.gmra.mrb[0].mxu0 %v9796
        %v10782 = vpop.f32.mrb[0].mxu0
        %v10783 = vadd.f32 %v10622, %v10782
        %v10784 = vpop.f32.mrb[0].mxu0
        %v10785 = vpop.f32.mrb[0].mxu0
        %v10786 = vadd.f32 %v10625, %v10785
        %v10787 = vpop.f32.mrb[0].mxu0
        %10788 = vmatprep.mubr.bf16.mxu0 %v9807
        %10789 = vmatmul.mubr.bf16.gmra.mrb[0].mxu0 %v9806
        %v10790 = vpop.f32.mrb[0].mxu0
        %v10791 = vadd.f32 %v10630, %v10790
        %v10792 = vpop.f32.mrb[0].mxu0
        %v10793 = vpop.f32.mrb[0].mxu0
        %v10794 = vadd.f32 %v10633, %v10793
        %v10795 = vpop.f32.mrb[0].mxu0
        %10796 = vmatprep.mubr.bf16.mxu0 %v9817
        %10797 = vmatmul.mubr.bf16.gmra.mrb[0].mxu0 %v9816
        %v10798 = vpop.f32.mrb[0].mxu0
        %v10799 = vadd.f32 %v10638, %v10798
        %v10800 = vpop.f32.mrb[0].mxu0
        %v10801 = vpop.f32.mrb[0].mxu0
        %v10802 = vadd.f32 %v10641, %v10801
        %v10803 = vpop.f32.mrb[0].mxu0
        %10804 = vmatprep.mubr.bf16.mxu0 %v9827
        %10805 = vmatmul.mubr.bf16.gmra.mrb[0].mxu0 %v9826
        %v10806 = vpop.f32.mrb[0].mxu0
        %v10807 = vadd.f32 %v10646, %v10806
        %v10808 = vpop.f32.mrb[0].mxu0
        %v10809 = vpop.f32.mrb[0].mxu0
        %v10810 = vadd.f32 %v10649, %v10809
        %v10811 = vpop.f32.mrb[0].mxu0
        %10812 = vmatprep.mubr.bf16.mxu0 %v9837
        %10813 = vmatmul.mubr.bf16.gmra.mrb[0].mxu0 %v9836
        %v10814 = vpop.f32.mrb[0].mxu0
        %v10815 = vadd.f32 %v10654, %v10814
        %v10816 = vpop.f32.mrb[0].mxu0
        %v10817 = vpop.f32.mrb[0].mxu0
        %v10818 = vadd.f32 %v10657, %v10817
        %v10819 = vpop.f32.mrb[0].mxu0
        %10820 = vmatprep.mubr.bf16.mxu0 %v9847
        %10821 = vmatmul.mubr.bf16.gmra.mrb[0].mxu0 %v9846
        %v10822 = vpop.f32.mrb[0].mxu0
        %v10823 = vadd.f32 %v10662, %v10822
        %v10824 = vpop.f32.mrb[0].mxu0
        %v10825 = vpop.f32.mrb[0].mxu0
        %v10826 = vadd.f32 %v10665, %v10825
        %v10827 = vpop.f32.mrb[0].mxu0
        %10828 = vmatprep.mubr.bf16.mxu0 %v9857
        %10829 = vmatmul.mubr.bf16.gmra.mrb[0].mxu0 %v9856
        %v10830 = vpop.f32.mrb[0].mxu0
        %v10831 = vadd.f32 %v10670, %v10830
        %v10832 = vpop.f32.mrb[0].mxu0
        %v10833 = vpop.f32.mrb[0].mxu0
        %v10834 = vadd.f32 %v10673, %v10833
        %v10835 = vpop.f32.mrb[0].mxu0
        %10836 = vmatprep.mubr.bf16.mxu0 %v9867
        %10837 = vmatmul.mubr.bf16.gmra.mrb[0].mxu0 %v9866
        %v10838 = vpop.f32.mrb[0].mxu0
        %v10839 = vadd.f32 %v10678, %v10838
        %v10840 = vpop.f32.mrb[0].mxu0
        %v10841 = vpop.f32.mrb[0].mxu0
        %v10842 = vadd.f32 %v10681, %v10841
        %v10843 = vpop.f32.mrb[0].mxu0
        %10844 = vmatprep.mubr.bf16.mxu0 %v9877
        %10845 = vmatmul.mubr.bf16.gmra.mrb[0].mxu0 %v9876
        %v10846 = vpop.f32.mrb[0].mxu0
        %v10847 = vadd.f32 %v10686, %v10846
        %v10848 = vpop.f32.mrb[0].mxu0
        %v10849 = vpop.f32.mrb[0].mxu0
        %v10850 = vadd.f32 %v10689, %v10849
        %v10851 = vpop.f32.mrb[0].mxu0
        %10852 = vdwg.mxu0
        %10853 = vmatprep.subr.bf16.mxu0 0
        %10854 = vmatpush1.bf16.msra.mxu0 %v10403
        %10855 = vmatprep.subr.bf16.mxu0 0
        %10856 = vmatpush1.bf16.msra.mxu0 %v10404
        %10857 = vmatprep.subr.bf16.mxu0 0
        %10858 = vmatpush1.bf16.msra.mxu0 %v10405
        %10859 = vmatprep.subr.bf16.mxu0 0
        %10860 = vmatpush1.bf16.msra.mxu0 %v10406
        %10861 = vmatprep.subr.bf16.mxu0 0
        %10862 = vmatpush1.bf16.msra.mxu0 %v10407
        %10863 = vmatprep.subr.bf16.mxu0 0
        %10864 = vmatpush1.bf16.msra.mxu0 %v10408
        %10865 = vmatprep.subr.bf16.mxu0 0
        %10866 = vmatpush1.bf16.msra.mxu0 %v10409
        %10867 = vmatprep.subr.bf16.mxu0 0
        %10868 = vmatpush1.bf16.msra.mxu0 %v10410
        %10869 = vmatprep.subr.bf16.mxu0 0
        %10870 = vmatpush1.bf16.msra.mxu0 %v10411
        %10871 = vmatprep.subr.bf16.mxu0 0
        %10872 = vmatpush1.bf16.msra.mxu0 %v10412
        %10873 = vmatprep.subr.bf16.mxu0 0
        %10874 = vmatpush1.bf16.msra.mxu0 %v10413
        %10875 = vmatprep.subr.bf16.mxu0 0
        %10876 = vmatpush1.bf16.msra.mxu0 %v10414
        %10877 = vmatprep.subr.bf16.mxu0 0
        %10878 = vmatpush1.bf16.msra.mxu0 %v10415
        %10879 = vmatprep.subr.bf16.mxu0 0
        %10880 = vmatpush1.bf16.msra.mxu0 %v10416
        %10881 = vmatprep.subr.bf16.mxu0 0
        %10882 = vmatpush1.bf16.msra.mxu0 %v10417
        %10883 = vmatprep.subr.bf16.mxu0 0
        %10884 = vmatpush1.bf16.msra.mxu0 %v10418
        %10885 = vmatprep.mubr.bf16.mxu0 %v9729
        %10886 = vmatmul.mubr.bf16.gmra.mrb[0].mxu0 %v9728
        %v10887 = vpop.f32.mrb[0].mxu0
        %v10888 = vadd.f32 %v10727, %v10887
        %v10889 = vpop.f32.mrb[0].mxu0
        %v10890 = vpop.f32.mrb[0].mxu0
        %v10891 = vadd.f32 %v10730, %v10890
        %v10892 = vpop.f32.mrb[0].mxu0
        %10893 = vmatprep.mubr.bf16.mxu0 %v9739
        %10894 = vmatmul.mubr.bf16.gmra.mrb[0].mxu0 %v9738
        %v10895 = vpop.f32.mrb[0].mxu0
        %v10896 = vadd.f32 %v10735, %v10895
        %v10897 = vpop.f32.mrb[0].mxu0
        %v10898 = vpop.f32.mrb[0].mxu0
        %v10899 = vadd.f32 %v10738, %v10898
        %v10900 = vpop.f32.mrb[0].mxu0
        %10901 = vmatprep.mubr.bf16.mxu0 %v9749
        %10902 = vmatmul.mubr.bf16.gmra.mrb[0].mxu0 %v9748
        %v10903 = vpop.f32.mrb[0].mxu0
        %v10904 = vadd.f32 %v10743, %v10903
        %v10905 = vpop.f32.mrb[0].mxu0
        %v10906 = vpop.f32.mrb[0].mxu0
        %v10907 = vadd.f32 %v10746, %v10906
        %v10908 = vpop.f32.mrb[0].mxu0
        %10909 = vmatprep.mubr.bf16.mxu0 %v9759
        %10910 = vmatmul.mubr.bf16.gmra.mrb[0].mxu0 %v9758
        %v10911 = vpop.f32.mrb[0].mxu0
        %v10912 = vadd.f32 %v10751, %v10911
        %v10913 = vpop.f32.mrb[0].mxu0
        %v10914 = vpop.f32.mrb[0].mxu0
        %v10915 = vadd.f32 %v10754, %v10914
        %v10916 = vpop.f32.mrb[0].mxu0
        %10917 = vmatprep.mubr.bf16.mxu0 %v9769
        %10918 = vmatmul.mubr.bf16.gmra.mrb[0].mxu0 %v9768
        %v10919 = vpop.f32.mrb[0].mxu0
        %v10920 = vadd.f32 %v10759, %v10919
        %v10921 = vpop.f32.mrb[0].mxu0
        %v10922 = vpop.f32.mrb[0].mxu0
        %v10923 = vadd.f32 %v10762, %v10922
        %v10924 = vpop.f32.mrb[0].mxu0
        %10925 = vmatprep.mubr.bf16.mxu0 %v9779
        %10926 = vmatmul.mubr.bf16.gmra.mrb[0].mxu0 %v9778
        %v10927 = vpop.f32.mrb[0].mxu0
        %v10928 = vadd.f32 %v10767, %v10927
        %v10929 = vpop.f32.mrb[0].mxu0
        %v10930 = vpop.f32.mrb[0].mxu0
        %v10931 = vadd.f32 %v10770, %v10930
        %v10932 = vpop.f32.mrb[0].mxu0
        %10933 = vmatprep.mubr.bf16.mxu0 %v9789
        %10934 = vmatmul.mubr.bf16.gmra.mrb[0].mxu0 %v9788
        %v10935 = vpop.f32.mrb[0].mxu0
        %v10936 = vadd.f32 %v10775, %v10935
        %v10937 = vpop.f32.mrb[0].mxu0
        %v10938 = vpop.f32.mrb[0].mxu0
        %v10939 = vadd.f32 %v10778, %v10938
        %v10940 = vpop.f32.mrb[0].mxu0
        %10941 = vmatprep.mubr.bf16.mxu0 %v9799
        %10942 = vmatmul.mubr.bf16.gmra.mrb[0].mxu0 %v9798
        %v10943 = vpop.f32.mrb[0].mxu0
        %v10944 = vadd.f32 %v10783, %v10943
        %v10945 = vpop.f32.mrb[0].mxu0
        %v10946 = vpop.f32.mrb[0].mxu0
        %v10947 = vadd.f32 %v10786, %v10946
        %v10948 = vpop.f32.mrb[0].mxu0
        %10949 = vmatprep.mubr.bf16.mxu0 %v9809
        %10950 = vmatmul.mubr.bf16.gmra.mrb[0].mxu0 %v9808
        %v10951 = vpop.f32.mrb[0].mxu0
        %v10952 = vadd.f32 %v10791, %v10951
        %v10953 = vpop.f32.mrb[0].mxu0
        %v10954 = vpop.f32.mrb[0].mxu0
        %v10955 = vadd.f32 %v10794, %v10954
        %v10956 = vpop.f32.mrb[0].mxu0
        %10957 = vmatprep.mubr.bf16.mxu0 %v9819
        %10958 = vmatmul.mubr.bf16.gmra.mrb[0].mxu0 %v9818
        %v10959 = vpop.f32.mrb[0].mxu0
        %v10960 = vadd.f32 %v10799, %v10959
        %v10961 = vpop.f32.mrb[0].mxu0
        %v10962 = vpop.f32.mrb[0].mxu0
        %v10963 = vadd.f32 %v10802, %v10962
        %v10964 = vpop.f32.mrb[0].mxu0
        %10965 = vmatprep.mubr.bf16.mxu0 %v9829
        %10966 = vmatmul.mubr.bf16.gmra.mrb[0].mxu0 %v9828
        %v10967 = vpop.f32.mrb[0].mxu0
        %v10968 = vadd.f32 %v10807, %v10967
        %v10969 = vpop.f32.mrb[0].mxu0
        %v10970 = vpop.f32.mrb[0].mxu0
        %v10971 = vadd.f32 %v10810, %v10970
        %v10972 = vpop.f32.mrb[0].mxu0
        %10973 = vmatprep.mubr.bf16.mxu0 %v9839
        %10974 = vmatmul.mubr.bf16.gmra.mrb[0].mxu0 %v9838
        %v10975 = vpop.f32.mrb[0].mxu0
        %v10976 = vadd.f32 %v10815, %v10975
        %v10977 = vpop.f32.mrb[0].mxu0
        %v10978 = vpop.f32.mrb[0].mxu0
        %v10979 = vadd.f32 %v10818, %v10978
        %v10980 = vpop.f32.mrb[0].mxu0
        %10981 = vmatprep.mubr.bf16.mxu0 %v9849
        %10982 = vmatmul.mubr.bf16.gmra.mrb[0].mxu0 %v9848
        %v10983 = vpop.f32.mrb[0].mxu0
        %v10984 = vadd.f32 %v10823, %v10983
        %v10985 = vpop.f32.mrb[0].mxu0
        %v10986 = vpop.f32.mrb[0].mxu0
        %v10987 = vadd.f32 %v10826, %v10986
        %v10988 = vpop.f32.mrb[0].mxu0
        %10989 = vmatprep.mubr.bf16.mxu0 %v9859
        %10990 = vmatmul.mubr.bf16.gmra.mrb[0].mxu0 %v9858
        %v10991 = vpop.f32.mrb[0].mxu0
        %v10992 = vadd.f32 %v10831, %v10991
        %v10993 = vpop.f32.mrb[0].mxu0
        %v10994 = vpop.f32.mrb[0].mxu0
        %v10995 = vadd.f32 %v10834, %v10994
        %v10996 = vpop.f32.mrb[0].mxu0
        %10997 = vmatprep.mubr.bf16.mxu0 %v9869
        %10998 = vmatmul.mubr.bf16.gmra.mrb[0].mxu0 %v9868
        %v10999 = vpop.f32.mrb[0].mxu0
        %v11000 = vadd.f32 %v10839, %v10999
        %v11001 = vpop.f32.mrb[0].mxu0
        %v11002 = vpop.f32.mrb[0].mxu0
        %v11003 = vadd.f32 %v10842, %v11002
        %v11004 = vpop.f32.mrb[0].mxu0
        %11005 = vmatprep.mubr.bf16.mxu0 %v9879
        %11006 = vmatmul.mubr.bf16.gmra.mrb[0].mxu0 %v9878
        %v11007 = vpop.f32.mrb[0].mxu0
        %v11008 = vadd.f32 %v10847, %v11007
        %v11009 = vpop.f32.mrb[0].mxu0
        %v11010 = vpop.f32.mrb[0].mxu0
        %v11011 = vadd.f32 %v10850, %v11010
        %v11012 = vpop.f32.mrb[0].mxu0
        %11013 = vdwg.mxu0
        %11014 = vmatprep.subr.bf16.mxu0 0
        %11015 = vmatpush1.bf16.msra.mxu0 %v10419
        %11016 = vmatprep.subr.bf16.mxu0 0
        %11017 = vmatpush1.bf16.msra.mxu0 %v10420
        %11018 = vmatprep.subr.bf16.mxu0 0
        %11019 = vmatpush1.bf16.msra.mxu0 %v10421
        %11020 = vmatprep.subr.bf16.mxu0 0
        %11021 = vmatpush1.bf16.msra.mxu0 %v10422
        %11022 = vmatprep.subr.bf16.mxu0 0
        %11023 = vmatpush1.bf16.msra.mxu0 %v10423
        %11024 = vmatprep.subr.bf16.mxu0 0
        %11025 = vmatpush1.bf16.msra.mxu0 %v10424
        %11026 = vmatprep.subr.bf16.mxu0 0
        %11027 = vmatpush1.bf16.msra.mxu0 %v10425
        %11028 = vmatprep.subr.bf16.mxu0 0
        %11029 = vmatpush1.bf16.msra.mxu0 %v10426
        %11030 = vmatprep.subr.bf16.mxu0 0
        %11031 = vmatpush1.bf16.msra.mxu0 %v10427
        %11032 = vmatprep.subr.bf16.mxu0 0
        %11033 = vmatpush1.bf16.msra.mxu0 %v10428
        %11034 = vmatprep.subr.bf16.mxu0 0
        %11035 = vmatpush1.bf16.msra.mxu0 %v10429
        %11036 = vmatprep.subr.bf16.mxu0 0
        %11037 = vmatpush1.bf16.msra.mxu0 %v10430
        %11038 = vmatprep.subr.bf16.mxu0 0
        %11039 = vmatpush1.bf16.msra.mxu0 %v10431
        %11040 = vmatprep.subr.bf16.mxu0 0
        %11041 = vmatpush1.bf16.msra.mxu0 %v10432
        %11042 = vmatprep.subr.bf16.mxu0 0
        %11043 = vmatpush1.bf16.msra.mxu0 %v10433
        %11044 = vmatprep.subr.bf16.mxu0 0
        %11045 = vmatpush1.bf16.msra.mxu0 %v10434
        %11046 = vmatprep.mubr.bf16.mxu0 %v9731
        %11047 = vmatmul.mubr.bf16.gmra.mrb[0].mxu0 %v9730
        %v11048 = vpop.f32.mrb[0].mxu0
        %v11049 = vadd.f32 %v10888, %v11048
        %v11050 = vpop.f32.mrb[0].mxu0
        %v11051 = vpop.f32.mrb[0].mxu0
        %v11052 = vadd.f32 %v10891, %v11051
        %v11053 = vpop.f32.mrb[0].mxu0
        %11054 = vmatprep.mubr.bf16.mxu0 %v9741
        %11055 = vmatmul.mubr.bf16.gmra.mrb[0].mxu0 %v9740
        %v11056 = vpop.f32.mrb[0].mxu0
        %v11057 = vadd.f32 %v10896, %v11056
        %v11058 = vpop.f32.mrb[0].mxu0
        %v11059 = vpop.f32.mrb[0].mxu0
        %v11060 = vadd.f32 %v10899, %v11059
        %v11061 = vpop.f32.mrb[0].mxu0
        %11062 = vmatprep.mubr.bf16.mxu0 %v9751
        %11063 = vmatmul.mubr.bf16.gmra.mrb[0].mxu0 %v9750
        %v11064 = vpop.f32.mrb[0].mxu0
        %v11065 = vadd.f32 %v10904, %v11064
        %v11066 = vpop.f32.mrb[0].mxu0
        %v11067 = vpop.f32.mrb[0].mxu0
        %v11068 = vadd.f32 %v10907, %v11067
        %v11069 = vpop.f32.mrb[0].mxu0
        %11070 = vmatprep.mubr.bf16.mxu0 %v9761
        %11071 = vmatmul.mubr.bf16.gmra.mrb[0].mxu0 %v9760
        %v11072 = vpop.f32.mrb[0].mxu0
        %v11073 = vadd.f32 %v10912, %v11072
        %v11074 = vpop.f32.mrb[0].mxu0
        %v11075 = vpop.f32.mrb[0].mxu0
        %v11076 = vadd.f32 %v10915, %v11075
        %v11077 = vpop.f32.mrb[0].mxu0
        %11078 = vmatprep.mubr.bf16.mxu0 %v9771
        %11079 = vmatmul.mubr.bf16.gmra.mrb[0].mxu0 %v9770
        %v11080 = vpop.f32.mrb[0].mxu0
        %v11081 = vadd.f32 %v10920, %v11080
        %v11082 = vpop.f32.mrb[0].mxu0
        %v11083 = vpop.f32.mrb[0].mxu0
        %v11084 = vadd.f32 %v10923, %v11083
        %v11085 = vpop.f32.mrb[0].mxu0
        %11086 = vmatprep.mubr.bf16.mxu0 %v9781
        %11087 = vmatmul.mubr.bf16.gmra.mrb[0].mxu0 %v9780
        %v11088 = vpop.f32.mrb[0].mxu0
        %v11089 = vadd.f32 %v10928, %v11088
        %v11090 = vpop.f32.mrb[0].mxu0
        %v11091 = vpop.f32.mrb[0].mxu0
        %v11092 = vadd.f32 %v10931, %v11091
        %v11093 = vpop.f32.mrb[0].mxu0
        %11094 = vmatprep.mubr.bf16.mxu0 %v9791
        %11095 = vmatmul.mubr.bf16.gmra.mrb[0].mxu0 %v9790
        %v11096 = vpop.f32.mrb[0].mxu0
        %v11097 = vadd.f32 %v10936, %v11096
        %v11098 = vpop.f32.mrb[0].mxu0
        %v11099 = vpop.f32.mrb[0].mxu0
        %v11100 = vadd.f32 %v10939, %v11099
        %v11101 = vpop.f32.mrb[0].mxu0
        %11102 = vmatprep.mubr.bf16.mxu0 %v9801
        %11103 = vmatmul.mubr.bf16.gmra.mrb[0].mxu0 %v9800
        %v11104 = vpop.f32.mrb[0].mxu0
        %v11105 = vadd.f32 %v10944, %v11104
        %v11106 = vpop.f32.mrb[0].mxu0
        %v11107 = vpop.f32.mrb[0].mxu0
        %v11108 = vadd.f32 %v10947, %v11107
        %v11109 = vpop.f32.mrb[0].mxu0
        %11110 = vmatprep.mubr.bf16.mxu0 %v9811
        %11111 = vmatmul.mubr.bf16.gmra.mrb[0].mxu0 %v9810
        %v11112 = vpop.f32.mrb[0].mxu0
        %v11113 = vadd.f32 %v10952, %v11112
        %v11114 = vpop.f32.mrb[0].mxu0
        %v11115 = vpop.f32.mrb[0].mxu0
        %v11116 = vadd.f32 %v10955, %v11115
        %v11117 = vpop.f32.mrb[0].mxu0
        %11118 = vmatprep.mubr.bf16.mxu0 %v9821
        %11119 = vmatmul.mubr.bf16.gmra.mrb[0].mxu0 %v9820
        %v11120 = vpop.f32.mrb[0].mxu0
        %v11121 = vadd.f32 %v10960, %v11120
        %v11122 = vpop.f32.mrb[0].mxu0
        %v11123 = vpop.f32.mrb[0].mxu0
        %v11124 = vadd.f32 %v10963, %v11123
        %v11125 = vpop.f32.mrb[0].mxu0
        %11126 = vmatprep.mubr.bf16.mxu0 %v9831
        %11127 = vmatmul.mubr.bf16.gmra.mrb[0].mxu0 %v9830
        %v11128 = vpop.f32.mrb[0].mxu0
        %v11129 = vadd.f32 %v10968, %v11128
        %v11130 = vpop.f32.mrb[0].mxu0
        %v11131 = vpop.f32.mrb[0].mxu0
        %v11132 = vadd.f32 %v10971, %v11131
        %v11133 = vpop.f32.mrb[0].mxu0
        %11134 = vmatprep.mubr.bf16.mxu0 %v9841
        %11135 = vmatmul.mubr.bf16.gmra.mrb[0].mxu0 %v9840
        %v11136 = vpop.f32.mrb[0].mxu0
        %v11137 = vadd.f32 %v10976, %v11136
        %v11138 = vpop.f32.mrb[0].mxu0
        %v11139 = vpop.f32.mrb[0].mxu0
        %v11140 = vadd.f32 %v10979, %v11139
        %v11141 = vpop.f32.mrb[0].mxu0
        %11142 = vmatprep.mubr.bf16.mxu0 %v9851
        %11143 = vmatmul.mubr.bf16.gmra.mrb[0].mxu0 %v9850
        %v11144 = vpop.f32.mrb[0].mxu0
        %v11145 = vadd.f32 %v10984, %v11144
        %v11146 = vpop.f32.mrb[0].mxu0
        %v11147 = vpop.f32.mrb[0].mxu0
        %v11148 = vadd.f32 %v10987, %v11147
        %v11149 = vpop.f32.mrb[0].mxu0
        %11150 = vmatprep.mubr.bf16.mxu0 %v9861
        %11151 = vmatmul.mubr.bf16.gmra.mrb[0].mxu0 %v9860
        %v11152 = vpop.f32.mrb[0].mxu0
        %v11153 = vadd.f32 %v10992, %v11152
        %v11154 = vpop.f32.mrb[0].mxu0
        %v11155 = vpop.f32.mrb[0].mxu0
        %v11156 = vadd.f32 %v10995, %v11155
        %v11157 = vpop.f32.mrb[0].mxu0
        %11158 = vmatprep.mubr.bf16.mxu0 %v9871
        %11159 = vmatmul.mubr.bf16.gmra.mrb[0].mxu0 %v9870
        %v11160 = vpop.f32.mrb[0].mxu0
        %v11161 = vadd.f32 %v11000, %v11160
        %v11162 = vpop.f32.mrb[0].mxu0
        %v11163 = vpop.f32.mrb[0].mxu0
        %v11164 = vadd.f32 %v11003, %v11163
        %v11165 = vpop.f32.mrb[0].mxu0
        %11166 = vmatprep.mubr.bf16.mxu0 %v9881
        %11167 = vmatmul.mubr.bf16.gmra.mrb[0].mxu0 %v9880
        %v11168 = vpop.f32.mrb[0].mxu0
        %v11169 = vadd.f32 %v11008, %v11168
        %v11170 = vpop.f32.mrb[0].mxu0
        %v11171 = vpop.f32.mrb[0].mxu0
        %v11172 = vadd.f32 %v11011, %v11171
        %v11173 = vpop.f32.mrb[0].mxu0
        %11174 = vdwg.mxu0
        %11175 = vmatprep.subr.bf16.mxu0 0
        %11176 = vmatpush1.bf16.msra.mxu0 %v10435
        %11177 = vmatprep.subr.bf16.mxu0 0
        %11178 = vmatpush1.bf16.msra.mxu0 %v10436
        %11179 = vmatprep.subr.bf16.mxu0 0
        %11180 = vmatpush1.bf16.msra.mxu0 %v10437
        %11181 = vmatprep.subr.bf16.mxu0 0
        %11182 = vmatpush1.bf16.msra.mxu0 %v10438
        %11183 = vmatprep.subr.bf16.mxu0 0
        %11184 = vmatpush1.bf16.msra.mxu0 %v10439
        %11185 = vmatprep.subr.bf16.mxu0 0
        %11186 = vmatpush1.bf16.msra.mxu0 %v10440
        %11187 = vmatprep.subr.bf16.mxu0 0
        %11188 = vmatpush1.bf16.msra.mxu0 %v10441
        %11189 = vmatprep.subr.bf16.mxu0 0
        %11190 = vmatpush1.bf16.msra.mxu0 %v10442
        %11191 = vmatprep.subr.bf16.mxu0 0
        %11192 = vmatpush1.bf16.msra.mxu0 %v10443
        %11193 = vmatprep.subr.bf16.mxu0 0
        %11194 = vmatpush1.bf16.msra.mxu0 %v10444
        %11195 = vmatprep.subr.bf16.mxu0 0
        %11196 = vmatpush1.bf16.msra.mxu0 %v10445
        %11197 = vmatprep.subr.bf16.mxu0 0
        %11198 = vmatpush1.bf16.msra.mxu0 %v10446
        %11199 = vmatprep.subr.bf16.mxu0 0
        %11200 = vmatpush1.bf16.msra.mxu0 %v10447
        %11201 = vmatprep.subr.bf16.mxu0 0
        %11202 = vmatpush1.bf16.msra.mxu0 %v10448
        %11203 = vmatprep.subr.bf16.mxu0 0
        %11204 = vmatpush1.bf16.msra.mxu0 %v10449
        %11205 = vmatprep.subr.bf16.mxu0 0
        %11206 = vmatpush1.bf16.msra.mxu0 %v10450
        %11207 = vmatprep.mubr.bf16.mxu0 %v9733
        %11208 = vmatmul.mubr.bf16.gmra.mrb[0].mxu0 %v9732
        %v11209 = vpop.f32.mrb[0].mxu0
        %v11210 = vadd.f32 %v11049, %v11209
        %v11211 = vpop.f32.mrb[0].mxu0
        %v11212 = vpop.f32.mrb[0].mxu0
        %v11213 = vadd.f32 %v11052, %v11212
        %v11214 = vpop.f32.mrb[0].mxu0
        %11215 = vmatprep.mubr.bf16.mxu0 %v9743
        %11216 = vmatmul.mubr.bf16.gmra.mrb[0].mxu0 %v9742
        %v11217 = vpop.f32.mrb[0].mxu0
        %v11218 = vadd.f32 %v11057, %v11217
        %v11219 = vpop.f32.mrb[0].mxu0
        %v11220 = vpop.f32.mrb[0].mxu0
        %v11221 = vadd.f32 %v11060, %v11220
        %v11222 = vpop.f32.mrb[0].mxu0
        %11223 = vmatprep.mubr.bf16.mxu0 %v9753
        %11224 = vmatmul.mubr.bf16.gmra.mrb[0].mxu0 %v9752
        %v11225 = vpop.f32.mrb[0].mxu0
        %v11226 = vadd.f32 %v11065, %v11225
        %v11227 = vpop.f32.mrb[0].mxu0
        %v11228 = vpop.f32.mrb[0].mxu0
        %v11229 = vadd.f32 %v11068, %v11228
        %v11230 = vpop.f32.mrb[0].mxu0
        %11231 = vmatprep.mubr.bf16.mxu0 %v9763
        %11232 = vmatmul.mubr.bf16.gmra.mrb[0].mxu0 %v9762
        %v11233 = vpop.f32.mrb[0].mxu0
        %v11234 = vadd.f32 %v11073, %v11233
        %v11235 = vpop.f32.mrb[0].mxu0
        %v11236 = vpop.f32.mrb[0].mxu0
        %v11237 = vadd.f32 %v11076, %v11236
        %v11238 = vpop.f32.mrb[0].mxu0
        %11239 = vmatprep.mubr.bf16.mxu0 %v9773
        %11240 = vmatmul.mubr.bf16.gmra.mrb[0].mxu0 %v9772
        %v11241 = vpop.f32.mrb[0].mxu0
        %v11242 = vadd.f32 %v11081, %v11241
        %v11243 = vpop.f32.mrb[0].mxu0
        %v11244 = vpop.f32.mrb[0].mxu0
        %v11245 = vadd.f32 %v11084, %v11244
        %v11246 = vpop.f32.mrb[0].mxu0
        %11247 = vmatprep.mubr.bf16.mxu0 %v9783
        %11248 = vmatmul.mubr.bf16.gmra.mrb[0].mxu0 %v9782
        %v11249 = vpop.f32.mrb[0].mxu0
        %v11250 = vadd.f32 %v11089, %v11249
        %v11251 = vpop.f32.mrb[0].mxu0
        %v11252 = vpop.f32.mrb[0].mxu0
        %v11253 = vadd.f32 %v11092, %v11252
        %v11254 = vpop.f32.mrb[0].mxu0
        %11255 = vmatprep.mubr.bf16.mxu0 %v9793
        %11256 = vmatmul.mubr.bf16.gmra.mrb[0].mxu0 %v9792
        %v11257 = vpop.f32.mrb[0].mxu0
        %v11258 = vadd.f32 %v11097, %v11257
        %v11259 = vpop.f32.mrb[0].mxu0
        %v11260 = vpop.f32.mrb[0].mxu0
        %v11261 = vadd.f32 %v11100, %v11260
        %v11262 = vpop.f32.mrb[0].mxu0
        %11263 = vmatprep.mubr.bf16.mxu0 %v9803
        %11264 = vmatmul.mubr.bf16.gmra.mrb[0].mxu0 %v9802
        %v11265 = vpop.f32.mrb[0].mxu0
        %v11266 = vadd.f32 %v11105, %v11265
        %v11267 = vpop.f32.mrb[0].mxu0
        %v11268 = vpop.f32.mrb[0].mxu0
        %v11269 = vadd.f32 %v11108, %v11268
        %v11270 = vpop.f32.mrb[0].mxu0
        %11271 = vmatprep.mubr.bf16.mxu0 %v9813
        %11272 = vmatmul.mubr.bf16.gmra.mrb[0].mxu0 %v9812
        %v11273 = vpop.f32.mrb[0].mxu0
        %v11274 = vadd.f32 %v11113, %v11273
        %v11275 = vpop.f32.mrb[0].mxu0
        %v11276 = vpop.f32.mrb[0].mxu0
        %v11277 = vadd.f32 %v11116, %v11276
        %v11278 = vpop.f32.mrb[0].mxu0
        %11279 = vmatprep.mubr.bf16.mxu0 %v9823
        %11280 = vmatmul.mubr.bf16.gmra.mrb[0].mxu0 %v9822
        %v11281 = vpop.f32.mrb[0].mxu0
        %v11282 = vadd.f32 %v11121, %v11281
        %v11283 = vpop.f32.mrb[0].mxu0
        %v11284 = vpop.f32.mrb[0].mxu0
        %v11285 = vadd.f32 %v11124, %v11284
        %v11286 = vpop.f32.mrb[0].mxu0
        %11287 = vmatprep.mubr.bf16.mxu0 %v9833
        %11288 = vmatmul.mubr.bf16.gmra.mrb[0].mxu0 %v9832
        %v11289 = vpop.f32.mrb[0].mxu0
        %v11290 = vadd.f32 %v11129, %v11289
        %v11291 = vpop.f32.mrb[0].mxu0
        %v11292 = vpop.f32.mrb[0].mxu0
        %v11293 = vadd.f32 %v11132, %v11292
        %v11294 = vpop.f32.mrb[0].mxu0
        %11295 = vmatprep.mubr.bf16.mxu0 %v9843
        %11296 = vmatmul.mubr.bf16.gmra.mrb[0].mxu0 %v9842
        %v11297 = vpop.f32.mrb[0].mxu0
        %v11298 = vadd.f32 %v11137, %v11297
        %v11299 = vpop.f32.mrb[0].mxu0
        %v11300 = vpop.f32.mrb[0].mxu0
        %v11301 = vadd.f32 %v11140, %v11300
        %v11302 = vpop.f32.mrb[0].mxu0
        %11303 = vmatprep.mubr.bf16.mxu0 %v9853
        %11304 = vmatmul.mubr.bf16.gmra.mrb[0].mxu0 %v9852
        %v11305 = vpop.f32.mrb[0].mxu0
        %v11306 = vadd.f32 %v11145, %v11305
        %v11307 = vpop.f32.mrb[0].mxu0
        %v11308 = vpop.f32.mrb[0].mxu0
        %v11309 = vadd.f32 %v11148, %v11308
        %v11310 = vpop.f32.mrb[0].mxu0
        %11311 = vmatprep.mubr.bf16.mxu0 %v9863
        %11312 = vmatmul.mubr.bf16.gmra.mrb[0].mxu0 %v9862
        %v11313 = vpop.f32.mrb[0].mxu0
        %v11314 = vadd.f32 %v11153, %v11313
        %v11315 = vpop.f32.mrb[0].mxu0
        %v11316 = vpop.f32.mrb[0].mxu0
        %v11317 = vadd.f32 %v11156, %v11316
        %v11318 = vpop.f32.mrb[0].mxu0
        %11319 = vmatprep.mubr.bf16.mxu0 %v9873
        %11320 = vmatmul.mubr.bf16.gmra.mrb[0].mxu0 %v9872
        %v11321 = vpop.f32.mrb[0].mxu0
        %v11322 = vadd.f32 %v11161, %v11321
        %v11323 = vpop.f32.mrb[0].mxu0
        %v11324 = vpop.f32.mrb[0].mxu0
        %v11325 = vadd.f32 %v11164, %v11324
        %v11326 = vpop.f32.mrb[0].mxu0
        %11327 = vmatprep.mubr.bf16.mxu0 %v9883
        %11328 = vmatmul.mubr.bf16.gmra.mrb[0].mxu0 %v9882
        %v11329 = vpop.f32.mrb[0].mxu0
        %v11330 = vadd.f32 %v11169, %v11329
        %v11331 = vpop.f32.mrb[0].mxu0
        %v11332 = vpop.f32.mrb[0].mxu0
        %v11333 = vadd.f32 %v11172, %v11332
        %v11334 = vpop.f32.mrb[0].mxu0
        %11335 = vdwg.mxu0
        %11336 = vst [vmem:[%s525] sm:$0xff] %v11210
        %11337 = vst [vmem:[%s525 + $0x8] sm:$0xff] %v11213
        %11338 = vst [vmem:[%s525 + $0x10] sm:$0xff] %v11218
        %11339 = vst [vmem:[%s525 + $0x18] sm:$0xff] %v11221
        %11340 = vst [vmem:[%s525 + $0x20] sm:$0xff] %v11226
        %11341 = vst [vmem:[%s525 + $0x28] sm:$0xff] %v11229
        %11342 = vst [vmem:[%s525 + $0x30] sm:$0xff] %v11234
        %11343 = vst [vmem:[%s525 + $0x38] sm:$0xff] %v11237
        %11344 = vst [vmem:[%s525 + $0x40] sm:$0xff] %v11242
        %11345 = vst [vmem:[%s525 + $0x48] sm:$0xff] %v11245
        %11346 = vst [vmem:[%s525 + $0x50] sm:$0xff] %v11250
        %11347 = vst [vmem:[%s525 + $0x58] sm:$0xff] %v11253
        %11348 = vst [vmem:[%s525 + $0x60] sm:$0xff] %v11258
        %11349 = vst [vmem:[%s525 + $0x68] sm:$0xff] %v11261
        %11350 = vst [vmem:[%s525 + $0x70] sm:$0xff] %v11266
        %11351 = vst [vmem:[%s525 + $0x78] sm:$0xff] %v11269
        %11352 = vst [vmem:[%s525 + $0x80] sm:$0xff] %v11274
        %11353 = vst [vmem:[%s525 + $0x88] sm:$0xff] %v11277
        %11354 = vst [vmem:[%s525 + $0x90] sm:$0xff] %v11282
        %11355 = vst [vmem:[%s525 + $0x98] sm:$0xff] %v11285
        %11356 = vst [vmem:[%s525 + $0xa0] sm:$0xff] %v11290
        %11357 = vst [vmem:[%s525 + $0xa8] sm:$0xff] %v11293
        %11358 = vst [vmem:[%s525 + $0xb0] sm:$0xff] %v11298
        %11359 = vst [vmem:[%s525 + $0xb8] sm:$0xff] %v11301
        %11360 = vst [vmem:[%s525 + $0xc0] sm:$0xff] %v11306
        %11361 = vst [vmem:[%s525 + $0xc8] sm:$0xff] %v11309
        %11362 = vst [vmem:[%s525 + $0xd0] sm:$0xff] %v11314
        %11363 = vst [vmem:[%s525 + $0xd8] sm:$0xff] %v11317
        %11364 = vst [vmem:[%s525 + $0xe0] sm:$0xff] %v11322
        %11365 = vst [vmem:[%s525 + $0xe8] sm:$0xff] %v11325
        %11366 = vst [vmem:[%s525 + $0xf0] sm:$0xff] %v11330
        %11367 = vst [vmem:[%s525 + $0xf8] sm:$0xff] %v11333
        %s11368 = sand.u32 %s384, 1
        %s11369 = scalar_lea.sflag [#allocation7], %s11368
        %s11370 = sand.u32 %s384, 1
        %s11371 = smul.addr %s11370, 256
        %s11372 = scalar_lea.vmem [#allocation6], %s11371
        // Predicated region
        $region85: #{resblock_forward.1} parent=83 // pred_check
          %p11373 = pneg %p394
        $region86: #{resblock_forward.1} parent=83 // pred_check_branch
          %11375 = sbr.rel (%p11373) target = $region88
        $region87: #{resblock_forward.1} parent=83 // pred_region
          %s11377 = ssub.s32 4096, 4096
          %11378 = vsyncadd %s11369, %s11377
          %s11379 = smul.addr %s30, 32
          %s11380 = smul.addr %s11379, 128
          %s11381 = scalar_lea.hbm %s16, %s11380
          %s11382 = sshll.u32 %s11372, 4
          %s11383 = int_to_ptr.vmem [resolvable:$true] %s11382
          %11388 = dma.vmem_to_hbm [thread:$0]  %s11383, 4096, %s11381, %s11369, 128, 128, 8
        $region88: #{resblock_forward.1} parent=83 // pred_fallthru
          _
      $region84: #{resblock_forward.1} parent=5 // pred_fallthru
        _
      %p11389 = scmp.le.s32.totalorder 2, %s25
      // Predicated region
      $region89: #{resblock_forward.1} parent=5 // pred_check
        %p11390 = pneg %p11389
      $region90: #{resblock_forward.1} parent=5 // pred_check_branch
        %11392 = sbr.rel (%p11390) target = $region92
      $region91: #{resblock_forward.1} parent=5 // pred_region
        %s11393 = ssub.s32 %s25, 2
        // Predicated region
        $region93: #{resblock_forward.1} parent=91 // pred_check
          %p11394 = pneg %p400
        $region94: #{resblock_forward.1} parent=91 // pred_check_branch
          %11396 = sbr.rel (%p11394) target = $region96
        $region95: #{resblock_forward.1} parent=91 // pred_region
          %s11397 = sand.u32 %s385, 1
          %s11398 = scalar_lea.sflag [#allocation7], %s11397
          %s11399 = sand.u32 %s385, 1
          %s11400 = smul.addr %s11399, 256
          %s11401 = scalar_lea.vmem [#allocation6], %s11400
          %11402 = dma.done %s11398, 4096
        $region96: #{resblock_forward.1} parent=91 // pred_fallthru
          _
      $region92: #{resblock_forward.1} parent=5 // pred_fallthru
        _
    $region6: #{resblock_forward.1} parent=1 // loop_footer
      %s29 = sadd.s32 1, %s25
    $region7: #{resblock_forward.1} parent=1 // loop_footer_branch
      %24 = sbr.rel target = $region3
    $region8: #{resblock_forward.1} parent=1 // loop_exit
      _
    %11403 = vsyncpa [#allocation7], 1
    %s11404 = scalar_lea.sflag [#allocation7], 1
    %11405 = vsyncpa %s11404, 1

</llo_original>
